<compile_context>
chip_gen: v7x
topology: tpu7x:2x2x1
jax: 0.10.0
libtpu: 0.0.40
codegen_flags: <defaults>
</compile_context>

<pallas_src>
import functools

import jax
import jax.numpy as jnp
import numpy as np
from jax.experimental import pallas as pl
from jax.experimental.pallas import tpu as pltpu

_VMEM = pl.BlockSpec(memory_space=pltpu.MemorySpace.VMEM)

SIGMA = 0.5       # length_scale (learnable_length_scale=False -> plain float)
GAMMA = 0.999     # only used by update_embeddings(), not by forward()
BN_EPS = 1e-5
USE_BF16_MATMUL = False   # v6e/v7x: set True to cast matmul operands to bf16 (f32 accum)


# ---------------------------------------------------------------------------
# In-kernel helpers (traced inside the Pallas kernel; jnp values only).
# Ops used: 2-D static slices, concat (both axes), 2-D matmul, elementwise math,
# axis-0 reductions -- no in-kernel iota, reshape or roll.
# ---------------------------------------------------------------------------
def _mm(a, b):
    if USE_BF16_MATMUL:
        a = a.astype(jnp.bfloat16)
        b = b.astype(jnp.bfloat16)
    return jnp.dot(a, b, preferred_element_type=jnp.float32)


def _shift_rows(x, d):
    """Row shift: result[i] = x[i + d] (wrapped rows are garbage that a later
    precomputed valid-row selection matmul drops)."""
    if d == 0:
        return x
    return jnp.concatenate([x[d:, :], x[:d, :]], axis=0)


def _conv_taps(x, w, bias, shifts):
    """'valid' conv + bias + ReLU as ONE matmul: kh/kw taps fused along the K/lane
    axis -- operand (rows, taps*cin) against weight (taps*cin, cout)."""
    if len(shifts) == 1:
        op = x
    else:
        op = jnp.concatenate([_shift_rows(x, d) for d in shifts], axis=1)
    return jnp.maximum(_mm(op, w) + bias, 0.0)


def _shift_max(x, shifts):
    """Elementwise max of x with its row-shifted copies (pool neighbours)."""
    m = x
    for d in shifts:
        if d:
            m = jnp.maximum(m, _shift_rows(x, d))
    return m


def _bn(x, g, b):
    """Train-mode BatchNorm (biased variance) over (positions, channels).
    Single-pass: var = E[x^2] - mean^2 (clamped), per perf review."""
    inv_n = 1.0 / x.shape[0]
    mean = jnp.sum(x, axis=0, keepdims=True) * inv_n
    ex2 = jnp.sum(x * x, axis=0, keepdims=True) * inv_n
    var = jnp.maximum(ex2 - mean * mean, 0.0)
    return (x - mean) * jax.lax.rsqrt(var + BN_EPS) * g + b


# ---------------------------------------------------------------------------
# The single fused forward kernel.
# ---------------------------------------------------------------------------
def _cnn_duq_kernel(p1_ref, w1_ref, w2_ref, w3_ref, w4_ref, w5_ref,
                    fc1w_ref, duqw_ref, s1_ref, s2_ref, s3_ref, red_ref,
                    sp_ref, z_ref, y_ref, *, dims, sigma):
    nb, oh1, ow1 = dims                    # conv1 output grid (compact, all valid)
    oh2 = oh1 - 2                          # conv2 output height
    pw2 = (ow1 - 2) // 2                   # width after (1,2) pool  -> grid G1
    ph4 = oh2 // 2                         # height after (2,2) pool -> grid G2
    pw4 = (pw2 - 4) // 2                   # width after (2,2) pool
    hw = ph4 * (pw4 - 4)                   # spatial positions entering fc1
    c5 = w5_ref.shape[1]                   # channels entering fc1 (32)
    ec = z_ref.shape[1]                    # embedding_size * num_classes
    nc = y_ref.shape[1]                    # num_classes
    nrow = nb * hw

    # ---- packed tiny parameters (one DMA) --------------------------------
    sp = sp_ref[...]
    c1b, c2b = sp[0:1, 0:16], sp[1:2, 0:16]
    bn1g, bn1b = sp[2:3, 0:16], sp[3:4, 0:16]
    c3b, c4b = sp[4:5, 0:16], sp[5:6, 0:32]
    bn2g, bn2b = sp[6:7, 0:32], sp[7:8, 0:32]
    c5b, fc1b = sp[8:9, 0:32], sp[9:10, 0:64]
    msk = sp[10:10 + nrow, 0:hw * c5]                      # (nb*hw, hw*c5) flatten mask
    lsum = sp[10 + nrow:10 + nrow + nb, 0:nrow]            # (nb, nb*hw) per-sample row-sum
    emb = sp[10 + nrow + nb:11 + nrow + nb, 0:ec]          # (1, E*C) embeddings m/N

    # ---- conv1 (5x5, cin=1): host-built patches -> one matmul ------------
    a = jnp.maximum(_mm(p1_ref[...], w1_ref[...]) + c1b, 0.0)      # (nb*oh1*ow1, 16)

    # ---- conv2 (3x3): taps fused along K -> one (rows,144)@(144,16) ------
    a = _conv_taps(a, w2_ref[...], c2b,
                   [dh * ow1 + dw for dh in range(3) for dw in range(3)])

    # ---- max_pool (1,2): max with 1-row shift + one selection matmul; bn1 -
    a = _mm(s1_ref[...], _shift_max(a, [1]))                       # (nb*oh2*pw2, 16)
    a = _bn(a, bn1g, bn1b)

    # ---- conv3, conv4 (1x3) on the compact G1 grid -----------------------
    a = _conv_taps(a, w3_ref[...], c3b, [0, 1, 2])                 # (., 16)
    a = _conv_taps(a, w4_ref[...], c4b, [0, 1, 2])                 # (., 32)

    # ---- max_pool (2,2): max over 4 shifted neighbours + selection; bn2 ---
    a = _mm(s2_ref[...], _shift_max(a, [1, pw2, pw2 + 1]))         # (nb*ph4*pw4, 32)
    a = _bn(a, bn2g, bn2b)

    # ---- conv5 applied twice with the same weights (as in the module) ----
    w5 = w5_ref[...]
    a = _conv_taps(a, w5, c5b, [0, 1, 2])
    a = _conv_taps(a, w5, c5b, [0, 1, 2])

    # ---- drop invalid columns (valid-row selection) + bn2 again ----------
    a = _mm(s3_ref[...], a)                                        # (nb*hw, 32)
    a = _bn(a, bn2g, bn2b)

    # ---- fc1: torch flatten(1) folded into the pre-permuted weight.
    # Build the (nb, hw*c5) operand with lane-tile + mask + row-sum matmul
    # (no in-kernel reshape / single-row slices), then ONE K=hw*c5 matmul.
    a_exp = jnp.concatenate([a] * hw, axis=1) * msk                # (nb*hw, hw*c5)
    a_flat = _mm(lsum, a_exp)                                      # (nb, hw*c5)
    feat = jnp.maximum(_mm(a_flat, fc1w_ref[...]) + fc1b, 0.0)     # (nb, 64)

    # ---- DUQ head: one lane-dense matmul, then the RBF distances ---------
    zflat = _mm(feat, duqw_ref[...])                               # (nb, E*C)
    z_ref[...] = zflat
    d = zflat - emb
    acc = _mm(d * d, red_ref[...])                                 # (nb, C): sum over E
    ne = ec // nc
    y_ref[...] = jnp.exp(-(acc * (1.0 / ne)) / (2.0 * sigma * sigma))


# ---------------------------------------------------------------------------
# Host-side glue: one-time parameter / helper-matrix preprocessing + wrapper.
# ---------------------------------------------------------------------------
def _conv_w2d(w_oihw):
    """torch OIHW conv weight -> tap-fused matrix (KH*KW*Cin, Cout), (kh,kw) blocks, ci minor."""
    cout = w_oihw.shape[0]
    return jnp.transpose(w_oihw, (2, 3, 1, 0)).reshape(-1, cout)


def _im2col_conv1(x_nchw):
    """5x5 'valid' patches of the raw (B,1,H,W) input -> (B*OH*OW, 25), cols (kh*5+kw)."""
    b = x_nchw.shape[0]
    x = x_nchw[:, 0]
    h, w = x.shape[1], x.shape[2]
    oh, ow = h - 4, w - 4
    cols = [x[:, i:i + oh, j:j + ow] for i in range(5) for j in range(5)]
    return jnp.stack(cols, axis=-1).reshape(b * oh * ow, 25)


def _sel(src_rows, n_in):
    """0/1 selection matrix S (len(src_rows), n_in) with S[i, src_rows[i]] = 1."""
    s = np.zeros((len(src_rows), n_in), np.float32)
    s[np.arange(len(src_rows)), np.asarray(src_rows)] = 1.0
    return jnp.asarray(s)


def _geometry(nb, h, w):
    oh1, ow1 = h - 4, w - 4
    oh2, pw2 = oh1 - 2, (ow1 - 2) // 2
    ph4, pw4 = oh2 // 2, (pw2 - 4) // 2
    hw = ph4 * (pw4 - 4)
    return oh1, ow1, oh2, pw2, ph4, pw4, hw


def preprocess_params(p, input_shape):
    """One-time layout conversion + host precompute of all 0/1 helper matrices."""
    nb, _, h, w = input_shape
    oh1, ow1, oh2, pw2, ph4, pw4, hw = _geometry(nb, h, w)
    c5 = p["conv5_w"].shape[0]
    nout = p["fc1_w"].shape[0]
    assert p["fc1_w"].shape[1] == hw * c5, "fc1 in-features must match the input geometry"
    ne, nc, nf = p["W"].shape
    ec = ne * nc
    pack_w = max(ec, hw * c5, 128)

    # fc1: torch flatten order (c, h, w) -> weight rows reordered to (pos, c).
    fc1m = jnp.transpose(p["fc1_w"].reshape(nout, c5, hw), (2, 1, 0)).reshape(hw * c5, nout)

    # pool / validity selections (fused: pool compaction == valid-row selection).
    s1 = _sel([(b * oh1 + hh) * ow1 + 2 * wp
               for b in range(nb) for hh in range(oh2) for wp in range(pw2)],
              nb * oh1 * ow1)
    s2 = _sel([(b * oh2 + 2 * hp) * pw2 + 2 * wp
               for b in range(nb) for hp in range(ph4) for wp in range(pw4)],
              nb * oh2 * pw2)
    s3 = _sel([(b * ph4 + hh) * pw4 + ww
               for b in range(nb) for hh in range(ph4) for ww in range(pw4 - 4)],
              nb * ph4 * pw4)
    red = jnp.asarray(
        (np.arange(ec)[:, None] % nc == np.arange(nc)[None, :]).astype(np.float32))

    # flatten helpers: mask (nb*hw, hw*c5) and per-sample row-sum (nb, nb*hw).
    r = np.arange(nb * hw)
    l = np.arange(hw * c5)
    msk = ((l[None, :] // c5) == (r[:, None] % hw)).astype(np.float32)
    lsum = ((r[None, :] // hw) == np.arange(nb)[:, None]).astype(np.float32)

    # pack the tiny (1,C) params + flatten helpers into one array (one DMA).
    def row(v):
        v = jnp.asarray(v, jnp.float32).reshape(-1)
        return jnp.pad(v, (0, pack_w - v.shape[0]))[None, :]

    small_rows = [row(p["conv1_b"]), row(p["conv2_b"]), row(p["bn1_g"]), row(p["bn1_b"]),
                  row(p["conv3_b"]), row(p["conv4_b"]), row(p["bn2_g"]), row(p["bn2_b"]),
                  row(p["conv5_b"]), row(p["fc1_b"])]
    msk_p = jnp.pad(jnp.asarray(msk), ((0, 0), (0, pack_w - hw * c5)))
    lsum_p = jnp.pad(jnp.asarray(lsum), ((0, 0), (0, pack_w - nb * hw)))
    sp_static = jnp.concatenate(small_rows + [msk_p, lsum_p], axis=0)

    return {
        "p1_w": _conv_w2d(p["conv1_w"]), "p2_w": _conv_w2d(p["conv2_w"]),
        "p3_w": _conv_w2d(p["conv3_w"]), "p4_w": _conv_w2d(p["conv4_w"]),
        "p5_w": _conv_w2d(p["conv5_w"]),
        "fc1_w": fc1m,
        "duq_w": jnp.transpose(p["W"], (2, 0, 1)).reshape(nf, ec),   # (64, E*C)
        "s1": s1, "s2": s2, "s3": s3, "red": red,
        "sp_static": sp_static,
        "m": p["m"], "N": p["N"],
    }


def forward(prep, x_nchw):
    nb, _, h, w = x_nchw.shape
    oh1, ow1, oh2, pw2, ph4, pw4, hw = _geometry(nb, h, w)
    assert prep["s1"].shape == (nb * oh2 * pw2, nb * oh1 * ow1), "prep/geometry mismatch"

    nc = prep["red"].shape[1]
    ec = prep["duq_w"].shape[1]
    ne = ec // nc
    pack_w = prep["sp_static"].shape[1]

    patches1 = _im2col_conv1(x_nchw)
    # embeddings = m / N, recomputed every forward (as in output_layer()).
    emb = (prep["m"] / prep["N"][None, :]).reshape(-1)
    sp = jnp.concatenate([prep["sp_static"],
                          jnp.pad(emb, (0, pack_w - ec))[None, :]], axis=0)

    args = (patches1, prep["p1_w"], prep["p2_w"], prep["p3_w"], prep["p4_w"],
            prep["p5_w"], prep["fc1_w"], prep["duq_w"],
            prep["s1"], prep["s2"], prep["s3"], prep["red"], sp)

    # Advisory cost estimate so XLA schedules the surrounding ops around the call.
    n0, n1, n2, n3 = nb * oh1 * ow1, nb * oh2 * pw2, nb * ph4 * pw4, nb * hw
    mm_shapes = [
        (n0, prep["p1_w"].shape[0], prep["p1_w"].shape[1]),
        (n0, prep["p2_w"].shape[0], prep["p2_w"].shape[1]),
        (n1, n0, prep["p2_w"].shape[1]),
        (n1, prep["p3_w"].shape[0], prep["p3_w"].shape[1]),
        (n1, prep["p4_w"].shape[0], prep["p4_w"].shape[1]),
        (n2, n1, prep["p4_w"].shape[1]),
        (n2, prep["p5_w"].shape[0], prep["p5_w"].shape[1]),
        (n2, prep["p5_w"].shape[0], prep["p5_w"].shape[1]),
        (n3, n2, prep["p5_w"].shape[1]),
        (nb, n3, prep["fc1_w"].shape[0]),
        (nb, prep["fc1_w"].shape[0], prep["fc1_w"].shape[1]),
        (nb, prep["duq_w"].shape[0], ec),
        (nb, ec, nc),
    ]
    flops = 2 * sum(m * k * n for m, k, n in mm_shapes)
    bytes_acc = sum(int(np.prod(a.shape)) * 4 for a in args) + nb * (ec + nc) * 4
    cost = pl.CostEstimate(flops=int(flops), transcendentals=int(nb * nc + 80),
                           bytes_accessed=int(bytes_acc))

    zflat, y_pred = pl.pallas_call(
        functools.partial(_cnn_duq_kernel, dims=(nb, oh1, ow1), sigma=float(SIGMA)),
        out_shape=(jax.ShapeDtypeStruct((nb, ec), jnp.float32),
                   jax.ShapeDtypeStruct((nb, nc), jnp.float32)),
        in_specs=[_VMEM] * len(args),
        out_specs=(_VMEM, _VMEM),
        cost_estimate=cost,
    )(*args)

    return zflat.reshape(nb, ne, nc), y_pred


# ---------------------------------------------------------------------------
# Deterministic parameter init (torch-layout shapes, matching the module's __init__).
# ---------------------------------------------------------------------------
def init_params(key, fc_in, embedding_size=32, num_classes=8):
    ks = jax.random.split(key, 8)

    def nrm(k, shape, scale):
        return scale * jax.random.normal(k, shape, jnp.float32)

    p = {
        "conv1_w": nrm(ks[0], (16, 1, 5, 5), 0.2),
        "conv1_b": jnp.zeros((16,), jnp.float32),
        "conv2_w": nrm(ks[1], (16, 16, 3, 3), 0.1),
        "conv2_b": jnp.zeros((16,), jnp.float32),
        "conv3_w": nrm(ks[2], (16, 16, 1, 3), 0.15),
        "conv3_b": jnp.zeros((16,), jnp.float32),
        "conv4_w": nrm(ks[3], (32, 16, 1, 3), 0.15),
        "conv4_b": jnp.zeros((32,), jnp.float32),
        "conv5_w": nrm(ks[4], (32, 32, 1, 3), 0.1),
        "conv5_b": jnp.zeros((32,), jnp.float32),
        "bn1_g": jnp.ones((16,), jnp.float32),
        "bn1_b": jnp.zeros((16,), jnp.float32),
        "bn2_g": jnp.ones((32,), jnp.float32),
        "bn2_b": jnp.zeros((32,), jnp.float32),
        "fc1_w": nrm(ks[5], (64, fc_in), 0.05),            # torch Linear: (out, in)
        "fc1_b": jnp.zeros((64,), jnp.float32),
        "W": nrm(ks[6], (embedding_size, num_classes, 64), 0.05),
        "N": 12.0 * jnp.ones((num_classes,), jnp.float32),
    }
    p["m"] = (jax.random.normal(ks[7], (embedding_size, num_classes), jnp.float32)
              * p["N"][None, :])
    return p


# ---------------------------------------------------------------------------
# Pure-JAX (XLA) reference of the PyTorch forward, used as a correctness check.
# ---------------------------------------------------------------------------
def _reference_forward(p, x):
    def conv(h, w, b):
        y = jax.lax.conv_general_dilated(h, w, (1, 1), "VALID",
                                         dimension_numbers=("NCHW", "OIHW", "NCHW"))
        return jax.nn.relu(y + b[None, :, None, None])

    def bn(h, g, be):
        mean = jnp.mean(h, axis=(0, 2, 3), keepdims=True)
        var = jnp.mean((h - mean) ** 2, axis=(0, 2, 3), keepdims=True)
        return ((h - mean) * jax.lax.rsqrt(var + BN_EPS)
                * g[None, :, None, None] + be[None, :, None, None])

    def pool(h, kh, kw):
        return jax.lax.reduce_window(h, -jnp.inf, jax.lax.max,
                                     (1, 1, kh, kw), (1, 1, kh, kw), "VALID")

    h = conv(x, p["conv1_w"], p["conv1_b"])
    h = conv(h, p["conv2_w"], p["conv2_b"])
    h = pool(h, 1, 2)
    h = bn(h, p["bn1_g"], p["bn1_b"])
    h = conv(h, p["conv3_w"], p["conv3_b"])
    h = conv(h, p["conv4_w"], p["conv4_b"])
    h = pool(h, 2, 2)
    h = bn(h, p["bn2_g"], p["bn2_b"])
    h = conv(h, p["conv5_w"], p["conv5_b"])
    h = conv(h, p["conv5_w"], p["conv5_b"])
    h = bn(h, p["bn2_g"], p["bn2_b"])
    feat = jax.nn.relu(h.reshape(h.shape[0], -1) @ p["fc1_w"].T + p["fc1_b"])
    z = jnp.einsum("ij,mnj->imn", feat, p["W"])
    emb = p["m"] / p["N"][None, :]
    y = jnp.exp(-jnp.mean((z - emb[None]) ** 2, axis=1) / (2.0 * SIGMA * SIGMA))
    return z, y


if __name__ == "__main__":
    B, H, W_in = 2, 10, 46
    # Shape trace: conv1->(6,42) conv2->(4,40) pool(1,2)->(4,20) conv3->(4,18)
    # conv4->(4,16) pool(2,2)->(2,8) conv5->(2,6) conv5->(2,4); flatten = 32*2*4 = 256.
    key = jax.random.PRNGKey(0)
    kp, kx = jax.random.split(key)
    params = init_params(kp, fc_in=32 * 2 * 4, embedding_size=32, num_classes=8)
    prep = preprocess_params(params, (B, 1, H, W_in))     # one-time layout/helper hoisting
    x = jax.random.normal(kx, (B, 1, H, W_in), jnp.float32)  # NCHW like PyTorch

    z, y_pred = jax.jit(forward)(prep, x)
    jax.block_until_ready((z, y_pred))

    assert z.shape == (B, 32, 8), z.shape
    assert y_pred.shape == (B, 8), y_pred.shape
    assert bool(jnp.all(jnp.isfinite(z))) and bool(jnp.all(jnp.isfinite(y_pred)))

    z_ref, y_ref = _reference_forward(params, x)
    assert np.allclose(np.asarray(z), np.asarray(z_ref), rtol=5e-2, atol=5e-2), \
        float(np.max(np.abs(np.asarray(z) - np.asarray(z_ref))))
    assert np.allclose(np.asarray(y_pred), np.asarray(y_ref), rtol=5e-2, atol=5e-2), \
        float(np.max(np.abs(np.asarray(y_pred) - np.asarray(y_ref))))

    print("KERNEL_OK")
</pallas_src>

<mosaic_0001>
module attributes {stable_mosaic.version = 11 : i64} {
  func.func @_cnn_duq_kernel(%arg0: memref<504x25xf32, #tpu.memory_space<vmem>>, %arg1: memref<25x16xf32, #tpu.memory_space<vmem>>, %arg2: memref<144x16xf32, #tpu.memory_space<vmem>>, %arg3: memref<48x16xf32, #tpu.memory_space<vmem>>, %arg4: memref<48x32xf32, #tpu.memory_space<vmem>>, %arg5: memref<96x32xf32, #tpu.memory_space<vmem>>, %arg6: memref<256x64xf32, #tpu.memory_space<vmem>>, %arg7: memref<64x256xf32, #tpu.memory_space<vmem>>, %arg8: memref<160x504xf32, #tpu.memory_space<vmem>>, %arg9: memref<32x160xf32, #tpu.memory_space<vmem>>, %arg10: memref<16x32xf32, #tpu.memory_space<vmem>>, %arg11: memref<256x8xf32, #tpu.memory_space<vmem>>, %arg12: memref<29x256xf32, #tpu.memory_space<vmem>>, %arg13: memref<2x256xf32, #tpu.memory_space<vmem>>, %arg14: memref<2x8xf32, #tpu.memory_space<vmem>>) attributes {dimension_semantics = [], scalar_prefetch = 0 : i64, scratch_operands = 0 : i64, tpu.core_type = #tpu.core_type<tc>} {
    %c0 = arith.constant 0 : index
    %c0_0 = arith.constant 0 : index
    %0 = vector.load %arg12[%c0, %c0_0] : memref<29x256xf32, #tpu.memory_space<vmem>>, vector<29x256xf32>
    %1 = vector.extract_strided_slice %0 {offsets = [0, 0], sizes = [1, 16], strides = [1, 1]} : vector<29x256xf32> to vector<1x16xf32>
    %2 = vector.extract_strided_slice %0 {offsets = [1, 0], sizes = [1, 16], strides = [1, 1]} : vector<29x256xf32> to vector<1x16xf32>
    %3 = vector.extract_strided_slice %0 {offsets = [2, 0], sizes = [1, 16], strides = [1, 1]} : vector<29x256xf32> to vector<1x16xf32>
    %4 = vector.extract_strided_slice %0 {offsets = [3, 0], sizes = [1, 16], strides = [1, 1]} : vector<29x256xf32> to vector<1x16xf32>
    %5 = vector.extract_strided_slice %0 {offsets = [4, 0], sizes = [1, 16], strides = [1, 1]} : vector<29x256xf32> to vector<1x16xf32>
    %6 = vector.extract_strided_slice %0 {offsets = [5, 0], sizes = [1, 32], strides = [1, 1]} : vector<29x256xf32> to vector<1x32xf32>
    %7 = vector.extract_strided_slice %0 {offsets = [6, 0], sizes = [1, 32], strides = [1, 1]} : vector<29x256xf32> to vector<1x32xf32>
    %8 = vector.extract_strided_slice %0 {offsets = [7, 0], sizes = [1, 32], strides = [1, 1]} : vector<29x256xf32> to vector<1x32xf32>
    %9 = vector.extract_strided_slice %0 {offsets = [8, 0], sizes = [1, 32], strides = [1, 1]} : vector<29x256xf32> to vector<1x32xf32>
    %10 = vector.extract_strided_slice %0 {offsets = [9, 0], sizes = [1, 64], strides = [1, 1]} : vector<29x256xf32> to vector<1x64xf32>
    %11 = vector.extract_strided_slice %0 {offsets = [10, 0], sizes = [16, 256], strides = [1, 1]} : vector<29x256xf32> to vector<16x256xf32>
    %12 = vector.extract_strided_slice %0 {offsets = [26, 0], sizes = [2, 16], strides = [1, 1]} : vector<29x256xf32> to vector<2x16xf32>
    %13 = vector.extract_strided_slice %0 {offsets = [28, 0], sizes = [1, 256], strides = [1, 1]} : vector<29x256xf32> to vector<1x256xf32>
    %c0_1 = arith.constant 0 : index
    %c0_2 = arith.constant 0 : index
    %14 = vector.load %arg0[%c0_1, %c0_2] : memref<504x25xf32, #tpu.memory_space<vmem>>, vector<504x25xf32>
    %c0_3 = arith.constant 0 : index
    %c0_4 = arith.constant 0 : index
    %15 = vector.load %arg1[%c0_3, %c0_4] : memref<25x16xf32, #tpu.memory_space<vmem>>, vector<25x16xf32>
    %cst = arith.constant dense<0.000000e+00> : vector<504x16xf32>
    %16 = tpu.matmul %14, %15, %cst {dimension_numbers = #tpu.dot_dimension_numbers<[1], [0], [0], [1], [0, 0, 1, 1], [], []>} : vector<504x25xf32>, vector<25x16xf32>, vector<504x16xf32> -> vector<504x16xf32>
    %17 = vector.broadcast %1 : vector<1x16xf32> to vector<504x16xf32>
    %18 = arith.addf %16, %17 : vector<504x16xf32>
    %cst_5 = arith.constant 0.000000e+00 : f32
    %19 = vector.broadcast %cst_5 : f32 to vector<504x16xf32>
    %20 = arith.maximumf %18, %19 : vector<504x16xf32>
    %c0_6 = arith.constant 0 : index
    %c0_7 = arith.constant 0 : index
    %21 = vector.load %arg2[%c0_6, %c0_7] : memref<144x16xf32, #tpu.memory_space<vmem>>, vector<144x16xf32>
    %22 = vector.extract_strided_slice %20 {offsets = [1, 0], sizes = [503, 16], strides = [1, 1]} : vector<504x16xf32> to vector<503x16xf32>
    %23 = vector.extract_strided_slice %20 {offsets = [0, 0], sizes = [1, 16], strides = [1, 1]} : vector<504x16xf32> to vector<1x16xf32>
    %24 = tpu.concatenate %22, %23 in 0 : vector<503x16xf32>, vector<1x16xf32> -> vector<504x16xf32>
    %25 = vector.extract_strided_slice %20 {offsets = [2, 0], sizes = [502, 16], strides = [1, 1]} : vector<504x16xf32> to vector<502x16xf32>
    %26 = vector.extract_strided_slice %20 {offsets = [0, 0], sizes = [2, 16], strides = [1, 1]} : vector<504x16xf32> to vector<2x16xf32>
    %27 = tpu.concatenate %25, %26 in 0 : vector<502x16xf32>, vector<2x16xf32> -> vector<504x16xf32>
    %28 = vector.extract_strided_slice %20 {offsets = [42, 0], sizes = [462, 16], strides = [1, 1]} : vector<504x16xf32> to vector<462x16xf32>
    %29 = vector.extract_strided_slice %20 {offsets = [0, 0], sizes = [42, 16], strides = [1, 1]} : vector<504x16xf32> to vector<42x16xf32>
    %30 = tpu.concatenate %28, %29 in 0 : vector<462x16xf32>, vector<42x16xf32> -> vector<504x16xf32>
    %31 = vector.extract_strided_slice %20 {offsets = [43, 0], sizes = [461, 16], strides = [1, 1]} : vector<504x16xf32> to vector<461x16xf32>
    %32 = vector.extract_strided_slice %20 {offsets = [0, 0], sizes = [43, 16], strides = [1, 1]} : vector<504x16xf32> to vector<43x16xf32>
    %33 = tpu.concatenate %31, %32 in 0 : vector<461x16xf32>, vector<43x16xf32> -> vector<504x16xf32>
    %34 = vector.extract_strided_slice %20 {offsets = [44, 0], sizes = [460, 16], strides = [1, 1]} : vector<504x16xf32> to vector<460x16xf32>
    %35 = vector.extract_strided_slice %20 {offsets = [0, 0], sizes = [44, 16], strides = [1, 1]} : vector<504x16xf32> to vector<44x16xf32>
    %36 = tpu.concatenate %34, %35 in 0 : vector<460x16xf32>, vector<44x16xf32> -> vector<504x16xf32>
    %37 = vector.extract_strided_slice %20 {offsets = [84, 0], sizes = [420, 16], strides = [1, 1]} : vector<504x16xf32> to vector<420x16xf32>
    %38 = vector.extract_strided_slice %20 {offsets = [0, 0], sizes = [84, 16], strides = [1, 1]} : vector<504x16xf32> to vector<84x16xf32>
    %39 = tpu.concatenate %37, %38 in 0 : vector<420x16xf32>, vector<84x16xf32> -> vector<504x16xf32>
    %40 = vector.extract_strided_slice %20 {offsets = [85, 0], sizes = [419, 16], strides = [1, 1]} : vector<504x16xf32> to vector<419x16xf32>
    %41 = vector.extract_strided_slice %20 {offsets = [0, 0], sizes = [85, 16], strides = [1, 1]} : vector<504x16xf32> to vector<85x16xf32>
    %42 = tpu.concatenate %40, %41 in 0 : vector<419x16xf32>, vector<85x16xf32> -> vector<504x16xf32>
    %43 = vector.extract_strided_slice %20 {offsets = [86, 0], sizes = [418, 16], strides = [1, 1]} : vector<504x16xf32> to vector<418x16xf32>
    %44 = vector.extract_strided_slice %20 {offsets = [0, 0], sizes = [86, 16], strides = [1, 1]} : vector<504x16xf32> to vector<86x16xf32>
    %45 = tpu.concatenate %43, %44 in 0 : vector<418x16xf32>, vector<86x16xf32> -> vector<504x16xf32>
    %46 = tpu.concatenate %20, %24, %27, %30, %33, %36, %39, %42, %45 in 1 : vector<504x16xf32>, vector<504x16xf32>, vector<504x16xf32>, vector<504x16xf32>, vector<504x16xf32>, vector<504x16xf32>, vector<504x16xf32>, vector<504x16xf32>, vector<504x16xf32> -> vector<504x144xf32>
    %cst_8 = arith.constant dense<0.000000e+00> : vector<504x16xf32>
    %47 = tpu.matmul %46, %21, %cst_8 {dimension_numbers = #tpu.dot_dimension_numbers<[1], [0], [0], [1], [0, 0, 1, 1], [], []>} : vector<504x144xf32>, vector<144x16xf32>, vector<504x16xf32> -> vector<504x16xf32>
    %48 = vector.broadcast %2 : vector<1x16xf32> to vector<504x16xf32>
    %49 = arith.addf %47, %48 : vector<504x16xf32>
    %cst_9 = arith.constant 0.000000e+00 : f32
    %50 = vector.broadcast %cst_9 : f32 to vector<504x16xf32>
    %51 = arith.maximumf %49, %50 : vector<504x16xf32>
    %c0_10 = arith.constant 0 : index
    %c0_11 = arith.constant 0 : index
    %52 = vector.load %arg8[%c0_10, %c0_11] : memref<160x504xf32, #tpu.memory_space<vmem>>, vector<160x504xf32>
    %53 = vector.extract_strided_slice %51 {offsets = [1, 0], sizes = [503, 16], strides = [1, 1]} : vector<504x16xf32> to vector<503x16xf32>
    %54 = vector.extract_strided_slice %51 {offsets = [0, 0], sizes = [1, 16], strides = [1, 1]} : vector<504x16xf32> to vector<1x16xf32>
    %55 = tpu.concatenate %53, %54 in 0 : vector<503x16xf32>, vector<1x16xf32> -> vector<504x16xf32>
    %56 = arith.maximumf %51, %55 : vector<504x16xf32>
    %cst_12 = arith.constant dense<0.000000e+00> : vector<160x16xf32>
    %57 = tpu.matmul %52, %56, %cst_12 {dimension_numbers = #tpu.dot_dimension_numbers<[1], [0], [0], [1], [0, 0, 1, 1], [], []>} : vector<160x504xf32>, vector<504x16xf32>, vector<160x16xf32> -> vector<160x16xf32>
    %cst_13 = arith.constant dense<0.000000e+00> : vector<16xf32>
    %58 = vector.multi_reduction <add>, %57, %cst_13 [0] : vector<160x16xf32> to vector<16xf32>
    %59 = vector.shape_cast %58 : vector<16xf32> to vector<1x16xf32>
    %cst_14 = arith.constant 6.250000e-03 : f32
    %60 = vector.broadcast %cst_14 : f32 to vector<1x16xf32>
    %61 = arith.mulf %59, %60 : vector<1x16xf32>
    %62 = arith.mulf %57, %57 : vector<160x16xf32>
    %cst_15 = arith.constant dense<0.000000e+00> : vector<16xf32>
    %63 = vector.multi_reduction <add>, %62, %cst_15 [0] : vector<160x16xf32> to vector<16xf32>
    %64 = vector.shape_cast %63 : vector<16xf32> to vector<1x16xf32>
    %cst_16 = arith.constant 6.250000e-03 : f32
    %65 = vector.broadcast %cst_16 : f32 to vector<1x16xf32>
    %66 = arith.mulf %64, %65 : vector<1x16xf32>
    %67 = arith.mulf %61, %61 : vector<1x16xf32>
    %68 = arith.subf %66, %67 : vector<1x16xf32>
    %cst_17 = arith.constant 0.000000e+00 : f32
    %69 = vector.broadcast %cst_17 : f32 to vector<1x16xf32>
    %70 = arith.maximumf %68, %69 : vector<1x16xf32>
    %71 = vector.broadcast %61 : vector<1x16xf32> to vector<160x16xf32>
    %72 = arith.subf %57, %71 : vector<160x16xf32>
    %cst_18 = arith.constant 9.99999974E-6 : f32
    %73 = vector.broadcast %cst_18 : f32 to vector<1x16xf32>
    %74 = arith.addf %70, %73 : vector<1x16xf32>
    %75 = math.rsqrt %74 : vector<1x16xf32>
    %76 = vector.broadcast %75 : vector<1x16xf32> to vector<160x16xf32>
    %77 = arith.mulf %72, %76 : vector<160x16xf32>
    %78 = vector.broadcast %3 : vector<1x16xf32> to vector<160x16xf32>
    %79 = arith.mulf %77, %78 : vector<160x16xf32>
    %80 = vector.broadcast %4 : vector<1x16xf32> to vector<160x16xf32>
    %81 = arith.addf %79, %80 : vector<160x16xf32>
    %c0_19 = arith.constant 0 : index
    %c0_20 = arith.constant 0 : index
    %82 = vector.load %arg3[%c0_19, %c0_20] : memref<48x16xf32, #tpu.memory_space<vmem>>, vector<48x16xf32>
    %83 = vector.extract_strided_slice %81 {offsets = [1, 0], sizes = [159, 16], strides = [1, 1]} : vector<160x16xf32> to vector<159x16xf32>
    %84 = vector.extract_strided_slice %81 {offsets = [0, 0], sizes = [1, 16], strides = [1, 1]} : vector<160x16xf32> to vector<1x16xf32>
    %85 = tpu.concatenate %83, %84 in 0 : vector<159x16xf32>, vector<1x16xf32> -> vector<160x16xf32>
    %86 = vector.extract_strided_slice %81 {offsets = [2, 0], sizes = [158, 16], strides = [1, 1]} : vector<160x16xf32> to vector<158x16xf32>
    %87 = vector.extract_strided_slice %81 {offsets = [0, 0], sizes = [2, 16], strides = [1, 1]} : vector<160x16xf32> to vector<2x16xf32>
    %88 = tpu.concatenate %86, %87 in 0 : vector<158x16xf32>, vector<2x16xf32> -> vector<160x16xf32>
    %89 = tpu.concatenate %81, %85, %88 in 1 : vector<160x16xf32>, vector<160x16xf32>, vector<160x16xf32> -> vector<160x48xf32>
    %cst_21 = arith.constant dense<0.000000e+00> : vector<160x16xf32>
    %90 = tpu.matmul %89, %82, %cst_21 {dimension_numbers = #tpu.dot_dimension_numbers<[1], [0], [0], [1], [0, 0, 1, 1], [], []>} : vector<160x48xf32>, vector<48x16xf32>, vector<160x16xf32> -> vector<160x16xf32>
    %91 = vector.broadcast %5 : vector<1x16xf32> to vector<160x16xf32>
    %92 = arith.addf %90, %91 : vector<160x16xf32>
    %cst_22 = arith.constant 0.000000e+00 : f32
    %93 = vector.broadcast %cst_22 : f32 to vector<160x16xf32>
    %94 = arith.maximumf %92, %93 : vector<160x16xf32>
    %c0_23 = arith.constant 0 : index
    %c0_24 = arith.constant 0 : index
    %95 = vector.load %arg4[%c0_23, %c0_24] : memref<48x32xf32, #tpu.memory_space<vmem>>, vector<48x32xf32>
    %96 = vector.extract_strided_slice %94 {offsets = [1, 0], sizes = [159, 16], strides = [1, 1]} : vector<160x16xf32> to vector<159x16xf32>
    %97 = vector.extract_strided_slice %94 {offsets = [0, 0], sizes = [1, 16], strides = [1, 1]} : vector<160x16xf32> to vector<1x16xf32>
    %98 = tpu.concatenate %96, %97 in 0 : vector<159x16xf32>, vector<1x16xf32> -> vector<160x16xf32>
    %99 = vector.extract_strided_slice %94 {offsets = [2, 0], sizes = [158, 16], strides = [1, 1]} : vector<160x16xf32> to vector<158x16xf32>
    %100 = vector.extract_strided_slice %94 {offsets = [0, 0], sizes = [2, 16], strides = [1, 1]} : vector<160x16xf32> to vector<2x16xf32>
    %101 = tpu.concatenate %99, %100 in 0 : vector<158x16xf32>, vector<2x16xf32> -> vector<160x16xf32>
    %102 = tpu.concatenate %94, %98, %101 in 1 : vector<160x16xf32>, vector<160x16xf32>, vector<160x16xf32> -> vector<160x48xf32>
    %cst_25 = arith.constant dense<0.000000e+00> : vector<160x32xf32>
    %103 = tpu.matmul %102, %95, %cst_25 {dimension_numbers = #tpu.dot_dimension_numbers<[1], [0], [0], [1], [0, 0, 1, 1], [], []>} : vector<160x48xf32>, vector<48x32xf32>, vector<160x32xf32> -> vector<160x32xf32>
    %104 = vector.broadcast %6 : vector<1x32xf32> to vector<160x32xf32>
    %105 = arith.addf %103, %104 : vector<160x32xf32>
    %cst_26 = arith.constant 0.000000e+00 : f32
    %106 = vector.broadcast %cst_26 : f32 to vector<160x32xf32>
    %107 = arith.maximumf %105, %106 : vector<160x32xf32>
    %c0_27 = arith.constant 0 : index
    %c0_28 = arith.constant 0 : index
    %108 = vector.load %arg9[%c0_27, %c0_28] : memref<32x160xf32, #tpu.memory_space<vmem>>, vector<32x160xf32>
    %109 = vector.extract_strided_slice %107 {offsets = [1, 0], sizes = [159, 32], strides = [1, 1]} : vector<160x32xf32> to vector<159x32xf32>
    %110 = vector.extract_strided_slice %107 {offsets = [0, 0], sizes = [1, 32], strides = [1, 1]} : vector<160x32xf32> to vector<1x32xf32>
    %111 = tpu.concatenate %109, %110 in 0 : vector<159x32xf32>, vector<1x32xf32> -> vector<160x32xf32>
    %112 = arith.maximumf %107, %111 : vector<160x32xf32>
    %113 = vector.extract_strided_slice %107 {offsets = [20, 0], sizes = [140, 32], strides = [1, 1]} : vector<160x32xf32> to vector<140x32xf32>
    %114 = vector.extract_strided_slice %107 {offsets = [0, 0], sizes = [20, 32], strides = [1, 1]} : vector<160x32xf32> to vector<20x32xf32>
    %115 = tpu.concatenate %113, %114 in 0 : vector<140x32xf32>, vector<20x32xf32> -> vector<160x32xf32>
    %116 = arith.maximumf %112, %115 : vector<160x32xf32>
    %117 = vector.extract_strided_slice %107 {offsets = [21, 0], sizes = [139, 32], strides = [1, 1]} : vector<160x32xf32> to vector<139x32xf32>
    %118 = vector.extract_strided_slice %107 {offsets = [0, 0], sizes = [21, 32], strides = [1, 1]} : vector<160x32xf32> to vector<21x32xf32>
    %119 = tpu.concatenate %117, %118 in 0 : vector<139x32xf32>, vector<21x32xf32> -> vector<160x32xf32>
    %120 = arith.maximumf %116, %119 : vector<160x32xf32>
    %cst_29 = arith.constant dense<0.000000e+00> : vector<32x32xf32>
    %121 = tpu.matmul %108, %120, %cst_29 {dimension_numbers = #tpu.dot_dimension_numbers<[1], [0], [0], [1], [0, 0, 1, 1], [], []>} : vector<32x160xf32>, vector<160x32xf32>, vector<32x32xf32> -> vector<32x32xf32>
    %cst_30 = arith.constant dense<0.000000e+00> : vector<32xf32>
    %122 = vector.multi_reduction <add>, %121, %cst_30 [0] : vector<32x32xf32> to vector<32xf32>
    %123 = vector.shape_cast %122 : vector<32xf32> to vector<1x32xf32>
    %cst_31 = arith.constant 3.125000e-02 : f32
    %124 = vector.broadcast %cst_31 : f32 to vector<1x32xf32>
    %125 = arith.mulf %123, %124 : vector<1x32xf32>
    %126 = arith.mulf %121, %121 : vector<32x32xf32>
    %cst_32 = arith.constant dense<0.000000e+00> : vector<32xf32>
    %127 = vector.multi_reduction <add>, %126, %cst_32 [0] : vector<32x32xf32> to vector<32xf32>
    %128 = vector.shape_cast %127 : vector<32xf32> to vector<1x32xf32>
    %cst_33 = arith.constant 3.125000e-02 : f32
    %129 = vector.broadcast %cst_33 : f32 to vector<1x32xf32>
    %130 = arith.mulf %128, %129 : vector<1x32xf32>
    %131 = arith.mulf %125, %125 : vector<1x32xf32>
    %132 = arith.subf %130, %131 : vector<1x32xf32>
    %cst_34 = arith.constant 0.000000e+00 : f32
    %133 = vector.broadcast %cst_34 : f32 to vector<1x32xf32>
    %134 = arith.maximumf %132, %133 : vector<1x32xf32>
    %135 = vector.broadcast %125 : vector<1x32xf32> to vector<32x32xf32>
    %136 = arith.subf %121, %135 : vector<32x32xf32>
    %cst_35 = arith.constant 9.99999974E-6 : f32
    %137 = vector.broadcast %cst_35 : f32 to vector<1x32xf32>
    %138 = arith.addf %134, %137 : vector<1x32xf32>
    %139 = math.rsqrt %138 : vector<1x32xf32>
    %140 = vector.broadcast %139 : vector<1x32xf32> to vector<32x32xf32>
    %141 = arith.mulf %136, %140 : vector<32x32xf32>
    %142 = vector.broadcast %7 : vector<1x32xf32> to vector<32x32xf32>
    %143 = arith.mulf %141, %142 : vector<32x32xf32>
    %144 = vector.broadcast %8 : vector<1x32xf32> to vector<32x32xf32>
    %145 = arith.addf %143, %144 : vector<32x32xf32>
    %c0_36 = arith.constant 0 : index
    %c0_37 = arith.constant 0 : index
    %146 = vector.load %arg5[%c0_36, %c0_37] : memref<96x32xf32, #tpu.memory_space<vmem>>, vector<96x32xf32>
    %147 = vector.extract_strided_slice %145 {offsets = [1, 0], sizes = [31, 32], strides = [1, 1]} : vector<32x32xf32> to vector<31x32xf32>
    %148 = vector.extract_strided_slice %145 {offsets = [0, 0], sizes = [1, 32], strides = [1, 1]} : vector<32x32xf32> to vector<1x32xf32>
    %149 = tpu.concatenate %147, %148 in 0 : vector<31x32xf32>, vector<1x32xf32> -> vector<32x32xf32>
    %150 = vector.extract_strided_slice %145 {offsets = [2, 0], sizes = [30, 32], strides = [1, 1]} : vector<32x32xf32> to vector<30x32xf32>
    %151 = vector.extract_strided_slice %145 {offsets = [0, 0], sizes = [2, 32], strides = [1, 1]} : vector<32x32xf32> to vector<2x32xf32>
    %152 = tpu.concatenate %150, %151 in 0 : vector<30x32xf32>, vector<2x32xf32> -> vector<32x32xf32>
    %153 = tpu.concatenate %145, %149, %152 in 1 : vector<32x32xf32>, vector<32x32xf32>, vector<32x32xf32> -> vector<32x96xf32>
    %cst_38 = arith.constant dense<0.000000e+00> : vector<32x32xf32>
    %154 = tpu.matmul %153, %146, %cst_38 {dimension_numbers = #tpu.dot_dimension_numbers<[1], [0], [0], [1], [0, 0, 1, 1], [], []>} : vector<32x96xf32>, vector<96x32xf32>, vector<32x32xf32> -> vector<32x32xf32>
    %155 = vector.broadcast %9 : vector<1x32xf32> to vector<32x32xf32>
    %156 = arith.addf %154, %155 : vector<32x32xf32>
    %cst_39 = arith.constant 0.000000e+00 : f32
    %157 = vector.broadcast %cst_39 : f32 to vector<32x32xf32>
    %158 = arith.maximumf %156, %157 : vector<32x32xf32>
    %159 = vector.extract_strided_slice %158 {offsets = [1, 0], sizes = [31, 32], strides = [1, 1]} : vector<32x32xf32> to vector<31x32xf32>
    %160 = vector.extract_strided_slice %158 {offsets = [0, 0], sizes = [1, 32], strides = [1, 1]} : vector<32x32xf32> to vector<1x32xf32>
    %161 = tpu.concatenate %159, %160 in 0 : vector<31x32xf32>, vector<1x32xf32> -> vector<32x32xf32>
    %162 = vector.extract_strided_slice %158 {offsets = [2, 0], sizes = [30, 32], strides = [1, 1]} : vector<32x32xf32> to vector<30x32xf32>
    %163 = vector.extract_strided_slice %158 {offsets = [0, 0], sizes = [2, 32], strides = [1, 1]} : vector<32x32xf32> to vector<2x32xf32>
    %164 = tpu.concatenate %162, %163 in 0 : vector<30x32xf32>, vector<2x32xf32> -> vector<32x32xf32>
    %165 = tpu.concatenate %158, %161, %164 in 1 : vector<32x32xf32>, vector<32x32xf32>, vector<32x32xf32> -> vector<32x96xf32>
    %cst_40 = arith.constant dense<0.000000e+00> : vector<32x32xf32>
    %166 = tpu.matmul %165, %146, %cst_40 {dimension_numbers = #tpu.dot_dimension_numbers<[1], [0], [0], [1], [0, 0, 1, 1], [], []>} : vector<32x96xf32>, vector<96x32xf32>, vector<32x32xf32> -> vector<32x32xf32>
    %167 = vector.broadcast %9 : vector<1x32xf32> to vector<32x32xf32>
    %168 = arith.addf %166, %167 : vector<32x32xf32>
    %cst_41 = arith.constant 0.000000e+00 : f32
    %169 = vector.broadcast %cst_41 : f32 to vector<32x32xf32>
    %170 = arith.maximumf %168, %169 : vector<32x32xf32>
    %c0_42 = arith.constant 0 : index
    %c0_43 = arith.constant 0 : index
    %171 = vector.load %arg10[%c0_42, %c0_43] : memref<16x32xf32, #tpu.memory_space<vmem>>, vector<16x32xf32>
    %cst_44 = arith.constant dense<0.000000e+00> : vector<16x32xf32>
    %172 = tpu.matmul %171, %170, %cst_44 {dimension_numbers = #tpu.dot_dimension_numbers<[1], [0], [0], [1], [0, 0, 1, 1], [], []>} : vector<16x32xf32>, vector<32x32xf32>, vector<16x32xf32> -> vector<16x32xf32>
    %cst_45 = arith.constant dense<0.000000e+00> : vector<32xf32>
    %173 = vector.multi_reduction <add>, %172, %cst_45 [0] : vector<16x32xf32> to vector<32xf32>
    %174 = vector.shape_cast %173 : vector<32xf32> to vector<1x32xf32>
    %cst_46 = arith.constant 6.250000e-02 : f32
    %175 = vector.broadcast %cst_46 : f32 to vector<1x32xf32>
    %176 = arith.mulf %174, %175 : vector<1x32xf32>
    %177 = arith.mulf %172, %172 : vector<16x32xf32>
    %cst_47 = arith.constant dense<0.000000e+00> : vector<32xf32>
    %178 = vector.multi_reduction <add>, %177, %cst_47 [0] : vector<16x32xf32> to vector<32xf32>
    %179 = vector.shape_cast %178 : vector<32xf32> to vector<1x32xf32>
    %cst_48 = arith.constant 6.250000e-02 : f32
    %180 = vector.broadcast %cst_48 : f32 to vector<1x32xf32>
    %181 = arith.mulf %179, %180 : vector<1x32xf32>
    %182 = arith.mulf %176, %176 : vector<1x32xf32>
    %183 = arith.subf %181, %182 : vector<1x32xf32>
    %cst_49 = arith.constant 0.000000e+00 : f32
    %184 = vector.broadcast %cst_49 : f32 to vector<1x32xf32>
    %185 = arith.maximumf %183, %184 : vector<1x32xf32>
    %186 = vector.broadcast %176 : vector<1x32xf32> to vector<16x32xf32>
    %187 = arith.subf %172, %186 : vector<16x32xf32>
    %cst_50 = arith.constant 9.99999974E-6 : f32
    %188 = vector.broadcast %cst_50 : f32 to vector<1x32xf32>
    %189 = arith.addf %185, %188 : vector<1x32xf32>
    %190 = math.rsqrt %189 : vector<1x32xf32>
    %191 = vector.broadcast %190 : vector<1x32xf32> to vector<16x32xf32>
    %192 = arith.mulf %187, %191 : vector<16x32xf32>
    %193 = vector.broadcast %7 : vector<1x32xf32> to vector<16x32xf32>
    %194 = arith.mulf %192, %193 : vector<16x32xf32>
    %195 = vector.broadcast %8 : vector<1x32xf32> to vector<16x32xf32>
    %196 = arith.addf %194, %195 : vector<16x32xf32>
    %197 = tpu.concatenate %196, %196, %196, %196, %196, %196, %196, %196 in 1 : vector<16x32xf32>, vector<16x32xf32>, vector<16x32xf32>, vector<16x32xf32>, vector<16x32xf32>, vector<16x32xf32>, vector<16x32xf32>, vector<16x32xf32> -> vector<16x256xf32>
    %198 = arith.mulf %197, %11 : vector<16x256xf32>
    %cst_51 = arith.constant dense<0.000000e+00> : vector<2x256xf32>
    %199 = tpu.matmul %12, %198, %cst_51 {dimension_numbers = #tpu.dot_dimension_numbers<[1], [0], [0], [1], [0, 0, 1, 1], [], []>} : vector<2x16xf32>, vector<16x256xf32>, vector<2x256xf32> -> vector<2x256xf32>
    %c0_52 = arith.constant 0 : index
    %c0_53 = arith.constant 0 : index
    %200 = vector.load %arg6[%c0_52, %c0_53] : memref<256x64xf32, #tpu.memory_space<vmem>>, vector<256x64xf32>
    %cst_54 = arith.constant dense<0.000000e+00> : vector<2x64xf32>
    %201 = tpu.matmul %199, %200, %cst_54 {dimension_numbers = #tpu.dot_dimension_numbers<[1], [0], [0], [1], [0, 0, 1, 1], [], []>} : vector<2x256xf32>, vector<256x64xf32>, vector<2x64xf32> -> vector<2x64xf32>
    %202 = vector.broadcast %10 : vector<1x64xf32> to vector<2x64xf32>
    %203 = arith.addf %201, %202 : vector<2x64xf32>
    %cst_55 = arith.constant 0.000000e+00 : f32
    %204 = vector.broadcast %cst_55 : f32 to vector<2x64xf32>
    %205 = arith.maximumf %203, %204 : vector<2x64xf32>
    %c0_56 = arith.constant 0 : index
    %c0_57 = arith.constant 0 : index
    %206 = vector.load %arg7[%c0_56, %c0_57] : memref<64x256xf32, #tpu.memory_space<vmem>>, vector<64x256xf32>
    %cst_58 = arith.constant dense<0.000000e+00> : vector<2x256xf32>
    %207 = tpu.matmul %205, %206, %cst_58 {dimension_numbers = #tpu.dot_dimension_numbers<[1], [0], [0], [1], [0, 0, 1, 1], [], []>} : vector<2x64xf32>, vector<64x256xf32>, vector<2x256xf32> -> vector<2x256xf32>
    %c0_59 = arith.constant 0 : index
    %c0_60 = arith.constant 0 : index
    %208 = vector.load %arg13[%c0_59, %c0_60] : memref<2x256xf32, #tpu.memory_space<vmem>>, vector<2x256xf32>
    tpu.vector_store %arg13[%c0_59, %c0_60], %207 {strides = array<i32>} : memref<2x256xf32, #tpu.memory_space<vmem>>, vector<2x256xf32>,
    %209 = vector.broadcast %13 : vector<1x256xf32> to vector<2x256xf32>
    %210 = arith.subf %207, %209 : vector<2x256xf32>
    %211 = arith.mulf %210, %210 : vector<2x256xf32>
    %c0_61 = arith.constant 0 : index
    %c0_62 = arith.constant 0 : index
    %212 = vector.load %arg11[%c0_61, %c0_62] : memref<256x8xf32, #tpu.memory_space<vmem>>, vector<256x8xf32>
    %cst_63 = arith.constant dense<0.000000e+00> : vector<2x8xf32>
    %213 = tpu.matmul %211, %212, %cst_63 {dimension_numbers = #tpu.dot_dimension_numbers<[1], [0], [0], [1], [0, 0, 1, 1], [], []>} : vector<2x256xf32>, vector<256x8xf32>, vector<2x8xf32> -> vector<2x8xf32>
    %cst_64 = arith.constant 3.125000e-02 : f32
    %214 = vector.broadcast %cst_64 : f32 to vector<2x8xf32>
    %215 = arith.mulf %213, %214 : vector<2x8xf32>
    %cst_65 = arith.constant 0.000000e+00 : f32
    %216 = vector.broadcast %cst_65 : f32 to vector<2x8xf32>
    %217 = arith.subf %216, %215 : vector<2x8xf32>
    %cst_66 = arith.constant 5.000000e-01 : f32
    %218 = vector.broadcast %cst_66 : f32 to vector<2x8xf32>
    %219 = arith.divf %217, %218 : vector<2x8xf32>
    %220 = math.exp %219 : vector<2x8xf32>
    %c0_67 = arith.constant 0 : index
    %c0_68 = arith.constant 0 : index
    %221 = vector.load %arg14[%c0_67, %c0_68] : memref<2x8xf32, #tpu.memory_space<vmem>>, vector<2x8xf32>
    tpu.vector_store %arg14[%c0_67, %c0_68], %220 {strides = array<i32>} : memref<2x8xf32, #tpu.memory_space<vmem>>, vector<2x8xf32>,
    return
  }
}

</mosaic_0001>

<llo_original>
// kernel: forward.1
$region0: #{forward.1}
  #allocation0 [shape = 'u32[]', space=smem, size = 0x4, offset = 0x4, fixed_abs, tag = 'smem constant byte address 0x4 - core index']
  #allocation1 [shape = 'u32[144,128]{1,0:T(1,128)}', space=vmem, size = 0x12000, scoped, tag = 'internal scratch']
  %s0 = inlined_call_operand.vmem [shape: f32[504,25], index: 0, kind: input, shape index: {}]
  %s1 = inlined_call_operand.vmem [shape: f32[25,16], index: 1, kind: input, shape index: {}]
  %s2 = inlined_call_operand.vmem [shape: f32[144,16], index: 2, kind: input, shape index: {}]
  %s3 = inlined_call_operand.vmem [shape: f32[48,16], index: 3, kind: input, shape index: {}]
  %s4 = inlined_call_operand.vmem [shape: f32[48,32], index: 4, kind: input, shape index: {}]
  %s5 = inlined_call_operand.vmem [shape: f32[96,32], index: 5, kind: input, shape index: {}]
  %s6 = inlined_call_operand.vmem [shape: f32[256,64], index: 6, kind: input, shape index: {}]
  %s7 = inlined_call_operand.vmem [shape: f32[64,256], index: 7, kind: input, shape index: {}]
  %s8 = inlined_call_operand.vmem [shape: f32[160,504], index: 8, kind: input, shape index: {}]
  %s9 = inlined_call_operand.vmem [shape: f32[32,160], index: 9, kind: input, shape index: {}]
  %s10 = inlined_call_operand.vmem [shape: f32[16,32], index: 10, kind: input, shape index: {}]
  %s11 = inlined_call_operand.vmem [shape: f32[256,8], index: 11, kind: input, shape index: {}]
  %s12 = inlined_call_operand.vmem [shape: f32[29,256], index: 12, kind: input, shape index: {}]
  %s13 = inlined_call_operand.vmem [shape: f32[2,256], index: 13, kind: output, shape index: {0}]
  %s14 = inlined_call_operand.hbm [shape: f32[2,8], index: 14, kind: output, shape index: {1}]
  %15 = xla_tuple %s13, %s14
  %s16 = sld [smem:[#allocation0]]
  $region70: #{forward.1} parent=0
    _
  %s18 = ssub.s32 1, %s16
  %s19 = scalar_select 0, %s18, %s16
  $region1: #{forward.1} parent=0
    #allocation2 [shape = 'u8[1024]{0}', space=vmem, size = 0x400, scoped, tag = 'output window, operand 1, single buffered']
    #allocation3 [shape = 's32[1]{0}', space=sflag, size = 0x4, scoped, tag = 'scoped memory for forward.1']
    %20 = vsyncpa [#allocation3], 0
    // Predicated region
    $region2: #{forward.1} parent=1 // pred_check
      _
    $region3: #{forward.1} parent=1 // pred_check_branch
      %22 = sbr.rel (0) target = $region5
    $region4: #{forward.1} parent=1 // pred_region
      _
    $region5: #{forward.1} parent=1 // pred_fallthru
      _
    // Predicated region
    $region6: #{forward.1} parent=1 // pred_check
      _
    $region7: #{forward.1} parent=1 // pred_check_branch
      %24 = sbr.rel (0) target = $region9
    $region8: #{forward.1} parent=1 // pred_region
      _
    $region9: #{forward.1} parent=1 // pred_fallthru
      _
    // Predicated region
    $region10: #{forward.1} parent=1 // pred_check
      _
    $region11: #{forward.1} parent=1 // pred_check_branch
      %26 = sbr.rel (0) target = $region13
    $region12: #{forward.1} parent=1 // pred_region
      _
    $region13: #{forward.1} parent=1 // pred_fallthru
      _
    // Predicated region
    $region14: #{forward.1} parent=1 // pred_check
      _
    $region15: #{forward.1} parent=1 // pred_check_branch
      %28 = sbr.rel (0) target = $region17
    $region16: #{forward.1} parent=1 // pred_region
      _
    $region17: #{forward.1} parent=1 // pred_fallthru
      _
    // Predicated region
    $region18: #{forward.1} parent=1 // pred_check
      _
    $region19: #{forward.1} parent=1 // pred_check_branch
      %30 = sbr.rel (0) target = $region21
    $region20: #{forward.1} parent=1 // pred_region
      _
    $region21: #{forward.1} parent=1 // pred_fallthru
      _
    // Predicated region
    $region22: #{forward.1} parent=1 // pred_check
      _
    $region23: #{forward.1} parent=1 // pred_check_branch
      %32 = sbr.rel (0) target = $region25
    $region24: #{forward.1} parent=1 // pred_region
      _
    $region25: #{forward.1} parent=1 // pred_fallthru
      _
    // Predicated region
    $region26: #{forward.1} parent=1 // pred_check
      _
    $region27: #{forward.1} parent=1 // pred_check_branch
      %34 = sbr.rel (0) target = $region29
    $region28: #{forward.1} parent=1 // pred_region
      _
    $region29: #{forward.1} parent=1 // pred_fallthru
      _
    // Predicated region
    $region30: #{forward.1} parent=1 // pred_check
      _
    $region31: #{forward.1} parent=1 // pred_check_branch
      %36 = sbr.rel (0) target = $region33
    $region32: #{forward.1} parent=1 // pred_region
      _
    $region33: #{forward.1} parent=1 // pred_fallthru
      _
    // Predicated region
    $region34: #{forward.1} parent=1 // pred_check
      _
    $region35: #{forward.1} parent=1 // pred_check_branch
      %38 = sbr.rel (0) target = $region37
    $region36: #{forward.1} parent=1 // pred_region
      _
    $region37: #{forward.1} parent=1 // pred_fallthru
      _
    // Predicated region
    $region38: #{forward.1} parent=1 // pred_check
      _
    $region39: #{forward.1} parent=1 // pred_check_branch
      %40 = sbr.rel (0) target = $region41
    $region40: #{forward.1} parent=1 // pred_region
      _
    $region41: #{forward.1} parent=1 // pred_fallthru
      _
    // Predicated region
    $region42: #{forward.1} parent=1 // pred_check
      _
    $region43: #{forward.1} parent=1 // pred_check_branch
      %42 = sbr.rel (0) target = $region45
    $region44: #{forward.1} parent=1 // pred_region
      _
    $region45: #{forward.1} parent=1 // pred_fallthru
      _
    // Predicated region
    $region46: #{forward.1} parent=1 // pred_check
      _
    $region47: #{forward.1} parent=1 // pred_check_branch
      %44 = sbr.rel (0) target = $region49
    $region48: #{forward.1} parent=1 // pred_region
      _
    $region49: #{forward.1} parent=1 // pred_fallthru
      _
    // Predicated region
    $region50: #{forward.1} parent=1 // pred_check
      _
    $region51: #{forward.1} parent=1 // pred_check_branch
      %46 = sbr.rel (0) target = $region53
    $region52: #{forward.1} parent=1 // pred_region
      _
    $region53: #{forward.1} parent=1 // pred_fallthru
      _
    %v47 = vld [vmem:[%s12] sm:$0xff]
    %v48 = vld [vmem:[%s12 + $0x10] sm:$0xff]
    %v49 = vld [vmem:[%s12 + $0x18] sm:$0xff]
    %v50 = vld [vmem:[%s12 + $0x20] sm:$0xff]
    %v51 = vld [vmem:[%s12 + $0x28] sm:$0xff]
    %v52 = vld [vmem:[%s12 + $0x30] sm:$0x1f]
    %v53 = vld [vmem:[%s12 + $0x38] sm:$0x1f]
    %v54 = vld [vmem:[%s0] sm:$0xff]
    %v55 = vld [vmem:[%s0 + $0x8] sm:$0xff]
    %v56 = vld [vmem:[%s0 + $0x10] sm:$0xff]
    %v57 = vld [vmem:[%s0 + $0x18] sm:$0xff]
    %v58 = vld [vmem:[%s0 + $0x20] sm:$0xff]
    %v59 = vld [vmem:[%s0 + $0x28] sm:$0xff]
    %v60 = vld [vmem:[%s0 + $0x30] sm:$0xff]
    %v61 = vld [vmem:[%s0 + $0x38] sm:$0xff]
    %v62 = vld [vmem:[%s0 + $0x40] sm:$0xff]
    %v63 = vld [vmem:[%s0 + $0x48] sm:$0xff]
    %v64 = vld [vmem:[%s0 + $0x50] sm:$0xff]
    %v65 = vld [vmem:[%s0 + $0x58] sm:$0xff]
    %v66 = vld [vmem:[%s0 + $0x60] sm:$0xff]
    %v67 = vld [vmem:[%s0 + $0x68] sm:$0xff]
    %v68 = vld [vmem:[%s0 + $0x70] sm:$0xff]
    %v69 = vld [vmem:[%s0 + $0x78] sm:$0xff]
    %v70 = vld [vmem:[%s0 + $0x80] sm:$0xff]
    %v71 = vld [vmem:[%s0 + $0x88] sm:$0xff]
    %v72 = vld [vmem:[%s0 + $0x90] sm:$0xff]
    %v73 = vld [vmem:[%s0 + $0x98] sm:$0xff]
    %v74 = vld [vmem:[%s0 + $0xa0] sm:$0xff]
    %v75 = vld [vmem:[%s0 + $0xa8] sm:$0xff]
    %v76 = vld [vmem:[%s0 + $0xb0] sm:$0xff]
    %v77 = vld [vmem:[%s0 + $0xb8] sm:$0xff]
    %v78 = vld [vmem:[%s0 + $0xc0] sm:$0xff]
    %v79 = vld [vmem:[%s0 + $0xc8] sm:$0xff]
    %v80 = vld [vmem:[%s0 + $0xd0] sm:$0xff]
    %v81 = vld [vmem:[%s0 + $0xd8] sm:$0xff]
    %v82 = vld [vmem:[%s0 + $0xe0] sm:$0xff]
    %v83 = vld [vmem:[%s0 + $0xe8] sm:$0xff]
    %v84 = vld [vmem:[%s0 + $0xf0] sm:$0xff]
    %v85 = vld [vmem:[%s0 + $0xf8] sm:$0xff]
    %v86 = vld [vmem:[%s0 + $0x100] sm:$0xff]
    %v87 = vld [vmem:[%s0 + $0x108] sm:$0xff]
    %v88 = vld [vmem:[%s0 + $0x110] sm:$0xff]
    %v89 = vld [vmem:[%s0 + $0x118] sm:$0xff]
    %v90 = vld [vmem:[%s0 + $0x120] sm:$0xff]
    %v91 = vld [vmem:[%s0 + $0x128] sm:$0xff]
    %v92 = vld [vmem:[%s0 + $0x130] sm:$0xff]
    %v93 = vld [vmem:[%s0 + $0x138] sm:$0xff]
    %v94 = vld [vmem:[%s0 + $0x140] sm:$0xff]
    %v95 = vld [vmem:[%s0 + $0x148] sm:$0xff]
    %v96 = vld [vmem:[%s0 + $0x150] sm:$0xff]
    %v97 = vld [vmem:[%s0 + $0x158] sm:$0xff]
    %v98 = vld [vmem:[%s0 + $0x160] sm:$0xff]
    %v99 = vld [vmem:[%s0 + $0x168] sm:$0xff]
    %v100 = vld [vmem:[%s0 + $0x170] sm:$0xff]
    %v101 = vld [vmem:[%s0 + $0x178] sm:$0xff]
    %v102 = vld [vmem:[%s0 + $0x180] sm:$0xff]
    %v103 = vld [vmem:[%s0 + $0x188] sm:$0xff]
    %v104 = vld [vmem:[%s0 + $0x190] sm:$0xff]
    %v105 = vld [vmem:[%s0 + $0x198] sm:$0xff]
    %v106 = vld [vmem:[%s0 + $0x1a0] sm:$0xff]
    %v107 = vld [vmem:[%s0 + $0x1a8] sm:$0xff]
    %v108 = vld [vmem:[%s0 + $0x1b0] sm:$0xff]
    %v109 = vld [vmem:[%s0 + $0x1b8] sm:$0xff]
    %v110 = vld [vmem:[%s0 + $0x1c0] sm:$0xff]
    %v111 = vld [vmem:[%s0 + $0x1c8] sm:$0xff]
    %v112 = vld [vmem:[%s0 + $0x1d0] sm:$0xff]
    %v113 = vld [vmem:[%s0 + $0x1d8] sm:$0xff]
    %v114 = vld [vmem:[%s0 + $0x1e0] sm:$0xff]
    %v115 = vld [vmem:[%s0 + $0x1e8] sm:$0xff]
    %v116 = vld [vmem:[%s0 + $0x1f0] sm:$0xff]
    %v117 = vld [vmem:[%s1] sm:$0xff]
    %v118 = vld [vmem:[%s1 + $0x8] sm:$0xff]
    %v119 = vld [vmem:[%s1 + $0x10] sm:$0xff]
    %v120 = vld [vmem:[%s1 + $0x18] sm:$0x1]
    %v121 = vlaneseq
    %v122 = vshrl.u32 %v121, 7
    %v123 = vsub.s32 0, %v122
    %v124 = vrot.slane %v47, %v123
    %vm125 = vcmask 203776
    %v127 = vsel %vm125, %v54, 0
    %v130 = vsel %vm125, %v55, 0
    %v133 = vsel %vm125, %v56, 0
    %v136 = vsel %vm125, %v57, 0
    %v139 = vsel %vm125, %v58, 0
    %v142 = vsel %vm125, %v59, 0
    %v145 = vsel %vm125, %v60, 0
    %v148 = vsel %vm125, %v61, 0
    %v151 = vsel %vm125, %v62, 0
    %v154 = vsel %vm125, %v63, 0
    %v157 = vsel %vm125, %v64, 0
    %v160 = vsel %vm125, %v65, 0
    %v163 = vsel %vm125, %v66, 0
    %v166 = vsel %vm125, %v67, 0
    %v169 = vsel %vm125, %v68, 0
    %v172 = vsel %vm125, %v69, 0
    %v175 = vsel %vm125, %v70, 0
    %v178 = vsel %vm125, %v71, 0
    %v181 = vsel %vm125, %v72, 0
    %v184 = vsel %vm125, %v73, 0
    %v187 = vsel %vm125, %v74, 0
    %v190 = vsel %vm125, %v75, 0
    %v193 = vsel %vm125, %v76, 0
    %v196 = vsel %vm125, %v77, 0
    %v199 = vsel %vm125, %v78, 0
    %v202 = vsel %vm125, %v79, 0
    %v205 = vsel %vm125, %v80, 0
    %v208 = vsel %vm125, %v81, 0
    %v211 = vsel %vm125, %v82, 0
    %v214 = vsel %vm125, %v83, 0
    %v217 = vsel %vm125, %v84, 0
    %v220 = vsel %vm125, %v85, 0
    %v223 = vsel %vm125, %v86, 0
    %v226 = vsel %vm125, %v87, 0
    %v229 = vsel %vm125, %v88, 0
    %v232 = vsel %vm125, %v89, 0
    %v235 = vsel %vm125, %v90, 0
    %v238 = vsel %vm125, %v91, 0
    %v241 = vsel %vm125, %v92, 0
    %v244 = vsel %vm125, %v93, 0
    %v247 = vsel %vm125, %v94, 0
    %v250 = vsel %vm125, %v95, 0
    %v253 = vsel %vm125, %v96, 0
    %v256 = vsel %vm125, %v97, 0
    %v259 = vsel %vm125, %v98, 0
    %v262 = vsel %vm125, %v99, 0
    %v265 = vsel %vm125, %v100, 0
    %v268 = vsel %vm125, %v101, 0
    %v271 = vsel %vm125, %v102, 0
    %v274 = vsel %vm125, %v103, 0
    %v277 = vsel %vm125, %v104, 0
    %v280 = vsel %vm125, %v105, 0
    %v283 = vsel %vm125, %v106, 0
    %v286 = vsel %vm125, %v107, 0
    %v289 = vsel %vm125, %v108, 0
    %v292 = vsel %vm125, %v109, 0
    %v295 = vsel %vm125, %v110, 0
    %v298 = vsel %vm125, %v111, 0
    %v301 = vsel %vm125, %v112, 0
    %v304 = vsel %vm125, %v113, 0
    %v307 = vsel %vm125, %v114, 0
    %v310 = vsel %vm125, %v115, 0
    %v313 = vsel %vm125, %v116, 0
    %vm315 = vcmask 1040384
    %v317 = vsel %vm315, %v120, 0
    %319 = vmatprep.subr.mxu0 0.0
    %320 = vmatpush1.msra.mxu0 %v117
    %321 = vmatprep.subr.mxu0 0.0
    %322 = vmatpush1.msra.mxu0 %v118
    %323 = vmatprep.subr.mxu0 0.0
    %324 = vmatpush1.msra.mxu0 %v119
    %325 = vmatprep.subr.mxu0 0.0
    %326 = vmatpush1.msra.mxu0 %v317
    %327 = vmatprep.subr.mxu0 0.0
    %328 = vmatpush1.msra.mxu0 0.0
    %329 = vmatprep.subr.mxu0 0.0
    %330 = vmatpush1.msra.mxu0 0.0
    %331 = vmatprep.subr.mxu0 0.0
    %332 = vmatpush1.msra.mxu0 0.0
    %333 = vmatprep.subr.mxu0 0.0
    %334 = vmatpush1.msra.mxu0 0.0
    %335 = vmatprep.subr.mxu0 0.0
    %336 = vmatpush1.msra.mxu0 0.0
    %337 = vmatprep.subr.mxu0 0.0
    %338 = vmatpush1.msra.mxu0 0.0
    %339 = vmatprep.subr.mxu0 0.0
    %340 = vmatpush1.msra.mxu0 0.0
    %341 = vmatprep.subr.mxu0 0.0
    %342 = vmatpush1.msra.mxu0 0.0
    %343 = vmatprep.subr.mxu0 0.0
    %344 = vmatpush1.msra.mxu0 0.0
    %345 = vmatprep.subr.mxu0 0.0
    %346 = vmatpush1.msra.mxu0 0.0
    %347 = vmatprep.subr.mxu0 0.0
    %348 = vmatpush1.msra.mxu0 0.0
    %349 = vmatprep.subr.mxu0 0.0
    %350 = vmatpush1.msra.mxu0 0.0
    %351 = vmatprep.subr.mxu0 0.0
    %352 = vmatpush1.msra.mxu0 0.0
    %353 = vmatprep.subr.mxu0 0.0
    %354 = vmatpush1.msra.mxu0 0.0
    %355 = vmatprep.subr.mxu0 0.0
    %356 = vmatpush1.msra.mxu0 0.0
    %357 = vmatprep.subr.mxu0 0.0
    %358 = vmatpush1.msra.mxu0 0.0
    %359 = vmatprep.subr.mxu0 0.0
    %360 = vmatpush1.msra.mxu0 0.0
    %361 = vmatprep.subr.mxu0 0.0
    %362 = vmatpush1.msra.mxu0 0.0
    %363 = vmatprep.subr.mxu0 0.0
    %364 = vmatpush1.msra.mxu0 0.0
    %365 = vmatprep.subr.mxu0 0.0
    %366 = vmatpush1.msra.mxu0 0.0
    %367 = vmatprep.subr.mxu0 0.0
    %368 = vmatpush1.msra.mxu0 0.0
    %369 = vmatprep.subr.mxu0 0.0
    %370 = vmatpush1.msra.mxu0 0.0
    %371 = vmatprep.subr.mxu0 0.0
    %372 = vmatpush1.msra.mxu0 0.0
    %373 = vmatprep.subr.mxu0 0.0
    %374 = vmatpush1.msra.mxu0 0.0
    %375 = vmatprep.subr.mxu0 0.0
    %376 = vmatpush1.msra.mxu0 0.0
    %377 = vmatprep.subr.mxu0 0.0
    %378 = vmatpush1.msra.mxu0 0.0
    %379 = vmatprep.subr.mxu0 0.0
    %380 = vmatpush1.msra.mxu0 0.0
    %381 = vmatprep.subr.mxu0 0.0
    %382 = vmatpush1.msra.mxu0 0.0
    %383 = vmatprep.mubr.f32.mxu0 0.0
    %384 = vmatmul.mubr.f32.gmra.mrb[0].mxu0 %v127
    %v385 = vpop.f32.mrb[0].mxu0
    %v386 = vadd.f32 %v124, %v385
    %v387 = vpop.f32.mrb[0].mxu0
    %388 = vmatprep.mubr.f32.mxu0 0.0
    %389 = vmatmul.mubr.f32.gmra.mrb[0].mxu0 %v130
    %v390 = vpop.f32.mrb[0].mxu0
    %v391 = vadd.f32 %v124, %v390
    %v392 = vpop.f32.mrb[0].mxu0
    %393 = vmatprep.mubr.f32.mxu0 0.0
    %394 = vmatmul.mubr.f32.gmra.mrb[0].mxu0 %v133
    %v395 = vpop.f32.mrb[0].mxu0
    %v396 = vadd.f32 %v124, %v395
    %v397 = vpop.f32.mrb[0].mxu0
    %398 = vmatprep.mubr.f32.mxu0 0.0
    %399 = vmatmul.mubr.f32.gmra.mrb[0].mxu0 %v136
    %v400 = vpop.f32.mrb[0].mxu0
    %v401 = vadd.f32 %v124, %v400
    %v402 = vpop.f32.mrb[0].mxu0
    %403 = vmatprep.mubr.f32.mxu0 0.0
    %404 = vmatmul.mubr.f32.gmra.mrb[0].mxu0 %v139
    %v405 = vpop.f32.mrb[0].mxu0
    %v406 = vadd.f32 %v124, %v405
    %v407 = vpop.f32.mrb[0].mxu0
    %408 = vmatprep.mubr.f32.mxu0 0.0
    %409 = vmatmul.mubr.f32.gmra.mrb[0].mxu0 %v142
    %v410 = vpop.f32.mrb[0].mxu0
    %v411 = vadd.f32 %v124, %v410
    %v412 = vpop.f32.mrb[0].mxu0
    %413 = vmatprep.mubr.f32.mxu0 0.0
    %414 = vmatmul.mubr.f32.gmra.mrb[0].mxu0 %v145
    %v415 = vpop.f32.mrb[0].mxu0
    %v416 = vadd.f32 %v124, %v415
    %v417 = vpop.f32.mrb[0].mxu0
    %418 = vmatprep.mubr.f32.mxu0 0.0
    %419 = vmatmul.mubr.f32.gmra.mrb[0].mxu0 %v148
    %v420 = vpop.f32.mrb[0].mxu0
    %v421 = vadd.f32 %v124, %v420
    %v422 = vpop.f32.mrb[0].mxu0
    %423 = vmatprep.mubr.f32.mxu0 0.0
    %424 = vmatmul.mubr.f32.gmra.mrb[0].mxu0 %v151
    %v425 = vpop.f32.mrb[0].mxu0
    %v426 = vadd.f32 %v124, %v425
    %v427 = vpop.f32.mrb[0].mxu0
    %428 = vmatprep.mubr.f32.mxu0 0.0
    %429 = vmatmul.mubr.f32.gmra.mrb[0].mxu0 %v154
    %v430 = vpop.f32.mrb[0].mxu0
    %v431 = vadd.f32 %v124, %v430
    %v432 = vpop.f32.mrb[0].mxu0
    %433 = vmatprep.mubr.f32.mxu0 0.0
    %434 = vmatmul.mubr.f32.gmra.mrb[0].mxu0 %v157
    %v435 = vpop.f32.mrb[0].mxu0
    %v436 = vadd.f32 %v124, %v435
    %v437 = vpop.f32.mrb[0].mxu0
    %438 = vmatprep.mubr.f32.mxu0 0.0
    %439 = vmatmul.mubr.f32.gmra.mrb[0].mxu0 %v160
    %v440 = vpop.f32.mrb[0].mxu0
    %v441 = vadd.f32 %v124, %v440
    %v442 = vpop.f32.mrb[0].mxu0
    %443 = vmatprep.mubr.f32.mxu0 0.0
    %444 = vmatmul.mubr.f32.gmra.mrb[0].mxu0 %v163
    %v445 = vpop.f32.mrb[0].mxu0
    %v446 = vadd.f32 %v124, %v445
    %v447 = vpop.f32.mrb[0].mxu0
    %448 = vmatprep.mubr.f32.mxu0 0.0
    %449 = vmatmul.mubr.f32.gmra.mrb[0].mxu0 %v166
    %v450 = vpop.f32.mrb[0].mxu0
    %v451 = vadd.f32 %v124, %v450
    %v452 = vpop.f32.mrb[0].mxu0
    %453 = vmatprep.mubr.f32.mxu0 0.0
    %454 = vmatmul.mubr.f32.gmra.mrb[0].mxu0 %v169
    %v455 = vpop.f32.mrb[0].mxu0
    %v456 = vadd.f32 %v124, %v455
    %v457 = vpop.f32.mrb[0].mxu0
    %458 = vmatprep.mubr.f32.mxu0 0.0
    %459 = vmatmul.mubr.f32.gmra.mrb[0].mxu0 %v172
    %v460 = vpop.f32.mrb[0].mxu0
    %v461 = vadd.f32 %v124, %v460
    %v462 = vpop.f32.mrb[0].mxu0
    %463 = vmatprep.mubr.f32.mxu0 0.0
    %464 = vmatmul.mubr.f32.gmra.mrb[0].mxu0 %v175
    %v465 = vpop.f32.mrb[0].mxu0
    %v466 = vadd.f32 %v124, %v465
    %v467 = vpop.f32.mrb[0].mxu0
    %468 = vmatprep.mubr.f32.mxu0 0.0
    %469 = vmatmul.mubr.f32.gmra.mrb[0].mxu0 %v178
    %v470 = vpop.f32.mrb[0].mxu0
    %v471 = vadd.f32 %v124, %v470
    %v472 = vpop.f32.mrb[0].mxu0
    %473 = vmatprep.mubr.f32.mxu0 0.0
    %474 = vmatmul.mubr.f32.gmra.mrb[0].mxu0 %v181
    %v475 = vpop.f32.mrb[0].mxu0
    %v476 = vadd.f32 %v124, %v475
    %v477 = vpop.f32.mrb[0].mxu0
    %478 = vmatprep.mubr.f32.mxu0 0.0
    %479 = vmatmul.mubr.f32.gmra.mrb[0].mxu0 %v184
    %v480 = vpop.f32.mrb[0].mxu0
    %v481 = vadd.f32 %v124, %v480
    %v482 = vpop.f32.mrb[0].mxu0
    %483 = vmatprep.mubr.f32.mxu0 0.0
    %484 = vmatmul.mubr.f32.gmra.mrb[0].mxu0 %v187
    %v485 = vpop.f32.mrb[0].mxu0
    %v486 = vadd.f32 %v124, %v485
    %v487 = vpop.f32.mrb[0].mxu0
    %488 = vmatprep.mubr.f32.mxu0 0.0
    %489 = vmatmul.mubr.f32.gmra.mrb[0].mxu0 %v190
    %v490 = vpop.f32.mrb[0].mxu0
    %v491 = vadd.f32 %v124, %v490
    %v492 = vpop.f32.mrb[0].mxu0
    %493 = vmatprep.mubr.f32.mxu0 0.0
    %494 = vmatmul.mubr.f32.gmra.mrb[0].mxu0 %v193
    %v495 = vpop.f32.mrb[0].mxu0
    %v496 = vadd.f32 %v124, %v495
    %v497 = vpop.f32.mrb[0].mxu0
    %498 = vmatprep.mubr.f32.mxu0 0.0
    %499 = vmatmul.mubr.f32.gmra.mrb[0].mxu0 %v196
    %v500 = vpop.f32.mrb[0].mxu0
    %v501 = vadd.f32 %v124, %v500
    %v502 = vpop.f32.mrb[0].mxu0
    %503 = vmatprep.mubr.f32.mxu0 0.0
    %504 = vmatmul.mubr.f32.gmra.mrb[0].mxu0 %v199
    %v505 = vpop.f32.mrb[0].mxu0
    %v506 = vadd.f32 %v124, %v505
    %v507 = vpop.f32.mrb[0].mxu0
    %508 = vmatprep.mubr.f32.mxu0 0.0
    %509 = vmatmul.mubr.f32.gmra.mrb[0].mxu0 %v202
    %v510 = vpop.f32.mrb[0].mxu0
    %v511 = vadd.f32 %v124, %v510
    %v512 = vpop.f32.mrb[0].mxu0
    %513 = vmatprep.mubr.f32.mxu0 0.0
    %514 = vmatmul.mubr.f32.gmra.mrb[0].mxu0 %v205
    %v515 = vpop.f32.mrb[0].mxu0
    %v516 = vadd.f32 %v124, %v515
    %v517 = vpop.f32.mrb[0].mxu0
    %518 = vmatprep.mubr.f32.mxu0 0.0
    %519 = vmatmul.mubr.f32.gmra.mrb[0].mxu0 %v208
    %v520 = vpop.f32.mrb[0].mxu0
    %v521 = vadd.f32 %v124, %v520
    %v522 = vpop.f32.mrb[0].mxu0
    %523 = vmatprep.mubr.f32.mxu0 0.0
    %524 = vmatmul.mubr.f32.gmra.mrb[0].mxu0 %v211
    %v525 = vpop.f32.mrb[0].mxu0
    %v526 = vadd.f32 %v124, %v525
    %v527 = vpop.f32.mrb[0].mxu0
    %528 = vmatprep.mubr.f32.mxu0 0.0
    %529 = vmatmul.mubr.f32.gmra.mrb[0].mxu0 %v214
    %v530 = vpop.f32.mrb[0].mxu0
    %v531 = vadd.f32 %v124, %v530
    %v532 = vpop.f32.mrb[0].mxu0
    %533 = vmatprep.mubr.f32.mxu0 0.0
    %534 = vmatmul.mubr.f32.gmra.mrb[0].mxu0 %v217
    %v535 = vpop.f32.mrb[0].mxu0
    %v536 = vadd.f32 %v124, %v535
    %v537 = vpop.f32.mrb[0].mxu0
    %538 = vmatprep.mubr.f32.mxu0 0.0
    %539 = vmatmul.mubr.f32.gmra.mrb[0].mxu0 %v220
    %v540 = vpop.f32.mrb[0].mxu0
    %v541 = vadd.f32 %v124, %v540
    %v542 = vpop.f32.mrb[0].mxu0
    %543 = vmatprep.mubr.f32.mxu0 0.0
    %544 = vmatmul.mubr.f32.gmra.mrb[0].mxu0 %v223
    %v545 = vpop.f32.mrb[0].mxu0
    %v546 = vadd.f32 %v124, %v545
    %v547 = vpop.f32.mrb[0].mxu0
    %548 = vmatprep.mubr.f32.mxu0 0.0
    %549 = vmatmul.mubr.f32.gmra.mrb[0].mxu0 %v226
    %v550 = vpop.f32.mrb[0].mxu0
    %v551 = vadd.f32 %v124, %v550
    %v552 = vpop.f32.mrb[0].mxu0
    %553 = vmatprep.mubr.f32.mxu0 0.0
    %554 = vmatmul.mubr.f32.gmra.mrb[0].mxu0 %v229
    %v555 = vpop.f32.mrb[0].mxu0
    %v556 = vadd.f32 %v124, %v555
    %v557 = vpop.f32.mrb[0].mxu0
    %558 = vmatprep.mubr.f32.mxu0 0.0
    %559 = vmatmul.mubr.f32.gmra.mrb[0].mxu0 %v232
    %v560 = vpop.f32.mrb[0].mxu0
    %v561 = vadd.f32 %v124, %v560
    %v562 = vpop.f32.mrb[0].mxu0
    %563 = vmatprep.mubr.f32.mxu0 0.0
    %564 = vmatmul.mubr.f32.gmra.mrb[0].mxu0 %v235
    %v565 = vpop.f32.mrb[0].mxu0
    %v566 = vadd.f32 %v124, %v565
    %v567 = vpop.f32.mrb[0].mxu0
    %568 = vmatprep.mubr.f32.mxu0 0.0
    %569 = vmatmul.mubr.f32.gmra.mrb[0].mxu0 %v238
    %v570 = vpop.f32.mrb[0].mxu0
    %v571 = vadd.f32 %v124, %v570
    %v572 = vpop.f32.mrb[0].mxu0
    %573 = vmatprep.mubr.f32.mxu0 0.0
    %574 = vmatmul.mubr.f32.gmra.mrb[0].mxu0 %v241
    %v575 = vpop.f32.mrb[0].mxu0
    %v576 = vadd.f32 %v124, %v575
    %v577 = vpop.f32.mrb[0].mxu0
    %578 = vmatprep.mubr.f32.mxu0 0.0
    %579 = vmatmul.mubr.f32.gmra.mrb[0].mxu0 %v244
    %v580 = vpop.f32.mrb[0].mxu0
    %v581 = vadd.f32 %v124, %v580
    %v582 = vpop.f32.mrb[0].mxu0
    %583 = vmatprep.mubr.f32.mxu0 0.0
    %584 = vmatmul.mubr.f32.gmra.mrb[0].mxu0 %v247
    %v585 = vpop.f32.mrb[0].mxu0
    %v586 = vadd.f32 %v124, %v585
    %v587 = vpop.f32.mrb[0].mxu0
    %588 = vmatprep.mubr.f32.mxu0 0.0
    %589 = vmatmul.mubr.f32.gmra.mrb[0].mxu0 %v250
    %v590 = vpop.f32.mrb[0].mxu0
    %v591 = vadd.f32 %v124, %v590
    %v592 = vpop.f32.mrb[0].mxu0
    %593 = vmatprep.mubr.f32.mxu0 0.0
    %594 = vmatmul.mubr.f32.gmra.mrb[0].mxu0 %v253
    %v595 = vpop.f32.mrb[0].mxu0
    %v596 = vadd.f32 %v124, %v595
    %v597 = vpop.f32.mrb[0].mxu0
    %598 = vmatprep.mubr.f32.mxu0 0.0
    %599 = vmatmul.mubr.f32.gmra.mrb[0].mxu0 %v256
    %v600 = vpop.f32.mrb[0].mxu0
    %v601 = vadd.f32 %v124, %v600
    %v602 = vpop.f32.mrb[0].mxu0
    %603 = vmatprep.mubr.f32.mxu0 0.0
    %604 = vmatmul.mubr.f32.gmra.mrb[0].mxu0 %v259
    %v605 = vpop.f32.mrb[0].mxu0
    %v606 = vadd.f32 %v124, %v605
    %v607 = vpop.f32.mrb[0].mxu0
    %608 = vmatprep.mubr.f32.mxu0 0.0
    %609 = vmatmul.mubr.f32.gmra.mrb[0].mxu0 %v262
    %v610 = vpop.f32.mrb[0].mxu0
    %v611 = vadd.f32 %v124, %v610
    %v612 = vpop.f32.mrb[0].mxu0
    %613 = vmatprep.mubr.f32.mxu0 0.0
    %614 = vmatmul.mubr.f32.gmra.mrb[0].mxu0 %v265
    %v615 = vpop.f32.mrb[0].mxu0
    %v616 = vadd.f32 %v124, %v615
    %v617 = vpop.f32.mrb[0].mxu0
    %618 = vmatprep.mubr.f32.mxu0 0.0
    %619 = vmatmul.mubr.f32.gmra.mrb[0].mxu0 %v268
    %v620 = vpop.f32.mrb[0].mxu0
    %v621 = vadd.f32 %v124, %v620
    %v622 = vpop.f32.mrb[0].mxu0
    %623 = vmatprep.mubr.f32.mxu0 0.0
    %624 = vmatmul.mubr.f32.gmra.mrb[0].mxu0 %v271
    %v625 = vpop.f32.mrb[0].mxu0
    %v626 = vadd.f32 %v124, %v625
    %v627 = vpop.f32.mrb[0].mxu0
    %628 = vmatprep.mubr.f32.mxu0 0.0
    %629 = vmatmul.mubr.f32.gmra.mrb[0].mxu0 %v274
    %v630 = vpop.f32.mrb[0].mxu0
    %v631 = vadd.f32 %v124, %v630
    %v632 = vpop.f32.mrb[0].mxu0
    %633 = vmatprep.mubr.f32.mxu0 0.0
    %634 = vmatmul.mubr.f32.gmra.mrb[0].mxu0 %v277
    %v635 = vpop.f32.mrb[0].mxu0
    %v636 = vadd.f32 %v124, %v635
    %v637 = vpop.f32.mrb[0].mxu0
    %638 = vmatprep.mubr.f32.mxu0 0.0
    %639 = vmatmul.mubr.f32.gmra.mrb[0].mxu0 %v280
    %v640 = vpop.f32.mrb[0].mxu0
    %v641 = vadd.f32 %v124, %v640
    %v642 = vpop.f32.mrb[0].mxu0
    %643 = vmatprep.mubr.f32.mxu0 0.0
    %644 = vmatmul.mubr.f32.gmra.mrb[0].mxu0 %v283
    %v645 = vpop.f32.mrb[0].mxu0
    %v646 = vadd.f32 %v124, %v645
    %v647 = vpop.f32.mrb[0].mxu0
    %648 = vmatprep.mubr.f32.mxu0 0.0
    %649 = vmatmul.mubr.f32.gmra.mrb[0].mxu0 %v286
    %v650 = vpop.f32.mrb[0].mxu0
    %v651 = vadd.f32 %v124, %v650
    %v652 = vpop.f32.mrb[0].mxu0
    %653 = vmatprep.mubr.f32.mxu0 0.0
    %654 = vmatmul.mubr.f32.gmra.mrb[0].mxu0 %v289
    %v655 = vpop.f32.mrb[0].mxu0
    %v656 = vadd.f32 %v124, %v655
    %v657 = vpop.f32.mrb[0].mxu0
    %658 = vmatprep.mubr.f32.mxu0 0.0
    %659 = vmatmul.mubr.f32.gmra.mrb[0].mxu0 %v292
    %v660 = vpop.f32.mrb[0].mxu0
    %v661 = vadd.f32 %v124, %v660
    %v662 = vpop.f32.mrb[0].mxu0
    %663 = vmatprep.mubr.f32.mxu0 0.0
    %664 = vmatmul.mubr.f32.gmra.mrb[0].mxu0 %v295
    %v665 = vpop.f32.mrb[0].mxu0
    %v666 = vadd.f32 %v124, %v665
    %v667 = vpop.f32.mrb[0].mxu0
    %668 = vmatprep.mubr.f32.mxu0 0.0
    %669 = vmatmul.mubr.f32.gmra.mrb[0].mxu0 %v298
    %v670 = vpop.f32.mrb[0].mxu0
    %v671 = vadd.f32 %v124, %v670
    %v672 = vpop.f32.mrb[0].mxu0
    %673 = vmatprep.mubr.f32.mxu0 0.0
    %674 = vmatmul.mubr.f32.gmra.mrb[0].mxu0 %v301
    %v675 = vpop.f32.mrb[0].mxu0
    %v676 = vadd.f32 %v124, %v675
    %v677 = vpop.f32.mrb[0].mxu0
    %678 = vmatprep.mubr.f32.mxu0 0.0
    %679 = vmatmul.mubr.f32.gmra.mrb[0].mxu0 %v304
    %v680 = vpop.f32.mrb[0].mxu0
    %v681 = vadd.f32 %v124, %v680
    %v682 = vpop.f32.mrb[0].mxu0
    %683 = vmatprep.mubr.f32.mxu0 0.0
    %684 = vmatmul.mubr.f32.gmra.mrb[0].mxu0 %v307
    %v685 = vpop.f32.mrb[0].mxu0
    %v686 = vadd.f32 %v124, %v685
    %v687 = vpop.f32.mrb[0].mxu0
    %688 = vmatprep.mubr.f32.mxu0 0.0
    %689 = vmatmul.mubr.f32.gmra.mrb[0].mxu0 %v310
    %v690 = vpop.f32.mrb[0].mxu0
    %v691 = vadd.f32 %v124, %v690
    %v692 = vpop.f32.mrb[0].mxu0
    %693 = vmatprep.mubr.f32.mxu0 0.0
    %694 = vmatmul.mubr.f32.gmra.mrb[0].mxu0 %v313
    %v695 = vpop.f32.mrb[0].mxu0
    %v696 = vadd.f32 %v124, %v695
    %v697 = vpop.f32.mrb[0].mxu0
    %698 = vdwg.mxu0
    %v699 = vmax.f32 %v386, 0.0
    %v700 = vmax.f32 %v391, 0.0
    %v701 = vmax.f32 %v396, 0.0
    %v702 = vmax.f32 %v401, 0.0
    %v703 = vmax.f32 %v406, 0.0
    %v704 = vmax.f32 %v411, 0.0
    %v705 = vmax.f32 %v416, 0.0
    %v706 = vmax.f32 %v421, 0.0
    %v707 = vmax.f32 %v426, 0.0
    %v708 = vmax.f32 %v431, 0.0
    %v709 = vmax.f32 %v436, 0.0
    %v710 = vmax.f32 %v441, 0.0
    %v711 = vmax.f32 %v446, 0.0
    %v712 = vmax.f32 %v451, 0.0
    %v713 = vmax.f32 %v456, 0.0
    %v714 = vmax.f32 %v461, 0.0
    %v715 = vmax.f32 %v466, 0.0
    %v716 = vmax.f32 %v471, 0.0
    %v717 = vmax.f32 %v476, 0.0
    %v718 = vmax.f32 %v481, 0.0
    %v719 = vmax.f32 %v486, 0.0
    %v720 = vmax.f32 %v491, 0.0
    %v721 = vmax.f32 %v496, 0.0
    %v722 = vmax.f32 %v501, 0.0
    %v723 = vmax.f32 %v506, 0.0
    %v724 = vmax.f32 %v511, 0.0
    %v725 = vmax.f32 %v516, 0.0
    %v726 = vmax.f32 %v521, 0.0
    %v727 = vmax.f32 %v526, 0.0
    %v728 = vmax.f32 %v531, 0.0
    %v729 = vmax.f32 %v536, 0.0
    %v730 = vmax.f32 %v541, 0.0
    %v731 = vmax.f32 %v546, 0.0
    %v732 = vmax.f32 %v551, 0.0
    %v733 = vmax.f32 %v556, 0.0
    %v734 = vmax.f32 %v561, 0.0
    %v735 = vmax.f32 %v566, 0.0
    %v736 = vmax.f32 %v571, 0.0
    %v737 = vmax.f32 %v576, 0.0
    %v738 = vmax.f32 %v581, 0.0
    %v739 = vmax.f32 %v586, 0.0
    %v740 = vmax.f32 %v591, 0.0
    %v741 = vmax.f32 %v596, 0.0
    %v742 = vmax.f32 %v601, 0.0
    %v743 = vmax.f32 %v606, 0.0
    %v744 = vmax.f32 %v611, 0.0
    %v745 = vmax.f32 %v616, 0.0
    %v746 = vmax.f32 %v621, 0.0
    %v747 = vmax.f32 %v626, 0.0
    %v748 = vmax.f32 %v631, 0.0
    %v749 = vmax.f32 %v636, 0.0
    %v750 = vmax.f32 %v641, 0.0
    %v751 = vmax.f32 %v646, 0.0
    %v752 = vmax.f32 %v651, 0.0
    %v753 = vmax.f32 %v656, 0.0
    %v754 = vmax.f32 %v661, 0.0
    %v755 = vmax.f32 %v666, 0.0
    %v756 = vmax.f32 %v671, 0.0
    %v757 = vmax.f32 %v676, 0.0
    %v758 = vmax.f32 %v681, 0.0
    %v759 = vmax.f32 %v686, 0.0
    %v760 = vmax.f32 %v691, 0.0
    %v761 = vmax.f32 %v696, 0.0
    %v762 = vld [vmem:[%s2] sm:$0xff]
    %v763 = vld [vmem:[%s2 + $0x8] sm:$0xff]
    %v764 = vld [vmem:[%s2 + $0x10] sm:$0xff]
    %v765 = vld [vmem:[%s2 + $0x18] sm:$0xff]
    %v766 = vld [vmem:[%s2 + $0x20] sm:$0xff]
    %v767 = vld [vmem:[%s2 + $0x28] sm:$0xff]
    %v768 = vld [vmem:[%s2 + $0x30] sm:$0xff]
    %v769 = vld [vmem:[%s2 + $0x38] sm:$0xff]
    %v770 = vld [vmem:[%s2 + $0x40] sm:$0xff]
    %v771 = vld [vmem:[%s2 + $0x48] sm:$0xff]
    %v772 = vld [vmem:[%s2 + $0x50] sm:$0xff]
    %v773 = vld [vmem:[%s2 + $0x58] sm:$0xff]
    %v774 = vld [vmem:[%s2 + $0x60] sm:$0xff]
    %v775 = vld [vmem:[%s2 + $0x68] sm:$0xff]
    %v776 = vld [vmem:[%s2 + $0x70] sm:$0xff]
    %v777 = vld [vmem:[%s2 + $0x78] sm:$0xff]
    %v778 = vld [vmem:[%s2 + $0x80] sm:$0xff]
    %v779 = vld [vmem:[%s2 + $0x88] sm:$0xff]
    %vm843 = vcmask 1046528
    %v844 = vrot.slane %v699, 1
    %v845 = vrot.slane %v700, 1
    %v846 = vsel %vm843, %v844, %v845
    %v847 = vrot.slane %v701, 1
    %v848 = vsel %vm843, %v845, %v847
    %v849 = vrot.slane %v702, 1
    %v850 = vsel %vm843, %v847, %v849
    %v851 = vrot.slane %v703, 1
    %v852 = vsel %vm843, %v849, %v851
    %v853 = vrot.slane %v704, 1
    %v854 = vsel %vm843, %v851, %v853
    %v855 = vrot.slane %v705, 1
    %v856 = vsel %vm843, %v853, %v855
    %v857 = vrot.slane %v706, 1
    %v858 = vsel %vm843, %v855, %v857
    %v859 = vrot.slane %v707, 1
    %v860 = vsel %vm843, %v857, %v859
    %v861 = vrot.slane %v708, 1
    %v862 = vsel %vm843, %v859, %v861
    %v863 = vrot.slane %v709, 1
    %v864 = vsel %vm843, %v861, %v863
    %v865 = vrot.slane %v710, 1
    %v866 = vsel %vm843, %v863, %v865
    %v867 = vrot.slane %v711, 1
    %v868 = vsel %vm843, %v865, %v867
    %v869 = vrot.slane %v712, 1
    %v870 = vsel %vm843, %v867, %v869
    %v871 = vrot.slane %v713, 1
    %v872 = vsel %vm843, %v869, %v871
    %v873 = vrot.slane %v714, 1
    %v874 = vsel %vm843, %v871, %v873
    %v875 = vrot.slane %v715, 1
    %v876 = vsel %vm843, %v873, %v875
    %v877 = vrot.slane %v716, 1
    %v878 = vsel %vm843, %v875, %v877
    %v879 = vrot.slane %v717, 1
    %v880 = vsel %vm843, %v877, %v879
    %v881 = vrot.slane %v718, 1
    %v882 = vsel %vm843, %v879, %v881
    %v883 = vrot.slane %v719, 1
    %v884 = vsel %vm843, %v881, %v883
    %v885 = vrot.slane %v720, 1
    %v886 = vsel %vm843, %v883, %v885
    %v887 = vrot.slane %v721, 1
    %v888 = vsel %vm843, %v885, %v887
    %v889 = vrot.slane %v722, 1
    %v890 = vsel %vm843, %v887, %v889
    %v891 = vrot.slane %v723, 1
    %v892 = vsel %vm843, %v889, %v891
    %v893 = vrot.slane %v724, 1
    %v894 = vsel %vm843, %v891, %v893
    %v895 = vrot.slane %v725, 1
    %v896 = vsel %vm843, %v893, %v895
    %v897 = vrot.slane %v726, 1
    %v898 = vsel %vm843, %v895, %v897
    %v899 = vrot.slane %v727, 1
    %v900 = vsel %vm843, %v897, %v899
    %v901 = vrot.slane %v728, 1
    %v902 = vsel %vm843, %v899, %v901
    %v903 = vrot.slane %v729, 1
    %v904 = vsel %vm843, %v901, %v903
    %v905 = vrot.slane %v730, 1
    %v906 = vsel %vm843, %v903, %v905
    %v907 = vrot.slane %v731, 1
    %v908 = vsel %vm843, %v905, %v907
    %v909 = vrot.slane %v732, 1
    %v910 = vsel %vm843, %v907, %v909
    %v911 = vrot.slane %v733, 1
    %v912 = vsel %vm843, %v909, %v911
    %v913 = vrot.slane %v734, 1
    %v914 = vsel %vm843, %v911, %v913
    %v915 = vrot.slane %v735, 1
    %v916 = vsel %vm843, %v913, %v915
    %v917 = vrot.slane %v736, 1
    %v918 = vsel %vm843, %v915, %v917
    %v919 = vrot.slane %v737, 1
    %v920 = vsel %vm843, %v917, %v919
    %v921 = vrot.slane %v738, 1
    %v922 = vsel %vm843, %v919, %v921
    %v923 = vrot.slane %v739, 1
    %v924 = vsel %vm843, %v921, %v923
    %v925 = vrot.slane %v740, 1
    %v926 = vsel %vm843, %v923, %v925
    %v927 = vrot.slane %v741, 1
    %v928 = vsel %vm843, %v925, %v927
    %v929 = vrot.slane %v742, 1
    %v930 = vsel %vm843, %v927, %v929
    %v931 = vrot.slane %v743, 1
    %v932 = vsel %vm843, %v929, %v931
    %v933 = vrot.slane %v744, 1
    %v934 = vsel %vm843, %v931, %v933
    %v935 = vrot.slane %v745, 1
    %v936 = vsel %vm843, %v933, %v935
    %v937 = vrot.slane %v746, 1
    %v938 = vsel %vm843, %v935, %v937
    %v939 = vrot.slane %v747, 1
    %v940 = vsel %vm843, %v937, %v939
    %v941 = vrot.slane %v748, 1
    %v942 = vsel %vm843, %v939, %v941
    %v943 = vrot.slane %v749, 1
    %v944 = vsel %vm843, %v941, %v943
    %v945 = vrot.slane %v750, 1
    %v946 = vsel %vm843, %v943, %v945
    %v947 = vrot.slane %v751, 1
    %v948 = vsel %vm843, %v945, %v947
    %v949 = vrot.slane %v752, 1
    %v950 = vsel %vm843, %v947, %v949
    %v951 = vrot.slane %v753, 1
    %v952 = vsel %vm843, %v949, %v951
    %v953 = vrot.slane %v754, 1
    %v954 = vsel %vm843, %v951, %v953
    %v955 = vrot.slane %v755, 1
    %v956 = vsel %vm843, %v953, %v955
    %v957 = vrot.slane %v756, 1
    %v958 = vsel %vm843, %v955, %v957
    %v959 = vrot.slane %v757, 1
    %v960 = vsel %vm843, %v957, %v959
    %v961 = vrot.slane %v758, 1
    %v962 = vsel %vm843, %v959, %v961
    %v963 = vrot.slane %v759, 1
    %v964 = vsel %vm843, %v961, %v963
    %v965 = vrot.slane %v760, 1
    %v966 = vsel %vm843, %v963, %v965
    %v967 = vrot.slane %v761, 1
    %v968 = vsel %vm843, %v965, %v967
    %v971 = vsel %vm843, %v967, %v844
    %vm972 = vcmask 1045504
    %v973 = vrot.slane %v699, 2
    %v974 = vrot.slane %v700, 2
    %v975 = vsel %vm972, %v973, %v974
    %v976 = vrot.slane %v701, 2
    %v977 = vsel %vm972, %v974, %v976
    %v978 = vrot.slane %v702, 2
    %v979 = vsel %vm972, %v976, %v978
    %v980 = vrot.slane %v703, 2
    %v981 = vsel %vm972, %v978, %v980
    %v982 = vrot.slane %v704, 2
    %v983 = vsel %vm972, %v980, %v982
    %v984 = vrot.slane %v705, 2
    %v985 = vsel %vm972, %v982, %v984
    %v986 = vrot.slane %v706, 2
    %v987 = vsel %vm972, %v984, %v986
    %v988 = vrot.slane %v707, 2
    %v989 = vsel %vm972, %v986, %v988
    %v990 = vrot.slane %v708, 2
    %v991 = vsel %vm972, %v988, %v990
    %v992 = vrot.slane %v709, 2
    %v993 = vsel %vm972, %v990, %v992
    %v994 = vrot.slane %v710, 2
    %v995 = vsel %vm972, %v992, %v994
    %v996 = vrot.slane %v711, 2
    %v997 = vsel %vm972, %v994, %v996
    %v998 = vrot.slane %v712, 2
    %v999 = vsel %vm972, %v996, %v998
    %v1000 = vrot.slane %v713, 2
    %v1001 = vsel %vm972, %v998, %v1000
    %v1002 = vrot.slane %v714, 2
    %v1003 = vsel %vm972, %v1000, %v1002
    %v1004 = vrot.slane %v715, 2
    %v1005 = vsel %vm972, %v1002, %v1004
    %v1006 = vrot.slane %v716, 2
    %v1007 = vsel %vm972, %v1004, %v1006
    %v1008 = vrot.slane %v717, 2
    %v1009 = vsel %vm972, %v1006, %v1008
    %v1010 = vrot.slane %v718, 2
    %v1011 = vsel %vm972, %v1008, %v1010
    %v1012 = vrot.slane %v719, 2
    %v1013 = vsel %vm972, %v1010, %v1012
    %v1014 = vrot.slane %v720, 2
    %v1015 = vsel %vm972, %v1012, %v1014
    %v1016 = vrot.slane %v721, 2
    %v1017 = vsel %vm972, %v1014, %v1016
    %v1018 = vrot.slane %v722, 2
    %v1019 = vsel %vm972, %v1016, %v1018
    %v1020 = vrot.slane %v723, 2
    %v1021 = vsel %vm972, %v1018, %v1020
    %v1022 = vrot.slane %v724, 2
    %v1023 = vsel %vm972, %v1020, %v1022
    %v1024 = vrot.slane %v725, 2
    %v1025 = vsel %vm972, %v1022, %v1024
    %v1026 = vrot.slane %v726, 2
    %v1027 = vsel %vm972, %v1024, %v1026
    %v1028 = vrot.slane %v727, 2
    %v1029 = vsel %vm972, %v1026, %v1028
    %v1030 = vrot.slane %v728, 2
    %v1031 = vsel %vm972, %v1028, %v1030
    %v1032 = vrot.slane %v729, 2
    %v1033 = vsel %vm972, %v1030, %v1032
    %v1034 = vrot.slane %v730, 2
    %v1035 = vsel %vm972, %v1032, %v1034
    %v1036 = vrot.slane %v731, 2
    %v1037 = vsel %vm972, %v1034, %v1036
    %v1038 = vrot.slane %v732, 2
    %v1039 = vsel %vm972, %v1036, %v1038
    %v1040 = vrot.slane %v733, 2
    %v1041 = vsel %vm972, %v1038, %v1040
    %v1042 = vrot.slane %v734, 2
    %v1043 = vsel %vm972, %v1040, %v1042
    %v1044 = vrot.slane %v735, 2
    %v1045 = vsel %vm972, %v1042, %v1044
    %v1046 = vrot.slane %v736, 2
    %v1047 = vsel %vm972, %v1044, %v1046
    %v1048 = vrot.slane %v737, 2
    %v1049 = vsel %vm972, %v1046, %v1048
    %v1050 = vrot.slane %v738, 2
    %v1051 = vsel %vm972, %v1048, %v1050
    %v1052 = vrot.slane %v739, 2
    %v1053 = vsel %vm972, %v1050, %v1052
    %v1054 = vrot.slane %v740, 2
    %v1055 = vsel %vm972, %v1052, %v1054
    %v1056 = vrot.slane %v741, 2
    %v1057 = vsel %vm972, %v1054, %v1056
    %v1058 = vrot.slane %v742, 2
    %v1059 = vsel %vm972, %v1056, %v1058
    %v1060 = vrot.slane %v743, 2
    %v1061 = vsel %vm972, %v1058, %v1060
    %v1062 = vrot.slane %v744, 2
    %v1063 = vsel %vm972, %v1060, %v1062
    %v1064 = vrot.slane %v745, 2
    %v1065 = vsel %vm972, %v1062, %v1064
    %v1066 = vrot.slane %v746, 2
    %v1067 = vsel %vm972, %v1064, %v1066
    %v1068 = vrot.slane %v747, 2
    %v1069 = vsel %vm972, %v1066, %v1068
    %v1070 = vrot.slane %v748, 2
    %v1071 = vsel %vm972, %v1068, %v1070
    %v1072 = vrot.slane %v749, 2
    %v1073 = vsel %vm972, %v1070, %v1072
    %v1074 = vrot.slane %v750, 2
    %v1075 = vsel %vm972, %v1072, %v1074
    %v1076 = vrot.slane %v751, 2
    %v1077 = vsel %vm972, %v1074, %v1076
    %v1078 = vrot.slane %v752, 2
    %v1079 = vsel %vm972, %v1076, %v1078
    %v1080 = vrot.slane %v753, 2
    %v1081 = vsel %vm972, %v1078, %v1080
    %v1082 = vrot.slane %v754, 2
    %v1083 = vsel %vm972, %v1080, %v1082
    %v1084 = vrot.slane %v755, 2
    %v1085 = vsel %vm972, %v1082, %v1084
    %v1086 = vrot.slane %v756, 2
    %v1087 = vsel %vm972, %v1084, %v1086
    %v1088 = vrot.slane %v757, 2
    %v1089 = vsel %vm972, %v1086, %v1088
    %v1090 = vrot.slane %v758, 2
    %v1091 = vsel %vm972, %v1088, %v1090
    %v1092 = vrot.slane %v759, 2
    %v1093 = vsel %vm972, %v1090, %v1092
    %v1094 = vrot.slane %v760, 2
    %v1095 = vsel %vm972, %v1092, %v1094
    %v1096 = vrot.slane %v761, 2
    %v1097 = vsel %vm972, %v1094, %v1096
    %v1100 = vsel %vm972, %v1096, %v973
    %vm1101 = vcmask 1044480
    %v1102 = vrot.slane %v704, 3
    %v1103 = vrot.slane %v705, 3
    %v1104 = vsel %vm1101, %v1102, %v1103
    %v1105 = vrot.slane %v706, 3
    %v1106 = vsel %vm1101, %v1103, %v1105
    %v1107 = vrot.slane %v707, 3
    %v1108 = vsel %vm1101, %v1105, %v1107
    %v1109 = vrot.slane %v708, 3
    %v1110 = vsel %vm1101, %v1107, %v1109
    %v1111 = vrot.slane %v709, 3
    %v1112 = vsel %vm1101, %v1109, %v1111
    %v1113 = vrot.slane %v710, 3
    %v1114 = vsel %vm1101, %v1111, %v1113
    %v1115 = vrot.slane %v711, 3
    %v1116 = vsel %vm1101, %v1113, %v1115
    %v1117 = vrot.slane %v712, 3
    %v1118 = vsel %vm1101, %v1115, %v1117
    %v1119 = vrot.slane %v713, 3
    %v1120 = vsel %vm1101, %v1117, %v1119
    %v1121 = vrot.slane %v714, 3
    %v1122 = vsel %vm1101, %v1119, %v1121
    %v1123 = vrot.slane %v715, 3
    %v1124 = vsel %vm1101, %v1121, %v1123
    %v1125 = vrot.slane %v716, 3
    %v1126 = vsel %vm1101, %v1123, %v1125
    %v1127 = vrot.slane %v717, 3
    %v1128 = vsel %vm1101, %v1125, %v1127
    %v1129 = vrot.slane %v718, 3
    %v1130 = vsel %vm1101, %v1127, %v1129
    %v1131 = vrot.slane %v719, 3
    %v1132 = vsel %vm1101, %v1129, %v1131
    %v1133 = vrot.slane %v720, 3
    %v1134 = vsel %vm1101, %v1131, %v1133
    %v1135 = vrot.slane %v721, 3
    %v1136 = vsel %vm1101, %v1133, %v1135
    %v1137 = vrot.slane %v722, 3
    %v1138 = vsel %vm1101, %v1135, %v1137
    %v1139 = vrot.slane %v723, 3
    %v1140 = vsel %vm1101, %v1137, %v1139
    %v1141 = vrot.slane %v724, 3
    %v1142 = vsel %vm1101, %v1139, %v1141
    %v1143 = vrot.slane %v725, 3
    %v1144 = vsel %vm1101, %v1141, %v1143
    %v1145 = vrot.slane %v726, 3
    %v1146 = vsel %vm1101, %v1143, %v1145
    %v1147 = vrot.slane %v727, 3
    %v1148 = vsel %vm1101, %v1145, %v1147
    %v1149 = vrot.slane %v728, 3
    %v1150 = vsel %vm1101, %v1147, %v1149
    %v1151 = vrot.slane %v729, 3
    %v1152 = vsel %vm1101, %v1149, %v1151
    %v1153 = vrot.slane %v730, 3
    %v1154 = vsel %vm1101, %v1151, %v1153
    %v1155 = vrot.slane %v731, 3
    %v1156 = vsel %vm1101, %v1153, %v1155
    %v1157 = vrot.slane %v732, 3
    %v1158 = vsel %vm1101, %v1155, %v1157
    %v1159 = vrot.slane %v733, 3
    %v1160 = vsel %vm1101, %v1157, %v1159
    %v1161 = vrot.slane %v734, 3
    %v1162 = vsel %vm1101, %v1159, %v1161
    %v1163 = vrot.slane %v735, 3
    %v1164 = vsel %vm1101, %v1161, %v1163
    %v1165 = vrot.slane %v736, 3
    %v1166 = vsel %vm1101, %v1163, %v1165
    %v1167 = vrot.slane %v737, 3
    %v1168 = vsel %vm1101, %v1165, %v1167
    %v1169 = vrot.slane %v738, 3
    %v1170 = vsel %vm1101, %v1167, %v1169
    %v1171 = vrot.slane %v739, 3
    %v1172 = vsel %vm1101, %v1169, %v1171
    %v1173 = vrot.slane %v740, 3
    %v1174 = vsel %vm1101, %v1171, %v1173
    %v1175 = vrot.slane %v741, 3
    %v1176 = vsel %vm1101, %v1173, %v1175
    %v1177 = vrot.slane %v742, 3
    %v1178 = vsel %vm1101, %v1175, %v1177
    %v1179 = vrot.slane %v743, 3
    %v1180 = vsel %vm1101, %v1177, %v1179
    %v1181 = vrot.slane %v744, 3
    %v1182 = vsel %vm1101, %v1179, %v1181
    %v1183 = vrot.slane %v745, 3
    %v1184 = vsel %vm1101, %v1181, %v1183
    %v1185 = vrot.slane %v746, 3
    %v1186 = vsel %vm1101, %v1183, %v1185
    %v1187 = vrot.slane %v747, 3
    %v1188 = vsel %vm1101, %v1185, %v1187
    %v1189 = vrot.slane %v748, 3
    %v1190 = vsel %vm1101, %v1187, %v1189
    %v1191 = vrot.slane %v749, 3
    %v1192 = vsel %vm1101, %v1189, %v1191
    %v1193 = vrot.slane %v750, 3
    %v1194 = vsel %vm1101, %v1191, %v1193
    %v1195 = vrot.slane %v751, 3
    %v1196 = vsel %vm1101, %v1193, %v1195
    %v1197 = vrot.slane %v752, 3
    %v1198 = vsel %vm1101, %v1195, %v1197
    %v1199 = vrot.slane %v753, 3
    %v1200 = vsel %vm1101, %v1197, %v1199
    %v1201 = vrot.slane %v754, 3
    %v1202 = vsel %vm1101, %v1199, %v1201
    %v1203 = vrot.slane %v755, 3
    %v1204 = vsel %vm1101, %v1201, %v1203
    %v1205 = vrot.slane %v756, 3
    %v1206 = vsel %vm1101, %v1203, %v1205
    %v1207 = vrot.slane %v757, 3
    %v1208 = vsel %vm1101, %v1205, %v1207
    %v1209 = vrot.slane %v758, 3
    %v1210 = vsel %vm1101, %v1207, %v1209
    %v1211 = vrot.slane %v759, 3
    %v1212 = vsel %vm1101, %v1209, %v1211
    %v1213 = vrot.slane %v760, 3
    %v1214 = vsel %vm1101, %v1211, %v1213
    %v1215 = vrot.slane %v761, 3
    %v1216 = vsel %vm1101, %v1213, %v1215
    %v1218 = vrot.slane %v699, 3
    %v1219 = vrot.slane %v700, 3
    %v1220 = vsel %vm1101, %v1218, %v1219
    %v1221 = vrot.slane %v701, 3
    %v1222 = vsel %vm1101, %v1219, %v1221
    %v1223 = vrot.slane %v702, 3
    %v1224 = vsel %vm1101, %v1221, %v1223
    %v1225 = vrot.slane %v703, 3
    %v1226 = vsel %vm1101, %v1223, %v1225
    %v1227 = vsel %vm1101, %v1225, %v1102
    %v1229 = vsel %vm1101, %v1215, %v1218
    %vm1230 = vcmask 1043456
    %v1231 = vrot.slane %v704, 4
    %v1232 = vrot.slane %v705, 4
    %v1233 = vsel %vm1230, %v1231, %v1232
    %v1234 = vrot.slane %v706, 4
    %v1235 = vsel %vm1230, %v1232, %v1234
    %v1236 = vrot.slane %v707, 4
    %v1237 = vsel %vm1230, %v1234, %v1236
    %v1238 = vrot.slane %v708, 4
    %v1239 = vsel %vm1230, %v1236, %v1238
    %v1240 = vrot.slane %v709, 4
    %v1241 = vsel %vm1230, %v1238, %v1240
    %v1242 = vrot.slane %v710, 4
    %v1243 = vsel %vm1230, %v1240, %v1242
    %v1244 = vrot.slane %v711, 4
    %v1245 = vsel %vm1230, %v1242, %v1244
    %v1246 = vrot.slane %v712, 4
    %v1247 = vsel %vm1230, %v1244, %v1246
    %v1248 = vrot.slane %v713, 4
    %v1249 = vsel %vm1230, %v1246, %v1248
    %v1250 = vrot.slane %v714, 4
    %v1251 = vsel %vm1230, %v1248, %v1250
    %v1252 = vrot.slane %v715, 4
    %v1253 = vsel %vm1230, %v1250, %v1252
    %v1254 = vrot.slane %v716, 4
    %v1255 = vsel %vm1230, %v1252, %v1254
    %v1256 = vrot.slane %v717, 4
    %v1257 = vsel %vm1230, %v1254, %v1256
    %v1258 = vrot.slane %v718, 4
    %v1259 = vsel %vm1230, %v1256, %v1258
    %v1260 = vrot.slane %v719, 4
    %v1261 = vsel %vm1230, %v1258, %v1260
    %v1262 = vrot.slane %v720, 4
    %v1263 = vsel %vm1230, %v1260, %v1262
    %v1264 = vrot.slane %v721, 4
    %v1265 = vsel %vm1230, %v1262, %v1264
    %v1266 = vrot.slane %v722, 4
    %v1267 = vsel %vm1230, %v1264, %v1266
    %v1268 = vrot.slane %v723, 4
    %v1269 = vsel %vm1230, %v1266, %v1268
    %v1270 = vrot.slane %v724, 4
    %v1271 = vsel %vm1230, %v1268, %v1270
    %v1272 = vrot.slane %v725, 4
    %v1273 = vsel %vm1230, %v1270, %v1272
    %v1274 = vrot.slane %v726, 4
    %v1275 = vsel %vm1230, %v1272, %v1274
    %v1276 = vrot.slane %v727, 4
    %v1277 = vsel %vm1230, %v1274, %v1276
    %v1278 = vrot.slane %v728, 4
    %v1279 = vsel %vm1230, %v1276, %v1278
    %v1280 = vrot.slane %v729, 4
    %v1281 = vsel %vm1230, %v1278, %v1280
    %v1282 = vrot.slane %v730, 4
    %v1283 = vsel %vm1230, %v1280, %v1282
    %v1284 = vrot.slane %v731, 4
    %v1285 = vsel %vm1230, %v1282, %v1284
    %v1286 = vrot.slane %v732, 4
    %v1287 = vsel %vm1230, %v1284, %v1286
    %v1288 = vrot.slane %v733, 4
    %v1289 = vsel %vm1230, %v1286, %v1288
    %v1290 = vrot.slane %v734, 4
    %v1291 = vsel %vm1230, %v1288, %v1290
    %v1292 = vrot.slane %v735, 4
    %v1293 = vsel %vm1230, %v1290, %v1292
    %v1294 = vrot.slane %v736, 4
    %v1295 = vsel %vm1230, %v1292, %v1294
    %v1296 = vrot.slane %v737, 4
    %v1297 = vsel %vm1230, %v1294, %v1296
    %v1298 = vrot.slane %v738, 4
    %v1299 = vsel %vm1230, %v1296, %v1298
    %v1300 = vrot.slane %v739, 4
    %v1301 = vsel %vm1230, %v1298, %v1300
    %v1302 = vrot.slane %v740, 4
    %v1303 = vsel %vm1230, %v1300, %v1302
    %v1304 = vrot.slane %v741, 4
    %v1305 = vsel %vm1230, %v1302, %v1304
    %v1306 = vrot.slane %v742, 4
    %v1307 = vsel %vm1230, %v1304, %v1306
    %v1308 = vrot.slane %v743, 4
    %v1309 = vsel %vm1230, %v1306, %v1308
    %v1310 = vrot.slane %v744, 4
    %v1311 = vsel %vm1230, %v1308, %v1310
    %v1312 = vrot.slane %v745, 4
    %v1313 = vsel %vm1230, %v1310, %v1312
    %v1314 = vrot.slane %v746, 4
    %v1315 = vsel %vm1230, %v1312, %v1314
    %v1316 = vrot.slane %v747, 4
    %v1317 = vsel %vm1230, %v1314, %v1316
    %v1318 = vrot.slane %v748, 4
    %v1319 = vsel %vm1230, %v1316, %v1318
    %v1320 = vrot.slane %v749, 4
    %v1321 = vsel %vm1230, %v1318, %v1320
    %v1322 = vrot.slane %v750, 4
    %v1323 = vsel %vm1230, %v1320, %v1322
    %v1324 = vrot.slane %v751, 4
    %v1325 = vsel %vm1230, %v1322, %v1324
    %v1326 = vrot.slane %v752, 4
    %v1327 = vsel %vm1230, %v1324, %v1326
    %v1328 = vrot.slane %v753, 4
    %v1329 = vsel %vm1230, %v1326, %v1328
    %v1330 = vrot.slane %v754, 4
    %v1331 = vsel %vm1230, %v1328, %v1330
    %v1332 = vrot.slane %v755, 4
    %v1333 = vsel %vm1230, %v1330, %v1332
    %v1334 = vrot.slane %v756, 4
    %v1335 = vsel %vm1230, %v1332, %v1334
    %v1336 = vrot.slane %v757, 4
    %v1337 = vsel %vm1230, %v1334, %v1336
    %v1338 = vrot.slane %v758, 4
    %v1339 = vsel %vm1230, %v1336, %v1338
    %v1340 = vrot.slane %v759, 4
    %v1341 = vsel %vm1230, %v1338, %v1340
    %v1342 = vrot.slane %v760, 4
    %v1343 = vsel %vm1230, %v1340, %v1342
    %v1344 = vrot.slane %v761, 4
    %v1345 = vsel %vm1230, %v1342, %v1344
    %v1347 = vrot.slane %v699, 4
    %v1348 = vrot.slane %v700, 4
    %v1349 = vsel %vm1230, %v1347, %v1348
    %v1350 = vrot.slane %v701, 4
    %v1351 = vsel %vm1230, %v1348, %v1350
    %v1352 = vrot.slane %v702, 4
    %v1353 = vsel %vm1230, %v1350, %v1352
    %v1354 = vrot.slane %v703, 4
    %v1355 = vsel %vm1230, %v1352, %v1354
    %v1356 = vsel %vm1230, %v1354, %v1231
    %v1358 = vsel %vm1230, %v1344, %v1347
    %vm1359 = vcmask 1042432
    %v1360 = vrot.slane %v709, 5
    %v1361 = vrot.slane %v710, 5
    %v1362 = vsel %vm1359, %v1360, %v1361
    %v1363 = vrot.slane %v711, 5
    %v1364 = vsel %vm1359, %v1361, %v1363
    %v1365 = vrot.slane %v712, 5
    %v1366 = vsel %vm1359, %v1363, %v1365
    %v1367 = vrot.slane %v713, 5
    %v1368 = vsel %vm1359, %v1365, %v1367
    %v1369 = vrot.slane %v714, 5
    %v1370 = vsel %vm1359, %v1367, %v1369
    %v1371 = vrot.slane %v715, 5
    %v1372 = vsel %vm1359, %v1369, %v1371
    %v1373 = vrot.slane %v716, 5
    %v1374 = vsel %vm1359, %v1371, %v1373
    %v1375 = vrot.slane %v717, 5
    %v1376 = vsel %vm1359, %v1373, %v1375
    %v1377 = vrot.slane %v718, 5
    %v1378 = vsel %vm1359, %v1375, %v1377
    %v1379 = vrot.slane %v719, 5
    %v1380 = vsel %vm1359, %v1377, %v1379
    %v1381 = vrot.slane %v720, 5
    %v1382 = vsel %vm1359, %v1379, %v1381
    %v1383 = vrot.slane %v721, 5
    %v1384 = vsel %vm1359, %v1381, %v1383
    %v1385 = vrot.slane %v722, 5
    %v1386 = vsel %vm1359, %v1383, %v1385
    %v1387 = vrot.slane %v723, 5
    %v1388 = vsel %vm1359, %v1385, %v1387
    %v1389 = vrot.slane %v724, 5
    %v1390 = vsel %vm1359, %v1387, %v1389
    %v1391 = vrot.slane %v725, 5
    %v1392 = vsel %vm1359, %v1389, %v1391
    %v1393 = vrot.slane %v726, 5
    %v1394 = vsel %vm1359, %v1391, %v1393
    %v1395 = vrot.slane %v727, 5
    %v1396 = vsel %vm1359, %v1393, %v1395
    %v1397 = vrot.slane %v728, 5
    %v1398 = vsel %vm1359, %v1395, %v1397
    %v1399 = vrot.slane %v729, 5
    %v1400 = vsel %vm1359, %v1397, %v1399
    %v1401 = vrot.slane %v730, 5
    %v1402 = vsel %vm1359, %v1399, %v1401
    %v1403 = vrot.slane %v731, 5
    %v1404 = vsel %vm1359, %v1401, %v1403
    %v1405 = vrot.slane %v732, 5
    %v1406 = vsel %vm1359, %v1403, %v1405
    %v1407 = vrot.slane %v733, 5
    %v1408 = vsel %vm1359, %v1405, %v1407
    %v1409 = vrot.slane %v734, 5
    %v1410 = vsel %vm1359, %v1407, %v1409
    %v1411 = vrot.slane %v735, 5
    %v1412 = vsel %vm1359, %v1409, %v1411
    %v1413 = vrot.slane %v736, 5
    %v1414 = vsel %vm1359, %v1411, %v1413
    %v1415 = vrot.slane %v737, 5
    %v1416 = vsel %vm1359, %v1413, %v1415
    %v1417 = vrot.slane %v738, 5
    %v1418 = vsel %vm1359, %v1415, %v1417
    %v1419 = vrot.slane %v739, 5
    %v1420 = vsel %vm1359, %v1417, %v1419
    %v1421 = vrot.slane %v740, 5
    %v1422 = vsel %vm1359, %v1419, %v1421
    %v1423 = vrot.slane %v741, 5
    %v1424 = vsel %vm1359, %v1421, %v1423
    %v1425 = vrot.slane %v742, 5
    %v1426 = vsel %vm1359, %v1423, %v1425
    %v1427 = vrot.slane %v743, 5
    %v1428 = vsel %vm1359, %v1425, %v1427
    %v1429 = vrot.slane %v744, 5
    %v1430 = vsel %vm1359, %v1427, %v1429
    %v1431 = vrot.slane %v745, 5
    %v1432 = vsel %vm1359, %v1429, %v1431
    %v1433 = vrot.slane %v746, 5
    %v1434 = vsel %vm1359, %v1431, %v1433
    %v1435 = vrot.slane %v747, 5
    %v1436 = vsel %vm1359, %v1433, %v1435
    %v1437 = vrot.slane %v748, 5
    %v1438 = vsel %vm1359, %v1435, %v1437
    %v1439 = vrot.slane %v749, 5
    %v1440 = vsel %vm1359, %v1437, %v1439
    %v1441 = vrot.slane %v750, 5
    %v1442 = vsel %vm1359, %v1439, %v1441
    %v1443 = vrot.slane %v751, 5
    %v1444 = vsel %vm1359, %v1441, %v1443
    %v1445 = vrot.slane %v752, 5
    %v1446 = vsel %vm1359, %v1443, %v1445
    %v1447 = vrot.slane %v753, 5
    %v1448 = vsel %vm1359, %v1445, %v1447
    %v1449 = vrot.slane %v754, 5
    %v1450 = vsel %vm1359, %v1447, %v1449
    %v1451 = vrot.slane %v755, 5
    %v1452 = vsel %vm1359, %v1449, %v1451
    %v1453 = vrot.slane %v756, 5
    %v1454 = vsel %vm1359, %v1451, %v1453
    %v1455 = vrot.slane %v757, 5
    %v1456 = vsel %vm1359, %v1453, %v1455
    %v1457 = vrot.slane %v758, 5
    %v1458 = vsel %vm1359, %v1455, %v1457
    %v1459 = vrot.slane %v759, 5
    %v1460 = vsel %vm1359, %v1457, %v1459
    %v1461 = vrot.slane %v760, 5
    %v1462 = vsel %vm1359, %v1459, %v1461
    %v1463 = vrot.slane %v761, 5
    %v1464 = vsel %vm1359, %v1461, %v1463
    %v1466 = vrot.slane %v699, 5
    %v1467 = vrot.slane %v700, 5
    %v1468 = vsel %vm1359, %v1466, %v1467
    %v1469 = vrot.slane %v701, 5
    %v1470 = vsel %vm1359, %v1467, %v1469
    %v1471 = vrot.slane %v702, 5
    %v1472 = vsel %vm1359, %v1469, %v1471
    %v1473 = vrot.slane %v703, 5
    %v1474 = vsel %vm1359, %v1471, %v1473
    %v1475 = vrot.slane %v704, 5
    %v1476 = vsel %vm1359, %v1473, %v1475
    %v1477 = vrot.slane %v705, 5
    %v1478 = vsel %vm1359, %v1475, %v1477
    %v1479 = vrot.slane %v706, 5
    %v1480 = vsel %vm1359, %v1477, %v1479
    %v1481 = vrot.slane %v707, 5
    %v1482 = vsel %vm1359, %v1479, %v1481
    %v1483 = vrot.slane %v708, 5
    %v1484 = vsel %vm1359, %v1481, %v1483
    %v1485 = vsel %vm1359, %v1483, %v1360
    %v1487 = vsel %vm1359, %v1463, %v1466
    %vm1488 = vcmask 1041408
    %v1489 = vrot.slane %v709, 6
    %v1490 = vrot.slane %v710, 6
    %v1491 = vsel %vm1488, %v1489, %v1490
    %v1492 = vrot.slane %v711, 6
    %v1493 = vsel %vm1488, %v1490, %v1492
    %v1494 = vrot.slane %v712, 6
    %v1495 = vsel %vm1488, %v1492, %v1494
    %v1496 = vrot.slane %v713, 6
    %v1497 = vsel %vm1488, %v1494, %v1496
    %v1498 = vrot.slane %v714, 6
    %v1499 = vsel %vm1488, %v1496, %v1498
    %v1500 = vrot.slane %v715, 6
    %v1501 = vsel %vm1488, %v1498, %v1500
    %v1502 = vrot.slane %v716, 6
    %v1503 = vsel %vm1488, %v1500, %v1502
    %v1504 = vrot.slane %v717, 6
    %v1505 = vsel %vm1488, %v1502, %v1504
    %v1506 = vrot.slane %v718, 6
    %v1507 = vsel %vm1488, %v1504, %v1506
    %v1508 = vrot.slane %v719, 6
    %v1509 = vsel %vm1488, %v1506, %v1508
    %v1510 = vrot.slane %v720, 6
    %v1511 = vsel %vm1488, %v1508, %v1510
    %v1512 = vrot.slane %v721, 6
    %v1513 = vsel %vm1488, %v1510, %v1512
    %v1514 = vrot.slane %v722, 6
    %v1515 = vsel %vm1488, %v1512, %v1514
    %v1516 = vrot.slane %v723, 6
    %v1517 = vsel %vm1488, %v1514, %v1516
    %v1518 = vrot.slane %v724, 6
    %v1519 = vsel %vm1488, %v1516, %v1518
    %v1520 = vrot.slane %v725, 6
    %v1521 = vsel %vm1488, %v1518, %v1520
    %v1522 = vrot.slane %v726, 6
    %v1523 = vsel %vm1488, %v1520, %v1522
    %v1524 = vrot.slane %v727, 6
    %v1525 = vsel %vm1488, %v1522, %v1524
    %v1526 = vrot.slane %v728, 6
    %v1527 = vsel %vm1488, %v1524, %v1526
    %v1528 = vrot.slane %v729, 6
    %v1529 = vsel %vm1488, %v1526, %v1528
    %v1530 = vrot.slane %v730, 6
    %v1531 = vsel %vm1488, %v1528, %v1530
    %v1532 = vrot.slane %v731, 6
    %v1533 = vsel %vm1488, %v1530, %v1532
    %v1534 = vrot.slane %v732, 6
    %v1535 = vsel %vm1488, %v1532, %v1534
    %v1536 = vrot.slane %v733, 6
    %v1537 = vsel %vm1488, %v1534, %v1536
    %v1538 = vrot.slane %v734, 6
    %v1539 = vsel %vm1488, %v1536, %v1538
    %v1540 = vrot.slane %v735, 6
    %v1541 = vsel %vm1488, %v1538, %v1540
    %v1542 = vrot.slane %v736, 6
    %v1543 = vsel %vm1488, %v1540, %v1542
    %v1544 = vrot.slane %v737, 6
    %v1545 = vsel %vm1488, %v1542, %v1544
    %v1546 = vrot.slane %v738, 6
    %v1547 = vsel %vm1488, %v1544, %v1546
    %v1548 = vrot.slane %v739, 6
    %v1549 = vsel %vm1488, %v1546, %v1548
    %v1550 = vrot.slane %v740, 6
    %v1551 = vsel %vm1488, %v1548, %v1550
    %v1552 = vrot.slane %v741, 6
    %v1553 = vsel %vm1488, %v1550, %v1552
    %v1554 = vrot.slane %v742, 6
    %v1555 = vsel %vm1488, %v1552, %v1554
    %v1556 = vrot.slane %v743, 6
    %v1557 = vsel %vm1488, %v1554, %v1556
    %v1558 = vrot.slane %v744, 6
    %v1559 = vsel %vm1488, %v1556, %v1558
    %v1560 = vrot.slane %v745, 6
    %v1561 = vsel %vm1488, %v1558, %v1560
    %v1562 = vrot.slane %v746, 6
    %v1563 = vsel %vm1488, %v1560, %v1562
    %v1564 = vrot.slane %v747, 6
    %v1565 = vsel %vm1488, %v1562, %v1564
    %v1566 = vrot.slane %v748, 6
    %v1567 = vsel %vm1488, %v1564, %v1566
    %v1568 = vrot.slane %v749, 6
    %v1569 = vsel %vm1488, %v1566, %v1568
    %v1570 = vrot.slane %v750, 6
    %v1571 = vsel %vm1488, %v1568, %v1570
    %v1572 = vrot.slane %v751, 6
    %v1573 = vsel %vm1488, %v1570, %v1572
    %v1574 = vrot.slane %v752, 6
    %v1575 = vsel %vm1488, %v1572, %v1574
    %v1576 = vrot.slane %v753, 6
    %v1577 = vsel %vm1488, %v1574, %v1576
    %v1578 = vrot.slane %v754, 6
    %v1579 = vsel %vm1488, %v1576, %v1578
    %v1580 = vrot.slane %v755, 6
    %v1581 = vsel %vm1488, %v1578, %v1580
    %v1582 = vrot.slane %v756, 6
    %v1583 = vsel %vm1488, %v1580, %v1582
    %v1584 = vrot.slane %v757, 6
    %v1585 = vsel %vm1488, %v1582, %v1584
    %v1586 = vrot.slane %v758, 6
    %v1587 = vsel %vm1488, %v1584, %v1586
    %v1588 = vrot.slane %v759, 6
    %v1589 = vsel %vm1488, %v1586, %v1588
    %v1590 = vrot.slane %v760, 6
    %v1591 = vsel %vm1488, %v1588, %v1590
    %v1592 = vrot.slane %v761, 6
    %v1593 = vsel %vm1488, %v1590, %v1592
    %v1595 = vrot.slane %v699, 6
    %v1596 = vrot.slane %v700, 6
    %v1597 = vsel %vm1488, %v1595, %v1596
    %v1598 = vrot.slane %v701, 6
    %v1599 = vsel %vm1488, %v1596, %v1598
    %v1600 = vrot.slane %v702, 6
    %v1601 = vsel %vm1488, %v1598, %v1600
    %v1602 = vrot.slane %v703, 6
    %v1603 = vsel %vm1488, %v1600, %v1602
    %v1604 = vrot.slane %v704, 6
    %v1605 = vsel %vm1488, %v1602, %v1604
    %v1606 = vrot.slane %v705, 6
    %v1607 = vsel %vm1488, %v1604, %v1606
    %v1608 = vrot.slane %v706, 6
    %v1609 = vsel %vm1488, %v1606, %v1608
    %v1610 = vrot.slane %v707, 6
    %v1611 = vsel %vm1488, %v1608, %v1610
    %v1612 = vrot.slane %v708, 6
    %v1613 = vsel %vm1488, %v1610, %v1612
    %v1614 = vsel %vm1488, %v1612, %v1489
    %v1616 = vsel %vm1488, %v1592, %v1595
    %1618 = vrot.lane.b32.xlu0 %v846, 16
    %v1619 = vpop.permute.xlu0 %1618
    %1620 = vrot.lane.b32.xlu0 %v848, 16
    %v1621 = vpop.permute.xlu0 %1620
    %1622 = vrot.lane.b32.xlu0 %v850, 16
    %v1623 = vpop.permute.xlu0 %1622
    %1624 = vrot.lane.b32.xlu0 %v852, 16
    %v1625 = vpop.permute.xlu0 %1624
    %1626 = vrot.lane.b32.xlu0 %v854, 16
    %v1627 = vpop.permute.xlu0 %1626
    %1628 = vrot.lane.b32.xlu0 %v856, 16
    %v1629 = vpop.permute.xlu0 %1628
    %1630 = vrot.lane.b32.xlu0 %v858, 16
    %v1631 = vpop.permute.xlu0 %1630
    %1632 = vrot.lane.b32.xlu0 %v860, 16
    %v1633 = vpop.permute.xlu0 %1632
    %1634 = vrot.lane.b32.xlu0 %v862, 16
    %v1635 = vpop.permute.xlu0 %1634
    %1636 = vrot.lane.b32.xlu0 %v864, 16
    %v1637 = vpop.permute.xlu0 %1636
    %1638 = vrot.lane.b32.xlu0 %v866, 16
    %v1639 = vpop.permute.xlu0 %1638
    %1640 = vrot.lane.b32.xlu0 %v868, 16
    %v1641 = vpop.permute.xlu0 %1640
    %1642 = vrot.lane.b32.xlu0 %v870, 16
    %v1643 = vpop.permute.xlu0 %1642
    %1644 = vrot.lane.b32.xlu0 %v872, 16
    %v1645 = vpop.permute.xlu0 %1644
    %1646 = vrot.lane.b32.xlu0 %v874, 16
    %v1647 = vpop.permute.xlu0 %1646
    %1648 = vrot.lane.b32.xlu0 %v876, 16
    %v1649 = vpop.permute.xlu0 %1648
    %1650 = vrot.lane.b32.xlu0 %v878, 16
    %v1651 = vpop.permute.xlu0 %1650
    %1652 = vrot.lane.b32.xlu0 %v880, 16
    %v1653 = vpop.permute.xlu0 %1652
    %1654 = vrot.lane.b32.xlu0 %v882, 16
    %v1655 = vpop.permute.xlu0 %1654
    %1656 = vrot.lane.b32.xlu0 %v884, 16
    %v1657 = vpop.permute.xlu0 %1656
    %1658 = vrot.lane.b32.xlu0 %v886, 16
    %v1659 = vpop.permute.xlu0 %1658
    %1660 = vrot.lane.b32.xlu0 %v888, 16
    %v1661 = vpop.permute.xlu0 %1660
    %1662 = vrot.lane.b32.xlu0 %v890, 16
    %v1663 = vpop.permute.xlu0 %1662
    %1664 = vrot.lane.b32.xlu0 %v892, 16
    %v1665 = vpop.permute.xlu0 %1664
    %1666 = vrot.lane.b32.xlu0 %v894, 16
    %v1667 = vpop.permute.xlu0 %1666
    %1668 = vrot.lane.b32.xlu0 %v896, 16
    %v1669 = vpop.permute.xlu0 %1668
    %1670 = vrot.lane.b32.xlu0 %v898, 16
    %v1671 = vpop.permute.xlu0 %1670
    %1672 = vrot.lane.b32.xlu0 %v900, 16
    %v1673 = vpop.permute.xlu0 %1672
    %1674 = vrot.lane.b32.xlu0 %v902, 16
    %v1675 = vpop.permute.xlu0 %1674
    %1676 = vrot.lane.b32.xlu0 %v904, 16
    %v1677 = vpop.permute.xlu0 %1676
    %1678 = vrot.lane.b32.xlu0 %v906, 16
    %v1679 = vpop.permute.xlu0 %1678
    %1680 = vrot.lane.b32.xlu0 %v908, 16
    %v1681 = vpop.permute.xlu0 %1680
    %1682 = vrot.lane.b32.xlu0 %v910, 16
    %v1683 = vpop.permute.xlu0 %1682
    %1684 = vrot.lane.b32.xlu0 %v912, 16
    %v1685 = vpop.permute.xlu0 %1684
    %1686 = vrot.lane.b32.xlu0 %v914, 16
    %v1687 = vpop.permute.xlu0 %1686
    %1688 = vrot.lane.b32.xlu0 %v916, 16
    %v1689 = vpop.permute.xlu0 %1688
    %1690 = vrot.lane.b32.xlu0 %v918, 16
    %v1691 = vpop.permute.xlu0 %1690
    %1692 = vrot.lane.b32.xlu0 %v920, 16
    %v1693 = vpop.permute.xlu0 %1692
    %1694 = vrot.lane.b32.xlu0 %v922, 16
    %v1695 = vpop.permute.xlu0 %1694
    %1696 = vrot.lane.b32.xlu0 %v924, 16
    %v1697 = vpop.permute.xlu0 %1696
    %1698 = vrot.lane.b32.xlu0 %v926, 16
    %v1699 = vpop.permute.xlu0 %1698
    %1700 = vrot.lane.b32.xlu0 %v928, 16
    %v1701 = vpop.permute.xlu0 %1700
    %1702 = vrot.lane.b32.xlu0 %v930, 16
    %v1703 = vpop.permute.xlu0 %1702
    %1704 = vrot.lane.b32.xlu0 %v932, 16
    %v1705 = vpop.permute.xlu0 %1704
    %1706 = vrot.lane.b32.xlu0 %v934, 16
    %v1707 = vpop.permute.xlu0 %1706
    %1708 = vrot.lane.b32.xlu0 %v936, 16
    %v1709 = vpop.permute.xlu0 %1708
    %1710 = vrot.lane.b32.xlu0 %v938, 16
    %v1711 = vpop.permute.xlu0 %1710
    %1712 = vrot.lane.b32.xlu0 %v940, 16
    %v1713 = vpop.permute.xlu0 %1712
    %1714 = vrot.lane.b32.xlu0 %v942, 16
    %v1715 = vpop.permute.xlu0 %1714
    %1716 = vrot.lane.b32.xlu0 %v944, 16
    %v1717 = vpop.permute.xlu0 %1716
    %1718 = vrot.lane.b32.xlu0 %v946, 16
    %v1719 = vpop.permute.xlu0 %1718
    %1720 = vrot.lane.b32.xlu0 %v948, 16
    %v1721 = vpop.permute.xlu0 %1720
    %1722 = vrot.lane.b32.xlu0 %v950, 16
    %v1723 = vpop.permute.xlu0 %1722
    %1724 = vrot.lane.b32.xlu0 %v952, 16
    %v1725 = vpop.permute.xlu0 %1724
    %1726 = vrot.lane.b32.xlu0 %v954, 16
    %v1727 = vpop.permute.xlu0 %1726
    %1728 = vrot.lane.b32.xlu0 %v956, 16
    %v1729 = vpop.permute.xlu0 %1728
    %1730 = vrot.lane.b32.xlu0 %v958, 16
    %v1731 = vpop.permute.xlu0 %1730
    %1732 = vrot.lane.b32.xlu0 %v960, 16
    %v1733 = vpop.permute.xlu0 %1732
    %1734 = vrot.lane.b32.xlu0 %v962, 16
    %v1735 = vpop.permute.xlu0 %1734
    %1736 = vrot.lane.b32.xlu0 %v964, 16
    %v1737 = vpop.permute.xlu0 %1736
    %1738 = vrot.lane.b32.xlu0 %v966, 16
    %v1739 = vpop.permute.xlu0 %1738
    %1740 = vrot.lane.b32.xlu0 %v968, 16
    %v1741 = vpop.permute.xlu0 %1740
    %1742 = vrot.lane.b32.xlu0 %v971, 16
    %v1743 = vpop.permute.xlu0 %1742
    %1808 = vrot.lane.b32.xlu0 %v975, 32
    %v1809 = vpop.permute.xlu0 %1808
    %1810 = vrot.lane.b32.xlu0 %v977, 32
    %v1811 = vpop.permute.xlu0 %1810
    %1812 = vrot.lane.b32.xlu0 %v979, 32
    %v1813 = vpop.permute.xlu0 %1812
    %1814 = vrot.lane.b32.xlu0 %v981, 32
    %v1815 = vpop.permute.xlu0 %1814
    %1816 = vrot.lane.b32.xlu0 %v983, 32
    %v1817 = vpop.permute.xlu0 %1816
    %1818 = vrot.lane.b32.xlu0 %v985, 32
    %v1819 = vpop.permute.xlu0 %1818
    %1820 = vrot.lane.b32.xlu0 %v987, 32
    %v1821 = vpop.permute.xlu0 %1820
    %1822 = vrot.lane.b32.xlu0 %v989, 32
    %v1823 = vpop.permute.xlu0 %1822
    %1824 = vrot.lane.b32.xlu0 %v991, 32
    %v1825 = vpop.permute.xlu0 %1824
    %1826 = vrot.lane.b32.xlu0 %v993, 32
    %v1827 = vpop.permute.xlu0 %1826
    %1828 = vrot.lane.b32.xlu0 %v995, 32
    %v1829 = vpop.permute.xlu0 %1828
    %1830 = vrot.lane.b32.xlu0 %v997, 32
    %v1831 = vpop.permute.xlu0 %1830
    %1832 = vrot.lane.b32.xlu0 %v999, 32
    %v1833 = vpop.permute.xlu0 %1832
    %1834 = vrot.lane.b32.xlu0 %v1001, 32
    %v1835 = vpop.permute.xlu0 %1834
    %1836 = vrot.lane.b32.xlu0 %v1003, 32
    %v1837 = vpop.permute.xlu0 %1836
    %1838 = vrot.lane.b32.xlu0 %v1005, 32
    %v1839 = vpop.permute.xlu0 %1838
    %1840 = vrot.lane.b32.xlu0 %v1007, 32
    %v1841 = vpop.permute.xlu0 %1840
    %1842 = vrot.lane.b32.xlu0 %v1009, 32
    %v1843 = vpop.permute.xlu0 %1842
    %1844 = vrot.lane.b32.xlu0 %v1011, 32
    %v1845 = vpop.permute.xlu0 %1844
    %1846 = vrot.lane.b32.xlu0 %v1013, 32
    %v1847 = vpop.permute.xlu0 %1846
    %1848 = vrot.lane.b32.xlu0 %v1015, 32
    %v1849 = vpop.permute.xlu0 %1848
    %1850 = vrot.lane.b32.xlu0 %v1017, 32
    %v1851 = vpop.permute.xlu0 %1850
    %1852 = vrot.lane.b32.xlu0 %v1019, 32
    %v1853 = vpop.permute.xlu0 %1852
    %1854 = vrot.lane.b32.xlu0 %v1021, 32
    %v1855 = vpop.permute.xlu0 %1854
    %1856 = vrot.lane.b32.xlu0 %v1023, 32
    %v1857 = vpop.permute.xlu0 %1856
    %1858 = vrot.lane.b32.xlu0 %v1025, 32
    %v1859 = vpop.permute.xlu0 %1858
    %1860 = vrot.lane.b32.xlu0 %v1027, 32
    %v1861 = vpop.permute.xlu0 %1860
    %1862 = vrot.lane.b32.xlu0 %v1029, 32
    %v1863 = vpop.permute.xlu0 %1862
    %1864 = vrot.lane.b32.xlu0 %v1031, 32
    %v1865 = vpop.permute.xlu0 %1864
    %1866 = vrot.lane.b32.xlu0 %v1033, 32
    %v1867 = vpop.permute.xlu0 %1866
    %1868 = vrot.lane.b32.xlu0 %v1035, 32
    %v1869 = vpop.permute.xlu0 %1868
    %1870 = vrot.lane.b32.xlu0 %v1037, 32
    %v1871 = vpop.permute.xlu0 %1870
    %1872 = vrot.lane.b32.xlu0 %v1039, 32
    %v1873 = vpop.permute.xlu0 %1872
    %1874 = vrot.lane.b32.xlu0 %v1041, 32
    %v1875 = vpop.permute.xlu0 %1874
    %1876 = vrot.lane.b32.xlu0 %v1043, 32
    %v1877 = vpop.permute.xlu0 %1876
    %1878 = vrot.lane.b32.xlu0 %v1045, 32
    %v1879 = vpop.permute.xlu0 %1878
    %1880 = vrot.lane.b32.xlu0 %v1047, 32
    %v1881 = vpop.permute.xlu0 %1880
    %1882 = vrot.lane.b32.xlu0 %v1049, 32
    %v1883 = vpop.permute.xlu0 %1882
    %1884 = vrot.lane.b32.xlu0 %v1051, 32
    %v1885 = vpop.permute.xlu0 %1884
    %1886 = vrot.lane.b32.xlu0 %v1053, 32
    %v1887 = vpop.permute.xlu0 %1886
    %1888 = vrot.lane.b32.xlu0 %v1055, 32
    %v1889 = vpop.permute.xlu0 %1888
    %1890 = vrot.lane.b32.xlu0 %v1057, 32
    %v1891 = vpop.permute.xlu0 %1890
    %1892 = vrot.lane.b32.xlu0 %v1059, 32
    %v1893 = vpop.permute.xlu0 %1892
    %1894 = vrot.lane.b32.xlu0 %v1061, 32
    %v1895 = vpop.permute.xlu0 %1894
    %1896 = vrot.lane.b32.xlu0 %v1063, 32
    %v1897 = vpop.permute.xlu0 %1896
    %1898 = vrot.lane.b32.xlu0 %v1065, 32
    %v1899 = vpop.permute.xlu0 %1898
    %1900 = vrot.lane.b32.xlu0 %v1067, 32
    %v1901 = vpop.permute.xlu0 %1900
    %1902 = vrot.lane.b32.xlu0 %v1069, 32
    %v1903 = vpop.permute.xlu0 %1902
    %1904 = vrot.lane.b32.xlu0 %v1071, 32
    %v1905 = vpop.permute.xlu0 %1904
    %1906 = vrot.lane.b32.xlu0 %v1073, 32
    %v1907 = vpop.permute.xlu0 %1906
    %1908 = vrot.lane.b32.xlu0 %v1075, 32
    %v1909 = vpop.permute.xlu0 %1908
    %1910 = vrot.lane.b32.xlu0 %v1077, 32
    %v1911 = vpop.permute.xlu0 %1910
    %1912 = vrot.lane.b32.xlu0 %v1079, 32
    %v1913 = vpop.permute.xlu0 %1912
    %1914 = vrot.lane.b32.xlu0 %v1081, 32
    %v1915 = vpop.permute.xlu0 %1914
    %1916 = vrot.lane.b32.xlu0 %v1083, 32
    %v1917 = vpop.permute.xlu0 %1916
    %1918 = vrot.lane.b32.xlu0 %v1085, 32
    %v1919 = vpop.permute.xlu0 %1918
    %1920 = vrot.lane.b32.xlu0 %v1087, 32
    %v1921 = vpop.permute.xlu0 %1920
    %1922 = vrot.lane.b32.xlu0 %v1089, 32
    %v1923 = vpop.permute.xlu0 %1922
    %1924 = vrot.lane.b32.xlu0 %v1091, 32
    %v1925 = vpop.permute.xlu0 %1924
    %1926 = vrot.lane.b32.xlu0 %v1093, 32
    %v1927 = vpop.permute.xlu0 %1926
    %1928 = vrot.lane.b32.xlu0 %v1095, 32
    %v1929 = vpop.permute.xlu0 %1928
    %1930 = vrot.lane.b32.xlu0 %v1097, 32
    %v1931 = vpop.permute.xlu0 %1930
    %1932 = vrot.lane.b32.xlu0 %v1100, 32
    %v1933 = vpop.permute.xlu0 %1932
    %1997 = vrot.lane.b32.xlu0 %v985, 48
    %v1998 = vpop.permute.xlu0 %1997
    %1999 = vrot.lane.b32.xlu0 %v987, 48
    %v2000 = vpop.permute.xlu0 %1999
    %2001 = vrot.lane.b32.xlu0 %v989, 48
    %v2002 = vpop.permute.xlu0 %2001
    %2003 = vrot.lane.b32.xlu0 %v991, 48
    %v2004 = vpop.permute.xlu0 %2003
    %2005 = vrot.lane.b32.xlu0 %v993, 48
    %v2006 = vpop.permute.xlu0 %2005
    %2007 = vrot.lane.b32.xlu0 %v995, 48
    %v2008 = vpop.permute.xlu0 %2007
    %2009 = vrot.lane.b32.xlu0 %v997, 48
    %v2010 = vpop.permute.xlu0 %2009
    %2011 = vrot.lane.b32.xlu0 %v999, 48
    %v2012 = vpop.permute.xlu0 %2011
    %2013 = vrot.lane.b32.xlu0 %v1001, 48
    %v2014 = vpop.permute.xlu0 %2013
    %2015 = vrot.lane.b32.xlu0 %v1003, 48
    %v2016 = vpop.permute.xlu0 %2015
    %2017 = vrot.lane.b32.xlu0 %v1005, 48
    %v2018 = vpop.permute.xlu0 %2017
    %2019 = vrot.lane.b32.xlu0 %v1007, 48
    %v2020 = vpop.permute.xlu0 %2019
    %2021 = vrot.lane.b32.xlu0 %v1009, 48
    %v2022 = vpop.permute.xlu0 %2021
    %2023 = vrot.lane.b32.xlu0 %v1011, 48
    %v2024 = vpop.permute.xlu0 %2023
    %2025 = vrot.lane.b32.xlu0 %v1013, 48
    %v2026 = vpop.permute.xlu0 %2025
    %2027 = vrot.lane.b32.xlu0 %v1015, 48
    %v2028 = vpop.permute.xlu0 %2027
    %2029 = vrot.lane.b32.xlu0 %v1017, 48
    %v2030 = vpop.permute.xlu0 %2029
    %2031 = vrot.lane.b32.xlu0 %v1019, 48
    %v2032 = vpop.permute.xlu0 %2031
    %2033 = vrot.lane.b32.xlu0 %v1021, 48
    %v2034 = vpop.permute.xlu0 %2033
    %2035 = vrot.lane.b32.xlu0 %v1023, 48
    %v2036 = vpop.permute.xlu0 %2035
    %2037 = vrot.lane.b32.xlu0 %v1025, 48
    %v2038 = vpop.permute.xlu0 %2037
    %2039 = vrot.lane.b32.xlu0 %v1027, 48
    %v2040 = vpop.permute.xlu0 %2039
    %2041 = vrot.lane.b32.xlu0 %v1029, 48
    %v2042 = vpop.permute.xlu0 %2041
    %2043 = vrot.lane.b32.xlu0 %v1031, 48
    %v2044 = vpop.permute.xlu0 %2043
    %2045 = vrot.lane.b32.xlu0 %v1033, 48
    %v2046 = vpop.permute.xlu0 %2045
    %2047 = vrot.lane.b32.xlu0 %v1035, 48
    %v2048 = vpop.permute.xlu0 %2047
    %2049 = vrot.lane.b32.xlu0 %v1037, 48
    %v2050 = vpop.permute.xlu0 %2049
    %2051 = vrot.lane.b32.xlu0 %v1039, 48
    %v2052 = vpop.permute.xlu0 %2051
    %2053 = vrot.lane.b32.xlu0 %v1041, 48
    %v2054 = vpop.permute.xlu0 %2053
    %2055 = vrot.lane.b32.xlu0 %v1043, 48
    %v2056 = vpop.permute.xlu0 %2055
    %2057 = vrot.lane.b32.xlu0 %v1045, 48
    %v2058 = vpop.permute.xlu0 %2057
    %2059 = vrot.lane.b32.xlu0 %v1047, 48
    %v2060 = vpop.permute.xlu0 %2059
    %2061 = vrot.lane.b32.xlu0 %v1049, 48
    %v2062 = vpop.permute.xlu0 %2061
    %2063 = vrot.lane.b32.xlu0 %v1051, 48
    %v2064 = vpop.permute.xlu0 %2063
    %2065 = vrot.lane.b32.xlu0 %v1053, 48
    %v2066 = vpop.permute.xlu0 %2065
    %2067 = vrot.lane.b32.xlu0 %v1055, 48
    %v2068 = vpop.permute.xlu0 %2067
    %2069 = vrot.lane.b32.xlu0 %v1057, 48
    %v2070 = vpop.permute.xlu0 %2069
    %2071 = vrot.lane.b32.xlu0 %v1059, 48
    %v2072 = vpop.permute.xlu0 %2071
    %2073 = vrot.lane.b32.xlu0 %v1061, 48
    %v2074 = vpop.permute.xlu0 %2073
    %2075 = vrot.lane.b32.xlu0 %v1063, 48
    %v2076 = vpop.permute.xlu0 %2075
    %2077 = vrot.lane.b32.xlu0 %v1065, 48
    %v2078 = vpop.permute.xlu0 %2077
    %2079 = vrot.lane.b32.xlu0 %v1067, 48
    %v2080 = vpop.permute.xlu0 %2079
    %2081 = vrot.lane.b32.xlu0 %v1069, 48
    %v2082 = vpop.permute.xlu0 %2081
    %2083 = vrot.lane.b32.xlu0 %v1071, 48
    %v2084 = vpop.permute.xlu0 %2083
    %2085 = vrot.lane.b32.xlu0 %v1073, 48
    %v2086 = vpop.permute.xlu0 %2085
    %2087 = vrot.lane.b32.xlu0 %v1075, 48
    %v2088 = vpop.permute.xlu0 %2087
    %2089 = vrot.lane.b32.xlu0 %v1077, 48
    %v2090 = vpop.permute.xlu0 %2089
    %2091 = vrot.lane.b32.xlu0 %v1079, 48
    %v2092 = vpop.permute.xlu0 %2091
    %2093 = vrot.lane.b32.xlu0 %v1081, 48
    %v2094 = vpop.permute.xlu0 %2093
    %2095 = vrot.lane.b32.xlu0 %v1083, 48
    %v2096 = vpop.permute.xlu0 %2095
    %2097 = vrot.lane.b32.xlu0 %v1085, 48
    %v2098 = vpop.permute.xlu0 %2097
    %2099 = vrot.lane.b32.xlu0 %v1087, 48
    %v2100 = vpop.permute.xlu0 %2099
    %2101 = vrot.lane.b32.xlu0 %v1089, 48
    %v2102 = vpop.permute.xlu0 %2101
    %2103 = vrot.lane.b32.xlu0 %v1091, 48
    %v2104 = vpop.permute.xlu0 %2103
    %2105 = vrot.lane.b32.xlu0 %v1093, 48
    %v2106 = vpop.permute.xlu0 %2105
    %2107 = vrot.lane.b32.xlu0 %v1095, 48
    %v2108 = vpop.permute.xlu0 %2107
    %2109 = vrot.lane.b32.xlu0 %v1097, 48
    %v2110 = vpop.permute.xlu0 %2109
    %2111 = vrot.lane.b32.xlu0 %v1100, 48
    %v2112 = vpop.permute.xlu0 %2111
    %2113 = vrot.lane.b32.xlu0 %v975, 48
    %v2114 = vpop.permute.xlu0 %2113
    %2115 = vrot.lane.b32.xlu0 %v977, 48
    %v2116 = vpop.permute.xlu0 %2115
    %2117 = vrot.lane.b32.xlu0 %v979, 48
    %v2118 = vpop.permute.xlu0 %2117
    %2119 = vrot.lane.b32.xlu0 %v981, 48
    %v2120 = vpop.permute.xlu0 %2119
    %2121 = vrot.lane.b32.xlu0 %v983, 48
    %v2122 = vpop.permute.xlu0 %2121
    %2187 = vrot.lane.b32.xlu0 %v1104, 64
    %v2188 = vpop.permute.xlu0 %2187
    %2189 = vrot.lane.b32.xlu0 %v1106, 64
    %v2190 = vpop.permute.xlu0 %2189
    %2191 = vrot.lane.b32.xlu0 %v1108, 64
    %v2192 = vpop.permute.xlu0 %2191
    %2193 = vrot.lane.b32.xlu0 %v1110, 64
    %v2194 = vpop.permute.xlu0 %2193
    %2195 = vrot.lane.b32.xlu0 %v1112, 64
    %v2196 = vpop.permute.xlu0 %2195
    %2197 = vrot.lane.b32.xlu0 %v1114, 64
    %v2198 = vpop.permute.xlu0 %2197
    %2199 = vrot.lane.b32.xlu0 %v1116, 64
    %v2200 = vpop.permute.xlu0 %2199
    %2201 = vrot.lane.b32.xlu0 %v1118, 64
    %v2202 = vpop.permute.xlu0 %2201
    %2203 = vrot.lane.b32.xlu0 %v1120, 64
    %v2204 = vpop.permute.xlu0 %2203
    %2205 = vrot.lane.b32.xlu0 %v1122, 64
    %v2206 = vpop.permute.xlu0 %2205
    %2207 = vrot.lane.b32.xlu0 %v1124, 64
    %v2208 = vpop.permute.xlu0 %2207
    %2209 = vrot.lane.b32.xlu0 %v1126, 64
    %v2210 = vpop.permute.xlu0 %2209
    %2211 = vrot.lane.b32.xlu0 %v1128, 64
    %v2212 = vpop.permute.xlu0 %2211
    %2213 = vrot.lane.b32.xlu0 %v1130, 64
    %v2214 = vpop.permute.xlu0 %2213
    %2215 = vrot.lane.b32.xlu0 %v1132, 64
    %v2216 = vpop.permute.xlu0 %2215
    %2217 = vrot.lane.b32.xlu0 %v1134, 64
    %v2218 = vpop.permute.xlu0 %2217
    %2219 = vrot.lane.b32.xlu0 %v1136, 64
    %v2220 = vpop.permute.xlu0 %2219
    %2221 = vrot.lane.b32.xlu0 %v1138, 64
    %v2222 = vpop.permute.xlu0 %2221
    %2223 = vrot.lane.b32.xlu0 %v1140, 64
    %v2224 = vpop.permute.xlu0 %2223
    %2225 = vrot.lane.b32.xlu0 %v1142, 64
    %v2226 = vpop.permute.xlu0 %2225
    %2227 = vrot.lane.b32.xlu0 %v1144, 64
    %v2228 = vpop.permute.xlu0 %2227
    %2229 = vrot.lane.b32.xlu0 %v1146, 64
    %v2230 = vpop.permute.xlu0 %2229
    %2231 = vrot.lane.b32.xlu0 %v1148, 64
    %v2232 = vpop.permute.xlu0 %2231
    %2233 = vrot.lane.b32.xlu0 %v1150, 64
    %v2234 = vpop.permute.xlu0 %2233
    %2235 = vrot.lane.b32.xlu0 %v1152, 64
    %v2236 = vpop.permute.xlu0 %2235
    %2237 = vrot.lane.b32.xlu0 %v1154, 64
    %v2238 = vpop.permute.xlu0 %2237
    %2239 = vrot.lane.b32.xlu0 %v1156, 64
    %v2240 = vpop.permute.xlu0 %2239
    %2241 = vrot.lane.b32.xlu0 %v1158, 64
    %v2242 = vpop.permute.xlu0 %2241
    %2243 = vrot.lane.b32.xlu0 %v1160, 64
    %v2244 = vpop.permute.xlu0 %2243
    %2245 = vrot.lane.b32.xlu0 %v1162, 64
    %v2246 = vpop.permute.xlu0 %2245
    %2247 = vrot.lane.b32.xlu0 %v1164, 64
    %v2248 = vpop.permute.xlu0 %2247
    %2249 = vrot.lane.b32.xlu0 %v1166, 64
    %v2250 = vpop.permute.xlu0 %2249
    %2251 = vrot.lane.b32.xlu0 %v1168, 64
    %v2252 = vpop.permute.xlu0 %2251
    %2253 = vrot.lane.b32.xlu0 %v1170, 64
    %v2254 = vpop.permute.xlu0 %2253
    %2255 = vrot.lane.b32.xlu0 %v1172, 64
    %v2256 = vpop.permute.xlu0 %2255
    %2257 = vrot.lane.b32.xlu0 %v1174, 64
    %v2258 = vpop.permute.xlu0 %2257
    %2259 = vrot.lane.b32.xlu0 %v1176, 64
    %v2260 = vpop.permute.xlu0 %2259
    %2261 = vrot.lane.b32.xlu0 %v1178, 64
    %v2262 = vpop.permute.xlu0 %2261
    %2263 = vrot.lane.b32.xlu0 %v1180, 64
    %v2264 = vpop.permute.xlu0 %2263
    %2265 = vrot.lane.b32.xlu0 %v1182, 64
    %v2266 = vpop.permute.xlu0 %2265
    %2267 = vrot.lane.b32.xlu0 %v1184, 64
    %v2268 = vpop.permute.xlu0 %2267
    %2269 = vrot.lane.b32.xlu0 %v1186, 64
    %v2270 = vpop.permute.xlu0 %2269
    %2271 = vrot.lane.b32.xlu0 %v1188, 64
    %v2272 = vpop.permute.xlu0 %2271
    %2273 = vrot.lane.b32.xlu0 %v1190, 64
    %v2274 = vpop.permute.xlu0 %2273
    %2275 = vrot.lane.b32.xlu0 %v1192, 64
    %v2276 = vpop.permute.xlu0 %2275
    %2277 = vrot.lane.b32.xlu0 %v1194, 64
    %v2278 = vpop.permute.xlu0 %2277
    %2279 = vrot.lane.b32.xlu0 %v1196, 64
    %v2280 = vpop.permute.xlu0 %2279
    %2281 = vrot.lane.b32.xlu0 %v1198, 64
    %v2282 = vpop.permute.xlu0 %2281
    %2283 = vrot.lane.b32.xlu0 %v1200, 64
    %v2284 = vpop.permute.xlu0 %2283
    %2285 = vrot.lane.b32.xlu0 %v1202, 64
    %v2286 = vpop.permute.xlu0 %2285
    %2287 = vrot.lane.b32.xlu0 %v1204, 64
    %v2288 = vpop.permute.xlu0 %2287
    %2289 = vrot.lane.b32.xlu0 %v1206, 64
    %v2290 = vpop.permute.xlu0 %2289
    %2291 = vrot.lane.b32.xlu0 %v1208, 64
    %v2292 = vpop.permute.xlu0 %2291
    %2293 = vrot.lane.b32.xlu0 %v1210, 64
    %v2294 = vpop.permute.xlu0 %2293
    %2295 = vrot.lane.b32.xlu0 %v1212, 64
    %v2296 = vpop.permute.xlu0 %2295
    %2297 = vrot.lane.b32.xlu0 %v1214, 64
    %v2298 = vpop.permute.xlu0 %2297
    %2299 = vrot.lane.b32.xlu0 %v1216, 64
    %v2300 = vpop.permute.xlu0 %2299
    %2301 = vrot.lane.b32.xlu0 %v1229, 64
    %v2302 = vpop.permute.xlu0 %2301
    %2303 = vrot.lane.b32.xlu0 %v1220, 64
    %v2304 = vpop.permute.xlu0 %2303
    %2305 = vrot.lane.b32.xlu0 %v1222, 64
    %v2306 = vpop.permute.xlu0 %2305
    %2307 = vrot.lane.b32.xlu0 %v1224, 64
    %v2308 = vpop.permute.xlu0 %2307
    %2309 = vrot.lane.b32.xlu0 %v1226, 64
    %v2310 = vpop.permute.xlu0 %2309
    %2311 = vrot.lane.b32.xlu0 %v1227, 64
    %v2312 = vpop.permute.xlu0 %2311
    %2377 = vrot.lane.b32.xlu0 %v1233, 80
    %v2378 = vpop.permute.xlu0 %2377
    %2379 = vrot.lane.b32.xlu0 %v1235, 80
    %v2380 = vpop.permute.xlu0 %2379
    %2381 = vrot.lane.b32.xlu0 %v1237, 80
    %v2382 = vpop.permute.xlu0 %2381
    %2383 = vrot.lane.b32.xlu0 %v1239, 80
    %v2384 = vpop.permute.xlu0 %2383
    %2385 = vrot.lane.b32.xlu0 %v1241, 80
    %v2386 = vpop.permute.xlu0 %2385
    %2387 = vrot.lane.b32.xlu0 %v1243, 80
    %v2388 = vpop.permute.xlu0 %2387
    %2389 = vrot.lane.b32.xlu0 %v1245, 80
    %v2390 = vpop.permute.xlu0 %2389
    %2391 = vrot.lane.b32.xlu0 %v1247, 80
    %v2392 = vpop.permute.xlu0 %2391
    %2393 = vrot.lane.b32.xlu0 %v1249, 80
    %v2394 = vpop.permute.xlu0 %2393
    %2395 = vrot.lane.b32.xlu0 %v1251, 80
    %v2396 = vpop.permute.xlu0 %2395
    %2397 = vrot.lane.b32.xlu0 %v1253, 80
    %v2398 = vpop.permute.xlu0 %2397
    %2399 = vrot.lane.b32.xlu0 %v1255, 80
    %v2400 = vpop.permute.xlu0 %2399
    %2401 = vrot.lane.b32.xlu0 %v1257, 80
    %v2402 = vpop.permute.xlu0 %2401
    %2403 = vrot.lane.b32.xlu0 %v1259, 80
    %v2404 = vpop.permute.xlu0 %2403
    %2405 = vrot.lane.b32.xlu0 %v1261, 80
    %v2406 = vpop.permute.xlu0 %2405
    %2407 = vrot.lane.b32.xlu0 %v1263, 80
    %v2408 = vpop.permute.xlu0 %2407
    %2409 = vrot.lane.b32.xlu0 %v1265, 80
    %v2410 = vpop.permute.xlu0 %2409
    %2411 = vrot.lane.b32.xlu0 %v1267, 80
    %v2412 = vpop.permute.xlu0 %2411
    %2413 = vrot.lane.b32.xlu0 %v1269, 80
    %v2414 = vpop.permute.xlu0 %2413
    %2415 = vrot.lane.b32.xlu0 %v1271, 80
    %v2416 = vpop.permute.xlu0 %2415
    %2417 = vrot.lane.b32.xlu0 %v1273, 80
    %v2418 = vpop.permute.xlu0 %2417
    %2419 = vrot.lane.b32.xlu0 %v1275, 80
    %v2420 = vpop.permute.xlu0 %2419
    %2421 = vrot.lane.b32.xlu0 %v1277, 80
    %v2422 = vpop.permute.xlu0 %2421
    %2423 = vrot.lane.b32.xlu0 %v1279, 80
    %v2424 = vpop.permute.xlu0 %2423
    %2425 = vrot.lane.b32.xlu0 %v1281, 80
    %v2426 = vpop.permute.xlu0 %2425
    %2427 = vrot.lane.b32.xlu0 %v1283, 80
    %v2428 = vpop.permute.xlu0 %2427
    %2429 = vrot.lane.b32.xlu0 %v1285, 80
    %v2430 = vpop.permute.xlu0 %2429
    %2431 = vrot.lane.b32.xlu0 %v1287, 80
    %v2432 = vpop.permute.xlu0 %2431
    %2433 = vrot.lane.b32.xlu0 %v1289, 80
    %v2434 = vpop.permute.xlu0 %2433
    %2435 = vrot.lane.b32.xlu0 %v1291, 80
    %v2436 = vpop.permute.xlu0 %2435
    %2437 = vrot.lane.b32.xlu0 %v1293, 80
    %v2438 = vpop.permute.xlu0 %2437
    %2439 = vrot.lane.b32.xlu0 %v1295, 80
    %v2440 = vpop.permute.xlu0 %2439
    %2441 = vrot.lane.b32.xlu0 %v1297, 80
    %v2442 = vpop.permute.xlu0 %2441
    %2443 = vrot.lane.b32.xlu0 %v1299, 80
    %v2444 = vpop.permute.xlu0 %2443
    %2445 = vrot.lane.b32.xlu0 %v1301, 80
    %v2446 = vpop.permute.xlu0 %2445
    %2447 = vrot.lane.b32.xlu0 %v1303, 80
    %v2448 = vpop.permute.xlu0 %2447
    %2449 = vrot.lane.b32.xlu0 %v1305, 80
    %v2450 = vpop.permute.xlu0 %2449
    %2451 = vrot.lane.b32.xlu0 %v1307, 80
    %v2452 = vpop.permute.xlu0 %2451
    %2453 = vrot.lane.b32.xlu0 %v1309, 80
    %v2454 = vpop.permute.xlu0 %2453
    %2455 = vrot.lane.b32.xlu0 %v1311, 80
    %v2456 = vpop.permute.xlu0 %2455
    %2457 = vrot.lane.b32.xlu0 %v1313, 80
    %v2458 = vpop.permute.xlu0 %2457
    %2459 = vrot.lane.b32.xlu0 %v1315, 80
    %v2460 = vpop.permute.xlu0 %2459
    %2461 = vrot.lane.b32.xlu0 %v1317, 80
    %v2462 = vpop.permute.xlu0 %2461
    %2463 = vrot.lane.b32.xlu0 %v1319, 80
    %v2464 = vpop.permute.xlu0 %2463
    %2465 = vrot.lane.b32.xlu0 %v1321, 80
    %v2466 = vpop.permute.xlu0 %2465
    %2467 = vrot.lane.b32.xlu0 %v1323, 80
    %v2468 = vpop.permute.xlu0 %2467
    %2469 = vrot.lane.b32.xlu0 %v1325, 80
    %v2470 = vpop.permute.xlu0 %2469
    %2471 = vrot.lane.b32.xlu0 %v1327, 80
    %v2472 = vpop.permute.xlu0 %2471
    %2473 = vrot.lane.b32.xlu0 %v1329, 80
    %v2474 = vpop.permute.xlu0 %2473
    %2475 = vrot.lane.b32.xlu0 %v1331, 80
    %v2476 = vpop.permute.xlu0 %2475
    %2477 = vrot.lane.b32.xlu0 %v1333, 80
    %v2478 = vpop.permute.xlu0 %2477
    %2479 = vrot.lane.b32.xlu0 %v1335, 80
    %v2480 = vpop.permute.xlu0 %2479
    %2481 = vrot.lane.b32.xlu0 %v1337, 80
    %v2482 = vpop.permute.xlu0 %2481
    %2483 = vrot.lane.b32.xlu0 %v1339, 80
    %v2484 = vpop.permute.xlu0 %2483
    %2485 = vrot.lane.b32.xlu0 %v1341, 80
    %v2486 = vpop.permute.xlu0 %2485
    %2487 = vrot.lane.b32.xlu0 %v1343, 80
    %v2488 = vpop.permute.xlu0 %2487
    %2489 = vrot.lane.b32.xlu0 %v1345, 80
    %v2490 = vpop.permute.xlu0 %2489
    %2491 = vrot.lane.b32.xlu0 %v1358, 80
    %v2492 = vpop.permute.xlu0 %2491
    %2493 = vrot.lane.b32.xlu0 %v1349, 80
    %v2494 = vpop.permute.xlu0 %2493
    %2495 = vrot.lane.b32.xlu0 %v1351, 80
    %v2496 = vpop.permute.xlu0 %2495
    %2497 = vrot.lane.b32.xlu0 %v1353, 80
    %v2498 = vpop.permute.xlu0 %2497
    %2499 = vrot.lane.b32.xlu0 %v1355, 80
    %v2500 = vpop.permute.xlu0 %2499
    %2501 = vrot.lane.b32.xlu0 %v1356, 80
    %v2502 = vpop.permute.xlu0 %2501
    %2566 = vrot.lane.b32.xlu0 %v1243, 96
    %v2567 = vpop.permute.xlu0 %2566
    %2568 = vrot.lane.b32.xlu0 %v1245, 96
    %v2569 = vpop.permute.xlu0 %2568
    %2570 = vrot.lane.b32.xlu0 %v1247, 96
    %v2571 = vpop.permute.xlu0 %2570
    %2572 = vrot.lane.b32.xlu0 %v1249, 96
    %v2573 = vpop.permute.xlu0 %2572
    %2574 = vrot.lane.b32.xlu0 %v1251, 96
    %v2575 = vpop.permute.xlu0 %2574
    %2576 = vrot.lane.b32.xlu0 %v1253, 96
    %v2577 = vpop.permute.xlu0 %2576
    %2578 = vrot.lane.b32.xlu0 %v1255, 96
    %v2579 = vpop.permute.xlu0 %2578
    %2580 = vrot.lane.b32.xlu0 %v1257, 96
    %v2581 = vpop.permute.xlu0 %2580
    %2582 = vrot.lane.b32.xlu0 %v1259, 96
    %v2583 = vpop.permute.xlu0 %2582
    %2584 = vrot.lane.b32.xlu0 %v1261, 96
    %v2585 = vpop.permute.xlu0 %2584
    %2586 = vrot.lane.b32.xlu0 %v1263, 96
    %v2587 = vpop.permute.xlu0 %2586
    %2588 = vrot.lane.b32.xlu0 %v1265, 96
    %v2589 = vpop.permute.xlu0 %2588
    %2590 = vrot.lane.b32.xlu0 %v1267, 96
    %v2591 = vpop.permute.xlu0 %2590
    %2592 = vrot.lane.b32.xlu0 %v1269, 96
    %v2593 = vpop.permute.xlu0 %2592
    %2594 = vrot.lane.b32.xlu0 %v1271, 96
    %v2595 = vpop.permute.xlu0 %2594
    %2596 = vrot.lane.b32.xlu0 %v1273, 96
    %v2597 = vpop.permute.xlu0 %2596
    %2598 = vrot.lane.b32.xlu0 %v1275, 96
    %v2599 = vpop.permute.xlu0 %2598
    %2600 = vrot.lane.b32.xlu0 %v1277, 96
    %v2601 = vpop.permute.xlu0 %2600
    %2602 = vrot.lane.b32.xlu0 %v1279, 96
    %v2603 = vpop.permute.xlu0 %2602
    %2604 = vrot.lane.b32.xlu0 %v1281, 96
    %v2605 = vpop.permute.xlu0 %2604
    %2606 = vrot.lane.b32.xlu0 %v1283, 96
    %v2607 = vpop.permute.xlu0 %2606
    %2608 = vrot.lane.b32.xlu0 %v1285, 96
    %v2609 = vpop.permute.xlu0 %2608
    %2610 = vrot.lane.b32.xlu0 %v1287, 96
    %v2611 = vpop.permute.xlu0 %2610
    %2612 = vrot.lane.b32.xlu0 %v1289, 96
    %v2613 = vpop.permute.xlu0 %2612
    %2614 = vrot.lane.b32.xlu0 %v1291, 96
    %v2615 = vpop.permute.xlu0 %2614
    %2616 = vrot.lane.b32.xlu0 %v1293, 96
    %v2617 = vpop.permute.xlu0 %2616
    %2618 = vrot.lane.b32.xlu0 %v1295, 96
    %v2619 = vpop.permute.xlu0 %2618
    %2620 = vrot.lane.b32.xlu0 %v1297, 96
    %v2621 = vpop.permute.xlu0 %2620
    %2622 = vrot.lane.b32.xlu0 %v1299, 96
    %v2623 = vpop.permute.xlu0 %2622
    %2624 = vrot.lane.b32.xlu0 %v1301, 96
    %v2625 = vpop.permute.xlu0 %2624
    %2626 = vrot.lane.b32.xlu0 %v1303, 96
    %v2627 = vpop.permute.xlu0 %2626
    %2628 = vrot.lane.b32.xlu0 %v1305, 96
    %v2629 = vpop.permute.xlu0 %2628
    %2630 = vrot.lane.b32.xlu0 %v1307, 96
    %v2631 = vpop.permute.xlu0 %2630
    %2632 = vrot.lane.b32.xlu0 %v1309, 96
    %v2633 = vpop.permute.xlu0 %2632
    %2634 = vrot.lane.b32.xlu0 %v1311, 96
    %v2635 = vpop.permute.xlu0 %2634
    %2636 = vrot.lane.b32.xlu0 %v1313, 96
    %v2637 = vpop.permute.xlu0 %2636
    %2638 = vrot.lane.b32.xlu0 %v1315, 96
    %v2639 = vpop.permute.xlu0 %2638
    %2640 = vrot.lane.b32.xlu0 %v1317, 96
    %v2641 = vpop.permute.xlu0 %2640
    %2642 = vrot.lane.b32.xlu0 %v1319, 96
    %v2643 = vpop.permute.xlu0 %2642
    %2644 = vrot.lane.b32.xlu0 %v1321, 96
    %v2645 = vpop.permute.xlu0 %2644
    %2646 = vrot.lane.b32.xlu0 %v1323, 96
    %v2647 = vpop.permute.xlu0 %2646
    %2648 = vrot.lane.b32.xlu0 %v1325, 96
    %v2649 = vpop.permute.xlu0 %2648
    %2650 = vrot.lane.b32.xlu0 %v1327, 96
    %v2651 = vpop.permute.xlu0 %2650
    %2652 = vrot.lane.b32.xlu0 %v1329, 96
    %v2653 = vpop.permute.xlu0 %2652
    %2654 = vrot.lane.b32.xlu0 %v1331, 96
    %v2655 = vpop.permute.xlu0 %2654
    %2656 = vrot.lane.b32.xlu0 %v1333, 96
    %v2657 = vpop.permute.xlu0 %2656
    %2658 = vrot.lane.b32.xlu0 %v1335, 96
    %v2659 = vpop.permute.xlu0 %2658
    %2660 = vrot.lane.b32.xlu0 %v1337, 96
    %v2661 = vpop.permute.xlu0 %2660
    %2662 = vrot.lane.b32.xlu0 %v1339, 96
    %v2663 = vpop.permute.xlu0 %2662
    %2664 = vrot.lane.b32.xlu0 %v1341, 96
    %v2665 = vpop.permute.xlu0 %2664
    %2666 = vrot.lane.b32.xlu0 %v1343, 96
    %v2667 = vpop.permute.xlu0 %2666
    %2668 = vrot.lane.b32.xlu0 %v1345, 96
    %v2669 = vpop.permute.xlu0 %2668
    %2670 = vrot.lane.b32.xlu0 %v1358, 96
    %v2671 = vpop.permute.xlu0 %2670
    %2672 = vrot.lane.b32.xlu0 %v1349, 96
    %v2673 = vpop.permute.xlu0 %2672
    %2674 = vrot.lane.b32.xlu0 %v1351, 96
    %v2675 = vpop.permute.xlu0 %2674
    %2676 = vrot.lane.b32.xlu0 %v1353, 96
    %v2677 = vpop.permute.xlu0 %2676
    %2678 = vrot.lane.b32.xlu0 %v1355, 96
    %v2679 = vpop.permute.xlu0 %2678
    %2680 = vrot.lane.b32.xlu0 %v1356, 96
    %v2681 = vpop.permute.xlu0 %2680
    %2682 = vrot.lane.b32.xlu0 %v1233, 96
    %v2683 = vpop.permute.xlu0 %2682
    %2684 = vrot.lane.b32.xlu0 %v1235, 96
    %v2685 = vpop.permute.xlu0 %2684
    %2686 = vrot.lane.b32.xlu0 %v1237, 96
    %v2687 = vpop.permute.xlu0 %2686
    %2688 = vrot.lane.b32.xlu0 %v1239, 96
    %v2689 = vpop.permute.xlu0 %2688
    %2690 = vrot.lane.b32.xlu0 %v1241, 96
    %v2691 = vpop.permute.xlu0 %2690
    %2756 = vrot.lane.b32.xlu0 %v1362, 112
    %v2757 = vpop.permute.xlu0 %2756
    %2758 = vrot.lane.b32.xlu0 %v1364, 112
    %v2759 = vpop.permute.xlu0 %2758
    %2760 = vrot.lane.b32.xlu0 %v1366, 112
    %v2761 = vpop.permute.xlu0 %2760
    %2762 = vrot.lane.b32.xlu0 %v1368, 112
    %v2763 = vpop.permute.xlu0 %2762
    %2764 = vrot.lane.b32.xlu0 %v1370, 112
    %v2765 = vpop.permute.xlu0 %2764
    %2766 = vrot.lane.b32.xlu0 %v1372, 112
    %v2767 = vpop.permute.xlu0 %2766
    %2768 = vrot.lane.b32.xlu0 %v1374, 112
    %v2769 = vpop.permute.xlu0 %2768
    %2770 = vrot.lane.b32.xlu0 %v1376, 112
    %v2771 = vpop.permute.xlu0 %2770
    %2772 = vrot.lane.b32.xlu0 %v1378, 112
    %v2773 = vpop.permute.xlu0 %2772
    %2774 = vrot.lane.b32.xlu0 %v1380, 112
    %v2775 = vpop.permute.xlu0 %2774
    %2776 = vrot.lane.b32.xlu0 %v1382, 112
    %v2777 = vpop.permute.xlu0 %2776
    %2778 = vrot.lane.b32.xlu0 %v1384, 112
    %v2779 = vpop.permute.xlu0 %2778
    %2780 = vrot.lane.b32.xlu0 %v1386, 112
    %v2781 = vpop.permute.xlu0 %2780
    %2782 = vrot.lane.b32.xlu0 %v1388, 112
    %v2783 = vpop.permute.xlu0 %2782
    %2784 = vrot.lane.b32.xlu0 %v1390, 112
    %v2785 = vpop.permute.xlu0 %2784
    %2786 = vrot.lane.b32.xlu0 %v1392, 112
    %v2787 = vpop.permute.xlu0 %2786
    %2788 = vrot.lane.b32.xlu0 %v1394, 112
    %v2789 = vpop.permute.xlu0 %2788
    %2790 = vrot.lane.b32.xlu0 %v1396, 112
    %v2791 = vpop.permute.xlu0 %2790
    %2792 = vrot.lane.b32.xlu0 %v1398, 112
    %v2793 = vpop.permute.xlu0 %2792
    %2794 = vrot.lane.b32.xlu0 %v1400, 112
    %v2795 = vpop.permute.xlu0 %2794
    %2796 = vrot.lane.b32.xlu0 %v1402, 112
    %v2797 = vpop.permute.xlu0 %2796
    %2798 = vrot.lane.b32.xlu0 %v1404, 112
    %v2799 = vpop.permute.xlu0 %2798
    %2800 = vrot.lane.b32.xlu0 %v1406, 112
    %v2801 = vpop.permute.xlu0 %2800
    %2802 = vrot.lane.b32.xlu0 %v1408, 112
    %v2803 = vpop.permute.xlu0 %2802
    %2804 = vrot.lane.b32.xlu0 %v1410, 112
    %v2805 = vpop.permute.xlu0 %2804
    %2806 = vrot.lane.b32.xlu0 %v1412, 112
    %v2807 = vpop.permute.xlu0 %2806
    %2808 = vrot.lane.b32.xlu0 %v1414, 112
    %v2809 = vpop.permute.xlu0 %2808
    %2810 = vrot.lane.b32.xlu0 %v1416, 112
    %v2811 = vpop.permute.xlu0 %2810
    %2812 = vrot.lane.b32.xlu0 %v1418, 112
    %v2813 = vpop.permute.xlu0 %2812
    %2814 = vrot.lane.b32.xlu0 %v1420, 112
    %v2815 = vpop.permute.xlu0 %2814
    %2816 = vrot.lane.b32.xlu0 %v1422, 112
    %v2817 = vpop.permute.xlu0 %2816
    %2818 = vrot.lane.b32.xlu0 %v1424, 112
    %v2819 = vpop.permute.xlu0 %2818
    %2820 = vrot.lane.b32.xlu0 %v1426, 112
    %v2821 = vpop.permute.xlu0 %2820
    %2822 = vrot.lane.b32.xlu0 %v1428, 112
    %v2823 = vpop.permute.xlu0 %2822
    %2824 = vrot.lane.b32.xlu0 %v1430, 112
    %v2825 = vpop.permute.xlu0 %2824
    %2826 = vrot.lane.b32.xlu0 %v1432, 112
    %v2827 = vpop.permute.xlu0 %2826
    %2828 = vrot.lane.b32.xlu0 %v1434, 112
    %v2829 = vpop.permute.xlu0 %2828
    %2830 = vrot.lane.b32.xlu0 %v1436, 112
    %v2831 = vpop.permute.xlu0 %2830
    %2832 = vrot.lane.b32.xlu0 %v1438, 112
    %v2833 = vpop.permute.xlu0 %2832
    %2834 = vrot.lane.b32.xlu0 %v1440, 112
    %v2835 = vpop.permute.xlu0 %2834
    %2836 = vrot.lane.b32.xlu0 %v1442, 112
    %v2837 = vpop.permute.xlu0 %2836
    %2838 = vrot.lane.b32.xlu0 %v1444, 112
    %v2839 = vpop.permute.xlu0 %2838
    %2840 = vrot.lane.b32.xlu0 %v1446, 112
    %v2841 = vpop.permute.xlu0 %2840
    %2842 = vrot.lane.b32.xlu0 %v1448, 112
    %v2843 = vpop.permute.xlu0 %2842
    %2844 = vrot.lane.b32.xlu0 %v1450, 112
    %v2845 = vpop.permute.xlu0 %2844
    %2846 = vrot.lane.b32.xlu0 %v1452, 112
    %v2847 = vpop.permute.xlu0 %2846
    %2848 = vrot.lane.b32.xlu0 %v1454, 112
    %v2849 = vpop.permute.xlu0 %2848
    %2850 = vrot.lane.b32.xlu0 %v1456, 112
    %v2851 = vpop.permute.xlu0 %2850
    %2852 = vrot.lane.b32.xlu0 %v1458, 112
    %v2853 = vpop.permute.xlu0 %2852
    %2854 = vrot.lane.b32.xlu0 %v1460, 112
    %v2855 = vpop.permute.xlu0 %2854
    %2856 = vrot.lane.b32.xlu0 %v1462, 112
    %v2857 = vpop.permute.xlu0 %2856
    %2858 = vrot.lane.b32.xlu0 %v1464, 112
    %v2859 = vpop.permute.xlu0 %2858
    %2860 = vrot.lane.b32.xlu0 %v1487, 112
    %v2861 = vpop.permute.xlu0 %2860
    %2862 = vrot.lane.b32.xlu0 %v1468, 112
    %v2863 = vpop.permute.xlu0 %2862
    %2864 = vrot.lane.b32.xlu0 %v1470, 112
    %v2865 = vpop.permute.xlu0 %2864
    %2866 = vrot.lane.b32.xlu0 %v1472, 112
    %v2867 = vpop.permute.xlu0 %2866
    %2868 = vrot.lane.b32.xlu0 %v1474, 112
    %v2869 = vpop.permute.xlu0 %2868
    %2870 = vrot.lane.b32.xlu0 %v1476, 112
    %v2871 = vpop.permute.xlu0 %2870
    %2872 = vrot.lane.b32.xlu0 %v1478, 112
    %v2873 = vpop.permute.xlu0 %2872
    %2874 = vrot.lane.b32.xlu0 %v1480, 112
    %v2875 = vpop.permute.xlu0 %2874
    %2876 = vrot.lane.b32.xlu0 %v1482, 112
    %v2877 = vpop.permute.xlu0 %2876
    %2878 = vrot.lane.b32.xlu0 %v1484, 112
    %v2879 = vpop.permute.xlu0 %2878
    %2880 = vrot.lane.b32.xlu0 %v1485, 112
    %v2881 = vpop.permute.xlu0 %2880
    %vm2945 = vcmask 130048
    %v2946 = vsel %vm2945, %v699, %v1619
    %v2947 = vsel %vm2945, %v700, %v1621
    %v2948 = vsel %vm2945, %v701, %v1623
    %v2949 = vsel %vm2945, %v702, %v1625
    %v2950 = vsel %vm2945, %v703, %v1627
    %v2951 = vsel %vm2945, %v704, %v1629
    %v2952 = vsel %vm2945, %v705, %v1631
    %v2953 = vsel %vm2945, %v706, %v1633
    %v2954 = vsel %vm2945, %v707, %v1635
    %v2955 = vsel %vm2945, %v708, %v1637
    %v2956 = vsel %vm2945, %v709, %v1639
    %v2957 = vsel %vm2945, %v710, %v1641
    %v2958 = vsel %vm2945, %v711, %v1643
    %v2959 = vsel %vm2945, %v712, %v1645
    %v2960 = vsel %vm2945, %v713, %v1647
    %v2961 = vsel %vm2945, %v714, %v1649
    %v2962 = vsel %vm2945, %v715, %v1651
    %v2963 = vsel %vm2945, %v716, %v1653
    %v2964 = vsel %vm2945, %v717, %v1655
    %v2965 = vsel %vm2945, %v718, %v1657
    %v2966 = vsel %vm2945, %v719, %v1659
    %v2967 = vsel %vm2945, %v720, %v1661
    %v2968 = vsel %vm2945, %v721, %v1663
    %v2969 = vsel %vm2945, %v722, %v1665
    %v2970 = vsel %vm2945, %v723, %v1667
    %v2971 = vsel %vm2945, %v724, %v1669
    %v2972 = vsel %vm2945, %v725, %v1671
    %v2973 = vsel %vm2945, %v726, %v1673
    %v2974 = vsel %vm2945, %v727, %v1675
    %v2975 = vsel %vm2945, %v728, %v1677
    %v2976 = vsel %vm2945, %v729, %v1679
    %v2977 = vsel %vm2945, %v730, %v1681
    %v2978 = vsel %vm2945, %v731, %v1683
    %v2979 = vsel %vm2945, %v732, %v1685
    %v2980 = vsel %vm2945, %v733, %v1687
    %v2981 = vsel %vm2945, %v734, %v1689
    %v2982 = vsel %vm2945, %v735, %v1691
    %v2983 = vsel %vm2945, %v736, %v1693
    %v2984 = vsel %vm2945, %v737, %v1695
    %v2985 = vsel %vm2945, %v738, %v1697
    %v2986 = vsel %vm2945, %v739, %v1699
    %v2987 = vsel %vm2945, %v740, %v1701
    %v2988 = vsel %vm2945, %v741, %v1703
    %v2989 = vsel %vm2945, %v742, %v1705
    %v2990 = vsel %vm2945, %v743, %v1707
    %v2991 = vsel %vm2945, %v744, %v1709
    %v2992 = vsel %vm2945, %v745, %v1711
    %v2993 = vsel %vm2945, %v746, %v1713
    %v2994 = vsel %vm2945, %v747, %v1715
    %v2995 = vsel %vm2945, %v748, %v1717
    %v2996 = vsel %vm2945, %v749, %v1719
    %v2997 = vsel %vm2945, %v750, %v1721
    %v2998 = vsel %vm2945, %v751, %v1723
    %v2999 = vsel %vm2945, %v752, %v1725
    %v3000 = vsel %vm2945, %v753, %v1727
    %v3001 = vsel %vm2945, %v754, %v1729
    %v3002 = vsel %vm2945, %v755, %v1731
    %v3003 = vsel %vm2945, %v756, %v1733
    %v3004 = vsel %vm2945, %v757, %v1735
    %v3005 = vsel %vm2945, %v758, %v1737
    %v3006 = vsel %vm2945, %v759, %v1739
    %v3007 = vsel %vm2945, %v760, %v1741
    %v3008 = vsel %vm2945, %v761, %v1743
    %vm3009 = vcmask 261120
    %v3010 = vsel %vm3009, %v2946, %v1809
    %v3011 = vsel %vm3009, %v2947, %v1811
    %v3012 = vsel %vm3009, %v2948, %v1813
    %v3013 = vsel %vm3009, %v2949, %v1815
    %v3014 = vsel %vm3009, %v2950, %v1817
    %v3015 = vsel %vm3009, %v2951, %v1819
    %v3016 = vsel %vm3009, %v2952, %v1821
    %v3017 = vsel %vm3009, %v2953, %v1823
    %v3018 = vsel %vm3009, %v2954, %v1825
    %v3019 = vsel %vm3009, %v2955, %v1827
    %v3020 = vsel %vm3009, %v2956, %v1829
    %v3021 = vsel %vm3009, %v2957, %v1831
    %v3022 = vsel %vm3009, %v2958, %v1833
    %v3023 = vsel %vm3009, %v2959, %v1835
    %v3024 = vsel %vm3009, %v2960, %v1837
    %v3025 = vsel %vm3009, %v2961, %v1839
    %v3026 = vsel %vm3009, %v2962, %v1841
    %v3027 = vsel %vm3009, %v2963, %v1843
    %v3028 = vsel %vm3009, %v2964, %v1845
    %v3029 = vsel %vm3009, %v2965, %v1847
    %v3030 = vsel %vm3009, %v2966, %v1849
    %v3031 = vsel %vm3009, %v2967, %v1851
    %v3032 = vsel %vm3009, %v2968, %v1853
    %v3033 = vsel %vm3009, %v2969, %v1855
    %v3034 = vsel %vm3009, %v2970, %v1857
    %v3035 = vsel %vm3009, %v2971, %v1859
    %v3036 = vsel %vm3009, %v2972, %v1861
    %v3037 = vsel %vm3009, %v2973, %v1863
    %v3038 = vsel %vm3009, %v2974, %v1865
    %v3039 = vsel %vm3009, %v2975, %v1867
    %v3040 = vsel %vm3009, %v2976, %v1869
    %v3041 = vsel %vm3009, %v2977, %v1871
    %v3042 = vsel %vm3009, %v2978, %v1873
    %v3043 = vsel %vm3009, %v2979, %v1875
    %v3044 = vsel %vm3009, %v2980, %v1877
    %v3045 = vsel %vm3009, %v2981, %v1879
    %v3046 = vsel %vm3009, %v2982, %v1881
    %v3047 = vsel %vm3009, %v2983, %v1883
    %v3048 = vsel %vm3009, %v2984, %v1885
    %v3049 = vsel %vm3009, %v2985, %v1887
    %v3050 = vsel %vm3009, %v2986, %v1889
    %v3051 = vsel %vm3009, %v2987, %v1891
    %v3052 = vsel %vm3009, %v2988, %v1893
    %v3053 = vsel %vm3009, %v2989, %v1895
    %v3054 = vsel %vm3009, %v2990, %v1897
    %v3055 = vsel %vm3009, %v2991, %v1899
    %v3056 = vsel %vm3009, %v2992, %v1901
    %v3057 = vsel %vm3009, %v2993, %v1903
    %v3058 = vsel %vm3009, %v2994, %v1905
    %v3059 = vsel %vm3009, %v2995, %v1907
    %v3060 = vsel %vm3009, %v2996, %v1909
    %v3061 = vsel %vm3009, %v2997, %v1911
    %v3062 = vsel %vm3009, %v2998, %v1913
    %v3063 = vsel %vm3009, %v2999, %v1915
    %v3064 = vsel %vm3009, %v3000, %v1917
    %v3065 = vsel %vm3009, %v3001, %v1919
    %v3066 = vsel %vm3009, %v3002, %v1921
    %v3067 = vsel %vm3009, %v3003, %v1923
    %v3068 = vsel %vm3009, %v3004, %v1925
    %v3069 = vsel %vm3009, %v3005, %v1927
    %v3070 = vsel %vm3009, %v3006, %v1929
    %v3071 = vsel %vm3009, %v3007, %v1931
    %v3072 = vsel %vm3009, %v3008, %v1933
    %vm3073 = vcmask 392192
    %v3074 = vsel %vm3073, %v3010, %v1998
    %v3075 = vsel %vm3073, %v3011, %v2000
    %v3076 = vsel %vm3073, %v3012, %v2002
    %v3077 = vsel %vm3073, %v3013, %v2004
    %v3078 = vsel %vm3073, %v3014, %v2006
    %v3079 = vsel %vm3073, %v3015, %v2008
    %v3080 = vsel %vm3073, %v3016, %v2010
    %v3081 = vsel %vm3073, %v3017, %v2012
    %v3082 = vsel %vm3073, %v3018, %v2014
    %v3083 = vsel %vm3073, %v3019, %v2016
    %v3084 = vsel %vm3073, %v3020, %v2018
    %v3085 = vsel %vm3073, %v3021, %v2020
    %v3086 = vsel %vm3073, %v3022, %v2022
    %v3087 = vsel %vm3073, %v3023, %v2024
    %v3088 = vsel %vm3073, %v3024, %v2026
    %v3089 = vsel %vm3073, %v3025, %v2028
    %v3090 = vsel %vm3073, %v3026, %v2030
    %v3091 = vsel %vm3073, %v3027, %v2032
    %v3092 = vsel %vm3073, %v3028, %v2034
    %v3093 = vsel %vm3073, %v3029, %v2036
    %v3094 = vsel %vm3073, %v3030, %v2038
    %v3095 = vsel %vm3073, %v3031, %v2040
    %v3096 = vsel %vm3073, %v3032, %v2042
    %v3097 = vsel %vm3073, %v3033, %v2044
    %v3098 = vsel %vm3073, %v3034, %v2046
    %v3099 = vsel %vm3073, %v3035, %v2048
    %v3100 = vsel %vm3073, %v3036, %v2050
    %v3101 = vsel %vm3073, %v3037, %v2052
    %v3102 = vsel %vm3073, %v3038, %v2054
    %v3103 = vsel %vm3073, %v3039, %v2056
    %v3104 = vsel %vm3073, %v3040, %v2058
    %v3105 = vsel %vm3073, %v3041, %v2060
    %v3106 = vsel %vm3073, %v3042, %v2062
    %v3107 = vsel %vm3073, %v3043, %v2064
    %v3108 = vsel %vm3073, %v3044, %v2066
    %v3109 = vsel %vm3073, %v3045, %v2068
    %v3110 = vsel %vm3073, %v3046, %v2070
    %v3111 = vsel %vm3073, %v3047, %v2072
    %v3112 = vsel %vm3073, %v3048, %v2074
    %v3113 = vsel %vm3073, %v3049, %v2076
    %v3114 = vsel %vm3073, %v3050, %v2078
    %v3115 = vsel %vm3073, %v3051, %v2080
    %v3116 = vsel %vm3073, %v3052, %v2082
    %v3117 = vsel %vm3073, %v3053, %v2084
    %v3118 = vsel %vm3073, %v3054, %v2086
    %v3119 = vsel %vm3073, %v3055, %v2088
    %v3120 = vsel %vm3073, %v3056, %v2090
    %v3121 = vsel %vm3073, %v3057, %v2092
    %v3122 = vsel %vm3073, %v3058, %v2094
    %v3123 = vsel %vm3073, %v3059, %v2096
    %v3124 = vsel %vm3073, %v3060, %v2098
    %v3125 = vsel %vm3073, %v3061, %v2100
    %v3126 = vsel %vm3073, %v3062, %v2102
    %v3127 = vsel %vm3073, %v3063, %v2104
    %v3128 = vsel %vm3073, %v3064, %v2106
    %v3129 = vsel %vm3073, %v3065, %v2108
    %v3130 = vsel %vm3073, %v3066, %v2110
    %v3131 = vsel %vm3073, %v3067, %v2112
    %v3132 = vsel %vm3073, %v3068, %v2114
    %v3133 = vsel %vm3073, %v3069, %v2116
    %v3134 = vsel %vm3073, %v3070, %v2118
    %v3135 = vsel %vm3073, %v3071, %v2120
    %v3136 = vsel %vm3073, %v3072, %v2122
    %vm3137 = vcmask 523264
    %v3138 = vsel %vm3137, %v3074, %v2188
    %v3139 = vsel %vm3137, %v3075, %v2190
    %v3140 = vsel %vm3137, %v3076, %v2192
    %v3141 = vsel %vm3137, %v3077, %v2194
    %v3142 = vsel %vm3137, %v3078, %v2196
    %v3143 = vsel %vm3137, %v3079, %v2198
    %v3144 = vsel %vm3137, %v3080, %v2200
    %v3145 = vsel %vm3137, %v3081, %v2202
    %v3146 = vsel %vm3137, %v3082, %v2204
    %v3147 = vsel %vm3137, %v3083, %v2206
    %v3148 = vsel %vm3137, %v3084, %v2208
    %v3149 = vsel %vm3137, %v3085, %v2210
    %v3150 = vsel %vm3137, %v3086, %v2212
    %v3151 = vsel %vm3137, %v3087, %v2214
    %v3152 = vsel %vm3137, %v3088, %v2216
    %v3153 = vsel %vm3137, %v3089, %v2218
    %v3154 = vsel %vm3137, %v3090, %v2220
    %v3155 = vsel %vm3137, %v3091, %v2222
    %v3156 = vsel %vm3137, %v3092, %v2224
    %v3157 = vsel %vm3137, %v3093, %v2226
    %v3158 = vsel %vm3137, %v3094, %v2228
    %v3159 = vsel %vm3137, %v3095, %v2230
    %v3160 = vsel %vm3137, %v3096, %v2232
    %v3161 = vsel %vm3137, %v3097, %v2234
    %v3162 = vsel %vm3137, %v3098, %v2236
    %v3163 = vsel %vm3137, %v3099, %v2238
    %v3164 = vsel %vm3137, %v3100, %v2240
    %v3165 = vsel %vm3137, %v3101, %v2242
    %v3166 = vsel %vm3137, %v3102, %v2244
    %v3167 = vsel %vm3137, %v3103, %v2246
    %v3168 = vsel %vm3137, %v3104, %v2248
    %v3169 = vsel %vm3137, %v3105, %v2250
    %v3170 = vsel %vm3137, %v3106, %v2252
    %v3171 = vsel %vm3137, %v3107, %v2254
    %v3172 = vsel %vm3137, %v3108, %v2256
    %v3173 = vsel %vm3137, %v3109, %v2258
    %v3174 = vsel %vm3137, %v3110, %v2260
    %v3175 = vsel %vm3137, %v3111, %v2262
    %v3176 = vsel %vm3137, %v3112, %v2264
    %v3177 = vsel %vm3137, %v3113, %v2266
    %v3178 = vsel %vm3137, %v3114, %v2268
    %v3179 = vsel %vm3137, %v3115, %v2270
    %v3180 = vsel %vm3137, %v3116, %v2272
    %v3181 = vsel %vm3137, %v3117, %v2274
    %v3182 = vsel %vm3137, %v3118, %v2276
    %v3183 = vsel %vm3137, %v3119, %v2278
    %v3184 = vsel %vm3137, %v3120, %v2280
    %v3185 = vsel %vm3137, %v3121, %v2282
    %v3186 = vsel %vm3137, %v3122, %v2284
    %v3187 = vsel %vm3137, %v3123, %v2286
    %v3188 = vsel %vm3137, %v3124, %v2288
    %v3189 = vsel %vm3137, %v3125, %v2290
    %v3190 = vsel %vm3137, %v3126, %v2292
    %v3191 = vsel %vm3137, %v3127, %v2294
    %v3192 = vsel %vm3137, %v3128, %v2296
    %v3193 = vsel %vm3137, %v3129, %v2298
    %v3194 = vsel %vm3137, %v3130, %v2300
    %v3195 = vsel %vm3137, %v3131, %v2302
    %v3196 = vsel %vm3137, %v3132, %v2304
    %v3197 = vsel %vm3137, %v3133, %v2306
    %v3198 = vsel %vm3137, %v3134, %v2308
    %v3199 = vsel %vm3137, %v3135, %v2310
    %v3200 = vsel %vm3137, %v3136, %v2312
    %vm3201 = vcmask 654336
    %v3202 = vsel %vm3201, %v3138, %v2378
    %v3203 = vsel %vm3201, %v3139, %v2380
    %v3204 = vsel %vm3201, %v3140, %v2382
    %v3205 = vsel %vm3201, %v3141, %v2384
    %v3206 = vsel %vm3201, %v3142, %v2386
    %v3207 = vsel %vm3201, %v3143, %v2388
    %v3208 = vsel %vm3201, %v3144, %v2390
    %v3209 = vsel %vm3201, %v3145, %v2392
    %v3210 = vsel %vm3201, %v3146, %v2394
    %v3211 = vsel %vm3201, %v3147, %v2396
    %v3212 = vsel %vm3201, %v3148, %v2398
    %v3213 = vsel %vm3201, %v3149, %v2400
    %v3214 = vsel %vm3201, %v3150, %v2402
    %v3215 = vsel %vm3201, %v3151, %v2404
    %v3216 = vsel %vm3201, %v3152, %v2406
    %v3217 = vsel %vm3201, %v3153, %v2408
    %v3218 = vsel %vm3201, %v3154, %v2410
    %v3219 = vsel %vm3201, %v3155, %v2412
    %v3220 = vsel %vm3201, %v3156, %v2414
    %v3221 = vsel %vm3201, %v3157, %v2416
    %v3222 = vsel %vm3201, %v3158, %v2418
    %v3223 = vsel %vm3201, %v3159, %v2420
    %v3224 = vsel %vm3201, %v3160, %v2422
    %v3225 = vsel %vm3201, %v3161, %v2424
    %v3226 = vsel %vm3201, %v3162, %v2426
    %v3227 = vsel %vm3201, %v3163, %v2428
    %v3228 = vsel %vm3201, %v3164, %v2430
    %v3229 = vsel %vm3201, %v3165, %v2432
    %v3230 = vsel %vm3201, %v3166, %v2434
    %v3231 = vsel %vm3201, %v3167, %v2436
    %v3232 = vsel %vm3201, %v3168, %v2438
    %v3233 = vsel %vm3201, %v3169, %v2440
    %v3234 = vsel %vm3201, %v3170, %v2442
    %v3235 = vsel %vm3201, %v3171, %v2444
    %v3236 = vsel %vm3201, %v3172, %v2446
    %v3237 = vsel %vm3201, %v3173, %v2448
    %v3238 = vsel %vm3201, %v3174, %v2450
    %v3239 = vsel %vm3201, %v3175, %v2452
    %v3240 = vsel %vm3201, %v3176, %v2454
    %v3241 = vsel %vm3201, %v3177, %v2456
    %v3242 = vsel %vm3201, %v3178, %v2458
    %v3243 = vsel %vm3201, %v3179, %v2460
    %v3244 = vsel %vm3201, %v3180, %v2462
    %v3245 = vsel %vm3201, %v3181, %v2464
    %v3246 = vsel %vm3201, %v3182, %v2466
    %v3247 = vsel %vm3201, %v3183, %v2468
    %v3248 = vsel %vm3201, %v3184, %v2470
    %v3249 = vsel %vm3201, %v3185, %v2472
    %v3250 = vsel %vm3201, %v3186, %v2474
    %v3251 = vsel %vm3201, %v3187, %v2476
    %v3252 = vsel %vm3201, %v3188, %v2478
    %v3253 = vsel %vm3201, %v3189, %v2480
    %v3254 = vsel %vm3201, %v3190, %v2482
    %v3255 = vsel %vm3201, %v3191, %v2484
    %v3256 = vsel %vm3201, %v3192, %v2486
    %v3257 = vsel %vm3201, %v3193, %v2488
    %v3258 = vsel %vm3201, %v3194, %v2490
    %v3259 = vsel %vm3201, %v3195, %v2492
    %v3260 = vsel %vm3201, %v3196, %v2494
    %v3261 = vsel %vm3201, %v3197, %v2496
    %v3262 = vsel %vm3201, %v3198, %v2498
    %v3263 = vsel %vm3201, %v3199, %v2500
    %v3264 = vsel %vm3201, %v3200, %v2502
    %vm3265 = vcmask 785408
    %v3266 = vsel %vm3265, %v3202, %v2567
    %v3267 = vsel %vm3265, %v3203, %v2569
    %v3268 = vsel %vm3265, %v3204, %v2571
    %v3269 = vsel %vm3265, %v3205, %v2573
    %v3270 = vsel %vm3265, %v3206, %v2575
    %v3271 = vsel %vm3265, %v3207, %v2577
    %v3272 = vsel %vm3265, %v3208, %v2579
    %v3273 = vsel %vm3265, %v3209, %v2581
    %v3274 = vsel %vm3265, %v3210, %v2583
    %v3275 = vsel %vm3265, %v3211, %v2585
    %v3276 = vsel %vm3265, %v3212, %v2587
    %v3277 = vsel %vm3265, %v3213, %v2589
    %v3278 = vsel %vm3265, %v3214, %v2591
    %v3279 = vsel %vm3265, %v3215, %v2593
    %v3280 = vsel %vm3265, %v3216, %v2595
    %v3281 = vsel %vm3265, %v3217, %v2597
    %v3282 = vsel %vm3265, %v3218, %v2599
    %v3283 = vsel %vm3265, %v3219, %v2601
    %v3284 = vsel %vm3265, %v3220, %v2603
    %v3285 = vsel %vm3265, %v3221, %v2605
    %v3286 = vsel %vm3265, %v3222, %v2607
    %v3287 = vsel %vm3265, %v3223, %v2609
    %v3288 = vsel %vm3265, %v3224, %v2611
    %v3289 = vsel %vm3265, %v3225, %v2613
    %v3290 = vsel %vm3265, %v3226, %v2615
    %v3291 = vsel %vm3265, %v3227, %v2617
    %v3292 = vsel %vm3265, %v3228, %v2619
    %v3293 = vsel %vm3265, %v3229, %v2621
    %v3294 = vsel %vm3265, %v3230, %v2623
    %v3295 = vsel %vm3265, %v3231, %v2625
    %v3296 = vsel %vm3265, %v3232, %v2627
    %v3297 = vsel %vm3265, %v3233, %v2629
    %v3298 = vsel %vm3265, %v3234, %v2631
    %v3299 = vsel %vm3265, %v3235, %v2633
    %v3300 = vsel %vm3265, %v3236, %v2635
    %v3301 = vsel %vm3265, %v3237, %v2637
    %v3302 = vsel %vm3265, %v3238, %v2639
    %v3303 = vsel %vm3265, %v3239, %v2641
    %v3304 = vsel %vm3265, %v3240, %v2643
    %v3305 = vsel %vm3265, %v3241, %v2645
    %v3306 = vsel %vm3265, %v3242, %v2647
    %v3307 = vsel %vm3265, %v3243, %v2649
    %v3308 = vsel %vm3265, %v3244, %v2651
    %v3309 = vsel %vm3265, %v3245, %v2653
    %v3310 = vsel %vm3265, %v3246, %v2655
    %v3311 = vsel %vm3265, %v3247, %v2657
    %v3312 = vsel %vm3265, %v3248, %v2659
    %v3313 = vsel %vm3265, %v3249, %v2661
    %v3314 = vsel %vm3265, %v3250, %v2663
    %v3315 = vsel %vm3265, %v3251, %v2665
    %v3316 = vsel %vm3265, %v3252, %v2667
    %v3317 = vsel %vm3265, %v3253, %v2669
    %v3318 = vsel %vm3265, %v3254, %v2671
    %v3319 = vsel %vm3265, %v3255, %v2673
    %v3320 = vsel %vm3265, %v3256, %v2675
    %v3321 = vsel %vm3265, %v3257, %v2677
    %v3322 = vsel %vm3265, %v3258, %v2679
    %v3323 = vsel %vm3265, %v3259, %v2681
    %v3324 = vsel %vm3265, %v3260, %v2683
    %v3325 = vsel %vm3265, %v3261, %v2685
    %v3326 = vsel %vm3265, %v3262, %v2687
    %v3327 = vsel %vm3265, %v3263, %v2689
    %v3328 = vsel %vm3265, %v3264, %v2691
    %vm3329 = vcmask 916480
    %v3330 = vsel %vm3329, %v3266, %v2757
    %v3331 = vsel %vm3329, %v3267, %v2759
    %v3332 = vsel %vm3329, %v3268, %v2761
    %v3333 = vsel %vm3329, %v3269, %v2763
    %v3334 = vsel %vm3329, %v3270, %v2765
    %v3335 = vsel %vm3329, %v3271, %v2767
    %v3336 = vsel %vm3329, %v3272, %v2769
    %v3337 = vsel %vm3329, %v3273, %v2771
    %v3338 = vsel %vm3329, %v3274, %v2773
    %v3339 = vsel %vm3329, %v3275, %v2775
    %v3340 = vsel %vm3329, %v3276, %v2777
    %v3341 = vsel %vm3329, %v3277, %v2779
    %v3342 = vsel %vm3329, %v3278, %v2781
    %v3343 = vsel %vm3329, %v3279, %v2783
    %v3344 = vsel %vm3329, %v3280, %v2785
    %v3345 = vsel %vm3329, %v3281, %v2787
    %v3346 = vsel %vm3329, %v3282, %v2789
    %v3347 = vsel %vm3329, %v3283, %v2791
    %v3348 = vsel %vm3329, %v3284, %v2793
    %v3349 = vsel %vm3329, %v3285, %v2795
    %v3350 = vsel %vm3329, %v3286, %v2797
    %v3351 = vsel %vm3329, %v3287, %v2799
    %v3352 = vsel %vm3329, %v3288, %v2801
    %v3353 = vsel %vm3329, %v3289, %v2803
    %v3354 = vsel %vm3329, %v3290, %v2805
    %v3355 = vsel %vm3329, %v3291, %v2807
    %v3356 = vsel %vm3329, %v3292, %v2809
    %v3357 = vsel %vm3329, %v3293, %v2811
    %v3358 = vsel %vm3329, %v3294, %v2813
    %v3359 = vsel %vm3329, %v3295, %v2815
    %v3360 = vsel %vm3329, %v3296, %v2817
    %v3361 = vsel %vm3329, %v3297, %v2819
    %v3362 = vsel %vm3329, %v3298, %v2821
    %v3363 = vsel %vm3329, %v3299, %v2823
    %v3364 = vsel %vm3329, %v3300, %v2825
    %v3365 = vsel %vm3329, %v3301, %v2827
    %v3366 = vsel %vm3329, %v3302, %v2829
    %v3367 = vsel %vm3329, %v3303, %v2831
    %v3368 = vsel %vm3329, %v3304, %v2833
    %v3369 = vsel %vm3329, %v3305, %v2835
    %v3370 = vsel %vm3329, %v3306, %v2837
    %v3371 = vsel %vm3329, %v3307, %v2839
    %v3372 = vsel %vm3329, %v3308, %v2841
    %v3373 = vsel %vm3329, %v3309, %v2843
    %v3374 = vsel %vm3329, %v3310, %v2845
    %v3375 = vsel %vm3329, %v3311, %v2847
    %v3376 = vsel %vm3329, %v3312, %v2849
    %v3377 = vsel %vm3329, %v3313, %v2851
    %v3378 = vsel %vm3329, %v3314, %v2853
    %v3379 = vsel %vm3329, %v3315, %v2855
    %v3380 = vsel %vm3329, %v3316, %v2857
    %v3381 = vsel %vm3329, %v3317, %v2859
    %v3382 = vsel %vm3329, %v3318, %v2861
    %v3383 = vsel %vm3329, %v3319, %v2863
    %v3384 = vsel %vm3329, %v3320, %v2865
    %v3385 = vsel %vm3329, %v3321, %v2867
    %v3386 = vsel %vm3329, %v3322, %v2869
    %v3387 = vsel %vm3329, %v3323, %v2871
    %v3388 = vsel %vm3329, %v3324, %v2873
    %v3389 = vsel %vm3329, %v3325, %v2875
    %v3390 = vsel %vm3329, %v3326, %v2877
    %v3391 = vsel %vm3329, %v3327, %v2879
    %v3392 = vsel %vm3329, %v3328, %v2881
    %v3393 = vlaneseq
    %v3394 = vshrl.u32 %v3393, 7
    %v3395 = vsub.s32 1, %v3394
    %v3396 = vrot.slane %v47, %v3395
    %v3397 = vsel %vm2945, %v1491, 0
    %v3399 = vsel %vm2945, %v1493, 0
    %v3401 = vsel %vm2945, %v1495, 0
    %v3403 = vsel %vm2945, %v1497, 0
    %v3405 = vsel %vm2945, %v1499, 0
    %v3407 = vsel %vm2945, %v1501, 0
    %v3409 = vsel %vm2945, %v1503, 0
    %v3411 = vsel %vm2945, %v1505, 0
    %v3413 = vsel %vm2945, %v1507, 0
    %v3415 = vsel %vm2945, %v1509, 0
    %v3417 = vsel %vm2945, %v1511, 0
    %v3419 = vsel %vm2945, %v1513, 0
    %v3421 = vsel %vm2945, %v1515, 0
    %v3423 = vsel %vm2945, %v1517, 0
    %v3425 = vsel %vm2945, %v1519, 0
    %v3427 = vsel %vm2945, %v1521, 0
    %v3429 = vsel %vm2945, %v1523, 0
    %v3431 = vsel %vm2945, %v1525, 0
    %v3433 = vsel %vm2945, %v1527, 0
    %v3435 = vsel %vm2945, %v1529, 0
    %v3437 = vsel %vm2945, %v1531, 0
    %v3439 = vsel %vm2945, %v1533, 0
    %v3441 = vsel %vm2945, %v1535, 0
    %v3443 = vsel %vm2945, %v1537, 0
    %v3445 = vsel %vm2945, %v1539, 0
    %v3447 = vsel %vm2945, %v1541, 0
    %v3449 = vsel %vm2945, %v1543, 0
    %v3451 = vsel %vm2945, %v1545, 0
    %v3453 = vsel %vm2945, %v1547, 0
    %v3455 = vsel %vm2945, %v1549, 0
    %v3457 = vsel %vm2945, %v1551, 0
    %v3459 = vsel %vm2945, %v1553, 0
    %v3461 = vsel %vm2945, %v1555, 0
    %v3463 = vsel %vm2945, %v1557, 0
    %v3465 = vsel %vm2945, %v1559, 0
    %v3467 = vsel %vm2945, %v1561, 0
    %v3469 = vsel %vm2945, %v1563, 0
    %v3471 = vsel %vm2945, %v1565, 0
    %v3473 = vsel %vm2945, %v1567, 0
    %v3475 = vsel %vm2945, %v1569, 0
    %v3477 = vsel %vm2945, %v1571, 0
    %v3479 = vsel %vm2945, %v1573, 0
    %v3481 = vsel %vm2945, %v1575, 0
    %v3483 = vsel %vm2945, %v1577, 0
    %v3485 = vsel %vm2945, %v1579, 0
    %v3487 = vsel %vm2945, %v1581, 0
    %v3489 = vsel %vm2945, %v1583, 0
    %v3491 = vsel %vm2945, %v1585, 0
    %v3493 = vsel %vm2945, %v1587, 0
    %v3495 = vsel %vm2945, %v1589, 0
    %v3497 = vsel %vm2945, %v1591, 0
    %v3499 = vsel %vm2945, %v1593, 0
    %v3502 = vsel %vm2945, %v1616, 0
    %v3504 = vsel %vm2945, %v1597, 0
    %v3506 = vsel %vm2945, %v1599, 0
    %v3508 = vsel %vm2945, %v1601, 0
    %v3510 = vsel %vm2945, %v1603, 0
    %v3512 = vsel %vm2945, %v1605, 0
    %v3514 = vsel %vm2945, %v1607, 0
    %v3516 = vsel %vm2945, %v1609, 0
    %v3518 = vsel %vm2945, %v1611, 0
    %v3520 = vsel %vm2945, %v1613, 0
    %v3522 = vsel %vm2945, %v1614, 0
    %3524 = vmatprep.subr.mxu0 0.0
    %3525 = vmatpush1.msra.mxu0 %v762
    %3526 = vmatprep.subr.mxu0 0.0
    %3527 = vmatpush1.msra.mxu0 %v763
    %3528 = vmatprep.subr.mxu0 0.0
    %3529 = vmatpush1.msra.mxu0 %v764
    %3530 = vmatprep.subr.mxu0 0.0
    %3531 = vmatpush1.msra.mxu0 %v765
    %3532 = vmatprep.subr.mxu0 0.0
    %3533 = vmatpush1.msra.mxu0 %v766
    %3534 = vmatprep.subr.mxu0 0.0
    %3535 = vmatpush1.msra.mxu0 %v767
    %3536 = vmatprep.subr.mxu0 0.0
    %3537 = vmatpush1.msra.mxu0 %v768
    %3538 = vmatprep.subr.mxu0 0.0
    %3539 = vmatpush1.msra.mxu0 %v769
    %3540 = vmatprep.subr.mxu0 0.0
    %3541 = vmatpush1.msra.mxu0 %v770
    %3542 = vmatprep.subr.mxu0 0.0
    %3543 = vmatpush1.msra.mxu0 %v771
    %3544 = vmatprep.subr.mxu0 0.0
    %3545 = vmatpush1.msra.mxu0 %v772
    %3546 = vmatprep.subr.mxu0 0.0
    %3547 = vmatpush1.msra.mxu0 %v773
    %3548 = vmatprep.subr.mxu0 0.0
    %3549 = vmatpush1.msra.mxu0 %v774
    %3550 = vmatprep.subr.mxu0 0.0
    %3551 = vmatpush1.msra.mxu0 %v775
    %3552 = vmatprep.subr.mxu0 0.0
    %3553 = vmatpush1.msra.mxu0 %v776
    %3554 = vmatprep.subr.mxu0 0.0
    %3555 = vmatpush1.msra.mxu0 %v777
    %3556 = vmatprep.subr.mxu0 0.0
    %3557 = vmatpush1.msra.mxu0 %v778
    %3558 = vmatprep.subr.mxu0 0.0
    %3559 = vmatpush1.msra.mxu0 %v779
    %3560 = vmatprep.subr.mxu0 0.0
    %3561 = vmatpush1.msra.mxu0 0.0
    %3562 = vmatprep.subr.mxu0 0.0
    %3563 = vmatpush1.msra.mxu0 0.0
    %3564 = vmatprep.subr.mxu0 0.0
    %3565 = vmatpush1.msra.mxu0 0.0
    %3566 = vmatprep.subr.mxu0 0.0
    %3567 = vmatpush1.msra.mxu0 0.0
    %3568 = vmatprep.subr.mxu0 0.0
    %3569 = vmatpush1.msra.mxu0 0.0
    %3570 = vmatprep.subr.mxu0 0.0
    %3571 = vmatpush1.msra.mxu0 0.0
    %3572 = vmatprep.subr.mxu0 0.0
    %3573 = vmatpush1.msra.mxu0 0.0
    %3574 = vmatprep.subr.mxu0 0.0
    %3575 = vmatpush1.msra.mxu0 0.0
    %3576 = vmatprep.subr.mxu0 0.0
    %3577 = vmatpush1.msra.mxu0 0.0
    %3578 = vmatprep.subr.mxu0 0.0
    %3579 = vmatpush1.msra.mxu0 0.0
    %3580 = vmatprep.subr.mxu0 0.0
    %3581 = vmatpush1.msra.mxu0 0.0
    %3582 = vmatprep.subr.mxu0 0.0
    %3583 = vmatpush1.msra.mxu0 0.0
    %3584 = vmatprep.subr.mxu0 0.0
    %3585 = vmatpush1.msra.mxu0 0.0
    %3586 = vmatprep.subr.mxu0 0.0
    %3587 = vmatpush1.msra.mxu0 0.0
    %3588 = vmatprep.mubr.f32.mxu0 %v3397
    %3589 = vmatmul.mubr.f32.gmra.mrb[0].mxu0 %v3330
    %v3590 = vpop.f32.mrb[0].mxu0
    %v3591 = vadd.f32 %v3396, %v3590
    %v3592 = vpop.f32.mrb[0].mxu0
    %3593 = vmatprep.mubr.f32.mxu0 %v3399
    %3594 = vmatmul.mubr.f32.gmra.mrb[0].mxu0 %v3331
    %v3595 = vpop.f32.mrb[0].mxu0
    %v3596 = vadd.f32 %v3396, %v3595
    %v3597 = vpop.f32.mrb[0].mxu0
    %3598 = vmatprep.mubr.f32.mxu0 %v3401
    %3599 = vmatmul.mubr.f32.gmra.mrb[0].mxu0 %v3332
    %v3600 = vpop.f32.mrb[0].mxu0
    %v3601 = vadd.f32 %v3396, %v3600
    %v3602 = vpop.f32.mrb[0].mxu0
    %3603 = vmatprep.mubr.f32.mxu0 %v3403
    %3604 = vmatmul.mubr.f32.gmra.mrb[0].mxu0 %v3333
    %v3605 = vpop.f32.mrb[0].mxu0
    %v3606 = vadd.f32 %v3396, %v3605
    %v3607 = vpop.f32.mrb[0].mxu0
    %3608 = vmatprep.mubr.f32.mxu0 %v3405
    %3609 = vmatmul.mubr.f32.gmra.mrb[0].mxu0 %v3334
    %v3610 = vpop.f32.mrb[0].mxu0
    %v3611 = vadd.f32 %v3396, %v3610
    %v3612 = vpop.f32.mrb[0].mxu0
    %3613 = vmatprep.mubr.f32.mxu0 %v3407
    %3614 = vmatmul.mubr.f32.gmra.mrb[0].mxu0 %v3335
    %v3615 = vpop.f32.mrb[0].mxu0
    %v3616 = vadd.f32 %v3396, %v3615
    %v3617 = vpop.f32.mrb[0].mxu0
    %3618 = vmatprep.mubr.f32.mxu0 %v3409
    %3619 = vmatmul.mubr.f32.gmra.mrb[0].mxu0 %v3336
    %v3620 = vpop.f32.mrb[0].mxu0
    %v3621 = vadd.f32 %v3396, %v3620
    %v3622 = vpop.f32.mrb[0].mxu0
    %3623 = vmatprep.mubr.f32.mxu0 %v3411
    %3624 = vmatmul.mubr.f32.gmra.mrb[0].mxu0 %v3337
    %v3625 = vpop.f32.mrb[0].mxu0
    %v3626 = vadd.f32 %v3396, %v3625
    %v3627 = vpop.f32.mrb[0].mxu0
    %3628 = vmatprep.mubr.f32.mxu0 %v3413
    %3629 = vmatmul.mubr.f32.gmra.mrb[0].mxu0 %v3338
    %v3630 = vpop.f32.mrb[0].mxu0
    %v3631 = vadd.f32 %v3396, %v3630
    %v3632 = vpop.f32.mrb[0].mxu0
    %3633 = vmatprep.mubr.f32.mxu0 %v3415
    %3634 = vmatmul.mubr.f32.gmra.mrb[0].mxu0 %v3339
    %v3635 = vpop.f32.mrb[0].mxu0
    %v3636 = vadd.f32 %v3396, %v3635
    %v3637 = vpop.f32.mrb[0].mxu0
    %3638 = vmatprep.mubr.f32.mxu0 %v3417
    %3639 = vmatmul.mubr.f32.gmra.mrb[0].mxu0 %v3340
    %v3640 = vpop.f32.mrb[0].mxu0
    %v3641 = vadd.f32 %v3396, %v3640
    %v3642 = vpop.f32.mrb[0].mxu0
    %3643 = vmatprep.mubr.f32.mxu0 %v3419
    %3644 = vmatmul.mubr.f32.gmra.mrb[0].mxu0 %v3341
    %v3645 = vpop.f32.mrb[0].mxu0
    %v3646 = vadd.f32 %v3396, %v3645
    %v3647 = vpop.f32.mrb[0].mxu0
    %3648 = vmatprep.mubr.f32.mxu0 %v3421
    %3649 = vmatmul.mubr.f32.gmra.mrb[0].mxu0 %v3342
    %v3650 = vpop.f32.mrb[0].mxu0
    %v3651 = vadd.f32 %v3396, %v3650
    %v3652 = vpop.f32.mrb[0].mxu0
    %3653 = vmatprep.mubr.f32.mxu0 %v3423
    %3654 = vmatmul.mubr.f32.gmra.mrb[0].mxu0 %v3343
    %v3655 = vpop.f32.mrb[0].mxu0
    %v3656 = vadd.f32 %v3396, %v3655
    %v3657 = vpop.f32.mrb[0].mxu0
    %3658 = vmatprep.mubr.f32.mxu0 %v3425
    %3659 = vmatmul.mubr.f32.gmra.mrb[0].mxu0 %v3344
    %v3660 = vpop.f32.mrb[0].mxu0
    %v3661 = vadd.f32 %v3396, %v3660
    %v3662 = vpop.f32.mrb[0].mxu0
    %3663 = vmatprep.mubr.f32.mxu0 %v3427
    %3664 = vmatmul.mubr.f32.gmra.mrb[0].mxu0 %v3345
    %v3665 = vpop.f32.mrb[0].mxu0
    %v3666 = vadd.f32 %v3396, %v3665
    %v3667 = vpop.f32.mrb[0].mxu0
    %3668 = vmatprep.mubr.f32.mxu0 %v3429
    %3669 = vmatmul.mubr.f32.gmra.mrb[0].mxu0 %v3346
    %v3670 = vpop.f32.mrb[0].mxu0
    %v3671 = vadd.f32 %v3396, %v3670
    %v3672 = vpop.f32.mrb[0].mxu0
    %3673 = vmatprep.mubr.f32.mxu0 %v3431
    %3674 = vmatmul.mubr.f32.gmra.mrb[0].mxu0 %v3347
    %v3675 = vpop.f32.mrb[0].mxu0
    %v3676 = vadd.f32 %v3396, %v3675
    %v3677 = vpop.f32.mrb[0].mxu0
    %3678 = vmatprep.mubr.f32.mxu0 %v3433
    %3679 = vmatmul.mubr.f32.gmra.mrb[0].mxu0 %v3348
    %v3680 = vpop.f32.mrb[0].mxu0
    %v3681 = vadd.f32 %v3396, %v3680
    %v3682 = vpop.f32.mrb[0].mxu0
    %3683 = vmatprep.mubr.f32.mxu0 %v3435
    %3684 = vmatmul.mubr.f32.gmra.mrb[0].mxu0 %v3349
    %v3685 = vpop.f32.mrb[0].mxu0
    %v3686 = vadd.f32 %v3396, %v3685
    %v3687 = vpop.f32.mrb[0].mxu0
    %3688 = vmatprep.mubr.f32.mxu0 %v3437
    %3689 = vmatmul.mubr.f32.gmra.mrb[0].mxu0 %v3350
    %v3690 = vpop.f32.mrb[0].mxu0
    %v3691 = vadd.f32 %v3396, %v3690
    %v3692 = vpop.f32.mrb[0].mxu0
    %3693 = vmatprep.mubr.f32.mxu0 %v3439
    %3694 = vmatmul.mubr.f32.gmra.mrb[0].mxu0 %v3351
    %v3695 = vpop.f32.mrb[0].mxu0
    %v3696 = vadd.f32 %v3396, %v3695
    %v3697 = vpop.f32.mrb[0].mxu0
    %3698 = vmatprep.mubr.f32.mxu0 %v3441
    %3699 = vmatmul.mubr.f32.gmra.mrb[0].mxu0 %v3352
    %v3700 = vpop.f32.mrb[0].mxu0
    %v3701 = vadd.f32 %v3396, %v3700
    %v3702 = vpop.f32.mrb[0].mxu0
    %3703 = vmatprep.mubr.f32.mxu0 %v3443
    %3704 = vmatmul.mubr.f32.gmra.mrb[0].mxu0 %v3353
    %v3705 = vpop.f32.mrb[0].mxu0
    %v3706 = vadd.f32 %v3396, %v3705
    %v3707 = vpop.f32.mrb[0].mxu0
    %3708 = vmatprep.mubr.f32.mxu0 %v3445
    %3709 = vmatmul.mubr.f32.gmra.mrb[0].mxu0 %v3354
    %v3710 = vpop.f32.mrb[0].mxu0
    %v3711 = vadd.f32 %v3396, %v3710
    %v3712 = vpop.f32.mrb[0].mxu0
    %3713 = vmatprep.mubr.f32.mxu0 %v3447
    %3714 = vmatmul.mubr.f32.gmra.mrb[0].mxu0 %v3355
    %v3715 = vpop.f32.mrb[0].mxu0
    %v3716 = vadd.f32 %v3396, %v3715
    %v3717 = vpop.f32.mrb[0].mxu0
    %3718 = vmatprep.mubr.f32.mxu0 %v3449
    %3719 = vmatmul.mubr.f32.gmra.mrb[0].mxu0 %v3356
    %v3720 = vpop.f32.mrb[0].mxu0
    %v3721 = vadd.f32 %v3396, %v3720
    %v3722 = vpop.f32.mrb[0].mxu0
    %3723 = vmatprep.mubr.f32.mxu0 %v3451
    %3724 = vmatmul.mubr.f32.gmra.mrb[0].mxu0 %v3357
    %v3725 = vpop.f32.mrb[0].mxu0
    %v3726 = vadd.f32 %v3396, %v3725
    %v3727 = vpop.f32.mrb[0].mxu0
    %3728 = vmatprep.mubr.f32.mxu0 %v3453
    %3729 = vmatmul.mubr.f32.gmra.mrb[0].mxu0 %v3358
    %v3730 = vpop.f32.mrb[0].mxu0
    %v3731 = vadd.f32 %v3396, %v3730
    %v3732 = vpop.f32.mrb[0].mxu0
    %3733 = vmatprep.mubr.f32.mxu0 %v3455
    %3734 = vmatmul.mubr.f32.gmra.mrb[0].mxu0 %v3359
    %v3735 = vpop.f32.mrb[0].mxu0
    %v3736 = vadd.f32 %v3396, %v3735
    %v3737 = vpop.f32.mrb[0].mxu0
    %3738 = vmatprep.mubr.f32.mxu0 %v3457
    %3739 = vmatmul.mubr.f32.gmra.mrb[0].mxu0 %v3360
    %v3740 = vpop.f32.mrb[0].mxu0
    %v3741 = vadd.f32 %v3396, %v3740
    %v3742 = vpop.f32.mrb[0].mxu0
    %3743 = vmatprep.mubr.f32.mxu0 %v3459
    %3744 = vmatmul.mubr.f32.gmra.mrb[0].mxu0 %v3361
    %v3745 = vpop.f32.mrb[0].mxu0
    %v3746 = vadd.f32 %v3396, %v3745
    %v3747 = vpop.f32.mrb[0].mxu0
    %3748 = vmatprep.mubr.f32.mxu0 %v3461
    %3749 = vmatmul.mubr.f32.gmra.mrb[0].mxu0 %v3362
    %v3750 = vpop.f32.mrb[0].mxu0
    %v3751 = vadd.f32 %v3396, %v3750
    %v3752 = vpop.f32.mrb[0].mxu0
    %3753 = vmatprep.mubr.f32.mxu0 %v3463
    %3754 = vmatmul.mubr.f32.gmra.mrb[0].mxu0 %v3363
    %v3755 = vpop.f32.mrb[0].mxu0
    %v3756 = vadd.f32 %v3396, %v3755
    %v3757 = vpop.f32.mrb[0].mxu0
    %3758 = vmatprep.mubr.f32.mxu0 %v3465
    %3759 = vmatmul.mubr.f32.gmra.mrb[0].mxu0 %v3364
    %v3760 = vpop.f32.mrb[0].mxu0
    %v3761 = vadd.f32 %v3396, %v3760
    %v3762 = vpop.f32.mrb[0].mxu0
    %3763 = vmatprep.mubr.f32.mxu0 %v3467
    %3764 = vmatmul.mubr.f32.gmra.mrb[0].mxu0 %v3365
    %v3765 = vpop.f32.mrb[0].mxu0
    %v3766 = vadd.f32 %v3396, %v3765
    %v3767 = vpop.f32.mrb[0].mxu0
    %3768 = vmatprep.mubr.f32.mxu0 %v3469
    %3769 = vmatmul.mubr.f32.gmra.mrb[0].mxu0 %v3366
    %v3770 = vpop.f32.mrb[0].mxu0
    %v3771 = vadd.f32 %v3396, %v3770
    %v3772 = vpop.f32.mrb[0].mxu0
    %3773 = vmatprep.mubr.f32.mxu0 %v3471
    %3774 = vmatmul.mubr.f32.gmra.mrb[0].mxu0 %v3367
    %v3775 = vpop.f32.mrb[0].mxu0
    %v3776 = vadd.f32 %v3396, %v3775
    %v3777 = vpop.f32.mrb[0].mxu0
    %3778 = vmatprep.mubr.f32.mxu0 %v3473
    %3779 = vmatmul.mubr.f32.gmra.mrb[0].mxu0 %v3368
    %v3780 = vpop.f32.mrb[0].mxu0
    %v3781 = vadd.f32 %v3396, %v3780
    %v3782 = vpop.f32.mrb[0].mxu0
    %3783 = vmatprep.mubr.f32.mxu0 %v3475
    %3784 = vmatmul.mubr.f32.gmra.mrb[0].mxu0 %v3369
    %v3785 = vpop.f32.mrb[0].mxu0
    %v3786 = vadd.f32 %v3396, %v3785
    %v3787 = vpop.f32.mrb[0].mxu0
    %3788 = vmatprep.mubr.f32.mxu0 %v3477
    %3789 = vmatmul.mubr.f32.gmra.mrb[0].mxu0 %v3370
    %v3790 = vpop.f32.mrb[0].mxu0
    %v3791 = vadd.f32 %v3396, %v3790
    %v3792 = vpop.f32.mrb[0].mxu0
    %3793 = vmatprep.mubr.f32.mxu0 %v3479
    %3794 = vmatmul.mubr.f32.gmra.mrb[0].mxu0 %v3371
    %v3795 = vpop.f32.mrb[0].mxu0
    %v3796 = vadd.f32 %v3396, %v3795
    %v3797 = vpop.f32.mrb[0].mxu0
    %3798 = vmatprep.mubr.f32.mxu0 %v3481
    %3799 = vmatmul.mubr.f32.gmra.mrb[0].mxu0 %v3372
    %v3800 = vpop.f32.mrb[0].mxu0
    %v3801 = vadd.f32 %v3396, %v3800
    %v3802 = vpop.f32.mrb[0].mxu0
    %3803 = vmatprep.mubr.f32.mxu0 %v3483
    %3804 = vmatmul.mubr.f32.gmra.mrb[0].mxu0 %v3373
    %v3805 = vpop.f32.mrb[0].mxu0
    %v3806 = vadd.f32 %v3396, %v3805
    %v3807 = vpop.f32.mrb[0].mxu0
    %3808 = vmatprep.mubr.f32.mxu0 %v3485
    %3809 = vmatmul.mubr.f32.gmra.mrb[0].mxu0 %v3374
    %v3810 = vpop.f32.mrb[0].mxu0
    %v3811 = vadd.f32 %v3396, %v3810
    %v3812 = vpop.f32.mrb[0].mxu0
    %3813 = vmatprep.mubr.f32.mxu0 %v3487
    %3814 = vmatmul.mubr.f32.gmra.mrb[0].mxu0 %v3375
    %v3815 = vpop.f32.mrb[0].mxu0
    %v3816 = vadd.f32 %v3396, %v3815
    %v3817 = vpop.f32.mrb[0].mxu0
    %3818 = vmatprep.mubr.f32.mxu0 %v3489
    %3819 = vmatmul.mubr.f32.gmra.mrb[0].mxu0 %v3376
    %v3820 = vpop.f32.mrb[0].mxu0
    %v3821 = vadd.f32 %v3396, %v3820
    %v3822 = vpop.f32.mrb[0].mxu0
    %3823 = vmatprep.mubr.f32.mxu0 %v3491
    %3824 = vmatmul.mubr.f32.gmra.mrb[0].mxu0 %v3377
    %v3825 = vpop.f32.mrb[0].mxu0
    %v3826 = vadd.f32 %v3396, %v3825
    %v3827 = vpop.f32.mrb[0].mxu0
    %3828 = vmatprep.mubr.f32.mxu0 %v3493
    %3829 = vmatmul.mubr.f32.gmra.mrb[0].mxu0 %v3378
    %v3830 = vpop.f32.mrb[0].mxu0
    %v3831 = vadd.f32 %v3396, %v3830
    %v3832 = vpop.f32.mrb[0].mxu0
    %3833 = vmatprep.mubr.f32.mxu0 %v3495
    %3834 = vmatmul.mubr.f32.gmra.mrb[0].mxu0 %v3379
    %v3835 = vpop.f32.mrb[0].mxu0
    %v3836 = vadd.f32 %v3396, %v3835
    %v3837 = vpop.f32.mrb[0].mxu0
    %3838 = vmatprep.mubr.f32.mxu0 %v3497
    %3839 = vmatmul.mubr.f32.gmra.mrb[0].mxu0 %v3380
    %v3840 = vpop.f32.mrb[0].mxu0
    %v3841 = vadd.f32 %v3396, %v3840
    %v3842 = vpop.f32.mrb[0].mxu0
    %3843 = vmatprep.mubr.f32.mxu0 %v3499
    %3844 = vmatmul.mubr.f32.gmra.mrb[0].mxu0 %v3381
    %v3845 = vpop.f32.mrb[0].mxu0
    %v3846 = vadd.f32 %v3396, %v3845
    %v3847 = vpop.f32.mrb[0].mxu0
    %3848 = vmatprep.mubr.f32.mxu0 %v3502
    %3849 = vmatmul.mubr.f32.gmra.mrb[0].mxu0 %v3382
    %v3850 = vpop.f32.mrb[0].mxu0
    %v3851 = vadd.f32 %v3396, %v3850
    %v3852 = vpop.f32.mrb[0].mxu0
    %3853 = vmatprep.mubr.f32.mxu0 %v3504
    %3854 = vmatmul.mubr.f32.gmra.mrb[0].mxu0 %v3383
    %v3855 = vpop.f32.mrb[0].mxu0
    %v3856 = vadd.f32 %v3396, %v3855
    %v3857 = vpop.f32.mrb[0].mxu0
    %3858 = vmatprep.mubr.f32.mxu0 %v3506
    %3859 = vmatmul.mubr.f32.gmra.mrb[0].mxu0 %v3384
    %v3860 = vpop.f32.mrb[0].mxu0
    %v3861 = vadd.f32 %v3396, %v3860
    %v3862 = vpop.f32.mrb[0].mxu0
    %3863 = vmatprep.mubr.f32.mxu0 %v3508
    %3864 = vmatmul.mubr.f32.gmra.mrb[0].mxu0 %v3385
    %v3865 = vpop.f32.mrb[0].mxu0
    %v3866 = vadd.f32 %v3396, %v3865
    %v3867 = vpop.f32.mrb[0].mxu0
    %3868 = vmatprep.mubr.f32.mxu0 %v3510
    %3869 = vmatmul.mubr.f32.gmra.mrb[0].mxu0 %v3386
    %v3870 = vpop.f32.mrb[0].mxu0
    %v3871 = vadd.f32 %v3396, %v3870
    %v3872 = vpop.f32.mrb[0].mxu0
    %3873 = vmatprep.mubr.f32.mxu0 %v3512
    %3874 = vmatmul.mubr.f32.gmra.mrb[0].mxu0 %v3387
    %v3875 = vpop.f32.mrb[0].mxu0
    %v3876 = vadd.f32 %v3396, %v3875
    %v3877 = vpop.f32.mrb[0].mxu0
    %3878 = vmatprep.mubr.f32.mxu0 %v3514
    %3879 = vmatmul.mubr.f32.gmra.mrb[0].mxu0 %v3388
    %v3880 = vpop.f32.mrb[0].mxu0
    %v3881 = vadd.f32 %v3396, %v3880
    %v3882 = vpop.f32.mrb[0].mxu0
    %3883 = vmatprep.mubr.f32.mxu0 %v3516
    %3884 = vmatmul.mubr.f32.gmra.mrb[0].mxu0 %v3389
    %v3885 = vpop.f32.mrb[0].mxu0
    %v3886 = vadd.f32 %v3396, %v3885
    %v3887 = vpop.f32.mrb[0].mxu0
    %3888 = vmatprep.mubr.f32.mxu0 %v3518
    %3889 = vmatmul.mubr.f32.gmra.mrb[0].mxu0 %v3390
    %v3890 = vpop.f32.mrb[0].mxu0
    %v3891 = vadd.f32 %v3396, %v3890
    %v3892 = vpop.f32.mrb[0].mxu0
    %3893 = vmatprep.mubr.f32.mxu0 %v3520
    %3894 = vmatmul.mubr.f32.gmra.mrb[0].mxu0 %v3391
    %v3895 = vpop.f32.mrb[0].mxu0
    %v3896 = vadd.f32 %v3396, %v3895
    %v3897 = vpop.f32.mrb[0].mxu0
    %3898 = vmatprep.mubr.f32.mxu0 %v3522
    %3899 = vmatmul.mubr.f32.gmra.mrb[0].mxu0 %v3392
    %v3900 = vpop.f32.mrb[0].mxu0
    %v3901 = vadd.f32 %v3396, %v3900
    %v3902 = vpop.f32.mrb[0].mxu0
    %3903 = vdwg.mxu0
    %v3904 = vmax.f32 %v3591, 0.0
    %v3905 = vmax.f32 %v3596, 0.0
    %v3906 = vmax.f32 %v3601, 0.0
    %v3907 = vmax.f32 %v3606, 0.0
    %v3908 = vmax.f32 %v3611, 0.0
    %v3909 = vmax.f32 %v3616, 0.0
    %v3910 = vmax.f32 %v3621, 0.0
    %v3911 = vmax.f32 %v3626, 0.0
    %v3912 = vmax.f32 %v3631, 0.0
    %v3913 = vmax.f32 %v3636, 0.0
    %v3914 = vmax.f32 %v3641, 0.0
    %v3915 = vmax.f32 %v3646, 0.0
    %v3916 = vmax.f32 %v3651, 0.0
    %v3917 = vmax.f32 %v3656, 0.0
    %v3918 = vmax.f32 %v3661, 0.0
    %v3919 = vmax.f32 %v3666, 0.0
    %v3920 = vmax.f32 %v3671, 0.0
    %v3921 = vmax.f32 %v3676, 0.0
    %v3922 = vmax.f32 %v3681, 0.0
    %v3923 = vmax.f32 %v3686, 0.0
    %v3924 = vmax.f32 %v3691, 0.0
    %v3925 = vmax.f32 %v3696, 0.0
    %v3926 = vmax.f32 %v3701, 0.0
    %v3927 = vmax.f32 %v3706, 0.0
    %v3928 = vmax.f32 %v3711, 0.0
    %v3929 = vmax.f32 %v3716, 0.0
    %v3930 = vmax.f32 %v3721, 0.0
    %v3931 = vmax.f32 %v3726, 0.0
    %v3932 = vmax.f32 %v3731, 0.0
    %v3933 = vmax.f32 %v3736, 0.0
    %v3934 = vmax.f32 %v3741, 0.0
    %v3935 = vmax.f32 %v3746, 0.0
    %v3936 = vmax.f32 %v3751, 0.0
    %v3937 = vmax.f32 %v3756, 0.0
    %v3938 = vmax.f32 %v3761, 0.0
    %v3939 = vmax.f32 %v3766, 0.0
    %v3940 = vmax.f32 %v3771, 0.0
    %v3941 = vmax.f32 %v3776, 0.0
    %v3942 = vmax.f32 %v3781, 0.0
    %v3943 = vmax.f32 %v3786, 0.0
    %v3944 = vmax.f32 %v3791, 0.0
    %v3945 = vmax.f32 %v3796, 0.0
    %v3946 = vmax.f32 %v3801, 0.0
    %v3947 = vmax.f32 %v3806, 0.0
    %v3948 = vmax.f32 %v3811, 0.0
    %v3949 = vmax.f32 %v3816, 0.0
    %v3950 = vmax.f32 %v3821, 0.0
    %v3951 = vmax.f32 %v3826, 0.0
    %v3952 = vmax.f32 %v3831, 0.0
    %v3953 = vmax.f32 %v3836, 0.0
    %v3954 = vmax.f32 %v3841, 0.0
    %v3955 = vmax.f32 %v3846, 0.0
    %v3956 = vmax.f32 %v3851, 0.0
    %v3957 = vmax.f32 %v3856, 0.0
    %v3958 = vmax.f32 %v3861, 0.0
    %v3959 = vmax.f32 %v3866, 0.0
    %v3960 = vmax.f32 %v3871, 0.0
    %v3961 = vmax.f32 %v3876, 0.0
    %v3962 = vmax.f32 %v3881, 0.0
    %v3963 = vmax.f32 %v3886, 0.0
    %v3964 = vmax.f32 %v3891, 0.0
    %v3965 = vmax.f32 %v3896, 0.0
    %v3966 = vmax.f32 %v3901, 0.0
    %v3967 = vld [vmem:[%s8] sm:$0xff]
    %v3968 = vld [vmem:[%s8 + $0x8] sm:$0xff]
    %v3969 = vld [vmem:[%s8 + $0x10] sm:$0xff]
    %v3970 = vld [vmem:[%s8 + $0x18] sm:$0xff]
    %v3971 = vld [vmem:[%s8 + $0x20] sm:$0xff]
    %v3972 = vld [vmem:[%s8 + $0x28] sm:$0xff]
    %v3973 = vld [vmem:[%s8 + $0x30] sm:$0xff]
    %v3974 = vld [vmem:[%s8 + $0x38] sm:$0xff]
    %v3975 = vld [vmem:[%s8 + $0x40] sm:$0xff]
    %v3976 = vld [vmem:[%s8 + $0x48] sm:$0xff]
    %v3977 = vld [vmem:[%s8 + $0x50] sm:$0xff]
    %v3978 = vld [vmem:[%s8 + $0x58] sm:$0xff]
    %v3979 = vld [vmem:[%s8 + $0x60] sm:$0xff]
    %v3980 = vld [vmem:[%s8 + $0x68] sm:$0xff]
    %v3981 = vld [vmem:[%s8 + $0x70] sm:$0xff]
    %v3982 = vld [vmem:[%s8 + $0x78] sm:$0xff]
    %v3983 = vld [vmem:[%s8 + $0x80] sm:$0xff]
    %v3984 = vld [vmem:[%s8 + $0x88] sm:$0xff]
    %v3985 = vld [vmem:[%s8 + $0x90] sm:$0xff]
    %v3986 = vld [vmem:[%s8 + $0x98] sm:$0xff]
    %v3987 = vld [vmem:[%s8 + $0xa0] sm:$0xff]
    %v3988 = vld [vmem:[%s8 + $0xa8] sm:$0xff]
    %v3989 = vld [vmem:[%s8 + $0xb0] sm:$0xff]
    %v3990 = vld [vmem:[%s8 + $0xb8] sm:$0xff]
    %v3991 = vld [vmem:[%s8 + $0xc0] sm:$0xff]
    %v3992 = vld [vmem:[%s8 + $0xc8] sm:$0xff]
    %v3993 = vld [vmem:[%s8 + $0xd0] sm:$0xff]
    %v3994 = vld [vmem:[%s8 + $0xd8] sm:$0xff]
    %v3995 = vld [vmem:[%s8 + $0xe0] sm:$0xff]
    %v3996 = vld [vmem:[%s8 + $0xe8] sm:$0xff]
    %v3997 = vld [vmem:[%s8 + $0xf0] sm:$0xff]
    %v3998 = vld [vmem:[%s8 + $0xf8] sm:$0xff]
    %v3999 = vld [vmem:[%s8 + $0x100] sm:$0xff]
    %v4000 = vld [vmem:[%s8 + $0x108] sm:$0xff]
    %v4001 = vld [vmem:[%s8 + $0x110] sm:$0xff]
    %v4002 = vld [vmem:[%s8 + $0x118] sm:$0xff]
    %v4003 = vld [vmem:[%s8 + $0x120] sm:$0xff]
    %v4004 = vld [vmem:[%s8 + $0x128] sm:$0xff]
    %v4005 = vld [vmem:[%s8 + $0x130] sm:$0xff]
    %v4006 = vld [vmem:[%s8 + $0x138] sm:$0xff]
    %v4007 = vld [vmem:[%s8 + $0x140] sm:$0xff]
    %v4008 = vld [vmem:[%s8 + $0x148] sm:$0xff]
    %v4009 = vld [vmem:[%s8 + $0x150] sm:$0xff]
    %v4010 = vld [vmem:[%s8 + $0x158] sm:$0xff]
    %v4011 = vld [vmem:[%s8 + $0x160] sm:$0xff]
    %v4012 = vld [vmem:[%s8 + $0x168] sm:$0xff]
    %v4013 = vld [vmem:[%s8 + $0x170] sm:$0xff]
    %v4014 = vld [vmem:[%s8 + $0x178] sm:$0xff]
    %v4015 = vld [vmem:[%s8 + $0x180] sm:$0xff]
    %v4016 = vld [vmem:[%s8 + $0x188] sm:$0xff]
    %v4017 = vld [vmem:[%s8 + $0x190] sm:$0xff]
    %v4018 = vld [vmem:[%s8 + $0x198] sm:$0xff]
    %v4019 = vld [vmem:[%s8 + $0x1a0] sm:$0xff]
    %v4020 = vld [vmem:[%s8 + $0x1a8] sm:$0xff]
    %v4021 = vld [vmem:[%s8 + $0x1b0] sm:$0xff]
    %v4022 = vld [vmem:[%s8 + $0x1b8] sm:$0xff]
    %v4023 = vld [vmem:[%s8 + $0x1c0] sm:$0xff]
    %v4024 = vld [vmem:[%s8 + $0x1c8] sm:$0xff]
    %v4025 = vld [vmem:[%s8 + $0x1d0] sm:$0xff]
    %v4026 = vld [vmem:[%s8 + $0x1d8] sm:$0xff]
    %v4027 = vld [vmem:[%s8 + $0x1e0] sm:$0xff]
    %v4028 = vld [vmem:[%s8 + $0x1e8] sm:$0xff]
    %v4029 = vld [vmem:[%s8 + $0x1f0] sm:$0xff]
    %v4030 = vld [vmem:[%s8 + $0x1f8] sm:$0xff]
    %v4031 = vld [vmem:[%s8 + $0x200] sm:$0xff]
    %v4032 = vld [vmem:[%s8 + $0x208] sm:$0xff]
    %v4033 = vld [vmem:[%s8 + $0x210] sm:$0xff]
    %v4034 = vld [vmem:[%s8 + $0x218] sm:$0xff]
    %v4035 = vld [vmem:[%s8 + $0x220] sm:$0xff]
    %v4036 = vld [vmem:[%s8 + $0x228] sm:$0xff]
    %v4037 = vld [vmem:[%s8 + $0x230] sm:$0xff]
    %v4038 = vld [vmem:[%s8 + $0x238] sm:$0xff]
    %v4039 = vld [vmem:[%s8 + $0x240] sm:$0xff]
    %v4040 = vld [vmem:[%s8 + $0x248] sm:$0xff]
    %v4041 = vld [vmem:[%s8 + $0x250] sm:$0xff]
    %v4042 = vld [vmem:[%s8 + $0x258] sm:$0xff]
    %v4043 = vld [vmem:[%s8 + $0x260] sm:$0xff]
    %v4044 = vld [vmem:[%s8 + $0x268] sm:$0xff]
    %v4045 = vld [vmem:[%s8 + $0x270] sm:$0xff]
    %v4046 = vld [vmem:[%s8 + $0x278] sm:$0xff]
    %v4110 = vrot.slane %v3904, 1
    %v4111 = vrot.slane %v3905, 1
    %v4112 = vsel %vm843, %v4110, %v4111
    %v4113 = vrot.slane %v3906, 1
    %v4114 = vsel %vm843, %v4111, %v4113
    %v4115 = vrot.slane %v3907, 1
    %v4116 = vsel %vm843, %v4113, %v4115
    %v4117 = vrot.slane %v3908, 1
    %v4118 = vsel %vm843, %v4115, %v4117
    %v4119 = vrot.slane %v3909, 1
    %v4120 = vsel %vm843, %v4117, %v4119
    %v4121 = vrot.slane %v3910, 1
    %v4122 = vsel %vm843, %v4119, %v4121
    %v4123 = vrot.slane %v3911, 1
    %v4124 = vsel %vm843, %v4121, %v4123
    %v4125 = vrot.slane %v3912, 1
    %v4126 = vsel %vm843, %v4123, %v4125
    %v4127 = vrot.slane %v3913, 1
    %v4128 = vsel %vm843, %v4125, %v4127
    %v4129 = vrot.slane %v3914, 1
    %v4130 = vsel %vm843, %v4127, %v4129
    %v4131 = vrot.slane %v3915, 1
    %v4132 = vsel %vm843, %v4129, %v4131
    %v4133 = vrot.slane %v3916, 1
    %v4134 = vsel %vm843, %v4131, %v4133
    %v4135 = vrot.slane %v3917, 1
    %v4136 = vsel %vm843, %v4133, %v4135
    %v4137 = vrot.slane %v3918, 1
    %v4138 = vsel %vm843, %v4135, %v4137
    %v4139 = vrot.slane %v3919, 1
    %v4140 = vsel %vm843, %v4137, %v4139
    %v4141 = vrot.slane %v3920, 1
    %v4142 = vsel %vm843, %v4139, %v4141
    %v4143 = vrot.slane %v3921, 1
    %v4144 = vsel %vm843, %v4141, %v4143
    %v4145 = vrot.slane %v3922, 1
    %v4146 = vsel %vm843, %v4143, %v4145
    %v4147 = vrot.slane %v3923, 1
    %v4148 = vsel %vm843, %v4145, %v4147
    %v4149 = vrot.slane %v3924, 1
    %v4150 = vsel %vm843, %v4147, %v4149
    %v4151 = vrot.slane %v3925, 1
    %v4152 = vsel %vm843, %v4149, %v4151
    %v4153 = vrot.slane %v3926, 1
    %v4154 = vsel %vm843, %v4151, %v4153
    %v4155 = vrot.slane %v3927, 1
    %v4156 = vsel %vm843, %v4153, %v4155
    %v4157 = vrot.slane %v3928, 1
    %v4158 = vsel %vm843, %v4155, %v4157
    %v4159 = vrot.slane %v3929, 1
    %v4160 = vsel %vm843, %v4157, %v4159
    %v4161 = vrot.slane %v3930, 1
    %v4162 = vsel %vm843, %v4159, %v4161
    %v4163 = vrot.slane %v3931, 1
    %v4164 = vsel %vm843, %v4161, %v4163
    %v4165 = vrot.slane %v3932, 1
    %v4166 = vsel %vm843, %v4163, %v4165
    %v4167 = vrot.slane %v3933, 1
    %v4168 = vsel %vm843, %v4165, %v4167
    %v4169 = vrot.slane %v3934, 1
    %v4170 = vsel %vm843, %v4167, %v4169
    %v4171 = vrot.slane %v3935, 1
    %v4172 = vsel %vm843, %v4169, %v4171
    %v4173 = vrot.slane %v3936, 1
    %v4174 = vsel %vm843, %v4171, %v4173
    %v4175 = vrot.slane %v3937, 1
    %v4176 = vsel %vm843, %v4173, %v4175
    %v4177 = vrot.slane %v3938, 1
    %v4178 = vsel %vm843, %v4175, %v4177
    %v4179 = vrot.slane %v3939, 1
    %v4180 = vsel %vm843, %v4177, %v4179
    %v4181 = vrot.slane %v3940, 1
    %v4182 = vsel %vm843, %v4179, %v4181
    %v4183 = vrot.slane %v3941, 1
    %v4184 = vsel %vm843, %v4181, %v4183
    %v4185 = vrot.slane %v3942, 1
    %v4186 = vsel %vm843, %v4183, %v4185
    %v4187 = vrot.slane %v3943, 1
    %v4188 = vsel %vm843, %v4185, %v4187
    %v4189 = vrot.slane %v3944, 1
    %v4190 = vsel %vm843, %v4187, %v4189
    %v4191 = vrot.slane %v3945, 1
    %v4192 = vsel %vm843, %v4189, %v4191
    %v4193 = vrot.slane %v3946, 1
    %v4194 = vsel %vm843, %v4191, %v4193
    %v4195 = vrot.slane %v3947, 1
    %v4196 = vsel %vm843, %v4193, %v4195
    %v4197 = vrot.slane %v3948, 1
    %v4198 = vsel %vm843, %v4195, %v4197
    %v4199 = vrot.slane %v3949, 1
    %v4200 = vsel %vm843, %v4197, %v4199
    %v4201 = vrot.slane %v3950, 1
    %v4202 = vsel %vm843, %v4199, %v4201
    %v4203 = vrot.slane %v3951, 1
    %v4204 = vsel %vm843, %v4201, %v4203
    %v4205 = vrot.slane %v3952, 1
    %v4206 = vsel %vm843, %v4203, %v4205
    %v4207 = vrot.slane %v3953, 1
    %v4208 = vsel %vm843, %v4205, %v4207
    %v4209 = vrot.slane %v3954, 1
    %v4210 = vsel %vm843, %v4207, %v4209
    %v4211 = vrot.slane %v3955, 1
    %v4212 = vsel %vm843, %v4209, %v4211
    %v4213 = vrot.slane %v3956, 1
    %v4214 = vsel %vm843, %v4211, %v4213
    %v4215 = vrot.slane %v3957, 1
    %v4216 = vsel %vm843, %v4213, %v4215
    %v4217 = vrot.slane %v3958, 1
    %v4218 = vsel %vm843, %v4215, %v4217
    %v4219 = vrot.slane %v3959, 1
    %v4220 = vsel %vm843, %v4217, %v4219
    %v4221 = vrot.slane %v3960, 1
    %v4222 = vsel %vm843, %v4219, %v4221
    %v4223 = vrot.slane %v3961, 1
    %v4224 = vsel %vm843, %v4221, %v4223
    %v4225 = vrot.slane %v3962, 1
    %v4226 = vsel %vm843, %v4223, %v4225
    %v4227 = vrot.slane %v3963, 1
    %v4228 = vsel %vm843, %v4225, %v4227
    %v4229 = vrot.slane %v3964, 1
    %v4230 = vsel %vm843, %v4227, %v4229
    %v4231 = vrot.slane %v3965, 1
    %v4232 = vsel %vm843, %v4229, %v4231
    %v4233 = vrot.slane %v3966, 1
    %v4234 = vsel %vm843, %v4231, %v4233
    %v4299 = vsel %vm843, %v4233, %v4110
    %v4300 = vmax.f32 %v3904, %v4112
    %v4301 = vmax.f32 %v3905, %v4114
    %v4302 = vmax.f32 %v3906, %v4116
    %v4303 = vmax.f32 %v3907, %v4118
    %v4304 = vmax.f32 %v3908, %v4120
    %v4305 = vmax.f32 %v3909, %v4122
    %v4306 = vmax.f32 %v3910, %v4124
    %v4307 = vmax.f32 %v3911, %v4126
    %v4308 = vmax.f32 %v3912, %v4128
    %v4309 = vmax.f32 %v3913, %v4130
    %v4310 = vmax.f32 %v3914, %v4132
    %v4311 = vmax.f32 %v3915, %v4134
    %v4312 = vmax.f32 %v3916, %v4136
    %v4313 = vmax.f32 %v3917, %v4138
    %v4314 = vmax.f32 %v3918, %v4140
    %v4315 = vmax.f32 %v3919, %v4142
    %v4316 = vmax.f32 %v3920, %v4144
    %v4317 = vmax.f32 %v3921, %v4146
    %v4318 = vmax.f32 %v3922, %v4148
    %v4319 = vmax.f32 %v3923, %v4150
    %v4320 = vmax.f32 %v3924, %v4152
    %v4321 = vmax.f32 %v3925, %v4154
    %v4322 = vmax.f32 %v3926, %v4156
    %v4323 = vmax.f32 %v3927, %v4158
    %v4324 = vmax.f32 %v3928, %v4160
    %v4325 = vmax.f32 %v3929, %v4162
    %v4326 = vmax.f32 %v3930, %v4164
    %v4327 = vmax.f32 %v3931, %v4166
    %v4328 = vmax.f32 %v3932, %v4168
    %v4329 = vmax.f32 %v3933, %v4170
    %v4330 = vmax.f32 %v3934, %v4172
    %v4331 = vmax.f32 %v3935, %v4174
    %v4332 = vmax.f32 %v3936, %v4176
    %v4333 = vmax.f32 %v3937, %v4178
    %v4334 = vmax.f32 %v3938, %v4180
    %v4335 = vmax.f32 %v3939, %v4182
    %v4336 = vmax.f32 %v3940, %v4184
    %v4337 = vmax.f32 %v3941, %v4186
    %v4338 = vmax.f32 %v3942, %v4188
    %v4339 = vmax.f32 %v3943, %v4190
    %v4340 = vmax.f32 %v3944, %v4192
    %v4341 = vmax.f32 %v3945, %v4194
    %v4342 = vmax.f32 %v3946, %v4196
    %v4343 = vmax.f32 %v3947, %v4198
    %v4344 = vmax.f32 %v3948, %v4200
    %v4345 = vmax.f32 %v3949, %v4202
    %v4346 = vmax.f32 %v3950, %v4204
    %v4347 = vmax.f32 %v3951, %v4206
    %v4348 = vmax.f32 %v3952, %v4208
    %v4349 = vmax.f32 %v3953, %v4210
    %v4350 = vmax.f32 %v3954, %v4212
    %v4351 = vmax.f32 %v3955, %v4214
    %v4352 = vmax.f32 %v3956, %v4216
    %v4353 = vmax.f32 %v3957, %v4218
    %v4354 = vmax.f32 %v3958, %v4220
    %v4355 = vmax.f32 %v3959, %v4222
    %v4356 = vmax.f32 %v3960, %v4224
    %v4357 = vmax.f32 %v3961, %v4226
    %v4358 = vmax.f32 %v3962, %v4228
    %v4359 = vmax.f32 %v3963, %v4230
    %v4360 = vmax.f32 %v3964, %v4232
    %v4361 = vmax.f32 %v3965, %v4234
    %v4362 = vmax.f32 %v3966, %v4299
    %vm4363 = vcmask 982016
    %v4365 = vsel %vm4363, %v3970, 0
    %v4368 = vsel %vm4363, %v3974, 0
    %v4371 = vsel %vm4363, %v3978, 0
    %v4374 = vsel %vm4363, %v3982, 0
    %v4377 = vsel %vm4363, %v3986, 0
    %v4380 = vsel %vm4363, %v3990, 0
    %v4383 = vsel %vm4363, %v3994, 0
    %v4386 = vsel %vm4363, %v3998, 0
    %v4389 = vsel %vm4363, %v4002, 0
    %v4392 = vsel %vm4363, %v4006, 0
    %v4395 = vsel %vm4363, %v4010, 0
    %v4398 = vsel %vm4363, %v4014, 0
    %v4401 = vsel %vm4363, %v4018, 0
    %v4404 = vsel %vm4363, %v4022, 0
    %v4407 = vsel %vm4363, %v4026, 0
    %v4410 = vsel %vm4363, %v4030, 0
    %v4413 = vsel %vm4363, %v4034, 0
    %v4416 = vsel %vm4363, %v4038, 0
    %v4419 = vsel %vm4363, %v4042, 0
    %v4422 = vsel %vm4363, %v4046, 0
    %4424 = vmatprep.subr.mxu0 0.0
    %4425 = vmatpush1.msra.mxu0 %v4300
    %4426 = vmatprep.subr.mxu0 0.0
    %4427 = vmatpush1.msra.mxu0 %v4301
    %4428 = vmatprep.subr.mxu0 0.0
    %4429 = vmatpush1.msra.mxu0 %v4302
    %4430 = vmatprep.subr.mxu0 0.0
    %4431 = vmatpush1.msra.mxu0 %v4303
    %4432 = vmatprep.subr.mxu0 0.0
    %4433 = vmatpush1.msra.mxu0 %v4304
    %4434 = vmatprep.subr.mxu0 0.0
    %4435 = vmatpush1.msra.mxu0 %v4305
    %4436 = vmatprep.subr.mxu0 0.0
    %4437 = vmatpush1.msra.mxu0 %v4306
    %4438 = vmatprep.subr.mxu0 0.0
    %4439 = vmatpush1.msra.mxu0 %v4307
    %4440 = vmatprep.subr.mxu0 0.0
    %4441 = vmatpush1.msra.mxu0 %v4308
    %4442 = vmatprep.subr.mxu0 0.0
    %4443 = vmatpush1.msra.mxu0 %v4309
    %4444 = vmatprep.subr.mxu0 0.0
    %4445 = vmatpush1.msra.mxu0 %v4310
    %4446 = vmatprep.subr.mxu0 0.0
    %4447 = vmatpush1.msra.mxu0 %v4311
    %4448 = vmatprep.subr.mxu0 0.0
    %4449 = vmatpush1.msra.mxu0 %v4312
    %4450 = vmatprep.subr.mxu0 0.0
    %4451 = vmatpush1.msra.mxu0 %v4313
    %4452 = vmatprep.subr.mxu0 0.0
    %4453 = vmatpush1.msra.mxu0 %v4314
    %4454 = vmatprep.subr.mxu0 0.0
    %4455 = vmatpush1.msra.mxu0 %v4315
    %4456 = vmatprep.subr.mxu0 0.0
    %4457 = vmatpush1.msra.mxu0 %v4316
    %4458 = vmatprep.subr.mxu0 0.0
    %4459 = vmatpush1.msra.mxu0 %v4317
    %4460 = vmatprep.subr.mxu0 0.0
    %4461 = vmatpush1.msra.mxu0 %v4318
    %4462 = vmatprep.subr.mxu0 0.0
    %4463 = vmatpush1.msra.mxu0 %v4319
    %4464 = vmatprep.subr.mxu0 0.0
    %4465 = vmatpush1.msra.mxu0 %v4320
    %4466 = vmatprep.subr.mxu0 0.0
    %4467 = vmatpush1.msra.mxu0 %v4321
    %4468 = vmatprep.subr.mxu0 0.0
    %4469 = vmatpush1.msra.mxu0 %v4322
    %4470 = vmatprep.subr.mxu0 0.0
    %4471 = vmatpush1.msra.mxu0 %v4323
    %4472 = vmatprep.subr.mxu0 0.0
    %4473 = vmatpush1.msra.mxu0 %v4324
    %4474 = vmatprep.subr.mxu0 0.0
    %4475 = vmatpush1.msra.mxu0 %v4325
    %4476 = vmatprep.subr.mxu0 0.0
    %4477 = vmatpush1.msra.mxu0 %v4326
    %4478 = vmatprep.subr.mxu0 0.0
    %4479 = vmatpush1.msra.mxu0 %v4327
    %4480 = vmatprep.subr.mxu0 0.0
    %4481 = vmatpush1.msra.mxu0 %v4328
    %4482 = vmatprep.subr.mxu0 0.0
    %4483 = vmatpush1.msra.mxu0 %v4329
    %4484 = vmatprep.subr.mxu0 0.0
    %4485 = vmatpush1.msra.mxu0 %v4330
    %4486 = vmatprep.subr.mxu0 0.0
    %4487 = vmatpush1.msra.mxu0 %v4331
    %4488 = vmatprep.mubr.f32.mxu0 %v3968
    %4489 = vmatmul.mubr.f32.gmra.mrb[0].mxu0 %v3967
    %v4490 = vpop.f32.mrb[0].mxu0
    %v4491 = vadd.f32 0.0, %v4490
    %v4492 = vpop.f32.mrb[0].mxu0
    %4493 = vmatprep.mubr.f32.mxu0 %v3972
    %4494 = vmatmul.mubr.f32.gmra.mrb[0].mxu0 %v3971
    %v4495 = vpop.f32.mrb[0].mxu0
    %v4496 = vadd.f32 0.0, %v4495
    %v4497 = vpop.f32.mrb[0].mxu0
    %4498 = vmatprep.mubr.f32.mxu0 %v3976
    %4499 = vmatmul.mubr.f32.gmra.mrb[0].mxu0 %v3975
    %v4500 = vpop.f32.mrb[0].mxu0
    %v4501 = vadd.f32 0.0, %v4500
    %v4502 = vpop.f32.mrb[0].mxu0
    %4503 = vmatprep.mubr.f32.mxu0 %v3980
    %4504 = vmatmul.mubr.f32.gmra.mrb[0].mxu0 %v3979
    %v4505 = vpop.f32.mrb[0].mxu0
    %v4506 = vadd.f32 0.0, %v4505
    %v4507 = vpop.f32.mrb[0].mxu0
    %4508 = vmatprep.mubr.f32.mxu0 %v3984
    %4509 = vmatmul.mubr.f32.gmra.mrb[0].mxu0 %v3983
    %v4510 = vpop.f32.mrb[0].mxu0
    %v4511 = vadd.f32 0.0, %v4510
    %v4512 = vpop.f32.mrb[0].mxu0
    %4513 = vmatprep.mubr.f32.mxu0 %v3988
    %4514 = vmatmul.mubr.f32.gmra.mrb[0].mxu0 %v3987
    %v4515 = vpop.f32.mrb[0].mxu0
    %v4516 = vadd.f32 0.0, %v4515
    %v4517 = vpop.f32.mrb[0].mxu0
    %4518 = vmatprep.mubr.f32.mxu0 %v3992
    %4519 = vmatmul.mubr.f32.gmra.mrb[0].mxu0 %v3991
    %v4520 = vpop.f32.mrb[0].mxu0
    %v4521 = vadd.f32 0.0, %v4520
    %v4522 = vpop.f32.mrb[0].mxu0
    %4523 = vmatprep.mubr.f32.mxu0 %v3996
    %4524 = vmatmul.mubr.f32.gmra.mrb[0].mxu0 %v3995
    %v4525 = vpop.f32.mrb[0].mxu0
    %v4526 = vadd.f32 0.0, %v4525
    %v4527 = vpop.f32.mrb[0].mxu0
    %4528 = vmatprep.mubr.f32.mxu0 %v4000
    %4529 = vmatmul.mubr.f32.gmra.mrb[0].mxu0 %v3999
    %v4530 = vpop.f32.mrb[0].mxu0
    %v4531 = vadd.f32 0.0, %v4530
    %v4532 = vpop.f32.mrb[0].mxu0
    %4533 = vmatprep.mubr.f32.mxu0 %v4004
    %4534 = vmatmul.mubr.f32.gmra.mrb[0].mxu0 %v4003
    %v4535 = vpop.f32.mrb[0].mxu0
    %v4536 = vadd.f32 0.0, %v4535
    %v4537 = vpop.f32.mrb[0].mxu0
    %4538 = vmatprep.mubr.f32.mxu0 %v4008
    %4539 = vmatmul.mubr.f32.gmra.mrb[0].mxu0 %v4007
    %v4540 = vpop.f32.mrb[0].mxu0
    %v4541 = vadd.f32 0.0, %v4540
    %v4542 = vpop.f32.mrb[0].mxu0
    %4543 = vmatprep.mubr.f32.mxu0 %v4012
    %4544 = vmatmul.mubr.f32.gmra.mrb[0].mxu0 %v4011
    %v4545 = vpop.f32.mrb[0].mxu0
    %v4546 = vadd.f32 0.0, %v4545
    %v4547 = vpop.f32.mrb[0].mxu0
    %4548 = vmatprep.mubr.f32.mxu0 %v4016
    %4549 = vmatmul.mubr.f32.gmra.mrb[0].mxu0 %v4015
    %v4550 = vpop.f32.mrb[0].mxu0
    %v4551 = vadd.f32 0.0, %v4550
    %v4552 = vpop.f32.mrb[0].mxu0
    %4553 = vmatprep.mubr.f32.mxu0 %v4020
    %4554 = vmatmul.mubr.f32.gmra.mrb[0].mxu0 %v4019
    %v4555 = vpop.f32.mrb[0].mxu0
    %v4556 = vadd.f32 0.0, %v4555
    %v4557 = vpop.f32.mrb[0].mxu0
    %4558 = vmatprep.mubr.f32.mxu0 %v4024
    %4559 = vmatmul.mubr.f32.gmra.mrb[0].mxu0 %v4023
    %v4560 = vpop.f32.mrb[0].mxu0
    %v4561 = vadd.f32 0.0, %v4560
    %v4562 = vpop.f32.mrb[0].mxu0
    %4563 = vmatprep.mubr.f32.mxu0 %v4028
    %4564 = vmatmul.mubr.f32.gmra.mrb[0].mxu0 %v4027
    %v4565 = vpop.f32.mrb[0].mxu0
    %v4566 = vadd.f32 0.0, %v4565
    %v4567 = vpop.f32.mrb[0].mxu0
    %4568 = vmatprep.mubr.f32.mxu0 %v4032
    %4569 = vmatmul.mubr.f32.gmra.mrb[0].mxu0 %v4031
    %v4570 = vpop.f32.mrb[0].mxu0
    %v4571 = vadd.f32 0.0, %v4570
    %v4572 = vpop.f32.mrb[0].mxu0
    %4573 = vmatprep.mubr.f32.mxu0 %v4036
    %4574 = vmatmul.mubr.f32.gmra.mrb[0].mxu0 %v4035
    %v4575 = vpop.f32.mrb[0].mxu0
    %v4576 = vadd.f32 0.0, %v4575
    %v4577 = vpop.f32.mrb[0].mxu0
    %4578 = vmatprep.mubr.f32.mxu0 %v4040
    %4579 = vmatmul.mubr.f32.gmra.mrb[0].mxu0 %v4039
    %v4580 = vpop.f32.mrb[0].mxu0
    %v4581 = vadd.f32 0.0, %v4580
    %v4582 = vpop.f32.mrb[0].mxu0
    %4583 = vmatprep.mubr.f32.mxu0 %v4044
    %4584 = vmatmul.mubr.f32.gmra.mrb[0].mxu0 %v4043
    %v4585 = vpop.f32.mrb[0].mxu0
    %v4586 = vadd.f32 0.0, %v4585
    %v4587 = vpop.f32.mrb[0].mxu0
    %4588 = vdwg.mxu0
    %4589 = vmatprep.subr.mxu0 0.0
    %4590 = vmatpush1.msra.mxu0 %v4332
    %4591 = vmatprep.subr.mxu0 0.0
    %4592 = vmatpush1.msra.mxu0 %v4333
    %4593 = vmatprep.subr.mxu0 0.0
    %4594 = vmatpush1.msra.mxu0 %v4334
    %4595 = vmatprep.subr.mxu0 0.0
    %4596 = vmatpush1.msra.mxu0 %v4335
    %4597 = vmatprep.subr.mxu0 0.0
    %4598 = vmatpush1.msra.mxu0 %v4336
    %4599 = vmatprep.subr.mxu0 0.0
    %4600 = vmatpush1.msra.mxu0 %v4337
    %4601 = vmatprep.subr.mxu0 0.0
    %4602 = vmatpush1.msra.mxu0 %v4338
    %4603 = vmatprep.subr.mxu0 0.0
    %4604 = vmatpush1.msra.mxu0 %v4339
    %4605 = vmatprep.subr.mxu0 0.0
    %4606 = vmatpush1.msra.mxu0 %v4340
    %4607 = vmatprep.subr.mxu0 0.0
    %4608 = vmatpush1.msra.mxu0 %v4341
    %4609 = vmatprep.subr.mxu0 0.0
    %4610 = vmatpush1.msra.mxu0 %v4342
    %4611 = vmatprep.subr.mxu0 0.0
    %4612 = vmatpush1.msra.mxu0 %v4343
    %4613 = vmatprep.subr.mxu0 0.0
    %4614 = vmatpush1.msra.mxu0 %v4344
    %4615 = vmatprep.subr.mxu0 0.0
    %4616 = vmatpush1.msra.mxu0 %v4345
    %4617 = vmatprep.subr.mxu0 0.0
    %4618 = vmatpush1.msra.mxu0 %v4346
    %4619 = vmatprep.subr.mxu0 0.0
    %4620 = vmatpush1.msra.mxu0 %v4347
    %4621 = vmatprep.subr.mxu0 0.0
    %4622 = vmatpush1.msra.mxu0 %v4348
    %4623 = vmatprep.subr.mxu0 0.0
    %4624 = vmatpush1.msra.mxu0 %v4349
    %4625 = vmatprep.subr.mxu0 0.0
    %4626 = vmatpush1.msra.mxu0 %v4350
    %4627 = vmatprep.subr.mxu0 0.0
    %4628 = vmatpush1.msra.mxu0 %v4351
    %4629 = vmatprep.subr.mxu0 0.0
    %4630 = vmatpush1.msra.mxu0 %v4352
    %4631 = vmatprep.subr.mxu0 0.0
    %4632 = vmatpush1.msra.mxu0 %v4353
    %4633 = vmatprep.subr.mxu0 0.0
    %4634 = vmatpush1.msra.mxu0 %v4354
    %4635 = vmatprep.subr.mxu0 0.0
    %4636 = vmatpush1.msra.mxu0 %v4355
    %4637 = vmatprep.subr.mxu0 0.0
    %4638 = vmatpush1.msra.mxu0 %v4356
    %4639 = vmatprep.subr.mxu0 0.0
    %4640 = vmatpush1.msra.mxu0 %v4357
    %4641 = vmatprep.subr.mxu0 0.0
    %4642 = vmatpush1.msra.mxu0 %v4358
    %4643 = vmatprep.subr.mxu0 0.0
    %4644 = vmatpush1.msra.mxu0 %v4359
    %4645 = vmatprep.subr.mxu0 0.0
    %4646 = vmatpush1.msra.mxu0 %v4360
    %4647 = vmatprep.subr.mxu0 0.0
    %4648 = vmatpush1.msra.mxu0 %v4361
    %4649 = vmatprep.subr.mxu0 0.0
    %4650 = vmatpush1.msra.mxu0 %v4362
    %4651 = vmatprep.subr.mxu0 0.0
    %4652 = vmatpush1.msra.mxu0 0.0
    %4653 = vmatprep.mubr.f32.mxu0 %v4365
    %4654 = vmatmul.mubr.f32.gmra.mrb[0].mxu0 %v3969
    %v4655 = vpop.f32.mrb[0].mxu0
    %v4656 = vadd.f32 %v4491, %v4655
    %v4657 = vpop.f32.mrb[0].mxu0
    %4658 = vmatprep.mubr.f32.mxu0 %v4368
    %4659 = vmatmul.mubr.f32.gmra.mrb[0].mxu0 %v3973
    %v4660 = vpop.f32.mrb[0].mxu0
    %v4661 = vadd.f32 %v4496, %v4660
    %v4662 = vpop.f32.mrb[0].mxu0
    %4663 = vmatprep.mubr.f32.mxu0 %v4371
    %4664 = vmatmul.mubr.f32.gmra.mrb[0].mxu0 %v3977
    %v4665 = vpop.f32.mrb[0].mxu0
    %v4666 = vadd.f32 %v4501, %v4665
    %v4667 = vpop.f32.mrb[0].mxu0
    %4668 = vmatprep.mubr.f32.mxu0 %v4374
    %4669 = vmatmul.mubr.f32.gmra.mrb[0].mxu0 %v3981
    %v4670 = vpop.f32.mrb[0].mxu0
    %v4671 = vadd.f32 %v4506, %v4670
    %v4672 = vpop.f32.mrb[0].mxu0
    %4673 = vmatprep.mubr.f32.mxu0 %v4377
    %4674 = vmatmul.mubr.f32.gmra.mrb[0].mxu0 %v3985
    %v4675 = vpop.f32.mrb[0].mxu0
    %v4676 = vadd.f32 %v4511, %v4675
    %v4677 = vpop.f32.mrb[0].mxu0
    %4678 = vmatprep.mubr.f32.mxu0 %v4380
    %4679 = vmatmul.mubr.f32.gmra.mrb[0].mxu0 %v3989
    %v4680 = vpop.f32.mrb[0].mxu0
    %v4681 = vadd.f32 %v4516, %v4680
    %v4682 = vpop.f32.mrb[0].mxu0
    %4683 = vmatprep.mubr.f32.mxu0 %v4383
    %4684 = vmatmul.mubr.f32.gmra.mrb[0].mxu0 %v3993
    %v4685 = vpop.f32.mrb[0].mxu0
    %v4686 = vadd.f32 %v4521, %v4685
    %v4687 = vpop.f32.mrb[0].mxu0
    %4688 = vmatprep.mubr.f32.mxu0 %v4386
    %4689 = vmatmul.mubr.f32.gmra.mrb[0].mxu0 %v3997
    %v4690 = vpop.f32.mrb[0].mxu0
    %v4691 = vadd.f32 %v4526, %v4690
    %v4692 = vpop.f32.mrb[0].mxu0
    %4693 = vmatprep.mubr.f32.mxu0 %v4389
    %4694 = vmatmul.mubr.f32.gmra.mrb[0].mxu0 %v4001
    %v4695 = vpop.f32.mrb[0].mxu0
    %v4696 = vadd.f32 %v4531, %v4695
    %v4697 = vpop.f32.mrb[0].mxu0
    %4698 = vmatprep.mubr.f32.mxu0 %v4392
    %4699 = vmatmul.mubr.f32.gmra.mrb[0].mxu0 %v4005
    %v4700 = vpop.f32.mrb[0].mxu0
    %v4701 = vadd.f32 %v4536, %v4700
    %v4702 = vpop.f32.mrb[0].mxu0
    %4703 = vmatprep.mubr.f32.mxu0 %v4395
    %4704 = vmatmul.mubr.f32.gmra.mrb[0].mxu0 %v4009
    %v4705 = vpop.f32.mrb[0].mxu0
    %v4706 = vadd.f32 %v4541, %v4705
    %v4707 = vpop.f32.mrb[0].mxu0
    %4708 = vmatprep.mubr.f32.mxu0 %v4398
    %4709 = vmatmul.mubr.f32.gmra.mrb[0].mxu0 %v4013
    %v4710 = vpop.f32.mrb[0].mxu0
    %v4711 = vadd.f32 %v4546, %v4710
    %v4712 = vpop.f32.mrb[0].mxu0
    %4713 = vmatprep.mubr.f32.mxu0 %v4401
    %4714 = vmatmul.mubr.f32.gmra.mrb[0].mxu0 %v4017
    %v4715 = vpop.f32.mrb[0].mxu0
    %v4716 = vadd.f32 %v4551, %v4715
    %v4717 = vpop.f32.mrb[0].mxu0
    %4718 = vmatprep.mubr.f32.mxu0 %v4404
    %4719 = vmatmul.mubr.f32.gmra.mrb[0].mxu0 %v4021
    %v4720 = vpop.f32.mrb[0].mxu0
    %v4721 = vadd.f32 %v4556, %v4720
    %v4722 = vpop.f32.mrb[0].mxu0
    %4723 = vmatprep.mubr.f32.mxu0 %v4407
    %4724 = vmatmul.mubr.f32.gmra.mrb[0].mxu0 %v4025
    %v4725 = vpop.f32.mrb[0].mxu0
    %v4726 = vadd.f32 %v4561, %v4725
    %v4727 = vpop.f32.mrb[0].mxu0
    %4728 = vmatprep.mubr.f32.mxu0 %v4410
    %4729 = vmatmul.mubr.f32.gmra.mrb[0].mxu0 %v4029
    %v4730 = vpop.f32.mrb[0].mxu0
    %v4731 = vadd.f32 %v4566, %v4730
    %v4732 = vpop.f32.mrb[0].mxu0
    %4733 = vmatprep.mubr.f32.mxu0 %v4413
    %4734 = vmatmul.mubr.f32.gmra.mrb[0].mxu0 %v4033
    %v4735 = vpop.f32.mrb[0].mxu0
    %v4736 = vadd.f32 %v4571, %v4735
    %v4737 = vpop.f32.mrb[0].mxu0
    %4738 = vmatprep.mubr.f32.mxu0 %v4416
    %4739 = vmatmul.mubr.f32.gmra.mrb[0].mxu0 %v4037
    %v4740 = vpop.f32.mrb[0].mxu0
    %v4741 = vadd.f32 %v4576, %v4740
    %v4742 = vpop.f32.mrb[0].mxu0
    %4743 = vmatprep.mubr.f32.mxu0 %v4419
    %4744 = vmatmul.mubr.f32.gmra.mrb[0].mxu0 %v4041
    %v4745 = vpop.f32.mrb[0].mxu0
    %v4746 = vadd.f32 %v4581, %v4745
    %v4747 = vpop.f32.mrb[0].mxu0
    %4748 = vmatprep.mubr.f32.mxu0 %v4422
    %4749 = vmatmul.mubr.f32.gmra.mrb[0].mxu0 %v4045
    %v4750 = vpop.f32.mrb[0].mxu0
    %v4751 = vadd.f32 %v4586, %v4750
    %v4752 = vpop.f32.mrb[0].mxu0
    %4753 = vdwg.mxu0
    %v4754 = vsel %vm2945, %v4656, 0.0
    %v4755 = vsel %vm2945, %v4661, 0.0
    %v4756 = vadd.f32 %v4754, %v4755
    %v4757 = vsel %vm2945, %v4666, 0.0
    %v4758 = vadd.f32 %v4756, %v4757
    %v4759 = vsel %vm2945, %v4671, 0.0
    %v4760 = vadd.f32 %v4758, %v4759
    %v4761 = vsel %vm2945, %v4676, 0.0
    %v4762 = vadd.f32 %v4760, %v4761
    %v4763 = vsel %vm2945, %v4681, 0.0
    %v4764 = vadd.f32 %v4762, %v4763
    %v4765 = vsel %vm2945, %v4686, 0.0
    %v4766 = vadd.f32 %v4764, %v4765
    %v4767 = vsel %vm2945, %v4691, 0.0
    %v4768 = vadd.f32 %v4766, %v4767
    %v4769 = vsel %vm2945, %v4696, 0.0
    %v4770 = vadd.f32 %v4768, %v4769
    %v4771 = vsel %vm2945, %v4701, 0.0
    %v4772 = vadd.f32 %v4770, %v4771
    %v4773 = vsel %vm2945, %v4706, 0.0
    %v4774 = vadd.f32 %v4772, %v4773
    %v4775 = vsel %vm2945, %v4711, 0.0
    %v4776 = vadd.f32 %v4774, %v4775
    %v4777 = vsel %vm2945, %v4716, 0.0
    %v4778 = vadd.f32 %v4776, %v4777
    %v4779 = vsel %vm2945, %v4721, 0.0
    %v4780 = vadd.f32 %v4778, %v4779
    %v4781 = vsel %vm2945, %v4726, 0.0
    %v4782 = vadd.f32 %v4780, %v4781
    %v4783 = vsel %vm2945, %v4731, 0.0
    %v4784 = vadd.f32 %v4782, %v4783
    %v4785 = vsel %vm2945, %v4736, 0.0
    %v4786 = vadd.f32 %v4784, %v4785
    %v4787 = vsel %vm2945, %v4741, 0.0
    %v4788 = vadd.f32 %v4786, %v4787
    %v4789 = vsel %vm2945, %v4746, 0.0
    %v4790 = vadd.f32 %v4788, %v4789
    %v4791 = vsel %vm2945, %v4751, 0.0
    %v4792 = vadd.f32 %v4790, %v4791
    %v4793 = vrot.slane %v4792, 4
    %v4794 = vadd.f32 %v4792, %v4793
    %v4795 = vrot.slane %v4794, 2
    %v4796 = vadd.f32 %v4794, %v4795
    %v4797 = vrot.slane %v4796, 1
    %v4798 = vadd.f32 %v4796, %v4797
    %v4799 = vmul.f32 %v4798, 0.00625
    %v4800 = vmul.f32 %v4656, %v4656
    %v4801 = vmul.f32 %v4661, %v4661
    %v4802 = vmul.f32 %v4666, %v4666
    %v4803 = vmul.f32 %v4671, %v4671
    %v4804 = vmul.f32 %v4676, %v4676
    %v4805 = vmul.f32 %v4681, %v4681
    %v4806 = vmul.f32 %v4686, %v4686
    %v4807 = vmul.f32 %v4691, %v4691
    %v4808 = vmul.f32 %v4696, %v4696
    %v4809 = vmul.f32 %v4701, %v4701
    %v4810 = vmul.f32 %v4706, %v4706
    %v4811 = vmul.f32 %v4711, %v4711
    %v4812 = vmul.f32 %v4716, %v4716
    %v4813 = vmul.f32 %v4721, %v4721
    %v4814 = vmul.f32 %v4726, %v4726
    %v4815 = vmul.f32 %v4731, %v4731
    %v4816 = vmul.f32 %v4736, %v4736
    %v4817 = vmul.f32 %v4741, %v4741
    %v4818 = vmul.f32 %v4746, %v4746
    %v4819 = vmul.f32 %v4751, %v4751
    %v4820 = vsel %vm2945, %v4800, 0.0
    %v4821 = vsel %vm2945, %v4801, 0.0
    %v4822 = vadd.f32 %v4820, %v4821
    %v4823 = vsel %vm2945, %v4802, 0.0
    %v4824 = vadd.f32 %v4822, %v4823
    %v4825 = vsel %vm2945, %v4803, 0.0
    %v4826 = vadd.f32 %v4824, %v4825
    %v4827 = vsel %vm2945, %v4804, 0.0
    %v4828 = vadd.f32 %v4826, %v4827
    %v4829 = vsel %vm2945, %v4805, 0.0
    %v4830 = vadd.f32 %v4828, %v4829
    %v4831 = vsel %vm2945, %v4806, 0.0
    %v4832 = vadd.f32 %v4830, %v4831
    %v4833 = vsel %vm2945, %v4807, 0.0
    %v4834 = vadd.f32 %v4832, %v4833
    %v4835 = vsel %vm2945, %v4808, 0.0
    %v4836 = vadd.f32 %v4834, %v4835
    %v4837 = vsel %vm2945, %v4809, 0.0
    %v4838 = vadd.f32 %v4836, %v4837
    %v4839 = vsel %vm2945, %v4810, 0.0
    %v4840 = vadd.f32 %v4838, %v4839
    %v4841 = vsel %vm2945, %v4811, 0.0
    %v4842 = vadd.f32 %v4840, %v4841
    %v4843 = vsel %vm2945, %v4812, 0.0
    %v4844 = vadd.f32 %v4842, %v4843
    %v4845 = vsel %vm2945, %v4813, 0.0
    %v4846 = vadd.f32 %v4844, %v4845
    %v4847 = vsel %vm2945, %v4814, 0.0
    %v4848 = vadd.f32 %v4846, %v4847
    %v4849 = vsel %vm2945, %v4815, 0.0
    %v4850 = vadd.f32 %v4848, %v4849
    %v4851 = vsel %vm2945, %v4816, 0.0
    %v4852 = vadd.f32 %v4850, %v4851
    %v4853 = vsel %vm2945, %v4817, 0.0
    %v4854 = vadd.f32 %v4852, %v4853
    %v4855 = vsel %vm2945, %v4818, 0.0
    %v4856 = vadd.f32 %v4854, %v4855
    %v4857 = vsel %vm2945, %v4819, 0.0
    %v4858 = vadd.f32 %v4856, %v4857
    %v4859 = vrot.slane %v4858, 4
    %v4860 = vadd.f32 %v4858, %v4859
    %v4861 = vrot.slane %v4860, 2
    %v4862 = vadd.f32 %v4860, %v4861
    %v4863 = vrot.slane %v4862, 1
    %v4864 = vadd.f32 %v4862, %v4863
    %v4865 = vmul.f32 %v4864, 0.00625
    %v4866 = vmul.f32 %v4799, %v4799
    %v4867 = vsub.f32 %v4865, %v4866
    %v4868 = vmax.f32 %v4867, 0.0
    %v4869 = vsub.f32 %v4656, %v4799
    %v4870 = vsub.f32 %v4661, %v4799
    %v4871 = vsub.f32 %v4666, %v4799
    %v4872 = vsub.f32 %v4671, %v4799
    %v4873 = vsub.f32 %v4676, %v4799
    %v4874 = vsub.f32 %v4681, %v4799
    %v4875 = vsub.f32 %v4686, %v4799
    %v4876 = vsub.f32 %v4691, %v4799
    %v4877 = vsub.f32 %v4696, %v4799
    %v4878 = vsub.f32 %v4701, %v4799
    %v4879 = vsub.f32 %v4706, %v4799
    %v4880 = vsub.f32 %v4711, %v4799
    %v4881 = vsub.f32 %v4716, %v4799
    %v4882 = vsub.f32 %v4721, %v4799
    %v4883 = vsub.f32 %v4726, %v4799
    %v4884 = vsub.f32 %v4731, %v4799
    %v4885 = vsub.f32 %v4736, %v4799
    %v4886 = vsub.f32 %v4741, %v4799
    %v4887 = vsub.f32 %v4746, %v4799
    %v4888 = vsub.f32 %v4751, %v4799
    %v4889 = vadd.f32 %v4868, 1e-05
    %v4890 = vrsqrt.pop %v4889
    %v4891 = vmul.f32 %v4869, %v4890
    %v4892 = vmul.f32 %v4870, %v4890
    %v4893 = vmul.f32 %v4871, %v4890
    %v4894 = vmul.f32 %v4872, %v4890
    %v4895 = vmul.f32 %v4873, %v4890
    %v4896 = vmul.f32 %v4874, %v4890
    %v4897 = vmul.f32 %v4875, %v4890
    %v4898 = vmul.f32 %v4876, %v4890
    %v4899 = vmul.f32 %v4877, %v4890
    %v4900 = vmul.f32 %v4878, %v4890
    %v4901 = vmul.f32 %v4879, %v4890
    %v4902 = vmul.f32 %v4880, %v4890
    %v4903 = vmul.f32 %v4881, %v4890
    %v4904 = vmul.f32 %v4882, %v4890
    %v4905 = vmul.f32 %v4883, %v4890
    %v4906 = vmul.f32 %v4884, %v4890
    %v4907 = vmul.f32 %v4885, %v4890
    %v4908 = vmul.f32 %v4886, %v4890
    %v4909 = vmul.f32 %v4887, %v4890
    %v4910 = vmul.f32 %v4888, %v4890
    %v4911 = vlaneseq
    %v4912 = vshrl.u32 %v4911, 7
    %v4913 = vsub.s32 2, %v4912
    %v4914 = vrot.slane %v47, %v4913
    %v4915 = vmul.f32 %v4891, %v4914
    %v4916 = vmul.f32 %v4892, %v4914
    %v4917 = vmul.f32 %v4893, %v4914
    %v4918 = vmul.f32 %v4894, %v4914
    %v4919 = vmul.f32 %v4895, %v4914
    %v4920 = vmul.f32 %v4896, %v4914
    %v4921 = vmul.f32 %v4897, %v4914
    %v4922 = vmul.f32 %v4898, %v4914
    %v4923 = vmul.f32 %v4899, %v4914
    %v4924 = vmul.f32 %v4900, %v4914
    %v4925 = vmul.f32 %v4901, %v4914
    %v4926 = vmul.f32 %v4902, %v4914
    %v4927 = vmul.f32 %v4903, %v4914
    %v4928 = vmul.f32 %v4904, %v4914
    %v4929 = vmul.f32 %v4905, %v4914
    %v4930 = vmul.f32 %v4906, %v4914
    %v4931 = vmul.f32 %v4907, %v4914
    %v4932 = vmul.f32 %v4908, %v4914
    %v4933 = vmul.f32 %v4909, %v4914
    %v4934 = vmul.f32 %v4910, %v4914
    %v4935 = vlaneseq
    %v4936 = vshrl.u32 %v4935, 7
    %v4937 = vsub.s32 3, %v4936
    %v4938 = vrot.slane %v47, %v4937
    %v4939 = vadd.f32 %v4915, %v4938
    %v4940 = vadd.f32 %v4916, %v4938
    %v4941 = vadd.f32 %v4917, %v4938
    %v4942 = vadd.f32 %v4918, %v4938
    %v4943 = vadd.f32 %v4919, %v4938
    %v4944 = vadd.f32 %v4920, %v4938
    %v4945 = vadd.f32 %v4921, %v4938
    %v4946 = vadd.f32 %v4922, %v4938
    %v4947 = vadd.f32 %v4923, %v4938
    %v4948 = vadd.f32 %v4924, %v4938
    %v4949 = vadd.f32 %v4925, %v4938
    %v4950 = vadd.f32 %v4926, %v4938
    %v4951 = vadd.f32 %v4927, %v4938
    %v4952 = vadd.f32 %v4928, %v4938
    %v4953 = vadd.f32 %v4929, %v4938
    %v4954 = vadd.f32 %v4930, %v4938
    %v4955 = vadd.f32 %v4931, %v4938
    %v4956 = vadd.f32 %v4932, %v4938
    %v4957 = vadd.f32 %v4933, %v4938
    %v4958 = vadd.f32 %v4934, %v4938
    %v4959 = vld [vmem:[%s3] sm:$0xff]
    %v4960 = vld [vmem:[%s3 + $0x8] sm:$0xff]
    %v4961 = vld [vmem:[%s3 + $0x10] sm:$0xff]
    %v4962 = vld [vmem:[%s3 + $0x18] sm:$0xff]
    %v4963 = vld [vmem:[%s3 + $0x20] sm:$0xff]
    %v4964 = vld [vmem:[%s3 + $0x28] sm:$0xff]
    %v4985 = vrot.slane %v4939, 1
    %v4986 = vrot.slane %v4940, 1
    %v4987 = vsel %vm843, %v4985, %v4986
    %v4988 = vrot.slane %v4941, 1
    %v4989 = vsel %vm843, %v4986, %v4988
    %v4990 = vrot.slane %v4942, 1
    %v4991 = vsel %vm843, %v4988, %v4990
    %v4992 = vrot.slane %v4943, 1
    %v4993 = vsel %vm843, %v4990, %v4992
    %v4994 = vrot.slane %v4944, 1
    %v4995 = vsel %vm843, %v4992, %v4994
    %v4996 = vrot.slane %v4945, 1
    %v4997 = vsel %vm843, %v4994, %v4996
    %v4998 = vrot.slane %v4946, 1
    %v4999 = vsel %vm843, %v4996, %v4998
    %v5000 = vrot.slane %v4947, 1
    %v5001 = vsel %vm843, %v4998, %v5000
    %v5002 = vrot.slane %v4948, 1
    %v5003 = vsel %vm843, %v5000, %v5002
    %v5004 = vrot.slane %v4949, 1
    %v5005 = vsel %vm843, %v5002, %v5004
    %v5006 = vrot.slane %v4950, 1
    %v5007 = vsel %vm843, %v5004, %v5006
    %v5008 = vrot.slane %v4951, 1
    %v5009 = vsel %vm843, %v5006, %v5008
    %v5010 = vrot.slane %v4952, 1
    %v5011 = vsel %vm843, %v5008, %v5010
    %v5012 = vrot.slane %v4953, 1
    %v5013 = vsel %vm843, %v5010, %v5012
    %v5014 = vrot.slane %v4954, 1
    %v5015 = vsel %vm843, %v5012, %v5014
    %v5016 = vrot.slane %v4955, 1
    %v5017 = vsel %vm843, %v5014, %v5016
    %v5018 = vrot.slane %v4956, 1
    %v5019 = vsel %vm843, %v5016, %v5018
    %v5020 = vrot.slane %v4957, 1
    %v5021 = vsel %vm843, %v5018, %v5020
    %v5022 = vrot.slane %v4958, 1
    %v5023 = vsel %vm843, %v5020, %v5022
    %v5026 = vsel %vm843, %v5022, %v4985
    %v5027 = vrot.slane %v4939, 2
    %v5028 = vrot.slane %v4940, 2
    %v5029 = vsel %vm972, %v5027, %v5028
    %v5030 = vrot.slane %v4941, 2
    %v5031 = vsel %vm972, %v5028, %v5030
    %v5032 = vrot.slane %v4942, 2
    %v5033 = vsel %vm972, %v5030, %v5032
    %v5034 = vrot.slane %v4943, 2
    %v5035 = vsel %vm972, %v5032, %v5034
    %v5036 = vrot.slane %v4944, 2
    %v5037 = vsel %vm972, %v5034, %v5036
    %v5038 = vrot.slane %v4945, 2
    %v5039 = vsel %vm972, %v5036, %v5038
    %v5040 = vrot.slane %v4946, 2
    %v5041 = vsel %vm972, %v5038, %v5040
    %v5042 = vrot.slane %v4947, 2
    %v5043 = vsel %vm972, %v5040, %v5042
    %v5044 = vrot.slane %v4948, 2
    %v5045 = vsel %vm972, %v5042, %v5044
    %v5046 = vrot.slane %v4949, 2
    %v5047 = vsel %vm972, %v5044, %v5046
    %v5048 = vrot.slane %v4950, 2
    %v5049 = vsel %vm972, %v5046, %v5048
    %v5050 = vrot.slane %v4951, 2
    %v5051 = vsel %vm972, %v5048, %v5050
    %v5052 = vrot.slane %v4952, 2
    %v5053 = vsel %vm972, %v5050, %v5052
    %v5054 = vrot.slane %v4953, 2
    %v5055 = vsel %vm972, %v5052, %v5054
    %v5056 = vrot.slane %v4954, 2
    %v5057 = vsel %vm972, %v5054, %v5056
    %v5058 = vrot.slane %v4955, 2
    %v5059 = vsel %vm972, %v5056, %v5058
    %v5060 = vrot.slane %v4956, 2
    %v5061 = vsel %vm972, %v5058, %v5060
    %v5062 = vrot.slane %v4957, 2
    %v5063 = vsel %vm972, %v5060, %v5062
    %v5064 = vrot.slane %v4958, 2
    %v5065 = vsel %vm972, %v5062, %v5064
    %v5068 = vsel %vm972, %v5064, %v5027
    %5070 = vrot.lane.b32.xlu0 %v4987, 16
    %v5071 = vpop.permute.xlu0 %5070
    %5072 = vrot.lane.b32.xlu0 %v4989, 16
    %v5073 = vpop.permute.xlu0 %5072
    %5074 = vrot.lane.b32.xlu0 %v4991, 16
    %v5075 = vpop.permute.xlu0 %5074
    %5076 = vrot.lane.b32.xlu0 %v4993, 16
    %v5077 = vpop.permute.xlu0 %5076
    %5078 = vrot.lane.b32.xlu0 %v4995, 16
    %v5079 = vpop.permute.xlu0 %5078
    %5080 = vrot.lane.b32.xlu0 %v4997, 16
    %v5081 = vpop.permute.xlu0 %5080
    %5082 = vrot.lane.b32.xlu0 %v4999, 16
    %v5083 = vpop.permute.xlu0 %5082
    %5084 = vrot.lane.b32.xlu0 %v5001, 16
    %v5085 = vpop.permute.xlu0 %5084
    %5086 = vrot.lane.b32.xlu0 %v5003, 16
    %v5087 = vpop.permute.xlu0 %5086
    %5088 = vrot.lane.b32.xlu0 %v5005, 16
    %v5089 = vpop.permute.xlu0 %5088
    %5090 = vrot.lane.b32.xlu0 %v5007, 16
    %v5091 = vpop.permute.xlu0 %5090
    %5092 = vrot.lane.b32.xlu0 %v5009, 16
    %v5093 = vpop.permute.xlu0 %5092
    %5094 = vrot.lane.b32.xlu0 %v5011, 16
    %v5095 = vpop.permute.xlu0 %5094
    %5096 = vrot.lane.b32.xlu0 %v5013, 16
    %v5097 = vpop.permute.xlu0 %5096
    %5098 = vrot.lane.b32.xlu0 %v5015, 16
    %v5099 = vpop.permute.xlu0 %5098
    %5100 = vrot.lane.b32.xlu0 %v5017, 16
    %v5101 = vpop.permute.xlu0 %5100
    %5102 = vrot.lane.b32.xlu0 %v5019, 16
    %v5103 = vpop.permute.xlu0 %5102
    %5104 = vrot.lane.b32.xlu0 %v5021, 16
    %v5105 = vpop.permute.xlu0 %5104
    %5106 = vrot.lane.b32.xlu0 %v5023, 16
    %v5107 = vpop.permute.xlu0 %5106
    %5108 = vrot.lane.b32.xlu0 %v5026, 16
    %v5109 = vpop.permute.xlu0 %5108
    %5131 = vrot.lane.b32.xlu0 %v5029, 32
    %v5132 = vpop.permute.xlu0 %5131
    %5133 = vrot.lane.b32.xlu0 %v5031, 32
    %v5134 = vpop.permute.xlu0 %5133
    %5135 = vrot.lane.b32.xlu0 %v5033, 32
    %v5136 = vpop.permute.xlu0 %5135
    %5137 = vrot.lane.b32.xlu0 %v5035, 32
    %v5138 = vpop.permute.xlu0 %5137
    %5139 = vrot.lane.b32.xlu0 %v5037, 32
    %v5140 = vpop.permute.xlu0 %5139
    %5141 = vrot.lane.b32.xlu0 %v5039, 32
    %v5142 = vpop.permute.xlu0 %5141
    %5143 = vrot.lane.b32.xlu0 %v5041, 32
    %v5144 = vpop.permute.xlu0 %5143
    %5145 = vrot.lane.b32.xlu0 %v5043, 32
    %v5146 = vpop.permute.xlu0 %5145
    %5147 = vrot.lane.b32.xlu0 %v5045, 32
    %v5148 = vpop.permute.xlu0 %5147
    %5149 = vrot.lane.b32.xlu0 %v5047, 32
    %v5150 = vpop.permute.xlu0 %5149
    %5151 = vrot.lane.b32.xlu0 %v5049, 32
    %v5152 = vpop.permute.xlu0 %5151
    %5153 = vrot.lane.b32.xlu0 %v5051, 32
    %v5154 = vpop.permute.xlu0 %5153
    %5155 = vrot.lane.b32.xlu0 %v5053, 32
    %v5156 = vpop.permute.xlu0 %5155
    %5157 = vrot.lane.b32.xlu0 %v5055, 32
    %v5158 = vpop.permute.xlu0 %5157
    %5159 = vrot.lane.b32.xlu0 %v5057, 32
    %v5160 = vpop.permute.xlu0 %5159
    %5161 = vrot.lane.b32.xlu0 %v5059, 32
    %v5162 = vpop.permute.xlu0 %5161
    %5163 = vrot.lane.b32.xlu0 %v5061, 32
    %v5164 = vpop.permute.xlu0 %5163
    %5165 = vrot.lane.b32.xlu0 %v5063, 32
    %v5166 = vpop.permute.xlu0 %5165
    %5167 = vrot.lane.b32.xlu0 %v5065, 32
    %v5168 = vpop.permute.xlu0 %5167
    %5169 = vrot.lane.b32.xlu0 %v5068, 32
    %v5170 = vpop.permute.xlu0 %5169
    %v5191 = vsel %vm2945, %v4939, %v5071
    %v5192 = vsel %vm2945, %v4940, %v5073
    %v5193 = vsel %vm2945, %v4941, %v5075
    %v5194 = vsel %vm2945, %v4942, %v5077
    %v5195 = vsel %vm2945, %v4943, %v5079
    %v5196 = vsel %vm2945, %v4944, %v5081
    %v5197 = vsel %vm2945, %v4945, %v5083
    %v5198 = vsel %vm2945, %v4946, %v5085
    %v5199 = vsel %vm2945, %v4947, %v5087
    %v5200 = vsel %vm2945, %v4948, %v5089
    %v5201 = vsel %vm2945, %v4949, %v5091
    %v5202 = vsel %vm2945, %v4950, %v5093
    %v5203 = vsel %vm2945, %v4951, %v5095
    %v5204 = vsel %vm2945, %v4952, %v5097
    %v5205 = vsel %vm2945, %v4953, %v5099
    %v5206 = vsel %vm2945, %v4954, %v5101
    %v5207 = vsel %vm2945, %v4955, %v5103
    %v5208 = vsel %vm2945, %v4956, %v5105
    %v5209 = vsel %vm2945, %v4957, %v5107
    %v5210 = vsel %vm2945, %v4958, %v5109
    %v5211 = vsel %vm3009, %v5191, %v5132
    %v5212 = vsel %vm3009, %v5192, %v5134
    %v5213 = vsel %vm3009, %v5193, %v5136
    %v5214 = vsel %vm3009, %v5194, %v5138
    %v5215 = vsel %vm3009, %v5195, %v5140
    %v5216 = vsel %vm3009, %v5196, %v5142
    %v5217 = vsel %vm3009, %v5197, %v5144
    %v5218 = vsel %vm3009, %v5198, %v5146
    %v5219 = vsel %vm3009, %v5199, %v5148
    %v5220 = vsel %vm3009, %v5200, %v5150
    %v5221 = vsel %vm3009, %v5201, %v5152
    %v5222 = vsel %vm3009, %v5202, %v5154
    %v5223 = vsel %vm3009, %v5203, %v5156
    %v5224 = vsel %vm3009, %v5204, %v5158
    %v5225 = vsel %vm3009, %v5205, %v5160
    %v5226 = vsel %vm3009, %v5206, %v5162
    %v5227 = vsel %vm3009, %v5207, %v5164
    %v5228 = vsel %vm3009, %v5208, %v5166
    %v5229 = vsel %vm3009, %v5209, %v5168
    %v5230 = vsel %vm3009, %v5210, %v5170
    %v5231 = vlaneseq
    %v5232 = vshrl.u32 %v5231, 7
    %v5233 = vsub.s32 4, %v5232
    %v5234 = vrot.slane %v47, %v5233
    %v5236 = vsel %vm3073, %v5211, 0
    %v5239 = vsel %vm3073, %v5212, 0
    %v5242 = vsel %vm3073, %v5213, 0
    %v5245 = vsel %vm3073, %v5214, 0
    %v5248 = vsel %vm3073, %v5215, 0
    %v5251 = vsel %vm3073, %v5216, 0
    %v5254 = vsel %vm3073, %v5217, 0
    %v5257 = vsel %vm3073, %v5218, 0
    %v5260 = vsel %vm3073, %v5219, 0
    %v5263 = vsel %vm3073, %v5220, 0
    %v5266 = vsel %vm3073, %v5221, 0
    %v5269 = vsel %vm3073, %v5222, 0
    %v5272 = vsel %vm3073, %v5223, 0
    %v5275 = vsel %vm3073, %v5224, 0
    %v5278 = vsel %vm3073, %v5225, 0
    %v5281 = vsel %vm3073, %v5226, 0
    %v5284 = vsel %vm3073, %v5227, 0
    %v5287 = vsel %vm3073, %v5228, 0
    %v5290 = vsel %vm3073, %v5229, 0
    %v5293 = vsel %vm3073, %v5230, 0
    %5295 = vmatprep.subr.mxu0 0.0
    %5296 = vmatpush1.msra.mxu0 %v4959
    %5297 = vmatprep.subr.mxu0 0.0
    %5298 = vmatpush1.msra.mxu0 %v4960
    %5299 = vmatprep.subr.mxu0 0.0
    %5300 = vmatpush1.msra.mxu0 %v4961
    %5301 = vmatprep.subr.mxu0 0.0
    %5302 = vmatpush1.msra.mxu0 %v4962
    %5303 = vmatprep.subr.mxu0 0.0
    %5304 = vmatpush1.msra.mxu0 %v4963
    %5305 = vmatprep.subr.mxu0 0.0
    %5306 = vmatpush1.msra.mxu0 %v4964
    %5307 = vmatprep.subr.mxu0 0.0
    %5308 = vmatpush1.msra.mxu0 0.0
    %5309 = vmatprep.subr.mxu0 0.0
    %5310 = vmatpush1.msra.mxu0 0.0
    %5311 = vmatprep.subr.mxu0 0.0
    %5312 = vmatpush1.msra.mxu0 0.0
    %5313 = vmatprep.subr.mxu0 0.0
    %5314 = vmatpush1.msra.mxu0 0.0
    %5315 = vmatprep.subr.mxu0 0.0
    %5316 = vmatpush1.msra.mxu0 0.0
    %5317 = vmatprep.subr.mxu0 0.0
    %5318 = vmatpush1.msra.mxu0 0.0
    %5319 = vmatprep.subr.mxu0 0.0
    %5320 = vmatpush1.msra.mxu0 0.0
    %5321 = vmatprep.subr.mxu0 0.0
    %5322 = vmatpush1.msra.mxu0 0.0
    %5323 = vmatprep.subr.mxu0 0.0
    %5324 = vmatpush1.msra.mxu0 0.0
    %5325 = vmatprep.subr.mxu0 0.0
    %5326 = vmatpush1.msra.mxu0 0.0
    %5327 = vmatprep.subr.mxu0 0.0
    %5328 = vmatpush1.msra.mxu0 0.0
    %5329 = vmatprep.subr.mxu0 0.0
    %5330 = vmatpush1.msra.mxu0 0.0
    %5331 = vmatprep.subr.mxu0 0.0
    %5332 = vmatpush1.msra.mxu0 0.0
    %5333 = vmatprep.subr.mxu0 0.0
    %5334 = vmatpush1.msra.mxu0 0.0
    %5335 = vmatprep.subr.mxu0 0.0
    %5336 = vmatpush1.msra.mxu0 0.0
    %5337 = vmatprep.subr.mxu0 0.0
    %5338 = vmatpush1.msra.mxu0 0.0
    %5339 = vmatprep.subr.mxu0 0.0
    %5340 = vmatpush1.msra.mxu0 0.0
    %5341 = vmatprep.subr.mxu0 0.0
    %5342 = vmatpush1.msra.mxu0 0.0
    %5343 = vmatprep.subr.mxu0 0.0
    %5344 = vmatpush1.msra.mxu0 0.0
    %5345 = vmatprep.subr.mxu0 0.0
    %5346 = vmatpush1.msra.mxu0 0.0
    %5347 = vmatprep.subr.mxu0 0.0
    %5348 = vmatpush1.msra.mxu0 0.0
    %5349 = vmatprep.subr.mxu0 0.0
    %5350 = vmatpush1.msra.mxu0 0.0
    %5351 = vmatprep.subr.mxu0 0.0
    %5352 = vmatpush1.msra.mxu0 0.0
    %5353 = vmatprep.subr.mxu0 0.0
    %5354 = vmatpush1.msra.mxu0 0.0
    %5355 = vmatprep.subr.mxu0 0.0
    %5356 = vmatpush1.msra.mxu0 0.0
    %5357 = vmatprep.subr.mxu0 0.0
    %5358 = vmatpush1.msra.mxu0 0.0
    %5359 = vmatprep.mubr.f32.mxu0 0.0
    %5360 = vmatmul.mubr.f32.gmra.mrb[0].mxu0 %v5236
    %v5361 = vpop.f32.mrb[0].mxu0
    %v5362 = vadd.f32 %v5234, %v5361
    %v5363 = vpop.f32.mrb[0].mxu0
    %5364 = vmatprep.mubr.f32.mxu0 0.0
    %5365 = vmatmul.mubr.f32.gmra.mrb[0].mxu0 %v5239
    %v5366 = vpop.f32.mrb[0].mxu0
    %v5367 = vadd.f32 %v5234, %v5366
    %v5368 = vpop.f32.mrb[0].mxu0
    %5369 = vmatprep.mubr.f32.mxu0 0.0
    %5370 = vmatmul.mubr.f32.gmra.mrb[0].mxu0 %v5242
    %v5371 = vpop.f32.mrb[0].mxu0
    %v5372 = vadd.f32 %v5234, %v5371
    %v5373 = vpop.f32.mrb[0].mxu0
    %5374 = vmatprep.mubr.f32.mxu0 0.0
    %5375 = vmatmul.mubr.f32.gmra.mrb[0].mxu0 %v5245
    %v5376 = vpop.f32.mrb[0].mxu0
    %v5377 = vadd.f32 %v5234, %v5376
    %v5378 = vpop.f32.mrb[0].mxu0
    %5379 = vmatprep.mubr.f32.mxu0 0.0
    %5380 = vmatmul.mubr.f32.gmra.mrb[0].mxu0 %v5248
    %v5381 = vpop.f32.mrb[0].mxu0
    %v5382 = vadd.f32 %v5234, %v5381
    %v5383 = vpop.f32.mrb[0].mxu0
    %5384 = vmatprep.mubr.f32.mxu0 0.0
    %5385 = vmatmul.mubr.f32.gmra.mrb[0].mxu0 %v5251
    %v5386 = vpop.f32.mrb[0].mxu0
    %v5387 = vadd.f32 %v5234, %v5386
    %v5388 = vpop.f32.mrb[0].mxu0
    %5389 = vmatprep.mubr.f32.mxu0 0.0
    %5390 = vmatmul.mubr.f32.gmra.mrb[0].mxu0 %v5254
    %v5391 = vpop.f32.mrb[0].mxu0
    %v5392 = vadd.f32 %v5234, %v5391
    %v5393 = vpop.f32.mrb[0].mxu0
    %5394 = vmatprep.mubr.f32.mxu0 0.0
    %5395 = vmatmul.mubr.f32.gmra.mrb[0].mxu0 %v5257
    %v5396 = vpop.f32.mrb[0].mxu0
    %v5397 = vadd.f32 %v5234, %v5396
    %v5398 = vpop.f32.mrb[0].mxu0
    %5399 = vmatprep.mubr.f32.mxu0 0.0
    %5400 = vmatmul.mubr.f32.gmra.mrb[0].mxu0 %v5260
    %v5401 = vpop.f32.mrb[0].mxu0
    %v5402 = vadd.f32 %v5234, %v5401
    %v5403 = vpop.f32.mrb[0].mxu0
    %5404 = vmatprep.mubr.f32.mxu0 0.0
    %5405 = vmatmul.mubr.f32.gmra.mrb[0].mxu0 %v5263
    %v5406 = vpop.f32.mrb[0].mxu0
    %v5407 = vadd.f32 %v5234, %v5406
    %v5408 = vpop.f32.mrb[0].mxu0
    %5409 = vmatprep.mubr.f32.mxu0 0.0
    %5410 = vmatmul.mubr.f32.gmra.mrb[0].mxu0 %v5266
    %v5411 = vpop.f32.mrb[0].mxu0
    %v5412 = vadd.f32 %v5234, %v5411
    %v5413 = vpop.f32.mrb[0].mxu0
    %5414 = vmatprep.mubr.f32.mxu0 0.0
    %5415 = vmatmul.mubr.f32.gmra.mrb[0].mxu0 %v5269
    %v5416 = vpop.f32.mrb[0].mxu0
    %v5417 = vadd.f32 %v5234, %v5416
    %v5418 = vpop.f32.mrb[0].mxu0
    %5419 = vmatprep.mubr.f32.mxu0 0.0
    %5420 = vmatmul.mubr.f32.gmra.mrb[0].mxu0 %v5272
    %v5421 = vpop.f32.mrb[0].mxu0
    %v5422 = vadd.f32 %v5234, %v5421
    %v5423 = vpop.f32.mrb[0].mxu0
    %5424 = vmatprep.mubr.f32.mxu0 0.0
    %5425 = vmatmul.mubr.f32.gmra.mrb[0].mxu0 %v5275
    %v5426 = vpop.f32.mrb[0].mxu0
    %v5427 = vadd.f32 %v5234, %v5426
    %v5428 = vpop.f32.mrb[0].mxu0
    %5429 = vmatprep.mubr.f32.mxu0 0.0
    %5430 = vmatmul.mubr.f32.gmra.mrb[0].mxu0 %v5278
    %v5431 = vpop.f32.mrb[0].mxu0
    %v5432 = vadd.f32 %v5234, %v5431
    %v5433 = vpop.f32.mrb[0].mxu0
    %5434 = vmatprep.mubr.f32.mxu0 0.0
    %5435 = vmatmul.mubr.f32.gmra.mrb[0].mxu0 %v5281
    %v5436 = vpop.f32.mrb[0].mxu0
    %v5437 = vadd.f32 %v5234, %v5436
    %v5438 = vpop.f32.mrb[0].mxu0
    %5439 = vmatprep.mubr.f32.mxu0 0.0
    %5440 = vmatmul.mubr.f32.gmra.mrb[0].mxu0 %v5284
    %v5441 = vpop.f32.mrb[0].mxu0
    %v5442 = vadd.f32 %v5234, %v5441
    %v5443 = vpop.f32.mrb[0].mxu0
    %5444 = vmatprep.mubr.f32.mxu0 0.0
    %5445 = vmatmul.mubr.f32.gmra.mrb[0].mxu0 %v5287
    %v5446 = vpop.f32.mrb[0].mxu0
    %v5447 = vadd.f32 %v5234, %v5446
    %v5448 = vpop.f32.mrb[0].mxu0
    %5449 = vmatprep.mubr.f32.mxu0 0.0
    %5450 = vmatmul.mubr.f32.gmra.mrb[0].mxu0 %v5290
    %v5451 = vpop.f32.mrb[0].mxu0
    %v5452 = vadd.f32 %v5234, %v5451
    %v5453 = vpop.f32.mrb[0].mxu0
    %5454 = vmatprep.mubr.f32.mxu0 0.0
    %5455 = vmatmul.mubr.f32.gmra.mrb[0].mxu0 %v5293
    %v5456 = vpop.f32.mrb[0].mxu0
    %v5457 = vadd.f32 %v5234, %v5456
    %v5458 = vpop.f32.mrb[0].mxu0
    %5459 = vdwg.mxu0
    %v5460 = vmax.f32 %v5362, 0.0
    %v5461 = vmax.f32 %v5367, 0.0
    %v5462 = vmax.f32 %v5372, 0.0
    %v5463 = vmax.f32 %v5377, 0.0
    %v5464 = vmax.f32 %v5382, 0.0
    %v5465 = vmax.f32 %v5387, 0.0
    %v5466 = vmax.f32 %v5392, 0.0
    %v5467 = vmax.f32 %v5397, 0.0
    %v5468 = vmax.f32 %v5402, 0.0
    %v5469 = vmax.f32 %v5407, 0.0
    %v5470 = vmax.f32 %v5412, 0.0
    %v5471 = vmax.f32 %v5417, 0.0
    %v5472 = vmax.f32 %v5422, 0.0
    %v5473 = vmax.f32 %v5427, 0.0
    %v5474 = vmax.f32 %v5432, 0.0
    %v5475 = vmax.f32 %v5437, 0.0
    %v5476 = vmax.f32 %v5442, 0.0
    %v5477 = vmax.f32 %v5447, 0.0
    %v5478 = vmax.f32 %v5452, 0.0
    %v5479 = vmax.f32 %v5457, 0.0
    %v5480 = vld [vmem:[%s4] sm:$0xff]
    %v5481 = vld [vmem:[%s4 + $0x8] sm:$0xff]
    %v5482 = vld [vmem:[%s4 + $0x10] sm:$0xff]
    %v5483 = vld [vmem:[%s4 + $0x18] sm:$0xff]
    %v5484 = vld [vmem:[%s4 + $0x20] sm:$0xff]
    %v5485 = vld [vmem:[%s4 + $0x28] sm:$0xff]
    %v5506 = vrot.slane %v5460, 1
    %v5507 = vrot.slane %v5461, 1
    %v5508 = vsel %vm843, %v5506, %v5507
    %v5509 = vrot.slane %v5462, 1
    %v5510 = vsel %vm843, %v5507, %v5509
    %v5511 = vrot.slane %v5463, 1
    %v5512 = vsel %vm843, %v5509, %v5511
    %v5513 = vrot.slane %v5464, 1
    %v5514 = vsel %vm843, %v5511, %v5513
    %v5515 = vrot.slane %v5465, 1
    %v5516 = vsel %vm843, %v5513, %v5515
    %v5517 = vrot.slane %v5466, 1
    %v5518 = vsel %vm843, %v5515, %v5517
    %v5519 = vrot.slane %v5467, 1
    %v5520 = vsel %vm843, %v5517, %v5519
    %v5521 = vrot.slane %v5468, 1
    %v5522 = vsel %vm843, %v5519, %v5521
    %v5523 = vrot.slane %v5469, 1
    %v5524 = vsel %vm843, %v5521, %v5523
    %v5525 = vrot.slane %v5470, 1
    %v5526 = vsel %vm843, %v5523, %v5525
    %v5527 = vrot.slane %v5471, 1
    %v5528 = vsel %vm843, %v5525, %v5527
    %v5529 = vrot.slane %v5472, 1
    %v5530 = vsel %vm843, %v5527, %v5529
    %v5531 = vrot.slane %v5473, 1
    %v5532 = vsel %vm843, %v5529, %v5531
    %v5533 = vrot.slane %v5474, 1
    %v5534 = vsel %vm843, %v5531, %v5533
    %v5535 = vrot.slane %v5475, 1
    %v5536 = vsel %vm843, %v5533, %v5535
    %v5537 = vrot.slane %v5476, 1
    %v5538 = vsel %vm843, %v5535, %v5537
    %v5539 = vrot.slane %v5477, 1
    %v5540 = vsel %vm843, %v5537, %v5539
    %v5541 = vrot.slane %v5478, 1
    %v5542 = vsel %vm843, %v5539, %v5541
    %v5543 = vrot.slane %v5479, 1
    %v5544 = vsel %vm843, %v5541, %v5543
    %v5547 = vsel %vm843, %v5543, %v5506
    %v5548 = vrot.slane %v5460, 2
    %v5549 = vrot.slane %v5461, 2
    %v5550 = vsel %vm972, %v5548, %v5549
    %v5551 = vrot.slane %v5462, 2
    %v5552 = vsel %vm972, %v5549, %v5551
    %v5553 = vrot.slane %v5463, 2
    %v5554 = vsel %vm972, %v5551, %v5553
    %v5555 = vrot.slane %v5464, 2
    %v5556 = vsel %vm972, %v5553, %v5555
    %v5557 = vrot.slane %v5465, 2
    %v5558 = vsel %vm972, %v5555, %v5557
    %v5559 = vrot.slane %v5466, 2
    %v5560 = vsel %vm972, %v5557, %v5559
    %v5561 = vrot.slane %v5467, 2
    %v5562 = vsel %vm972, %v5559, %v5561
    %v5563 = vrot.slane %v5468, 2
    %v5564 = vsel %vm972, %v5561, %v5563
    %v5565 = vrot.slane %v5469, 2
    %v5566 = vsel %vm972, %v5563, %v5565
    %v5567 = vrot.slane %v5470, 2
    %v5568 = vsel %vm972, %v5565, %v5567
    %v5569 = vrot.slane %v5471, 2
    %v5570 = vsel %vm972, %v5567, %v5569
    %v5571 = vrot.slane %v5472, 2
    %v5572 = vsel %vm972, %v5569, %v5571
    %v5573 = vrot.slane %v5473, 2
    %v5574 = vsel %vm972, %v5571, %v5573
    %v5575 = vrot.slane %v5474, 2
    %v5576 = vsel %vm972, %v5573, %v5575
    %v5577 = vrot.slane %v5475, 2
    %v5578 = vsel %vm972, %v5575, %v5577
    %v5579 = vrot.slane %v5476, 2
    %v5580 = vsel %vm972, %v5577, %v5579
    %v5581 = vrot.slane %v5477, 2
    %v5582 = vsel %vm972, %v5579, %v5581
    %v5583 = vrot.slane %v5478, 2
    %v5584 = vsel %vm972, %v5581, %v5583
    %v5585 = vrot.slane %v5479, 2
    %v5586 = vsel %vm972, %v5583, %v5585
    %v5589 = vsel %vm972, %v5585, %v5548
    %5591 = vrot.lane.b32.xlu0 %v5508, 16
    %v5592 = vpop.permute.xlu0 %5591
    %5593 = vrot.lane.b32.xlu0 %v5510, 16
    %v5594 = vpop.permute.xlu0 %5593
    %5595 = vrot.lane.b32.xlu0 %v5512, 16
    %v5596 = vpop.permute.xlu0 %5595
    %5597 = vrot.lane.b32.xlu0 %v5514, 16
    %v5598 = vpop.permute.xlu0 %5597
    %5599 = vrot.lane.b32.xlu0 %v5516, 16
    %v5600 = vpop.permute.xlu0 %5599
    %5601 = vrot.lane.b32.xlu0 %v5518, 16
    %v5602 = vpop.permute.xlu0 %5601
    %5603 = vrot.lane.b32.xlu0 %v5520, 16
    %v5604 = vpop.permute.xlu0 %5603
    %5605 = vrot.lane.b32.xlu0 %v5522, 16
    %v5606 = vpop.permute.xlu0 %5605
    %5607 = vrot.lane.b32.xlu0 %v5524, 16
    %v5608 = vpop.permute.xlu0 %5607
    %5609 = vrot.lane.b32.xlu0 %v5526, 16
    %v5610 = vpop.permute.xlu0 %5609
    %5611 = vrot.lane.b32.xlu0 %v5528, 16
    %v5612 = vpop.permute.xlu0 %5611
    %5613 = vrot.lane.b32.xlu0 %v5530, 16
    %v5614 = vpop.permute.xlu0 %5613
    %5615 = vrot.lane.b32.xlu0 %v5532, 16
    %v5616 = vpop.permute.xlu0 %5615
    %5617 = vrot.lane.b32.xlu0 %v5534, 16
    %v5618 = vpop.permute.xlu0 %5617
    %5619 = vrot.lane.b32.xlu0 %v5536, 16
    %v5620 = vpop.permute.xlu0 %5619
    %5621 = vrot.lane.b32.xlu0 %v5538, 16
    %v5622 = vpop.permute.xlu0 %5621
    %5623 = vrot.lane.b32.xlu0 %v5540, 16
    %v5624 = vpop.permute.xlu0 %5623
    %5625 = vrot.lane.b32.xlu0 %v5542, 16
    %v5626 = vpop.permute.xlu0 %5625
    %5627 = vrot.lane.b32.xlu0 %v5544, 16
    %v5628 = vpop.permute.xlu0 %5627
    %5629 = vrot.lane.b32.xlu0 %v5547, 16
    %v5630 = vpop.permute.xlu0 %5629
    %5652 = vrot.lane.b32.xlu0 %v5550, 32
    %v5653 = vpop.permute.xlu0 %5652
    %5654 = vrot.lane.b32.xlu0 %v5552, 32
    %v5655 = vpop.permute.xlu0 %5654
    %5656 = vrot.lane.b32.xlu0 %v5554, 32
    %v5657 = vpop.permute.xlu0 %5656
    %5658 = vrot.lane.b32.xlu0 %v5556, 32
    %v5659 = vpop.permute.xlu0 %5658
    %5660 = vrot.lane.b32.xlu0 %v5558, 32
    %v5661 = vpop.permute.xlu0 %5660
    %5662 = vrot.lane.b32.xlu0 %v5560, 32
    %v5663 = vpop.permute.xlu0 %5662
    %5664 = vrot.lane.b32.xlu0 %v5562, 32
    %v5665 = vpop.permute.xlu0 %5664
    %5666 = vrot.lane.b32.xlu0 %v5564, 32
    %v5667 = vpop.permute.xlu0 %5666
    %5668 = vrot.lane.b32.xlu0 %v5566, 32
    %v5669 = vpop.permute.xlu0 %5668
    %5670 = vrot.lane.b32.xlu0 %v5568, 32
    %v5671 = vpop.permute.xlu0 %5670
    %5672 = vrot.lane.b32.xlu0 %v5570, 32
    %v5673 = vpop.permute.xlu0 %5672
    %5674 = vrot.lane.b32.xlu0 %v5572, 32
    %v5675 = vpop.permute.xlu0 %5674
    %5676 = vrot.lane.b32.xlu0 %v5574, 32
    %v5677 = vpop.permute.xlu0 %5676
    %5678 = vrot.lane.b32.xlu0 %v5576, 32
    %v5679 = vpop.permute.xlu0 %5678
    %5680 = vrot.lane.b32.xlu0 %v5578, 32
    %v5681 = vpop.permute.xlu0 %5680
    %5682 = vrot.lane.b32.xlu0 %v5580, 32
    %v5683 = vpop.permute.xlu0 %5682
    %5684 = vrot.lane.b32.xlu0 %v5582, 32
    %v5685 = vpop.permute.xlu0 %5684
    %5686 = vrot.lane.b32.xlu0 %v5584, 32
    %v5687 = vpop.permute.xlu0 %5686
    %5688 = vrot.lane.b32.xlu0 %v5586, 32
    %v5689 = vpop.permute.xlu0 %5688
    %5690 = vrot.lane.b32.xlu0 %v5589, 32
    %v5691 = vpop.permute.xlu0 %5690
    %v5712 = vsel %vm2945, %v5460, %v5592
    %v5713 = vsel %vm2945, %v5461, %v5594
    %v5714 = vsel %vm2945, %v5462, %v5596
    %v5715 = vsel %vm2945, %v5463, %v5598
    %v5716 = vsel %vm2945, %v5464, %v5600
    %v5717 = vsel %vm2945, %v5465, %v5602
    %v5718 = vsel %vm2945, %v5466, %v5604
    %v5719 = vsel %vm2945, %v5467, %v5606
    %v5720 = vsel %vm2945, %v5468, %v5608
    %v5721 = vsel %vm2945, %v5469, %v5610
    %v5722 = vsel %vm2945, %v5470, %v5612
    %v5723 = vsel %vm2945, %v5471, %v5614
    %v5724 = vsel %vm2945, %v5472, %v5616
    %v5725 = vsel %vm2945, %v5473, %v5618
    %v5726 = vsel %vm2945, %v5474, %v5620
    %v5727 = vsel %vm2945, %v5475, %v5622
    %v5728 = vsel %vm2945, %v5476, %v5624
    %v5729 = vsel %vm2945, %v5477, %v5626
    %v5730 = vsel %vm2945, %v5478, %v5628
    %v5731 = vsel %vm2945, %v5479, %v5630
    %v5732 = vsel %vm3009, %v5712, %v5653
    %v5733 = vsel %vm3009, %v5713, %v5655
    %v5734 = vsel %vm3009, %v5714, %v5657
    %v5735 = vsel %vm3009, %v5715, %v5659
    %v5736 = vsel %vm3009, %v5716, %v5661
    %v5737 = vsel %vm3009, %v5717, %v5663
    %v5738 = vsel %vm3009, %v5718, %v5665
    %v5739 = vsel %vm3009, %v5719, %v5667
    %v5740 = vsel %vm3009, %v5720, %v5669
    %v5741 = vsel %vm3009, %v5721, %v5671
    %v5742 = vsel %vm3009, %v5722, %v5673
    %v5743 = vsel %vm3009, %v5723, %v5675
    %v5744 = vsel %vm3009, %v5724, %v5677
    %v5745 = vsel %vm3009, %v5725, %v5679
    %v5746 = vsel %vm3009, %v5726, %v5681
    %v5747 = vsel %vm3009, %v5727, %v5683
    %v5748 = vsel %vm3009, %v5728, %v5685
    %v5749 = vsel %vm3009, %v5729, %v5687
    %v5750 = vsel %vm3009, %v5730, %v5689
    %v5751 = vsel %vm3009, %v5731, %v5691
    %v5752 = vlaneseq
    %v5753 = vshrl.u32 %v5752, 7
    %v5754 = vsub.s32 5, %v5753
    %v5755 = vrot.slane %v47, %v5754
    %v5757 = vsel %vm3073, %v5732, 0
    %v5760 = vsel %vm3073, %v5733, 0
    %v5763 = vsel %vm3073, %v5734, 0
    %v5766 = vsel %vm3073, %v5735, 0
    %v5769 = vsel %vm3073, %v5736, 0
    %v5772 = vsel %vm3073, %v5737, 0
    %v5775 = vsel %vm3073, %v5738, 0
    %v5778 = vsel %vm3073, %v5739, 0
    %v5781 = vsel %vm3073, %v5740, 0
    %v5784 = vsel %vm3073, %v5741, 0
    %v5787 = vsel %vm3073, %v5742, 0
    %v5790 = vsel %vm3073, %v5743, 0
    %v5793 = vsel %vm3073, %v5744, 0
    %v5796 = vsel %vm3073, %v5745, 0
    %v5799 = vsel %vm3073, %v5746, 0
    %v5802 = vsel %vm3073, %v5747, 0
    %v5805 = vsel %vm3073, %v5748, 0
    %v5808 = vsel %vm3073, %v5749, 0
    %v5811 = vsel %vm3073, %v5750, 0
    %v5814 = vsel %vm3073, %v5751, 0
    %5816 = vmatprep.subr.mxu0 0.0
    %5817 = vmatpush1.msra.mxu0 %v5480
    %5818 = vmatprep.subr.mxu0 0.0
    %5819 = vmatpush1.msra.mxu0 %v5481
    %5820 = vmatprep.subr.mxu0 0.0
    %5821 = vmatpush1.msra.mxu0 %v5482
    %5822 = vmatprep.subr.mxu0 0.0
    %5823 = vmatpush1.msra.mxu0 %v5483
    %5824 = vmatprep.subr.mxu0 0.0
    %5825 = vmatpush1.msra.mxu0 %v5484
    %5826 = vmatprep.subr.mxu0 0.0
    %5827 = vmatpush1.msra.mxu0 %v5485
    %5828 = vmatprep.subr.mxu0 0.0
    %5829 = vmatpush1.msra.mxu0 0.0
    %5830 = vmatprep.subr.mxu0 0.0
    %5831 = vmatpush1.msra.mxu0 0.0
    %5832 = vmatprep.subr.mxu0 0.0
    %5833 = vmatpush1.msra.mxu0 0.0
    %5834 = vmatprep.subr.mxu0 0.0
    %5835 = vmatpush1.msra.mxu0 0.0
    %5836 = vmatprep.subr.mxu0 0.0
    %5837 = vmatpush1.msra.mxu0 0.0
    %5838 = vmatprep.subr.mxu0 0.0
    %5839 = vmatpush1.msra.mxu0 0.0
    %5840 = vmatprep.subr.mxu0 0.0
    %5841 = vmatpush1.msra.mxu0 0.0
    %5842 = vmatprep.subr.mxu0 0.0
    %5843 = vmatpush1.msra.mxu0 0.0
    %5844 = vmatprep.subr.mxu0 0.0
    %5845 = vmatpush1.msra.mxu0 0.0
    %5846 = vmatprep.subr.mxu0 0.0
    %5847 = vmatpush1.msra.mxu0 0.0
    %5848 = vmatprep.subr.mxu0 0.0
    %5849 = vmatpush1.msra.mxu0 0.0
    %5850 = vmatprep.subr.mxu0 0.0
    %5851 = vmatpush1.msra.mxu0 0.0
    %5852 = vmatprep.subr.mxu0 0.0
    %5853 = vmatpush1.msra.mxu0 0.0
    %5854 = vmatprep.subr.mxu0 0.0
    %5855 = vmatpush1.msra.mxu0 0.0
    %5856 = vmatprep.subr.mxu0 0.0
    %5857 = vmatpush1.msra.mxu0 0.0
    %5858 = vmatprep.subr.mxu0 0.0
    %5859 = vmatpush1.msra.mxu0 0.0
    %5860 = vmatprep.subr.mxu0 0.0
    %5861 = vmatpush1.msra.mxu0 0.0
    %5862 = vmatprep.subr.mxu0 0.0
    %5863 = vmatpush1.msra.mxu0 0.0
    %5864 = vmatprep.subr.mxu0 0.0
    %5865 = vmatpush1.msra.mxu0 0.0
    %5866 = vmatprep.subr.mxu0 0.0
    %5867 = vmatpush1.msra.mxu0 0.0
    %5868 = vmatprep.subr.mxu0 0.0
    %5869 = vmatpush1.msra.mxu0 0.0
    %5870 = vmatprep.subr.mxu0 0.0
    %5871 = vmatpush1.msra.mxu0 0.0
    %5872 = vmatprep.subr.mxu0 0.0
    %5873 = vmatpush1.msra.mxu0 0.0
    %5874 = vmatprep.subr.mxu0 0.0
    %5875 = vmatpush1.msra.mxu0 0.0
    %5876 = vmatprep.subr.mxu0 0.0
    %5877 = vmatpush1.msra.mxu0 0.0
    %5878 = vmatprep.subr.mxu0 0.0
    %5879 = vmatpush1.msra.mxu0 0.0
    %5880 = vmatprep.mubr.f32.mxu0 0.0
    %5881 = vmatmul.mubr.f32.gmra.mrb[0].mxu0 %v5757
    %v5882 = vpop.f32.mrb[0].mxu0
    %v5883 = vadd.f32 %v5755, %v5882
    %v5884 = vpop.f32.mrb[0].mxu0
    %5885 = vmatprep.mubr.f32.mxu0 0.0
    %5886 = vmatmul.mubr.f32.gmra.mrb[0].mxu0 %v5760
    %v5887 = vpop.f32.mrb[0].mxu0
    %v5888 = vadd.f32 %v5755, %v5887
    %v5889 = vpop.f32.mrb[0].mxu0
    %5890 = vmatprep.mubr.f32.mxu0 0.0
    %5891 = vmatmul.mubr.f32.gmra.mrb[0].mxu0 %v5763
    %v5892 = vpop.f32.mrb[0].mxu0
    %v5893 = vadd.f32 %v5755, %v5892
    %v5894 = vpop.f32.mrb[0].mxu0
    %5895 = vmatprep.mubr.f32.mxu0 0.0
    %5896 = vmatmul.mubr.f32.gmra.mrb[0].mxu0 %v5766
    %v5897 = vpop.f32.mrb[0].mxu0
    %v5898 = vadd.f32 %v5755, %v5897
    %v5899 = vpop.f32.mrb[0].mxu0
    %5900 = vmatprep.mubr.f32.mxu0 0.0
    %5901 = vmatmul.mubr.f32.gmra.mrb[0].mxu0 %v5769
    %v5902 = vpop.f32.mrb[0].mxu0
    %v5903 = vadd.f32 %v5755, %v5902
    %v5904 = vpop.f32.mrb[0].mxu0
    %5905 = vmatprep.mubr.f32.mxu0 0.0
    %5906 = vmatmul.mubr.f32.gmra.mrb[0].mxu0 %v5772
    %v5907 = vpop.f32.mrb[0].mxu0
    %v5908 = vadd.f32 %v5755, %v5907
    %v5909 = vpop.f32.mrb[0].mxu0
    %5910 = vmatprep.mubr.f32.mxu0 0.0
    %5911 = vmatmul.mubr.f32.gmra.mrb[0].mxu0 %v5775
    %v5912 = vpop.f32.mrb[0].mxu0
    %v5913 = vadd.f32 %v5755, %v5912
    %v5914 = vpop.f32.mrb[0].mxu0
    %5915 = vmatprep.mubr.f32.mxu0 0.0
    %5916 = vmatmul.mubr.f32.gmra.mrb[0].mxu0 %v5778
    %v5917 = vpop.f32.mrb[0].mxu0
    %v5918 = vadd.f32 %v5755, %v5917
    %v5919 = vpop.f32.mrb[0].mxu0
    %5920 = vmatprep.mubr.f32.mxu0 0.0
    %5921 = vmatmul.mubr.f32.gmra.mrb[0].mxu0 %v5781
    %v5922 = vpop.f32.mrb[0].mxu0
    %v5923 = vadd.f32 %v5755, %v5922
    %v5924 = vpop.f32.mrb[0].mxu0
    %5925 = vmatprep.mubr.f32.mxu0 0.0
    %5926 = vmatmul.mubr.f32.gmra.mrb[0].mxu0 %v5784
    %v5927 = vpop.f32.mrb[0].mxu0
    %v5928 = vadd.f32 %v5755, %v5927
    %v5929 = vpop.f32.mrb[0].mxu0
    %5930 = vmatprep.mubr.f32.mxu0 0.0
    %5931 = vmatmul.mubr.f32.gmra.mrb[0].mxu0 %v5787
    %v5932 = vpop.f32.mrb[0].mxu0
    %v5933 = vadd.f32 %v5755, %v5932
    %v5934 = vpop.f32.mrb[0].mxu0
    %5935 = vmatprep.mubr.f32.mxu0 0.0
    %5936 = vmatmul.mubr.f32.gmra.mrb[0].mxu0 %v5790
    %v5937 = vpop.f32.mrb[0].mxu0
    %v5938 = vadd.f32 %v5755, %v5937
    %v5939 = vpop.f32.mrb[0].mxu0
    %5940 = vmatprep.mubr.f32.mxu0 0.0
    %5941 = vmatmul.mubr.f32.gmra.mrb[0].mxu0 %v5793
    %v5942 = vpop.f32.mrb[0].mxu0
    %v5943 = vadd.f32 %v5755, %v5942
    %v5944 = vpop.f32.mrb[0].mxu0
    %5945 = vmatprep.mubr.f32.mxu0 0.0
    %5946 = vmatmul.mubr.f32.gmra.mrb[0].mxu0 %v5796
    %v5947 = vpop.f32.mrb[0].mxu0
    %v5948 = vadd.f32 %v5755, %v5947
    %v5949 = vpop.f32.mrb[0].mxu0
    %5950 = vmatprep.mubr.f32.mxu0 0.0
    %5951 = vmatmul.mubr.f32.gmra.mrb[0].mxu0 %v5799
    %v5952 = vpop.f32.mrb[0].mxu0
    %v5953 = vadd.f32 %v5755, %v5952
    %v5954 = vpop.f32.mrb[0].mxu0
    %5955 = vmatprep.mubr.f32.mxu0 0.0
    %5956 = vmatmul.mubr.f32.gmra.mrb[0].mxu0 %v5802
    %v5957 = vpop.f32.mrb[0].mxu0
    %v5958 = vadd.f32 %v5755, %v5957
    %v5959 = vpop.f32.mrb[0].mxu0
    %5960 = vmatprep.mubr.f32.mxu0 0.0
    %5961 = vmatmul.mubr.f32.gmra.mrb[0].mxu0 %v5805
    %v5962 = vpop.f32.mrb[0].mxu0
    %v5963 = vadd.f32 %v5755, %v5962
    %v5964 = vpop.f32.mrb[0].mxu0
    %5965 = vmatprep.mubr.f32.mxu0 0.0
    %5966 = vmatmul.mubr.f32.gmra.mrb[0].mxu0 %v5808
    %v5967 = vpop.f32.mrb[0].mxu0
    %v5968 = vadd.f32 %v5755, %v5967
    %v5969 = vpop.f32.mrb[0].mxu0
    %5970 = vmatprep.mubr.f32.mxu0 0.0
    %5971 = vmatmul.mubr.f32.gmra.mrb[0].mxu0 %v5811
    %v5972 = vpop.f32.mrb[0].mxu0
    %v5973 = vadd.f32 %v5755, %v5972
    %v5974 = vpop.f32.mrb[0].mxu0
    %5975 = vmatprep.mubr.f32.mxu0 0.0
    %5976 = vmatmul.mubr.f32.gmra.mrb[0].mxu0 %v5814
    %v5977 = vpop.f32.mrb[0].mxu0
    %v5978 = vadd.f32 %v5755, %v5977
    %v5979 = vpop.f32.mrb[0].mxu0
    %5980 = vdwg.mxu0
    %v5981 = vmax.f32 %v5883, 0.0
    %v5982 = vmax.f32 %v5888, 0.0
    %v5983 = vmax.f32 %v5893, 0.0
    %v5984 = vmax.f32 %v5898, 0.0
    %v5985 = vmax.f32 %v5903, 0.0
    %v5986 = vmax.f32 %v5908, 0.0
    %v5987 = vmax.f32 %v5913, 0.0
    %v5988 = vmax.f32 %v5918, 0.0
    %v5989 = vmax.f32 %v5923, 0.0
    %v5990 = vmax.f32 %v5928, 0.0
    %v5991 = vmax.f32 %v5933, 0.0
    %v5992 = vmax.f32 %v5938, 0.0
    %v5993 = vmax.f32 %v5943, 0.0
    %v5994 = vmax.f32 %v5948, 0.0
    %v5995 = vmax.f32 %v5953, 0.0
    %v5996 = vmax.f32 %v5958, 0.0
    %v5997 = vmax.f32 %v5963, 0.0
    %v5998 = vmax.f32 %v5968, 0.0
    %v5999 = vmax.f32 %v5973, 0.0
    %v6000 = vmax.f32 %v5978, 0.0
    %v6001 = vld [vmem:[%s9] sm:$0xff]
    %v6002 = vld [vmem:[%s9 + $0x8] sm:$0xff]
    %v6003 = vld [vmem:[%s9 + $0x10] sm:$0xff]
    %v6004 = vld [vmem:[%s9 + $0x18] sm:$0xff]
    %v6005 = vld [vmem:[%s9 + $0x20] sm:$0xff]
    %v6006 = vld [vmem:[%s9 + $0x28] sm:$0xff]
    %v6007 = vld [vmem:[%s9 + $0x30] sm:$0xff]
    %v6008 = vld [vmem:[%s9 + $0x38] sm:$0xff]
    %v6029 = vrot.slane %v5981, 1
    %v6030 = vrot.slane %v5982, 1
    %v6031 = vsel %vm843, %v6029, %v6030
    %v6032 = vrot.slane %v5983, 1
    %v6033 = vsel %vm843, %v6030, %v6032
    %v6034 = vrot.slane %v5984, 1
    %v6035 = vsel %vm843, %v6032, %v6034
    %v6036 = vrot.slane %v5985, 1
    %v6037 = vsel %vm843, %v6034, %v6036
    %v6038 = vrot.slane %v5986, 1
    %v6039 = vsel %vm843, %v6036, %v6038
    %v6040 = vrot.slane %v5987, 1
    %v6041 = vsel %vm843, %v6038, %v6040
    %v6042 = vrot.slane %v5988, 1
    %v6043 = vsel %vm843, %v6040, %v6042
    %v6044 = vrot.slane %v5989, 1
    %v6045 = vsel %vm843, %v6042, %v6044
    %v6046 = vrot.slane %v5990, 1
    %v6047 = vsel %vm843, %v6044, %v6046
    %v6048 = vrot.slane %v5991, 1
    %v6049 = vsel %vm843, %v6046, %v6048
    %v6050 = vrot.slane %v5992, 1
    %v6051 = vsel %vm843, %v6048, %v6050
    %v6052 = vrot.slane %v5993, 1
    %v6053 = vsel %vm843, %v6050, %v6052
    %v6054 = vrot.slane %v5994, 1
    %v6055 = vsel %vm843, %v6052, %v6054
    %v6056 = vrot.slane %v5995, 1
    %v6057 = vsel %vm843, %v6054, %v6056
    %v6058 = vrot.slane %v5996, 1
    %v6059 = vsel %vm843, %v6056, %v6058
    %v6060 = vrot.slane %v5997, 1
    %v6061 = vsel %vm843, %v6058, %v6060
    %v6062 = vrot.slane %v5998, 1
    %v6063 = vsel %vm843, %v6060, %v6062
    %v6064 = vrot.slane %v5999, 1
    %v6065 = vsel %vm843, %v6062, %v6064
    %v6066 = vrot.slane %v6000, 1
    %v6067 = vsel %vm843, %v6064, %v6066
    %v6089 = vsel %vm843, %v6066, %v6029
    %v6090 = vmax.f32 %v5981, %v6031
    %v6091 = vmax.f32 %v5982, %v6033
    %v6092 = vmax.f32 %v5983, %v6035
    %v6093 = vmax.f32 %v5984, %v6037
    %v6094 = vmax.f32 %v5985, %v6039
    %v6095 = vmax.f32 %v5986, %v6041
    %v6096 = vmax.f32 %v5987, %v6043
    %v6097 = vmax.f32 %v5988, %v6045
    %v6098 = vmax.f32 %v5989, %v6047
    %v6099 = vmax.f32 %v5990, %v6049
    %v6100 = vmax.f32 %v5991, %v6051
    %v6101 = vmax.f32 %v5992, %v6053
    %v6102 = vmax.f32 %v5993, %v6055
    %v6103 = vmax.f32 %v5994, %v6057
    %v6104 = vmax.f32 %v5995, %v6059
    %v6105 = vmax.f32 %v5996, %v6061
    %v6106 = vmax.f32 %v5997, %v6063
    %v6107 = vmax.f32 %v5998, %v6065
    %v6108 = vmax.f32 %v5999, %v6067
    %v6109 = vmax.f32 %v6000, %v6089
    %v6110 = vrot.slane %v5983, 4
    %v6111 = vrot.slane %v5984, 4
    %v6112 = vsel %vm1230, %v6110, %v6111
    %v6113 = vrot.slane %v5985, 4
    %v6114 = vsel %vm1230, %v6111, %v6113
    %v6115 = vrot.slane %v5986, 4
    %v6116 = vsel %vm1230, %v6113, %v6115
    %v6117 = vrot.slane %v5987, 4
    %v6118 = vsel %vm1230, %v6115, %v6117
    %v6119 = vrot.slane %v5988, 4
    %v6120 = vsel %vm1230, %v6117, %v6119
    %v6121 = vrot.slane %v5989, 4
    %v6122 = vsel %vm1230, %v6119, %v6121
    %v6123 = vrot.slane %v5990, 4
    %v6124 = vsel %vm1230, %v6121, %v6123
    %v6125 = vrot.slane %v5991, 4
    %v6126 = vsel %vm1230, %v6123, %v6125
    %v6127 = vrot.slane %v5992, 4
    %v6128 = vsel %vm1230, %v6125, %v6127
    %v6129 = vrot.slane %v5993, 4
    %v6130 = vsel %vm1230, %v6127, %v6129
    %v6131 = vrot.slane %v5994, 4
    %v6132 = vsel %vm1230, %v6129, %v6131
    %v6133 = vrot.slane %v5995, 4
    %v6134 = vsel %vm1230, %v6131, %v6133
    %v6135 = vrot.slane %v5996, 4
    %v6136 = vsel %vm1230, %v6133, %v6135
    %v6137 = vrot.slane %v5997, 4
    %v6138 = vsel %vm1230, %v6135, %v6137
    %v6139 = vrot.slane %v5998, 4
    %v6140 = vsel %vm1230, %v6137, %v6139
    %v6141 = vrot.slane %v5999, 4
    %v6142 = vsel %vm1230, %v6139, %v6141
    %v6143 = vrot.slane %v6000, 4
    %v6144 = vsel %vm1230, %v6141, %v6143
    %v6163 = vrot.slane %v5981, 4
    %v6164 = vrot.slane %v5982, 4
    %v6165 = vsel %vm1230, %v6163, %v6164
    %v6166 = vsel %vm1230, %v6164, %v6110
    %v6170 = vsel %vm1230, %v6143, %v6163
    %v6171 = vmax.f32 %v6090, %v6112
    %v6172 = vmax.f32 %v6091, %v6114
    %v6173 = vmax.f32 %v6092, %v6116
    %v6174 = vmax.f32 %v6093, %v6118
    %v6175 = vmax.f32 %v6094, %v6120
    %v6176 = vmax.f32 %v6095, %v6122
    %v6177 = vmax.f32 %v6096, %v6124
    %v6178 = vmax.f32 %v6097, %v6126
    %v6179 = vmax.f32 %v6098, %v6128
    %v6180 = vmax.f32 %v6099, %v6130
    %v6181 = vmax.f32 %v6100, %v6132
    %v6182 = vmax.f32 %v6101, %v6134
    %v6183 = vmax.f32 %v6102, %v6136
    %v6184 = vmax.f32 %v6103, %v6138
    %v6185 = vmax.f32 %v6104, %v6140
    %v6186 = vmax.f32 %v6105, %v6142
    %v6187 = vmax.f32 %v6106, %v6144
    %v6188 = vmax.f32 %v6107, %v6170
    %v6189 = vmax.f32 %v6108, %v6165
    %v6190 = vmax.f32 %v6109, %v6166
    %v6191 = vrot.slane %v5983, 5
    %v6192 = vrot.slane %v5984, 5
    %v6193 = vsel %vm1359, %v6191, %v6192
    %v6194 = vrot.slane %v5985, 5
    %v6195 = vsel %vm1359, %v6192, %v6194
    %v6196 = vrot.slane %v5986, 5
    %v6197 = vsel %vm1359, %v6194, %v6196
    %v6198 = vrot.slane %v5987, 5
    %v6199 = vsel %vm1359, %v6196, %v6198
    %v6200 = vrot.slane %v5988, 5
    %v6201 = vsel %vm1359, %v6198, %v6200
    %v6202 = vrot.slane %v5989, 5
    %v6203 = vsel %vm1359, %v6200, %v6202
    %v6204 = vrot.slane %v5990, 5
    %v6205 = vsel %vm1359, %v6202, %v6204
    %v6206 = vrot.slane %v5991, 5
    %v6207 = vsel %vm1359, %v6204, %v6206
    %v6208 = vrot.slane %v5992, 5
    %v6209 = vsel %vm1359, %v6206, %v6208
    %v6210 = vrot.slane %v5993, 5
    %v6211 = vsel %vm1359, %v6208, %v6210
    %v6212 = vrot.slane %v5994, 5
    %v6213 = vsel %vm1359, %v6210, %v6212
    %v6214 = vrot.slane %v5995, 5
    %v6215 = vsel %vm1359, %v6212, %v6214
    %v6216 = vrot.slane %v5996, 5
    %v6217 = vsel %vm1359, %v6214, %v6216
    %v6218 = vrot.slane %v5997, 5
    %v6219 = vsel %vm1359, %v6216, %v6218
    %v6220 = vrot.slane %v5998, 5
    %v6221 = vsel %vm1359, %v6218, %v6220
    %v6222 = vrot.slane %v5999, 5
    %v6223 = vsel %vm1359, %v6220, %v6222
    %v6224 = vrot.slane %v6000, 5
    %v6225 = vsel %vm1359, %v6222, %v6224
    %v6244 = vrot.slane %v5981, 5
    %v6245 = vrot.slane %v5982, 5
    %v6246 = vsel %vm1359, %v6244, %v6245
    %v6247 = vsel %vm1359, %v6245, %v6191
    %v6251 = vsel %vm1359, %v6224, %v6244
    %v6252 = vmax.f32 %v6171, %v6193
    %v6253 = vmax.f32 %v6172, %v6195
    %v6254 = vmax.f32 %v6173, %v6197
    %v6255 = vmax.f32 %v6174, %v6199
    %v6256 = vmax.f32 %v6175, %v6201
    %v6257 = vmax.f32 %v6176, %v6203
    %v6258 = vmax.f32 %v6177, %v6205
    %v6259 = vmax.f32 %v6178, %v6207
    %v6260 = vmax.f32 %v6179, %v6209
    %v6261 = vmax.f32 %v6180, %v6211
    %v6262 = vmax.f32 %v6181, %v6213
    %v6263 = vmax.f32 %v6182, %v6215
    %v6264 = vmax.f32 %v6183, %v6217
    %v6265 = vmax.f32 %v6184, %v6219
    %v6266 = vmax.f32 %v6185, %v6221
    %v6267 = vmax.f32 %v6186, %v6223
    %v6268 = vmax.f32 %v6187, %v6225
    %v6269 = vmax.f32 %v6188, %v6251
    %v6270 = vmax.f32 %v6189, %v6246
    %v6271 = vmax.f32 %v6190, %v6247
    %v6273 = vsel %vm3009, %v6002, 0
    %v6276 = vsel %vm3009, %v6004, 0
    %v6279 = vsel %vm3009, %v6006, 0
    %v6282 = vsel %vm3009, %v6008, 0
    %6284 = vmatprep.subr.mxu0 0.0
    %6285 = vmatpush1.msra.mxu0 %v6252
    %6286 = vmatprep.subr.mxu0 0.0
    %6287 = vmatpush1.msra.mxu0 %v6253
    %6288 = vmatprep.subr.mxu0 0.0
    %6289 = vmatpush1.msra.mxu0 %v6254
    %6290 = vmatprep.subr.mxu0 0.0
    %6291 = vmatpush1.msra.mxu0 %v6255
    %6292 = vmatprep.subr.mxu0 0.0
    %6293 = vmatpush1.msra.mxu0 %v6256
    %6294 = vmatprep.subr.mxu0 0.0
    %6295 = vmatpush1.msra.mxu0 %v6257
    %6296 = vmatprep.subr.mxu0 0.0
    %6297 = vmatpush1.msra.mxu0 %v6258
    %6298 = vmatprep.subr.mxu0 0.0
    %6299 = vmatpush1.msra.mxu0 %v6259
    %6300 = vmatprep.subr.mxu0 0.0
    %6301 = vmatpush1.msra.mxu0 %v6260
    %6302 = vmatprep.subr.mxu0 0.0
    %6303 = vmatpush1.msra.mxu0 %v6261
    %6304 = vmatprep.subr.mxu0 0.0
    %6305 = vmatpush1.msra.mxu0 %v6262
    %6306 = vmatprep.subr.mxu0 0.0
    %6307 = vmatpush1.msra.mxu0 %v6263
    %6308 = vmatprep.subr.mxu0 0.0
    %6309 = vmatpush1.msra.mxu0 %v6264
    %6310 = vmatprep.subr.mxu0 0.0
    %6311 = vmatpush1.msra.mxu0 %v6265
    %6312 = vmatprep.subr.mxu0 0.0
    %6313 = vmatpush1.msra.mxu0 %v6266
    %6314 = vmatprep.subr.mxu0 0.0
    %6315 = vmatpush1.msra.mxu0 %v6267
    %6316 = vmatprep.subr.mxu0 0.0
    %6317 = vmatpush1.msra.mxu0 %v6268
    %6318 = vmatprep.subr.mxu0 0.0
    %6319 = vmatpush1.msra.mxu0 %v6269
    %6320 = vmatprep.subr.mxu0 0.0
    %6321 = vmatpush1.msra.mxu0 %v6270
    %6322 = vmatprep.subr.mxu0 0.0
    %6323 = vmatpush1.msra.mxu0 %v6271
    %6324 = vmatprep.subr.mxu0 0.0
    %6325 = vmatpush1.msra.mxu0 0.0
    %6326 = vmatprep.subr.mxu0 0.0
    %6327 = vmatpush1.msra.mxu0 0.0
    %6328 = vmatprep.subr.mxu0 0.0
    %6329 = vmatpush1.msra.mxu0 0.0
    %6330 = vmatprep.subr.mxu0 0.0
    %6331 = vmatpush1.msra.mxu0 0.0
    %6332 = vmatprep.subr.mxu0 0.0
    %6333 = vmatpush1.msra.mxu0 0.0
    %6334 = vmatprep.subr.mxu0 0.0
    %6335 = vmatpush1.msra.mxu0 0.0
    %6336 = vmatprep.subr.mxu0 0.0
    %6337 = vmatpush1.msra.mxu0 0.0
    %6338 = vmatprep.subr.mxu0 0.0
    %6339 = vmatpush1.msra.mxu0 0.0
    %6340 = vmatprep.subr.mxu0 0.0
    %6341 = vmatpush1.msra.mxu0 0.0
    %6342 = vmatprep.subr.mxu0 0.0
    %6343 = vmatpush1.msra.mxu0 0.0
    %6344 = vmatprep.subr.mxu0 0.0
    %6345 = vmatpush1.msra.mxu0 0.0
    %6346 = vmatprep.subr.mxu0 0.0
    %6347 = vmatpush1.msra.mxu0 0.0
    %6348 = vmatprep.mubr.f32.mxu0 %v6273
    %6349 = vmatmul.mubr.f32.gmra.mrb[0].mxu0 %v6001
    %v6350 = vpop.f32.mrb[0].mxu0
    %v6351 = vadd.f32 0.0, %v6350
    %v6352 = vpop.f32.mrb[0].mxu0
    %6353 = vmatprep.mubr.f32.mxu0 %v6276
    %6354 = vmatmul.mubr.f32.gmra.mrb[0].mxu0 %v6003
    %v6355 = vpop.f32.mrb[0].mxu0
    %v6356 = vadd.f32 0.0, %v6355
    %v6357 = vpop.f32.mrb[0].mxu0
    %6358 = vmatprep.mubr.f32.mxu0 %v6279
    %6359 = vmatmul.mubr.f32.gmra.mrb[0].mxu0 %v6005
    %v6360 = vpop.f32.mrb[0].mxu0
    %v6361 = vadd.f32 0.0, %v6360
    %v6362 = vpop.f32.mrb[0].mxu0
    %6363 = vmatprep.mubr.f32.mxu0 %v6282
    %6364 = vmatmul.mubr.f32.gmra.mrb[0].mxu0 %v6007
    %v6365 = vpop.f32.mrb[0].mxu0
    %v6366 = vadd.f32 0.0, %v6365
    %v6367 = vpop.f32.mrb[0].mxu0
    %6368 = vdwg.mxu0
    %v6369 = vsel %vm3009, %v6351, 0.0
    %v6370 = vsel %vm3009, %v6356, 0.0
    %v6371 = vadd.f32 %v6369, %v6370
    %v6372 = vsel %vm3009, %v6361, 0.0
    %v6373 = vadd.f32 %v6371, %v6372
    %v6374 = vsel %vm3009, %v6366, 0.0
    %v6375 = vadd.f32 %v6373, %v6374
    %v6376 = vrot.slane %v6375, 4
    %v6377 = vadd.f32 %v6375, %v6376
    %v6378 = vrot.slane %v6377, 2
    %v6379 = vadd.f32 %v6377, %v6378
    %v6380 = vrot.slane %v6379, 1
    %v6381 = vadd.f32 %v6379, %v6380
    %v6382 = vmul.f32 %v6381, 0.03125
    %v6383 = vmul.f32 %v6351, %v6351
    %v6384 = vmul.f32 %v6356, %v6356
    %v6385 = vmul.f32 %v6361, %v6361
    %v6386 = vmul.f32 %v6366, %v6366
    %v6387 = vsel %vm3009, %v6383, 0.0
    %v6388 = vsel %vm3009, %v6384, 0.0
    %v6389 = vadd.f32 %v6387, %v6388
    %v6390 = vsel %vm3009, %v6385, 0.0
    %v6391 = vadd.f32 %v6389, %v6390
    %v6392 = vsel %vm3009, %v6386, 0.0
    %v6393 = vadd.f32 %v6391, %v6392
    %v6394 = vrot.slane %v6393, 4
    %v6395 = vadd.f32 %v6393, %v6394
    %v6396 = vrot.slane %v6395, 2
    %v6397 = vadd.f32 %v6395, %v6396
    %v6398 = vrot.slane %v6397, 1
    %v6399 = vadd.f32 %v6397, %v6398
    %v6400 = vmul.f32 %v6399, 0.03125
    %v6401 = vmul.f32 %v6382, %v6382
    %v6402 = vsub.f32 %v6400, %v6401
    %v6403 = vmax.f32 %v6402, 0.0
    %v6404 = vsub.f32 %v6351, %v6382
    %v6405 = vsub.f32 %v6356, %v6382
    %v6406 = vsub.f32 %v6361, %v6382
    %v6407 = vsub.f32 %v6366, %v6382
    %v6408 = vadd.f32 %v6403, 1e-05
    %v6409 = vrsqrt.pop %v6408
    %v6410 = vmul.f32 %v6404, %v6409
    %v6411 = vmul.f32 %v6405, %v6409
    %v6412 = vmul.f32 %v6406, %v6409
    %v6413 = vmul.f32 %v6407, %v6409
    %v6414 = vlaneseq
    %v6415 = vshrl.u32 %v6414, 7
    %v6416 = vsub.s32 6, %v6415
    %v6417 = vrot.slane %v47, %v6416
    %v6418 = vmul.f32 %v6410, %v6417
    %v6419 = vmul.f32 %v6411, %v6417
    %v6420 = vmul.f32 %v6412, %v6417
    %v6421 = vmul.f32 %v6413, %v6417
    %v6422 = vlaneseq
    %v6423 = vshrl.u32 %v6422, 7
    %v6424 = vsub.s32 7, %v6423
    %v6425 = vrot.slane %v47, %v6424
    %v6426 = vadd.f32 %v6418, %v6425
    %v6427 = vadd.f32 %v6419, %v6425
    %v6428 = vadd.f32 %v6420, %v6425
    %v6429 = vadd.f32 %v6421, %v6425
    %v6430 = vld [vmem:[%s5] sm:$0xff]
    %v6431 = vld [vmem:[%s5 + $0x8] sm:$0xff]
    %v6432 = vld [vmem:[%s5 + $0x10] sm:$0xff]
    %v6433 = vld [vmem:[%s5 + $0x18] sm:$0xff]
    %v6434 = vld [vmem:[%s5 + $0x20] sm:$0xff]
    %v6435 = vld [vmem:[%s5 + $0x28] sm:$0xff]
    %v6436 = vld [vmem:[%s5 + $0x30] sm:$0xff]
    %v6437 = vld [vmem:[%s5 + $0x38] sm:$0xff]
    %v6438 = vld [vmem:[%s5 + $0x40] sm:$0xff]
    %v6439 = vld [vmem:[%s5 + $0x48] sm:$0xff]
    %v6440 = vld [vmem:[%s5 + $0x50] sm:$0xff]
    %v6441 = vld [vmem:[%s5 + $0x58] sm:$0xff]
    %v6446 = vrot.slane %v6426, 1
    %v6447 = vrot.slane %v6427, 1
    %v6448 = vsel %vm843, %v6446, %v6447
    %v6449 = vrot.slane %v6428, 1
    %v6450 = vsel %vm843, %v6447, %v6449
    %v6451 = vrot.slane %v6429, 1
    %v6452 = vsel %vm843, %v6449, %v6451
    %v6455 = vsel %vm843, %v6451, %v6446
    %v6456 = vrot.slane %v6426, 2
    %v6457 = vrot.slane %v6427, 2
    %v6458 = vsel %vm972, %v6456, %v6457
    %v6459 = vrot.slane %v6428, 2
    %v6460 = vsel %vm972, %v6457, %v6459
    %v6461 = vrot.slane %v6429, 2
    %v6462 = vsel %vm972, %v6459, %v6461
    %v6465 = vsel %vm972, %v6461, %v6456
    %6467 = vrot.lane.b32.xlu0 %v6448, 32
    %v6468 = vpop.permute.xlu0 %6467
    %6469 = vrot.lane.b32.xlu0 %v6450, 32
    %v6470 = vpop.permute.xlu0 %6469
    %6471 = vrot.lane.b32.xlu0 %v6452, 32
    %v6472 = vpop.permute.xlu0 %6471
    %6473 = vrot.lane.b32.xlu0 %v6455, 32
    %v6474 = vpop.permute.xlu0 %6473
    %6480 = vrot.lane.b32.xlu0 %v6458, 64
    %v6481 = vpop.permute.xlu0 %6480
    %6482 = vrot.lane.b32.xlu0 %v6460, 64
    %v6483 = vpop.permute.xlu0 %6482
    %6484 = vrot.lane.b32.xlu0 %v6462, 64
    %v6485 = vpop.permute.xlu0 %6484
    %6486 = vrot.lane.b32.xlu0 %v6465, 64
    %v6487 = vpop.permute.xlu0 %6486
    %v6492 = vsel %vm3009, %v6426, %v6468
    %v6493 = vsel %vm3009, %v6427, %v6470
    %v6494 = vsel %vm3009, %v6428, %v6472
    %v6495 = vsel %vm3009, %v6429, %v6474
    %v6496 = vsel %vm3137, %v6492, %v6481
    %v6497 = vsel %vm3137, %v6493, %v6483
    %v6498 = vsel %vm3137, %v6494, %v6485
    %v6499 = vsel %vm3137, %v6495, %v6487
    %v6500 = vlaneseq
    %v6501 = vshrl.u32 %v6500, 7
    %v6502 = vsub.s32 0, %v6501
    %v6503 = vrot.slane %v48, %v6502
    %v6505 = vsel %vm3265, %v6496, 0
    %v6508 = vsel %vm3265, %v6497, 0
    %v6511 = vsel %vm3265, %v6498, 0
    %v6514 = vsel %vm3265, %v6499, 0
    %6516 = vmatprep.subr.mxu0 0.0
    %6517 = vmatpush1.msra.mxu0 %v6430
    %6518 = vmatprep.subr.mxu0 0.0
    %6519 = vmatpush1.msra.mxu0 %v6431
    %6520 = vmatprep.subr.mxu0 0.0
    %6521 = vmatpush1.msra.mxu0 %v6432
    %6522 = vmatprep.subr.mxu0 0.0
    %6523 = vmatpush1.msra.mxu0 %v6433
    %6524 = vmatprep.subr.mxu0 0.0
    %6525 = vmatpush1.msra.mxu0 %v6434
    %6526 = vmatprep.subr.mxu0 0.0
    %6527 = vmatpush1.msra.mxu0 %v6435
    %6528 = vmatprep.subr.mxu0 0.0
    %6529 = vmatpush1.msra.mxu0 %v6436
    %6530 = vmatprep.subr.mxu0 0.0
    %6531 = vmatpush1.msra.mxu0 %v6437
    %6532 = vmatprep.subr.mxu0 0.0
    %6533 = vmatpush1.msra.mxu0 %v6438
    %6534 = vmatprep.subr.mxu0 0.0
    %6535 = vmatpush1.msra.mxu0 %v6439
    %6536 = vmatprep.subr.mxu0 0.0
    %6537 = vmatpush1.msra.mxu0 %v6440
    %6538 = vmatprep.subr.mxu0 0.0
    %6539 = vmatpush1.msra.mxu0 %v6441
    %6540 = vmatprep.subr.mxu0 0.0
    %6541 = vmatpush1.msra.mxu0 0.0
    %6542 = vmatprep.subr.mxu0 0.0
    %6543 = vmatpush1.msra.mxu0 0.0
    %6544 = vmatprep.subr.mxu0 0.0
    %6545 = vmatpush1.msra.mxu0 0.0
    %6546 = vmatprep.subr.mxu0 0.0
    %6547 = vmatpush1.msra.mxu0 0.0
    %6548 = vmatprep.subr.mxu0 0.0
    %6549 = vmatpush1.msra.mxu0 0.0
    %6550 = vmatprep.subr.mxu0 0.0
    %6551 = vmatpush1.msra.mxu0 0.0
    %6552 = vmatprep.subr.mxu0 0.0
    %6553 = vmatpush1.msra.mxu0 0.0
    %6554 = vmatprep.subr.mxu0 0.0
    %6555 = vmatpush1.msra.mxu0 0.0
    %6556 = vmatprep.subr.mxu0 0.0
    %6557 = vmatpush1.msra.mxu0 0.0
    %6558 = vmatprep.subr.mxu0 0.0
    %6559 = vmatpush1.msra.mxu0 0.0
    %6560 = vmatprep.subr.mxu0 0.0
    %6561 = vmatpush1.msra.mxu0 0.0
    %6562 = vmatprep.subr.mxu0 0.0
    %6563 = vmatpush1.msra.mxu0 0.0
    %6564 = vmatprep.subr.mxu0 0.0
    %6565 = vmatpush1.msra.mxu0 0.0
    %6566 = vmatprep.subr.mxu0 0.0
    %6567 = vmatpush1.msra.mxu0 0.0
    %6568 = vmatprep.subr.mxu0 0.0
    %6569 = vmatpush1.msra.mxu0 0.0
    %6570 = vmatprep.subr.mxu0 0.0
    %6571 = vmatpush1.msra.mxu0 0.0
    %6572 = vmatprep.subr.mxu0 0.0
    %6573 = vmatpush1.msra.mxu0 0.0
    %6574 = vmatprep.subr.mxu0 0.0
    %6575 = vmatpush1.msra.mxu0 0.0
    %6576 = vmatprep.subr.mxu0 0.0
    %6577 = vmatpush1.msra.mxu0 0.0
    %6578 = vmatprep.subr.mxu0 0.0
    %6579 = vmatpush1.msra.mxu0 0.0
    %6580 = vmatprep.mubr.f32.mxu0 0.0
    %6581 = vmatmul.mubr.f32.gmra.mrb[0].mxu0 %v6505
    %v6582 = vpop.f32.mrb[0].mxu0
    %v6583 = vadd.f32 %v6503, %v6582
    %v6584 = vpop.f32.mrb[0].mxu0
    %6585 = vmatprep.mubr.f32.mxu0 0.0
    %6586 = vmatmul.mubr.f32.gmra.mrb[0].mxu0 %v6508
    %v6587 = vpop.f32.mrb[0].mxu0
    %v6588 = vadd.f32 %v6503, %v6587
    %v6589 = vpop.f32.mrb[0].mxu0
    %6590 = vmatprep.mubr.f32.mxu0 0.0
    %6591 = vmatmul.mubr.f32.gmra.mrb[0].mxu0 %v6511
    %v6592 = vpop.f32.mrb[0].mxu0
    %v6593 = vadd.f32 %v6503, %v6592
    %v6594 = vpop.f32.mrb[0].mxu0
    %6595 = vmatprep.mubr.f32.mxu0 0.0
    %6596 = vmatmul.mubr.f32.gmra.mrb[0].mxu0 %v6514
    %v6597 = vpop.f32.mrb[0].mxu0
    %v6598 = vadd.f32 %v6503, %v6597
    %v6599 = vpop.f32.mrb[0].mxu0
    %6600 = vdwg.mxu0
    %v6601 = vmax.f32 %v6583, 0.0
    %v6602 = vmax.f32 %v6588, 0.0
    %v6603 = vmax.f32 %v6593, 0.0
    %v6604 = vmax.f32 %v6598, 0.0
    %v6609 = vrot.slane %v6601, 1
    %v6610 = vrot.slane %v6602, 1
    %v6611 = vsel %vm843, %v6609, %v6610
    %v6612 = vrot.slane %v6603, 1
    %v6613 = vsel %vm843, %v6610, %v6612
    %v6614 = vrot.slane %v6604, 1
    %v6615 = vsel %vm843, %v6612, %v6614
    %v6618 = vsel %vm843, %v6614, %v6609
    %v6619 = vrot.slane %v6601, 2
    %v6620 = vrot.slane %v6602, 2
    %v6621 = vsel %vm972, %v6619, %v6620
    %v6622 = vrot.slane %v6603, 2
    %v6623 = vsel %vm972, %v6620, %v6622
    %v6624 = vrot.slane %v6604, 2
    %v6625 = vsel %vm972, %v6622, %v6624
    %v6628 = vsel %vm972, %v6624, %v6619
    %6630 = vrot.lane.b32.xlu0 %v6611, 32
    %v6631 = vpop.permute.xlu0 %6630
    %6632 = vrot.lane.b32.xlu0 %v6613, 32
    %v6633 = vpop.permute.xlu0 %6632
    %6634 = vrot.lane.b32.xlu0 %v6615, 32
    %v6635 = vpop.permute.xlu0 %6634
    %6636 = vrot.lane.b32.xlu0 %v6618, 32
    %v6637 = vpop.permute.xlu0 %6636
    %6643 = vrot.lane.b32.xlu0 %v6621, 64
    %v6644 = vpop.permute.xlu0 %6643
    %6645 = vrot.lane.b32.xlu0 %v6623, 64
    %v6646 = vpop.permute.xlu0 %6645
    %6647 = vrot.lane.b32.xlu0 %v6625, 64
    %v6648 = vpop.permute.xlu0 %6647
    %6649 = vrot.lane.b32.xlu0 %v6628, 64
    %v6650 = vpop.permute.xlu0 %6649
    %v6655 = vsel %vm3009, %v6601, %v6631
    %v6656 = vsel %vm3009, %v6602, %v6633
    %v6657 = vsel %vm3009, %v6603, %v6635
    %v6658 = vsel %vm3009, %v6604, %v6637
    %v6659 = vsel %vm3137, %v6655, %v6644
    %v6660 = vsel %vm3137, %v6656, %v6646
    %v6661 = vsel %vm3137, %v6657, %v6648
    %v6662 = vsel %vm3137, %v6658, %v6650
    %v6664 = vsel %vm3265, %v6659, 0
    %v6667 = vsel %vm3265, %v6660, 0
    %v6670 = vsel %vm3265, %v6661, 0
    %v6673 = vsel %vm3265, %v6662, 0
    %6675 = vmatprep.subr.mxu0 0.0
    %6676 = vmatpush1.msra.mxu0 %v6430
    %6677 = vmatprep.subr.mxu0 0.0
    %6678 = vmatpush1.msra.mxu0 %v6431
    %6679 = vmatprep.subr.mxu0 0.0
    %6680 = vmatpush1.msra.mxu0 %v6432
    %6681 = vmatprep.subr.mxu0 0.0
    %6682 = vmatpush1.msra.mxu0 %v6433
    %6683 = vmatprep.subr.mxu0 0.0
    %6684 = vmatpush1.msra.mxu0 %v6434
    %6685 = vmatprep.subr.mxu0 0.0
    %6686 = vmatpush1.msra.mxu0 %v6435
    %6687 = vmatprep.subr.mxu0 0.0
    %6688 = vmatpush1.msra.mxu0 %v6436
    %6689 = vmatprep.subr.mxu0 0.0
    %6690 = vmatpush1.msra.mxu0 %v6437
    %6691 = vmatprep.subr.mxu0 0.0
    %6692 = vmatpush1.msra.mxu0 %v6438
    %6693 = vmatprep.subr.mxu0 0.0
    %6694 = vmatpush1.msra.mxu0 %v6439
    %6695 = vmatprep.subr.mxu0 0.0
    %6696 = vmatpush1.msra.mxu0 %v6440
    %6697 = vmatprep.subr.mxu0 0.0
    %6698 = vmatpush1.msra.mxu0 %v6441
    %6699 = vmatprep.subr.mxu0 0.0
    %6700 = vmatpush1.msra.mxu0 0.0
    %6701 = vmatprep.subr.mxu0 0.0
    %6702 = vmatpush1.msra.mxu0 0.0
    %6703 = vmatprep.subr.mxu0 0.0
    %6704 = vmatpush1.msra.mxu0 0.0
    %6705 = vmatprep.subr.mxu0 0.0
    %6706 = vmatpush1.msra.mxu0 0.0
    %6707 = vmatprep.subr.mxu0 0.0
    %6708 = vmatpush1.msra.mxu0 0.0
    %6709 = vmatprep.subr.mxu0 0.0
    %6710 = vmatpush1.msra.mxu0 0.0
    %6711 = vmatprep.subr.mxu0 0.0
    %6712 = vmatpush1.msra.mxu0 0.0
    %6713 = vmatprep.subr.mxu0 0.0
    %6714 = vmatpush1.msra.mxu0 0.0
    %6715 = vmatprep.subr.mxu0 0.0
    %6716 = vmatpush1.msra.mxu0 0.0
    %6717 = vmatprep.subr.mxu0 0.0
    %6718 = vmatpush1.msra.mxu0 0.0
    %6719 = vmatprep.subr.mxu0 0.0
    %6720 = vmatpush1.msra.mxu0 0.0
    %6721 = vmatprep.subr.mxu0 0.0
    %6722 = vmatpush1.msra.mxu0 0.0
    %6723 = vmatprep.subr.mxu0 0.0
    %6724 = vmatpush1.msra.mxu0 0.0
    %6725 = vmatprep.subr.mxu0 0.0
    %6726 = vmatpush1.msra.mxu0 0.0
    %6727 = vmatprep.subr.mxu0 0.0
    %6728 = vmatpush1.msra.mxu0 0.0
    %6729 = vmatprep.subr.mxu0 0.0
    %6730 = vmatpush1.msra.mxu0 0.0
    %6731 = vmatprep.subr.mxu0 0.0
    %6732 = vmatpush1.msra.mxu0 0.0
    %6733 = vmatprep.subr.mxu0 0.0
    %6734 = vmatpush1.msra.mxu0 0.0
    %6735 = vmatprep.subr.mxu0 0.0
    %6736 = vmatpush1.msra.mxu0 0.0
    %6737 = vmatprep.subr.mxu0 0.0
    %6738 = vmatpush1.msra.mxu0 0.0
    %6739 = vmatprep.mubr.f32.mxu0 0.0
    %6740 = vmatmul.mubr.f32.gmra.mrb[0].mxu0 %v6664
    %v6741 = vpop.f32.mrb[0].mxu0
    %v6742 = vadd.f32 %v6503, %v6741
    %v6743 = vpop.f32.mrb[0].mxu0
    %6744 = vmatprep.mubr.f32.mxu0 0.0
    %6745 = vmatmul.mubr.f32.gmra.mrb[0].mxu0 %v6667
    %v6746 = vpop.f32.mrb[0].mxu0
    %v6747 = vadd.f32 %v6503, %v6746
    %v6748 = vpop.f32.mrb[0].mxu0
    %6749 = vmatprep.mubr.f32.mxu0 0.0
    %6750 = vmatmul.mubr.f32.gmra.mrb[0].mxu0 %v6670
    %v6751 = vpop.f32.mrb[0].mxu0
    %v6752 = vadd.f32 %v6503, %v6751
    %v6753 = vpop.f32.mrb[0].mxu0
    %6754 = vmatprep.mubr.f32.mxu0 0.0
    %6755 = vmatmul.mubr.f32.gmra.mrb[0].mxu0 %v6673
    %v6756 = vpop.f32.mrb[0].mxu0
    %v6757 = vadd.f32 %v6503, %v6756
    %v6758 = vpop.f32.mrb[0].mxu0
    %6759 = vdwg.mxu0
    %v6760 = vmax.f32 %v6742, 0.0
    %v6761 = vmax.f32 %v6747, 0.0
    %v6762 = vmax.f32 %v6752, 0.0
    %v6763 = vmax.f32 %v6757, 0.0
    %v6764 = vld [vmem:[%s10] sm:$0xff]
    %v6765 = vld [vmem:[%s10 + $0x8] sm:$0xff]
    %v6767 = vsel %vm3009, %v6764, 0
    %v6770 = vsel %vm3009, %v6765, 0
    %6772 = vmatprep.subr.mxu0 0.0
    %6773 = vmatpush1.msra.mxu0 %v6760
    %6774 = vmatprep.subr.mxu0 0.0
    %6775 = vmatpush1.msra.mxu0 %v6761
    %6776 = vmatprep.subr.mxu0 0.0
    %6777 = vmatpush1.msra.mxu0 %v6762
    %6778 = vmatprep.subr.mxu0 0.0
    %6779 = vmatpush1.msra.mxu0 %v6763
    %6780 = vmatprep.subr.mxu0 0.0
    %6781 = vmatpush1.msra.mxu0 0.0
    %6782 = vmatprep.subr.mxu0 0.0
    %6783 = vmatpush1.msra.mxu0 0.0
    %6784 = vmatprep.subr.mxu0 0.0
    %6785 = vmatpush1.msra.mxu0 0.0
    %6786 = vmatprep.subr.mxu0 0.0
    %6787 = vmatpush1.msra.mxu0 0.0
    %6788 = vmatprep.subr.mxu0 0.0
    %6789 = vmatpush1.msra.mxu0 0.0
    %6790 = vmatprep.subr.mxu0 0.0
    %6791 = vmatpush1.msra.mxu0 0.0
    %6792 = vmatprep.subr.mxu0 0.0
    %6793 = vmatpush1.msra.mxu0 0.0
    %6794 = vmatprep.subr.mxu0 0.0
    %6795 = vmatpush1.msra.mxu0 0.0
    %6796 = vmatprep.subr.mxu0 0.0
    %6797 = vmatpush1.msra.mxu0 0.0
    %6798 = vmatprep.subr.mxu0 0.0
    %6799 = vmatpush1.msra.mxu0 0.0
    %6800 = vmatprep.subr.mxu0 0.0
    %6801 = vmatpush1.msra.mxu0 0.0
    %6802 = vmatprep.subr.mxu0 0.0
    %6803 = vmatpush1.msra.mxu0 0.0
    %6804 = vmatprep.subr.mxu0 0.0
    %6805 = vmatpush1.msra.mxu0 0.0
    %6806 = vmatprep.subr.mxu0 0.0
    %6807 = vmatpush1.msra.mxu0 0.0
    %6808 = vmatprep.subr.mxu0 0.0
    %6809 = vmatpush1.msra.mxu0 0.0
    %6810 = vmatprep.subr.mxu0 0.0
    %6811 = vmatpush1.msra.mxu0 0.0
    %6812 = vmatprep.subr.mxu0 0.0
    %6813 = vmatpush1.msra.mxu0 0.0
    %6814 = vmatprep.subr.mxu0 0.0
    %6815 = vmatpush1.msra.mxu0 0.0
    %6816 = vmatprep.subr.mxu0 0.0
    %6817 = vmatpush1.msra.mxu0 0.0
    %6818 = vmatprep.subr.mxu0 0.0
    %6819 = vmatpush1.msra.mxu0 0.0
    %6820 = vmatprep.subr.mxu0 0.0
    %6821 = vmatpush1.msra.mxu0 0.0
    %6822 = vmatprep.subr.mxu0 0.0
    %6823 = vmatpush1.msra.mxu0 0.0
    %6824 = vmatprep.subr.mxu0 0.0
    %6825 = vmatpush1.msra.mxu0 0.0
    %6826 = vmatprep.subr.mxu0 0.0
    %6827 = vmatpush1.msra.mxu0 0.0
    %6828 = vmatprep.subr.mxu0 0.0
    %6829 = vmatpush1.msra.mxu0 0.0
    %6830 = vmatprep.subr.mxu0 0.0
    %6831 = vmatpush1.msra.mxu0 0.0
    %6832 = vmatprep.subr.mxu0 0.0
    %6833 = vmatpush1.msra.mxu0 0.0
    %6834 = vmatprep.subr.mxu0 0.0
    %6835 = vmatpush1.msra.mxu0 0.0
    %6836 = vmatprep.mubr.f32.mxu0 0.0
    %6837 = vmatmul.mubr.f32.gmra.mrb[0].mxu0 %v6767
    %v6838 = vpop.f32.mrb[0].mxu0
    %v6839 = vadd.f32 0.0, %v6838
    %v6840 = vpop.f32.mrb[0].mxu0
    %6841 = vmatprep.mubr.f32.mxu0 0.0
    %6842 = vmatmul.mubr.f32.gmra.mrb[0].mxu0 %v6770
    %v6843 = vpop.f32.mrb[0].mxu0
    %v6844 = vadd.f32 0.0, %v6843
    %v6845 = vpop.f32.mrb[0].mxu0
    %6846 = vdwg.mxu0
    %v6847 = vsel %vm3009, %v6839, 0.0
    %v6848 = vsel %vm3009, %v6844, 0.0
    %v6849 = vadd.f32 %v6847, %v6848
    %v6850 = vrot.slane %v6849, 4
    %v6851 = vadd.f32 %v6849, %v6850
    %v6852 = vrot.slane %v6851, 2
    %v6853 = vadd.f32 %v6851, %v6852
    %v6854 = vrot.slane %v6853, 1
    %v6855 = vadd.f32 %v6853, %v6854
    %v6856 = vmul.f32 %v6855, 0.0625
    %v6857 = vmul.f32 %v6839, %v6839
    %v6858 = vmul.f32 %v6844, %v6844
    %v6859 = vsel %vm3009, %v6857, 0.0
    %v6860 = vsel %vm3009, %v6858, 0.0
    %v6861 = vadd.f32 %v6859, %v6860
    %v6862 = vrot.slane %v6861, 4
    %v6863 = vadd.f32 %v6861, %v6862
    %v6864 = vrot.slane %v6863, 2
    %v6865 = vadd.f32 %v6863, %v6864
    %v6866 = vrot.slane %v6865, 1
    %v6867 = vadd.f32 %v6865, %v6866
    %v6868 = vmul.f32 %v6867, 0.0625
    %v6869 = vmul.f32 %v6856, %v6856
    %v6870 = vsub.f32 %v6868, %v6869
    %v6871 = vmax.f32 %v6870, 0.0
    %v6872 = vsub.f32 %v6839, %v6856
    %v6873 = vsub.f32 %v6844, %v6856
    %v6874 = vadd.f32 %v6871, 1e-05
    %v6875 = vrsqrt.pop %v6874
    %v6876 = vmul.f32 %v6872, %v6875
    %v6877 = vmul.f32 %v6873, %v6875
    %v6878 = vmul.f32 %v6876, %v6417
    %v6879 = vmul.f32 %v6877, %v6417
    %v6880 = vadd.f32 %v6878, %v6425
    %v6881 = vadd.f32 %v6879, %v6425
    %6884 = vrot.lane.b32.xlu0 %v6880, 32
    %v6885 = vpop.permute.xlu0 %6884
    %6886 = vrot.lane.b32.xlu0 %v6881, 32
    %v6887 = vpop.permute.xlu0 %6886
    %6890 = vrot.lane.b32.xlu0 %v6880, 64
    %v6891 = vpop.permute.xlu0 %6890
    %6892 = vrot.lane.b32.xlu0 %v6881, 64
    %v6893 = vpop.permute.xlu0 %6892
    %6896 = vrot.lane.b32.xlu0 %v6880, 96
    %v6897 = vpop.permute.xlu0 %6896
    %6898 = vrot.lane.b32.xlu0 %v6881, 96
    %v6899 = vpop.permute.xlu0 %6898
    %v6902 = vsel %vm3009, %v6880, %v6885
    %v6903 = vsel %vm3009, %v6881, %v6887
    %v6904 = vsel %vm3137, %v6902, %v6891
    %v6905 = vsel %vm3137, %v6903, %v6893
    %v6906 = vsel %vm3265, %v6904, %v6897
    %v6907 = vsel %vm3265, %v6905, %v6899
    %v6914 = vrot.slane %v48, 2
    %v6915 = vrot.slane %v50, 2
    %v6916 = vsel %vm972, %v6914, %v6915
    %v6917 = vrot.slane %v49, 2
    %v6918 = vrot.slane %v51, 2
    %v6919 = vsel %vm972, %v6917, %v6918
    %v6920 = vrot.slane %v52, 2
    %v6921 = vsel %vm972, %v6915, %v6920
    %v6922 = vrot.slane %v53, 2
    %v6923 = vsel %vm972, %v6918, %v6922
    %v6928 = vmul.f32 %v6906, %v6916
    %v6929 = vmul.f32 %v6906, %v6919
    %v6930 = vmul.f32 %v6907, %v6921
    %v6931 = vmul.f32 %v6907, %v6923
    %v6932 = vsel %vm2945, %v6920, 0
    %6934 = vmatprep.subr.mxu0 %v6929
    %6935 = vmatpush1.msra.mxu0 %v6928
    %6936 = vmatprep.subr.mxu0 %v6931
    %6937 = vmatpush1.msra.mxu0 %v6930
    %6938 = vmatprep.subr.mxu0 0.0
    %6939 = vmatpush1.msra.mxu0 0.0
    %6940 = vmatprep.subr.mxu0 0.0
    %6941 = vmatpush1.msra.mxu0 0.0
    %6942 = vmatprep.subr.mxu0 0.0
    %6943 = vmatpush1.msra.mxu0 0.0
    %6944 = vmatprep.subr.mxu0 0.0
    %6945 = vmatpush1.msra.mxu0 0.0
    %6946 = vmatprep.subr.mxu0 0.0
    %6947 = vmatpush1.msra.mxu0 0.0
    %6948 = vmatprep.subr.mxu0 0.0
    %6949 = vmatpush1.msra.mxu0 0.0
    %6950 = vmatprep.subr.mxu0 0.0
    %6951 = vmatpush1.msra.mxu0 0.0
    %6952 = vmatprep.subr.mxu0 0.0
    %6953 = vmatpush1.msra.mxu0 0.0
    %6954 = vmatprep.subr.mxu0 0.0
    %6955 = vmatpush1.msra.mxu0 0.0
    %6956 = vmatprep.subr.mxu0 0.0
    %6957 = vmatpush1.msra.mxu0 0.0
    %6958 = vmatprep.subr.mxu0 0.0
    %6959 = vmatpush1.msra.mxu0 0.0
    %6960 = vmatprep.subr.mxu0 0.0
    %6961 = vmatpush1.msra.mxu0 0.0
    %6962 = vmatprep.subr.mxu0 0.0
    %6963 = vmatpush1.msra.mxu0 0.0
    %6964 = vmatprep.subr.mxu0 0.0
    %6965 = vmatpush1.msra.mxu0 0.0
    %6966 = vmatprep.subr.mxu0 0.0
    %6967 = vmatpush1.msra.mxu0 0.0
    %6968 = vmatprep.subr.mxu0 0.0
    %6969 = vmatpush1.msra.mxu0 0.0
    %6970 = vmatprep.subr.mxu0 0.0
    %6971 = vmatpush1.msra.mxu0 0.0
    %6972 = vmatprep.subr.mxu0 0.0
    %6973 = vmatpush1.msra.mxu0 0.0
    %6974 = vmatprep.subr.mxu0 0.0
    %6975 = vmatpush1.msra.mxu0 0.0
    %6976 = vmatprep.subr.mxu0 0.0
    %6977 = vmatpush1.msra.mxu0 0.0
    %6978 = vmatprep.subr.mxu0 0.0
    %6979 = vmatpush1.msra.mxu0 0.0
    %6980 = vmatprep.subr.mxu0 0.0
    %6981 = vmatpush1.msra.mxu0 0.0
    %6982 = vmatprep.subr.mxu0 0.0
    %6983 = vmatpush1.msra.mxu0 0.0
    %6984 = vmatprep.subr.mxu0 0.0
    %6985 = vmatpush1.msra.mxu0 0.0
    %6986 = vmatprep.subr.mxu0 0.0
    %6987 = vmatpush1.msra.mxu0 0.0
    %6988 = vmatprep.subr.mxu0 0.0
    %6989 = vmatpush1.msra.mxu0 0.0
    %6990 = vmatprep.subr.mxu0 0.0
    %6991 = vmatpush1.msra.mxu0 0.0
    %6992 = vmatprep.subr.mxu0 0.0
    %6993 = vmatpush1.msra.mxu0 0.0
    %6994 = vmatprep.subr.mxu0 0.0
    %6995 = vmatpush1.msra.mxu0 0.0
    %6996 = vmatprep.subr.mxu0 0.0
    %6997 = vmatpush1.msra.mxu0 0.0
    %6998 = vmatprep.mubr.f32.mxu0 0.0
    %6999 = vmatmul.mubr.f32.gmra.mrb[0].mxu0 %v6932
    %v7000 = vpop.f32.mrb[0].mxu0
    %v7001 = vadd.f32 0.0, %v7000
    %v7002 = vpop.f32.mrb[0].mxu0
    %v7003 = vadd.f32 0.0, %v7002
    %7004 = vdwg.mxu0
    %v7005 = vld [vmem:[%s6] sm:$0xff]
    %v7006 = vld [vmem:[%s6 + $0x8] sm:$0xff]
    %v7007 = vld [vmem:[%s6 + $0x10] sm:$0xff]
    %v7008 = vld [vmem:[%s6 + $0x18] sm:$0xff]
    %v7009 = vld [vmem:[%s6 + $0x20] sm:$0xff]
    %v7010 = vld [vmem:[%s6 + $0x28] sm:$0xff]
    %v7011 = vld [vmem:[%s6 + $0x30] sm:$0xff]
    %v7012 = vld [vmem:[%s6 + $0x38] sm:$0xff]
    %v7013 = vld [vmem:[%s6 + $0x40] sm:$0xff]
    %v7014 = vld [vmem:[%s6 + $0x48] sm:$0xff]
    %v7015 = vld [vmem:[%s6 + $0x50] sm:$0xff]
    %v7016 = vld [vmem:[%s6 + $0x58] sm:$0xff]
    %v7017 = vld [vmem:[%s6 + $0x60] sm:$0xff]
    %v7018 = vld [vmem:[%s6 + $0x68] sm:$0xff]
    %v7019 = vld [vmem:[%s6 + $0x70] sm:$0xff]
    %v7020 = vld [vmem:[%s6 + $0x78] sm:$0xff]
    %v7021 = vld [vmem:[%s6 + $0x80] sm:$0xff]
    %v7022 = vld [vmem:[%s6 + $0x88] sm:$0xff]
    %v7023 = vld [vmem:[%s6 + $0x90] sm:$0xff]
    %v7024 = vld [vmem:[%s6 + $0x98] sm:$0xff]
    %v7025 = vld [vmem:[%s6 + $0xa0] sm:$0xff]
    %v7026 = vld [vmem:[%s6 + $0xa8] sm:$0xff]
    %v7027 = vld [vmem:[%s6 + $0xb0] sm:$0xff]
    %v7028 = vld [vmem:[%s6 + $0xb8] sm:$0xff]
    %v7029 = vld [vmem:[%s6 + $0xc0] sm:$0xff]
    %v7030 = vld [vmem:[%s6 + $0xc8] sm:$0xff]
    %v7031 = vld [vmem:[%s6 + $0xd0] sm:$0xff]
    %v7032 = vld [vmem:[%s6 + $0xd8] sm:$0xff]
    %v7033 = vld [vmem:[%s6 + $0xe0] sm:$0xff]
    %v7034 = vld [vmem:[%s6 + $0xe8] sm:$0xff]
    %v7035 = vld [vmem:[%s6 + $0xf0] sm:$0xff]
    %v7036 = vld [vmem:[%s6 + $0xf8] sm:$0xff]
    %v7037 = vlaneseq
    %v7038 = vshrl.u32 %v7037, 7
    %v7039 = vsub.s32 1, %v7038
    %v7040 = vrot.slane %v48, %v7039
    %7041 = vmatprep.subr.mxu0 0.0
    %7042 = vmatpush1.msra.mxu0 %v7005
    %7043 = vmatprep.subr.mxu0 0.0
    %7044 = vmatpush1.msra.mxu0 %v7006
    %7045 = vmatprep.subr.mxu0 0.0
    %7046 = vmatpush1.msra.mxu0 %v7007
    %7047 = vmatprep.subr.mxu0 0.0
    %7048 = vmatpush1.msra.mxu0 %v7008
    %7049 = vmatprep.subr.mxu0 0.0
    %7050 = vmatpush1.msra.mxu0 %v7009
    %7051 = vmatprep.subr.mxu0 0.0
    %7052 = vmatpush1.msra.mxu0 %v7010
    %7053 = vmatprep.subr.mxu0 0.0
    %7054 = vmatpush1.msra.mxu0 %v7011
    %7055 = vmatprep.subr.mxu0 0.0
    %7056 = vmatpush1.msra.mxu0 %v7012
    %7057 = vmatprep.subr.mxu0 0.0
    %7058 = vmatpush1.msra.mxu0 %v7013
    %7059 = vmatprep.subr.mxu0 0.0
    %7060 = vmatpush1.msra.mxu0 %v7014
    %7061 = vmatprep.subr.mxu0 0.0
    %7062 = vmatpush1.msra.mxu0 %v7015
    %7063 = vmatprep.subr.mxu0 0.0
    %7064 = vmatpush1.msra.mxu0 %v7016
    %7065 = vmatprep.subr.mxu0 0.0
    %7066 = vmatpush1.msra.mxu0 %v7017
    %7067 = vmatprep.subr.mxu0 0.0
    %7068 = vmatpush1.msra.mxu0 %v7018
    %7069 = vmatprep.subr.mxu0 0.0
    %7070 = vmatpush1.msra.mxu0 %v7019
    %7071 = vmatprep.subr.mxu0 0.0
    %7072 = vmatpush1.msra.mxu0 %v7020
    %7073 = vmatprep.subr.mxu0 0.0
    %7074 = vmatpush1.msra.mxu0 %v7021
    %7075 = vmatprep.subr.mxu0 0.0
    %7076 = vmatpush1.msra.mxu0 %v7022
    %7077 = vmatprep.subr.mxu0 0.0
    %7078 = vmatpush1.msra.mxu0 %v7023
    %7079 = vmatprep.subr.mxu0 0.0
    %7080 = vmatpush1.msra.mxu0 %v7024
    %7081 = vmatprep.subr.mxu0 0.0
    %7082 = vmatpush1.msra.mxu0 %v7025
    %7083 = vmatprep.subr.mxu0 0.0
    %7084 = vmatpush1.msra.mxu0 %v7026
    %7085 = vmatprep.subr.mxu0 0.0
    %7086 = vmatpush1.msra.mxu0 %v7027
    %7087 = vmatprep.subr.mxu0 0.0
    %7088 = vmatpush1.msra.mxu0 %v7028
    %7089 = vmatprep.subr.mxu0 0.0
    %7090 = vmatpush1.msra.mxu0 %v7029
    %7091 = vmatprep.subr.mxu0 0.0
    %7092 = vmatpush1.msra.mxu0 %v7030
    %7093 = vmatprep.subr.mxu0 0.0
    %7094 = vmatpush1.msra.mxu0 %v7031
    %7095 = vmatprep.subr.mxu0 0.0
    %7096 = vmatpush1.msra.mxu0 %v7032
    %7097 = vmatprep.subr.mxu0 0.0
    %7098 = vmatpush1.msra.mxu0 %v7033
    %7099 = vmatprep.subr.mxu0 0.0
    %7100 = vmatpush1.msra.mxu0 %v7034
    %7101 = vmatprep.subr.mxu0 0.0
    %7102 = vmatpush1.msra.mxu0 %v7035
    %7103 = vmatprep.subr.mxu0 0.0
    %7104 = vmatpush1.msra.mxu0 %v7036
    %7105 = vmatprep.mubr.f32.mxu0 %v7003
    %7106 = vmatmul.mubr.f32.gmra.mrb[0].mxu0 %v7001
    %v7107 = vpop.f32.mrb[0].mxu0
    %v7108 = vadd.f32 %v7040, %v7107
    %v7109 = vpop.f32.mrb[0].mxu0
    %7110 = vdwg.mxu0
    %v7111 = vmax.f32 %v7108, 0.0
    %v7112 = vld [vmem:[%s7] sm:$0xff]
    %v7113 = vld [vmem:[%s7 + $0x8] sm:$0xff]
    %v7114 = vld [vmem:[%s7 + $0x10] sm:$0xff]
    %v7115 = vld [vmem:[%s7 + $0x18] sm:$0xff]
    %v7116 = vld [vmem:[%s7 + $0x20] sm:$0xff]
    %v7117 = vld [vmem:[%s7 + $0x28] sm:$0xff]
    %v7118 = vld [vmem:[%s7 + $0x30] sm:$0xff]
    %v7119 = vld [vmem:[%s7 + $0x38] sm:$0xff]
    %v7120 = vld [vmem:[%s7 + $0x40] sm:$0xff]
    %v7121 = vld [vmem:[%s7 + $0x48] sm:$0xff]
    %v7122 = vld [vmem:[%s7 + $0x50] sm:$0xff]
    %v7123 = vld [vmem:[%s7 + $0x58] sm:$0xff]
    %v7124 = vld [vmem:[%s7 + $0x60] sm:$0xff]
    %v7125 = vld [vmem:[%s7 + $0x68] sm:$0xff]
    %v7126 = vld [vmem:[%s7 + $0x70] sm:$0xff]
    %v7127 = vld [vmem:[%s7 + $0x78] sm:$0xff]
    %v7129 = vsel %vm3137, %v7111, 0
    %7131 = vmatprep.subr.mxu0 %v7113
    %7132 = vmatpush1.msra.mxu0 %v7112
    %7133 = vmatprep.subr.mxu0 %v7115
    %7134 = vmatpush1.msra.mxu0 %v7114
    %7135 = vmatprep.subr.mxu0 %v7117
    %7136 = vmatpush1.msra.mxu0 %v7116
    %7137 = vmatprep.subr.mxu0 %v7119
    %7138 = vmatpush1.msra.mxu0 %v7118
    %7139 = vmatprep.subr.mxu0 %v7121
    %7140 = vmatpush1.msra.mxu0 %v7120
    %7141 = vmatprep.subr.mxu0 %v7123
    %7142 = vmatpush1.msra.mxu0 %v7122
    %7143 = vmatprep.subr.mxu0 %v7125
    %7144 = vmatpush1.msra.mxu0 %v7124
    %7145 = vmatprep.subr.mxu0 %v7127
    %7146 = vmatpush1.msra.mxu0 %v7126
    %7147 = vmatprep.subr.mxu0 0.0
    %7148 = vmatpush1.msra.mxu0 0.0
    %7149 = vmatprep.subr.mxu0 0.0
    %7150 = vmatpush1.msra.mxu0 0.0
    %7151 = vmatprep.subr.mxu0 0.0
    %7152 = vmatpush1.msra.mxu0 0.0
    %7153 = vmatprep.subr.mxu0 0.0
    %7154 = vmatpush1.msra.mxu0 0.0
    %7155 = vmatprep.subr.mxu0 0.0
    %7156 = vmatpush1.msra.mxu0 0.0
    %7157 = vmatprep.subr.mxu0 0.0
    %7158 = vmatpush1.msra.mxu0 0.0
    %7159 = vmatprep.subr.mxu0 0.0
    %7160 = vmatpush1.msra.mxu0 0.0
    %7161 = vmatprep.subr.mxu0 0.0
    %7162 = vmatpush1.msra.mxu0 0.0
    %7163 = vmatprep.subr.mxu0 0.0
    %7164 = vmatpush1.msra.mxu0 0.0
    %7165 = vmatprep.subr.mxu0 0.0
    %7166 = vmatpush1.msra.mxu0 0.0
    %7167 = vmatprep.subr.mxu0 0.0
    %7168 = vmatpush1.msra.mxu0 0.0
    %7169 = vmatprep.subr.mxu0 0.0
    %7170 = vmatpush1.msra.mxu0 0.0
    %7171 = vmatprep.subr.mxu0 0.0
    %7172 = vmatpush1.msra.mxu0 0.0
    %7173 = vmatprep.subr.mxu0 0.0
    %7174 = vmatpush1.msra.mxu0 0.0
    %7175 = vmatprep.subr.mxu0 0.0
    %7176 = vmatpush1.msra.mxu0 0.0
    %7177 = vmatprep.subr.mxu0 0.0
    %7178 = vmatpush1.msra.mxu0 0.0
    %7179 = vmatprep.subr.mxu0 0.0
    %7180 = vmatpush1.msra.mxu0 0.0
    %7181 = vmatprep.subr.mxu0 0.0
    %7182 = vmatpush1.msra.mxu0 0.0
    %7183 = vmatprep.subr.mxu0 0.0
    %7184 = vmatpush1.msra.mxu0 0.0
    %7185 = vmatprep.subr.mxu0 0.0
    %7186 = vmatpush1.msra.mxu0 0.0
    %7187 = vmatprep.subr.mxu0 0.0
    %7188 = vmatpush1.msra.mxu0 0.0
    %7189 = vmatprep.subr.mxu0 0.0
    %7190 = vmatpush1.msra.mxu0 0.0
    %7191 = vmatprep.subr.mxu0 0.0
    %7192 = vmatpush1.msra.mxu0 0.0
    %7193 = vmatprep.subr.mxu0 0.0
    %7194 = vmatpush1.msra.mxu0 0.0
    %7195 = vmatprep.mubr.f32.mxu0 0.0
    %7196 = vmatmul.mubr.f32.gmra.mrb[0].mxu0 %v7129
    %v7197 = vpop.f32.mrb[0].mxu0
    %v7198 = vadd.f32 0.0, %v7197
    %v7199 = vpop.f32.mrb[0].mxu0
    %v7200 = vadd.f32 0.0, %v7199
    %7201 = vdwg.mxu0
    %v7204 = vcombine.low %v7198, %v7200
    %v7206 = vunpack.c.l.s4 1983009808
    %v7207 = vunpack.c.0.s8 %v7206
    %v7208 = vlaneseq
    %v7209 = vshrl.u32 %v7208, 7
    %v7210 = vsub.s32 %v7207, %v7209
    %v7211 = vrot.slane %v7204, %v7210
    %7213 = vst [vmem:[%s13] sm:$0xf] %v7211
    %v7214 = vlaneseq
    %v7215 = vshrl.u32 %v7214, 7
    %v7216 = vsub.s32 4, %v7215
    %v7217 = vrot.slane %v52, %v7216
    %v7218 = vlaneseq
    %v7219 = vshrl.u32 %v7218, 7
    %v7220 = vsub.s32 4, %v7219
    %v7221 = vrot.slane %v53, %v7220
    %v7222 = vsub.f32 %v7198, %v7217
    %v7223 = vsub.f32 %v7200, %v7221
    %v7224 = vmul.f32 %v7222, %v7222
    %v7225 = vmul.f32 %v7223, %v7223
    %v7226 = vld [vmem:[%s11] sm:$0xff]
    %v7227 = vld [vmem:[%s11 + $0x8] sm:$0xff]
    %v7228 = vld [vmem:[%s11 + $0x10] sm:$0xff]
    %v7229 = vld [vmem:[%s11 + $0x18] sm:$0xff]
    %v7230 = vld [vmem:[%s11 + $0x20] sm:$0xff]
    %v7231 = vld [vmem:[%s11 + $0x28] sm:$0xff]
    %v7232 = vld [vmem:[%s11 + $0x30] sm:$0xff]
    %v7233 = vld [vmem:[%s11 + $0x38] sm:$0xff]
    %v7234 = vld [vmem:[%s11 + $0x40] sm:$0xff]
    %v7235 = vld [vmem:[%s11 + $0x48] sm:$0xff]
    %v7236 = vld [vmem:[%s11 + $0x50] sm:$0xff]
    %v7237 = vld [vmem:[%s11 + $0x58] sm:$0xff]
    %v7238 = vld [vmem:[%s11 + $0x60] sm:$0xff]
    %v7239 = vld [vmem:[%s11 + $0x68] sm:$0xff]
    %v7240 = vld [vmem:[%s11 + $0x70] sm:$0xff]
    %v7241 = vld [vmem:[%s11 + $0x78] sm:$0xff]
    %v7242 = vld [vmem:[%s11 + $0x80] sm:$0xff]
    %v7243 = vld [vmem:[%s11 + $0x88] sm:$0xff]
    %v7244 = vld [vmem:[%s11 + $0x90] sm:$0xff]
    %v7245 = vld [vmem:[%s11 + $0x98] sm:$0xff]
    %v7246 = vld [vmem:[%s11 + $0xa0] sm:$0xff]
    %v7247 = vld [vmem:[%s11 + $0xa8] sm:$0xff]
    %v7248 = vld [vmem:[%s11 + $0xb0] sm:$0xff]
    %v7249 = vld [vmem:[%s11 + $0xb8] sm:$0xff]
    %v7250 = vld [vmem:[%s11 + $0xc0] sm:$0xff]
    %v7251 = vld [vmem:[%s11 + $0xc8] sm:$0xff]
    %v7252 = vld [vmem:[%s11 + $0xd0] sm:$0xff]
    %v7253 = vld [vmem:[%s11 + $0xd8] sm:$0xff]
    %v7254 = vld [vmem:[%s11 + $0xe0] sm:$0xff]
    %v7255 = vld [vmem:[%s11 + $0xe8] sm:$0xff]
    %v7256 = vld [vmem:[%s11 + $0xf0] sm:$0xff]
    %v7257 = vld [vmem:[%s11 + $0xf8] sm:$0xff]
    %7258 = vmatprep.subr.mxu0 0.0
    %7259 = vmatpush1.msra.mxu0 %v7226
    %7260 = vmatprep.subr.mxu0 0.0
    %7261 = vmatpush1.msra.mxu0 %v7227
    %7262 = vmatprep.subr.mxu0 0.0
    %7263 = vmatpush1.msra.mxu0 %v7228
    %7264 = vmatprep.subr.mxu0 0.0
    %7265 = vmatpush1.msra.mxu0 %v7229
    %7266 = vmatprep.subr.mxu0 0.0
    %7267 = vmatpush1.msra.mxu0 %v7230
    %7268 = vmatprep.subr.mxu0 0.0
    %7269 = vmatpush1.msra.mxu0 %v7231
    %7270 = vmatprep.subr.mxu0 0.0
    %7271 = vmatpush1.msra.mxu0 %v7232
    %7272 = vmatprep.subr.mxu0 0.0
    %7273 = vmatpush1.msra.mxu0 %v7233
    %7274 = vmatprep.subr.mxu0 0.0
    %7275 = vmatpush1.msra.mxu0 %v7234
    %7276 = vmatprep.subr.mxu0 0.0
    %7277 = vmatpush1.msra.mxu0 %v7235
    %7278 = vmatprep.subr.mxu0 0.0
    %7279 = vmatpush1.msra.mxu0 %v7236
    %7280 = vmatprep.subr.mxu0 0.0
    %7281 = vmatpush1.msra.mxu0 %v7237
    %7282 = vmatprep.subr.mxu0 0.0
    %7283 = vmatpush1.msra.mxu0 %v7238
    %7284 = vmatprep.subr.mxu0 0.0
    %7285 = vmatpush1.msra.mxu0 %v7239
    %7286 = vmatprep.subr.mxu0 0.0
    %7287 = vmatpush1.msra.mxu0 %v7240
    %7288 = vmatprep.subr.mxu0 0.0
    %7289 = vmatpush1.msra.mxu0 %v7241
    %7290 = vmatprep.subr.mxu0 0.0
    %7291 = vmatpush1.msra.mxu0 %v7242
    %7292 = vmatprep.subr.mxu0 0.0
    %7293 = vmatpush1.msra.mxu0 %v7243
    %7294 = vmatprep.subr.mxu0 0.0
    %7295 = vmatpush1.msra.mxu0 %v7244
    %7296 = vmatprep.subr.mxu0 0.0
    %7297 = vmatpush1.msra.mxu0 %v7245
    %7298 = vmatprep.subr.mxu0 0.0
    %7299 = vmatpush1.msra.mxu0 %v7246
    %7300 = vmatprep.subr.mxu0 0.0
    %7301 = vmatpush1.msra.mxu0 %v7247
    %7302 = vmatprep.subr.mxu0 0.0
    %7303 = vmatpush1.msra.mxu0 %v7248
    %7304 = vmatprep.subr.mxu0 0.0
    %7305 = vmatpush1.msra.mxu0 %v7249
    %7306 = vmatprep.subr.mxu0 0.0
    %7307 = vmatpush1.msra.mxu0 %v7250
    %7308 = vmatprep.subr.mxu0 0.0
    %7309 = vmatpush1.msra.mxu0 %v7251
    %7310 = vmatprep.subr.mxu0 0.0
    %7311 = vmatpush1.msra.mxu0 %v7252
    %7312 = vmatprep.subr.mxu0 0.0
    %7313 = vmatpush1.msra.mxu0 %v7253
    %7314 = vmatprep.subr.mxu0 0.0
    %7315 = vmatpush1.msra.mxu0 %v7254
    %7316 = vmatprep.subr.mxu0 0.0
    %7317 = vmatpush1.msra.mxu0 %v7255
    %7318 = vmatprep.subr.mxu0 0.0
    %7319 = vmatpush1.msra.mxu0 %v7256
    %7320 = vmatprep.subr.mxu0 0.0
    %7321 = vmatpush1.msra.mxu0 %v7257
    %7322 = vmatprep.mubr.f32.mxu0 %v7225
    %7323 = vmatmul.mubr.f32.gmra.mrb[0].mxu0 %v7224
    %v7324 = vpop.f32.mrb[0].mxu0
    %v7325 = vadd.f32 0.0, %v7324
    %v7326 = vpop.f32.mrb[0].mxu0
    %7327 = vdwg.mxu0
    %v7328 = vmul.f32 %v7325, 0.03125
    %v7329 = vsub.f32 0.0, %v7328
    %v7330 = vrcp.pop 0.5
    %v7331 = vmul.f32 %v7329, %v7330
    %v7332 = vmul.f32 %v7331, 1.442695
    %v7333 = vpow.pop %v7332
    %vm7334 = vcmask 58368
    %7335 = vst.msk [vmem:[#allocation2] sm:$0x3] %vm7334, %v7333
    // Predicated region
    $region54: #{forward.1} parent=1 // pred_check
      _
    $region55: #{forward.1} parent=1 // pred_check_branch
      %7337 = sbr.rel (0) target = $region57
    $region56: #{forward.1} parent=1 // pred_region
      _
    $region57: #{forward.1} parent=1 // pred_fallthru
      _
    // Predicated region
    $region58: #{forward.1} parent=1 // pred_check
      _
    $region59: #{forward.1} parent=1 // pred_check_branch
      %7339 = sbr.rel (0) target = $region61
    $region60: #{forward.1} parent=1 // pred_region
      %s7341 = ssub.s32 32, 32
      %7342 = vsyncadd [#allocation3], %s7341
      %s7344 = sshll.u32 [#allocation2], 4
      %s7345 = int_to_ptr.vmem [resolvable:$true] %s7344
      %7347 = dma.vmem_to_hbm [thread:$0]  %s7345, 32, %s14, [#allocation3]
    $region61: #{forward.1} parent=1 // pred_fallthru
      _
    // Predicated region
    $region62: #{forward.1} parent=1 // pred_check
      _
    $region63: #{forward.1} parent=1 // pred_check_branch
      %7349 = sbr.rel (0) target = $region65
    $region64: #{forward.1} parent=1 // pred_region
      _
    $region65: #{forward.1} parent=1 // pred_fallthru
      _
    // Predicated region
    $region66: #{forward.1} parent=1 // pred_check
      _
    $region67: #{forward.1} parent=1 // pred_check_branch
      %7351 = sbr.rel (0) target = $region69
    $region68: #{forward.1} parent=1 // pred_region
      %7352 = dma.done [#allocation3], 32
    $region69: #{forward.1} parent=1 // pred_fallthru
      _
    %7353 = vsyncpa [#allocation3], 1

</llo_original>
